<compile_context>
chip_gen: v7x
topology: tpu7x:2x2x1
jax: 0.10.0
libtpu: 0.0.40
codegen_flags: <defaults>
</compile_context>

<pallas_src>
import functools

import jax
import jax.numpy as jnp
from jax.experimental import pallas as pl
from jax.experimental.pallas import tpu as pltpu


def _round_up(x, m):
    return (x + m - 1) // m * m


# ----------------------------------------------------------------------------
# im2col with pool-window-grouped rows (XLA glue; one gather/transpose per conv)
# ----------------------------------------------------------------------------
def _im2col_pooled(x, k, batch_major=True):
    """x: (B, Din, Hin, Win, C) channels-last.

    Builds im2col patches for a VALID conv of kernel size k whose output goes
    straight into MaxPool3d(2): rows are grouped so every 2x2x2 pool window is
    8 consecutive rows.  Row order is (b, dp, hp, wp, i, j, kk) if batch_major
    else (dp, hp, wp, b, i, j, kk).  K order is ((kd, kh, kw), cin), matching
    transpose(w, (2, 3, 4, 1, 0)).reshape(k^3*Cin, Cout).
    """
    B, Din, Hin, Win, C = x.shape
    Dp, Hp, Wp = (Din - k + 1) // 2, (Hin - k + 1) // 2, (Win - k + 1) // 2
    taps = [x[:, kd:kd + 2 * Dp, kh:kh + 2 * Hp, kw:kw + 2 * Wp, :]
            for kd in range(k) for kh in range(k) for kw in range(k)]
    t = jnp.stack(taps, axis=0)                       # (k^3, B, 2Dp, 2Hp, 2Wp, C)
    t = t.reshape(k ** 3, B, Dp, 2, Hp, 2, Wp, 2, C)
    if batch_major:                                   # rows: (b, dp, hp, wp, i, j, kk)
        perm = (1, 2, 4, 6, 3, 5, 7, 0, 8)
    else:                                             # rows: (dp, hp, wp, b, i, j, kk)
        perm = (2, 4, 6, 1, 3, 5, 7, 0, 8)
    t = jnp.transpose(t, perm)
    return t.reshape(B * Dp * Hp * Wp * 8, k ** 3 * C), (B, Dp, Hp, Wp)


# ----------------------------------------------------------------------------
# Kernel 1 / 2: GEMM + bias + ReLU with fused MaxPool3d(2) epilogue
# ----------------------------------------------------------------------------
def _conv_relu_pool_kernel(a_ref, w_ref, b_ref, o_ref):
    y = jnp.dot(a_ref[...], w_ref[...], preferred_element_type=jnp.float32)
    y = jnp.maximum(y + b_ref[...], 0.0)
    m, n = y.shape
    # Rows are pool-window grouped: MaxPool3d(2) == max over 8 consecutive rows.
    y = jnp.max(y.reshape(m // 8, 8, n), axis=1)
    o_ref[...] = y.astype(o_ref.dtype)


def conv_relu_pool_gemm(patches, w, b, out_dtype=jnp.bfloat16):
    """patches: (8*Mp, K) bf16, pool-grouped rows; w: (K, N) bf16; b: (1, N) f32.
    Returns pooled activations (Mp, N) in out_dtype (single pallas_call)."""
    M, K = patches.shape
    N = w.shape[1]
    Mp = M // 8
    # 2 M-tiles when cleanly divisible (keeps both v7x TensorCores busy);
    # otherwise one full block.  VMEM use per tile is << limits at these sizes.
    n_tiles = 2 if (Mp % 16 == 0 and Mp >= 32) else 1
    tm = M // n_tiles

    return pl.pallas_call(
        _conv_relu_pool_kernel,
        out_shape=jax.ShapeDtypeStruct((Mp, N), out_dtype),
        grid_spec=pltpu.PrefetchScalarGridSpec(
            num_scalar_prefetch=0,
            grid=(n_tiles,),
            in_specs=[pl.BlockSpec((tm, K), lambda i: (i, 0)),
                      pl.BlockSpec((K, N), lambda i: (0, 0)),
                      pl.BlockSpec((1, N), lambda i: (0, 0))],
            out_specs=pl.BlockSpec((Mp // n_tiles, N), lambda i: (i, 0))),
        compiler_params=pltpu.CompilerParams(
            dimension_semantics=("parallel",)),
    )(patches, w, b)


# ----------------------------------------------------------------------------
# Kernel 3: fused tail = conv3 GEMM + ReLU + pool3 + NCDHW flatten + fc1 + fc2
# ----------------------------------------------------------------------------
def _tail_kernel(p3_ref, w3_ref, b3_ref, w1_ref, b1_ref, w2_ref, b2_ref, o_ref,
                 *, n_batch, n_pos):
    # conv3 GEMM + bias + ReLU (f32 accumulation).  Rows: (pos, b, corner).
    y = jnp.dot(p3_ref[...], w3_ref[...], preferred_element_type=jnp.float32)
    y = jnp.maximum(y + b3_ref[...], 0.0)                      # (n_pos*n_batch*8, C)
    c = y.shape[-1]
    grp = n_batch * 8

    # pool3 + NCDHW flatten + fc1 folded together:
    #   fc1(x.view(B,-1)) = sum_pos pooled[pos] @ W1p[pos]
    # (W1p was pre-permuted so the channels-last pooled tensor feeds it directly).
    acc = jnp.zeros((n_batch, b1_ref.shape[-1]), jnp.float32)
    for pos in range(n_pos):
        blk = y[pos * grp:(pos + 1) * grp, :]                  # (n_batch*8, C)
        pooled = jnp.max(blk.reshape(n_batch, 8, c), axis=1)   # MaxPool3d(2)
        acc = acc + jnp.dot(pooled.astype(w1_ref.dtype), w1_ref[pos],
                            preferred_element_type=jnp.float32)
    h = jnp.maximum(acc + b1_ref[...], 0.0)                    # fc1 + ReLU

    # fc2 + softmax (f32 output).
    logits = jnp.dot(h.astype(w2_ref.dtype), w2_ref[...],
                     preferred_element_type=jnp.float32) + b2_ref[...]
    logits = logits - jnp.max(logits, axis=-1, keepdims=True)
    e = jnp.exp(logits)
    o_ref[...] = e / jnp.sum(e, axis=-1, keepdims=True)


def tail_fused(p3, w3, b3, w1p, b1, w2, b2, *, n_batch, n_pos, num_domains):
    def full_spec(arr):
        nd = arr.ndim
        return pl.BlockSpec(arr.shape, lambda i, nd=nd: (0,) * nd)

    kern = functools.partial(_tail_kernel, n_batch=n_batch, n_pos=n_pos)
    return pl.pallas_call(
        kern,
        out_shape=jax.ShapeDtypeStruct((n_batch, num_domains), jnp.float32),
        grid_spec=pltpu.PrefetchScalarGridSpec(
            num_scalar_prefetch=0,
            grid=(1,),
            in_specs=[full_spec(p3), full_spec(w3), full_spec(b3),
                      full_spec(w1p), full_spec(b1),
                      full_spec(w2), full_spec(b2)],
            out_specs=pl.BlockSpec((n_batch, num_domains), lambda i: (0, 0))),
        compiler_params=pltpu.CompilerParams(
            dimension_semantics=("arbitrary",)),
    )(p3, w3, b3, w1p, b1, w2, b2)


# ----------------------------------------------------------------------------
# One-time weight repacking (outside the jitted forward)
# ----------------------------------------------------------------------------
def prepare_params(params):
    def conv_w(w):  # (Cout, Cin, k, k, k) -> (k^3*Cin, Cout), (kd, kh, kw, cin) K-order
        co, ci, k = w.shape[0], w.shape[1], w.shape[2]
        return jnp.transpose(w, (2, 3, 4, 1, 0)).reshape(k ** 3 * ci, co)

    # conv1: pad K (27*CH_IN -> 128 mult) and N (64 -> 128) with zeros so the
    # GEMM is lane-dense; padded channels stay exactly 0 through ReLU/pool and
    # meet zero rows in conv2's weights.
    w1 = conv_w(params["conv1"]["w"])
    k1, n1 = w1.shape
    k1p, n1p = _round_up(k1, 128), _round_up(n1, 128)
    w1 = jnp.pad(w1, ((0, k1p - k1), (0, n1p - n1)))
    b1 = jnp.pad(params["conv1"]["b"], (0, n1p - n1)).reshape(1, n1p)

    # conv2 (1x1): K must match conv1's padded channel count.
    w2 = conv_w(params["conv2"]["w"])                          # (64, 128)
    w2 = jnp.pad(w2, ((0, n1p - w2.shape[0]), (0, 0)))         # (128, 128)
    b2 = params["conv2"]["b"].reshape(1, -1)

    w3 = conv_w(params["conv3"]["w"])                          # (27*128, 128)
    b3 = params["conv3"]["b"].reshape(1, -1)
    c3 = params["conv3"]["w"].shape[0]

    # fc1: permute input columns from PyTorch NCDHW-flatten order
    # (flat = c*n_pos + pos) to (pos, channel) -> no runtime transpose.
    wf1 = params["fc1"]["w"]                                   # (64, linear_dim)
    n_pos = wf1.shape[1] // c3
    wf1 = jnp.transpose(wf1.reshape(wf1.shape[0], c3, n_pos), (2, 1, 0))  # (n_pos, C, 64)
    bf1 = params["fc1"]["b"].reshape(1, -1)

    wf2 = params["fc2"]["w"].T                                 # (64, num_domains)
    bf2 = params["fc2"]["b"].reshape(1, -1)

    bf16 = jnp.bfloat16
    return {
        "conv1_w": w1.astype(bf16), "conv1_b": b1.astype(jnp.float32),
        "conv2_w": w2.astype(bf16), "conv2_b": b2.astype(jnp.float32),
        "conv3_w": w3.astype(bf16), "conv3_b": b3.astype(jnp.float32),
        "fc1_w": wf1.astype(bf16), "fc1_b": bf1.astype(jnp.float32),
        "fc2_w": wf2.astype(bf16), "fc2_b": bf2.astype(jnp.float32),
    }


# ----------------------------------------------------------------------------
# Forward pass: 3 pallas_calls + im2col gathers (XLA glue)
# ----------------------------------------------------------------------------
def domain_classifier_forward(prep, x):
    """x: (B, CH_IN, D, H, W) float32 (PyTorch NCDHW). Returns (B, num_domains)."""
    B = x.shape[0]
    xl = jnp.transpose(x, (0, 2, 3, 4, 1)).astype(jnp.bfloat16)   # channels-last once

    # conv1(k3, p0) + ReLU + pool  (fused GEMM)
    p1, (_, D1, H1, W1) = _im2col_pooled(xl, 3, batch_major=True)
    kp = prep["conv1_w"].shape[0]
    if p1.shape[1] != kp:
        p1 = jnp.pad(p1, ((0, 0), (0, kp - p1.shape[1])))
    a1 = conv_relu_pool_gemm(p1, prep["conv1_w"], prep["conv1_b"])
    a1 = a1.reshape(B, D1, H1, W1, -1)

    # conv2(k1, p1) + ReLU + pool  (fused GEMM; spatial zero-pad is the conv padding)
    a1p = jnp.pad(a1, ((0, 0), (1, 1), (1, 1), (1, 1), (0, 0)))
    p2, (_, D2, H2, W2) = _im2col_pooled(a1p, 1, batch_major=True)
    a2 = conv_relu_pool_gemm(p2, prep["conv2_w"], prep["conv2_b"])
    a2 = a2.reshape(B, D2, H2, W2, -1)

    # fused tail: conv3 + ReLU + pool + NCDHW flatten + fc1 + ReLU + fc2 + softmax
    p3, (_, D3, H3, W3) = _im2col_pooled(a2, 3, batch_major=False)
    n_pos = D3 * H3 * W3
    assert n_pos == prep["fc1_w"].shape[0], "linear_dim does not match flatten size"
    return tail_fused(p3, prep["conv3_w"], prep["conv3_b"],
                      prep["fc1_w"], prep["fc1_b"],
                      prep["fc2_w"], prep["fc2_b"],
                      n_batch=B, n_pos=n_pos,
                      num_domains=prep["fc2_w"].shape[1])


# ----------------------------------------------------------------------------
# Pure-JAX f32 reference (mirrors the PyTorch module) for a sanity check
# ----------------------------------------------------------------------------
def reference_forward(params, x):
    def conv3d(x, w, b, pad):
        dn = jax.lax.conv_dimension_numbers(x.shape, w.shape,
                                            ("NCDHW", "OIDHW", "NCDHW"))
        y = jax.lax.conv_general_dilated(x, w, (1, 1, 1), [(pad, pad)] * 3,
                                         dimension_numbers=dn)
        return jax.nn.relu(y + b.reshape(1, -1, 1, 1, 1))

    def pool(x):
        return jax.lax.reduce_window(x, -jnp.inf, jax.lax.max,
                                     (1, 1, 2, 2, 2), (1, 1, 2, 2, 2), "VALID")

    x = pool(conv3d(x, params["conv1"]["w"], params["conv1"]["b"], 0))
    x = pool(conv3d(x, params["conv2"]["w"], params["conv2"]["b"], 1))
    x = pool(conv3d(x, params["conv3"]["w"], params["conv3"]["b"], 0))
    x = x.reshape(x.shape[0], -1)
    x = jax.nn.relu(x @ params["fc1"]["w"].T + params["fc1"]["b"])
    return jax.nn.softmax(x @ params["fc2"]["w"].T + params["fc2"]["b"], axis=1)


# ----------------------------------------------------------------------------
# Deterministic parameter init (PyTorch-default-like uniform bounds)
# ----------------------------------------------------------------------------
def init_params(key, ch_in=4, num_domains=3, linear_dim=256):
    keys = jax.random.split(key, 5)

    def conv_p(k, c_out, c_in, ks):
        bnd = 1.0 / ((c_in * ks ** 3) ** 0.5)
        kw, kb = jax.random.split(k)
        return {"w": jax.random.uniform(kw, (c_out, c_in, ks, ks, ks),
                                        jnp.float32, -bnd, bnd),
                "b": jax.random.uniform(kb, (c_out,), jnp.float32, -bnd, bnd)}

    def fc_p(k, n_out, n_in):
        bnd = 1.0 / (n_in ** 0.5)
        kw, kb = jax.random.split(k)
        return {"w": jax.random.uniform(kw, (n_out, n_in), jnp.float32, -bnd, bnd),
                "b": jax.random.uniform(kb, (n_out,), jnp.float32, -bnd, bnd)}

    return {"conv1": conv_p(keys[0], 64, ch_in, 3),
            "conv2": conv_p(keys[1], 128, 64, 1),
            "conv3": conv_p(keys[2], 128, 128, 3),
            "fc1": fc_p(keys[3], 64, linear_dim),
            "fc2": fc_p(keys[4], num_domains, 64)}


if __name__ == "__main__":
    key = jax.random.PRNGKey(0)
    pkey, xkey = jax.random.split(key)
    CH_IN, NUM_DOMAINS, LINEAR_DIM = 4, 3, 256
    params = init_params(pkey, CH_IN, NUM_DOMAINS, LINEAR_DIM)
    prep = prepare_params(params)          # one-time weight repack (outside jit)

    # (B, C, D, H, W) = (2, 4, 22, 14, 14):
    #   conv1(k3,p0) -> (20,12,12), pool -> (10,6,6)
    #   conv2(k1,p1) -> (12, 8, 8), pool -> ( 6,4,4)
    #   conv3(k3,p0) -> ( 4, 2, 2), pool -> ( 2,1,1)
    #   flatten: 128 * 2 * 1 * 1 = 256 = linear_dim
    x = jax.random.normal(xkey, (2, CH_IN, 22, 14, 14), jnp.float32)

    fwd = jax.jit(domain_classifier_forward)
    y = fwd(prep, x)
    jax.block_until_ready(y)

    y_ref = reference_forward(params, x)
    assert y.shape == (2, NUM_DOMAINS), y.shape
    assert bool(jnp.all(jnp.isfinite(y)))
    assert bool(jnp.all(jnp.abs(jnp.sum(y, axis=1) - 1.0) < 1e-3))     # softmax rows
    assert bool(jnp.allclose(y, y_ref, atol=2e-2)), (y, y_ref)         # bf16 vs f32 ref
    print("KERNEL_OK")
</pallas_src>

<mosaic_0001>
module attributes {stable_mosaic.version = 11 : i64} {
  func.func @_conv_relu_pool_kernel(%arg0: i32, %arg1: memref<2880x128xbf16, #tpu.memory_space<vmem>>, %arg2: memref<128x128xbf16, #tpu.memory_space<vmem>>, %arg3: memref<1x128xf32, #tpu.memory_space<vmem>>, %arg4: memref<360x128xbf16, #tpu.memory_space<vmem>>) attributes {dimension_semantics = [#tpu.dimension_semantics<parallel>], iteration_bounds = array<i64: 2>, scalar_prefetch = 0 : i64, scratch_operands = 0 : i64, tpu.core_type = #tpu.core_type<tc>, window_params = [{transform_indices = @transform_0, window_bounds = array<i64: 2880, 128>}, {pipeline_mode = #tpu.pipeline_mode<synchronous>, transform_indices = @transform_1, window_bounds = array<i64: 128, 128>}, {pipeline_mode = #tpu.pipeline_mode<synchronous>, transform_indices = @transform_2, window_bounds = array<i64: 1, 128>}, {transform_indices = @transform_3, window_bounds = array<i64: 360, 128>}]} {
    %c0 = arith.constant 0 : index
    %c0_0 = arith.constant 0 : index
    %0 = vector.load %arg1[%c0, %c0_0] : memref<2880x128xbf16, #tpu.memory_space<vmem>>, vector<2880x128xbf16>
    %c0_1 = arith.constant 0 : index
    %c0_2 = arith.constant 0 : index
    %1 = vector.load %arg2[%c0_1, %c0_2] : memref<128x128xbf16, #tpu.memory_space<vmem>>, vector<128x128xbf16>
    %cst = arith.constant dense<0.000000e+00> : vector<2880x128xf32>
    %2 = tpu.matmul %0, %1, %cst {dimension_numbers = #tpu.dot_dimension_numbers<[1], [0], [0], [1], [0, 0, 1, 1], [], []>} : vector<2880x128xbf16>, vector<128x128xbf16>, vector<2880x128xf32> -> vector<2880x128xf32>
    %c0_3 = arith.constant 0 : index
    %c0_4 = arith.constant 0 : index
    %3 = vector.load %arg3[%c0_3, %c0_4] : memref<1x128xf32, #tpu.memory_space<vmem>>, vector<1x128xf32>
    %4 = vector.broadcast %3 : vector<1x128xf32> to vector<2880x128xf32>
    %5 = arith.addf %2, %4 : vector<2880x128xf32>
    %cst_5 = arith.constant 0.000000e+00 : f32
    %6 = vector.broadcast %cst_5 : f32 to vector<2880x128xf32>
    %7 = arith.maximumf %5, %6 : vector<2880x128xf32>
    %8 = vector.shape_cast %7 : vector<2880x128xf32> to vector<360x8x128xf32>
    %cst_6 = arith.constant dense<0xFF800000> : vector<360x128xf32>
    %9 = vector.multi_reduction <maximumf>, %8, %cst_6 [1] : vector<360x8x128xf32> to vector<360x128xf32>
    %10 = arith.truncf %9 : vector<360x128xf32> to vector<360x128xbf16>
    %c0_7 = arith.constant 0 : index
    %c0_8 = arith.constant 0 : index
    %11 = vector.load %arg4[%c0_7, %c0_8] : memref<360x128xbf16, #tpu.memory_space<vmem>>, vector<360x128xbf16>
    tpu.vector_store %arg4[%c0_7, %c0_8], %10 {strides = array<i32>} : memref<360x128xbf16, #tpu.memory_space<vmem>>, vector<360x128xbf16>,
    return
  }
  func.func @transform_0(%arg0: i32) -> (i32, i32) {
    %c0_i32 = arith.constant 0 : i32
    %c0_i32_0 = arith.constant 0 : i32
    return %arg0, %c0_i32 : i32, i32
  }
  func.func @transform_1(%arg0: i32) -> (i32, i32) {
    %c0_i32 = arith.constant 0 : i32
    %c0_i32_0 = arith.constant 0 : i32
    %c0_i32_1 = arith.constant 0 : i32
    return %c0_i32, %c0_i32_0 : i32, i32
  }
  func.func @transform_2(%arg0: i32) -> (i32, i32) {
    %c0_i32 = arith.constant 0 : i32
    %c0_i32_0 = arith.constant 0 : i32
    %c0_i32_1 = arith.constant 0 : i32
    return %c0_i32, %c0_i32_0 : i32, i32
  }
  func.func @transform_3(%arg0: i32) -> (i32, i32) {
    %c0_i32 = arith.constant 0 : i32
    %c0_i32_0 = arith.constant 0 : i32
    return %arg0, %c0_i32 : i32, i32
  }
}

module attributes {stable_mosaic.version = 11 : i64} {
  func.func @_conv_relu_pool_kernel(%arg0: i32, %arg1: memref<768x128xbf16, #tpu.memory_space<vmem>>, %arg2: memref<128x128xbf16, #tpu.memory_space<vmem>>, %arg3: memref<1x128xf32, #tpu.memory_space<vmem>>, %arg4: memref<96x128xbf16, #tpu.memory_space<vmem>>) attributes {dimension_semantics = [#tpu.dimension_semantics<parallel>], iteration_bounds = array<i64: 2>, scalar_prefetch = 0 : i64, scratch_operands = 0 : i64, tpu.core_type = #tpu.core_type<tc>, window_params = [{transform_indices = @transform_0, window_bounds = array<i64: 768, 128>}, {pipeline_mode = #tpu.pipeline_mode<synchronous>, transform_indices = @transform_1, window_bounds = array<i64: 128, 128>}, {pipeline_mode = #tpu.pipeline_mode<synchronous>, transform_indices = @transform_2, window_bounds = array<i64: 1, 128>}, {transform_indices = @transform_3, window_bounds = array<i64: 96, 128>}]} {
    %c0 = arith.constant 0 : index
    %c0_0 = arith.constant 0 : index
    %0 = vector.load %arg1[%c0, %c0_0] : memref<768x128xbf16, #tpu.memory_space<vmem>>, vector<768x128xbf16>
    %c0_1 = arith.constant 0 : index
    %c0_2 = arith.constant 0 : index
    %1 = vector.load %arg2[%c0_1, %c0_2] : memref<128x128xbf16, #tpu.memory_space<vmem>>, vector<128x128xbf16>
    %cst = arith.constant dense<0.000000e+00> : vector<768x128xf32>
    %2 = tpu.matmul %0, %1, %cst {dimension_numbers = #tpu.dot_dimension_numbers<[1], [0], [0], [1], [0, 0, 1, 1], [], []>} : vector<768x128xbf16>, vector<128x128xbf16>, vector<768x128xf32> -> vector<768x128xf32>
    %c0_3 = arith.constant 0 : index
    %c0_4 = arith.constant 0 : index
    %3 = vector.load %arg3[%c0_3, %c0_4] : memref<1x128xf32, #tpu.memory_space<vmem>>, vector<1x128xf32>
    %4 = vector.broadcast %3 : vector<1x128xf32> to vector<768x128xf32>
    %5 = arith.addf %2, %4 : vector<768x128xf32>
    %cst_5 = arith.constant 0.000000e+00 : f32
    %6 = vector.broadcast %cst_5 : f32 to vector<768x128xf32>
    %7 = arith.maximumf %5, %6 : vector<768x128xf32>
    %8 = vector.shape_cast %7 : vector<768x128xf32> to vector<96x8x128xf32>
    %cst_6 = arith.constant dense<0xFF800000> : vector<96x128xf32>
    %9 = vector.multi_reduction <maximumf>, %8, %cst_6 [1] : vector<96x8x128xf32> to vector<96x128xf32>
    %10 = arith.truncf %9 : vector<96x128xf32> to vector<96x128xbf16>
    %c0_7 = arith.constant 0 : index
    %c0_8 = arith.constant 0 : index
    %11 = vector.load %arg4[%c0_7, %c0_8] : memref<96x128xbf16, #tpu.memory_space<vmem>>, vector<96x128xbf16>
    tpu.vector_store %arg4[%c0_7, %c0_8], %10 {strides = array<i32>} : memref<96x128xbf16, #tpu.memory_space<vmem>>, vector<96x128xbf16>,
    return
  }
  func.func @transform_0(%arg0: i32) -> (i32, i32) {
    %c0_i32 = arith.constant 0 : i32
    %c0_i32_0 = arith.constant 0 : i32
    return %arg0, %c0_i32 : i32, i32
  }
  func.func @transform_1(%arg0: i32) -> (i32, i32) {
    %c0_i32 = arith.constant 0 : i32
    %c0_i32_0 = arith.constant 0 : i32
    %c0_i32_1 = arith.constant 0 : i32
    return %c0_i32, %c0_i32_0 : i32, i32
  }
  func.func @transform_2(%arg0: i32) -> (i32, i32) {
    %c0_i32 = arith.constant 0 : i32
    %c0_i32_0 = arith.constant 0 : i32
    %c0_i32_1 = arith.constant 0 : i32
    return %c0_i32, %c0_i32_0 : i32, i32
  }
  func.func @transform_3(%arg0: i32) -> (i32, i32) {
    %c0_i32 = arith.constant 0 : i32
    %c0_i32_0 = arith.constant 0 : i32
    return %arg0, %c0_i32 : i32, i32
  }
}

module attributes {stable_mosaic.version = 11 : i64} {
  func.func @_tail_kernel(%arg0: i32, %arg1: memref<32x3456xbf16, #tpu.memory_space<vmem>>, %arg2: memref<3456x128xbf16, #tpu.memory_space<vmem>>, %arg3: memref<1x128xf32, #tpu.memory_space<vmem>>, %arg4: memref<2x128x64xbf16, #tpu.memory_space<vmem>>, %arg5: memref<1x64xf32, #tpu.memory_space<vmem>>, %arg6: memref<64x3xbf16, #tpu.memory_space<vmem>>, %arg7: memref<1x3xf32, #tpu.memory_space<vmem>>, %arg8: memref<2x3xf32, #tpu.memory_space<vmem>>) attributes {dimension_semantics = [#tpu.dimension_semantics<arbitrary>], iteration_bounds = array<i64: 1>, scalar_prefetch = 0 : i64, scratch_operands = 0 : i64, tpu.core_type = #tpu.core_type<tc>, window_params = [{pipeline_mode = #tpu.pipeline_mode<synchronous>, transform_indices = @transform_0, window_bounds = array<i64: 32, 3456>}, {pipeline_mode = #tpu.pipeline_mode<synchronous>, transform_indices = @transform_1, window_bounds = array<i64: 3456, 128>}, {pipeline_mode = #tpu.pipeline_mode<synchronous>, transform_indices = @transform_2, window_bounds = array<i64: 1, 128>}, {pipeline_mode = #tpu.pipeline_mode<synchronous>, transform_indices = @transform_3, window_bounds = array<i64: 2, 128, 64>}, {pipeline_mode = #tpu.pipeline_mode<synchronous>, transform_indices = @transform_4, window_bounds = array<i64: 1, 64>}, {pipeline_mode = #tpu.pipeline_mode<synchronous>, transform_indices = @transform_5, window_bounds = array<i64: 64, 3>}, {pipeline_mode = #tpu.pipeline_mode<synchronous>, transform_indices = @transform_6, window_bounds = array<i64: 1, 3>}, {pipeline_mode = #tpu.pipeline_mode<synchronous>, transform_indices = @transform_7, window_bounds = array<i64: 2, 3>}]} {
    %c0 = arith.constant 0 : index
    %c0_0 = arith.constant 0 : index
    %0 = vector.load %arg1[%c0, %c0_0] : memref<32x3456xbf16, #tpu.memory_space<vmem>>, vector<32x3456xbf16>
    %c0_1 = arith.constant 0 : index
    %c0_2 = arith.constant 0 : index
    %1 = vector.load %arg2[%c0_1, %c0_2] : memref<3456x128xbf16, #tpu.memory_space<vmem>>, vector<3456x128xbf16>
    %cst = arith.constant dense<0.000000e+00> : vector<32x128xf32>
    %2 = tpu.matmul %0, %1, %cst {dimension_numbers = #tpu.dot_dimension_numbers<[1], [0], [0], [1], [0, 0, 1, 1], [], []>} : vector<32x3456xbf16>, vector<3456x128xbf16>, vector<32x128xf32> -> vector<32x128xf32>
    %c0_3 = arith.constant 0 : index
    %c0_4 = arith.constant 0 : index
    %3 = vector.load %arg3[%c0_3, %c0_4] : memref<1x128xf32, #tpu.memory_space<vmem>>, vector<1x128xf32>
    %4 = vector.broadcast %3 : vector<1x128xf32> to vector<32x128xf32>
    %5 = arith.addf %2, %4 : vector<32x128xf32>
    %cst_5 = arith.constant 0.000000e+00 : f32
    %6 = vector.broadcast %cst_5 : f32 to vector<32x128xf32>
    %7 = arith.maximumf %5, %6 : vector<32x128xf32>
    %cst_6 = arith.constant 0.000000e+00 : f32
    %8 = vector.broadcast %cst_6 : f32 to vector<2x64xf32>
    %9 = vector.extract_strided_slice %7 {offsets = [0, 0], sizes = [16, 128], strides = [1, 1]} : vector<32x128xf32> to vector<16x128xf32>
    %10 = vector.shape_cast %9 : vector<16x128xf32> to vector<2x8x128xf32>
    %cst_7 = arith.constant dense<0xFF800000> : vector<2x128xf32>
    %11 = vector.multi_reduction <maximumf>, %10, %cst_7 [1] : vector<2x8x128xf32> to vector<2x128xf32>
    %12 = arith.truncf %11 : vector<2x128xf32> to vector<2x128xbf16>
    %c0_8 = arith.constant 0 : index
    %c0_9 = arith.constant 0 : index
    %c0_10 = arith.constant 0 : index
    %13 = vector.load %arg4[%c0_8, %c0_9, %c0_10] : memref<2x128x64xbf16, #tpu.memory_space<vmem>>, vector<1x128x64xbf16>
    %14 = vector.shape_cast %13 : vector<1x128x64xbf16> to vector<128x64xbf16>
    %cst_11 = arith.constant dense<0.000000e+00> : vector<2x64xf32>
    %15 = tpu.matmul %12, %14, %cst_11 {dimension_numbers = #tpu.dot_dimension_numbers<[1], [0], [0], [1], [0, 0, 1, 1], [], []>} : vector<2x128xbf16>, vector<128x64xbf16>, vector<2x64xf32> -> vector<2x64xf32>
    %16 = arith.addf %8, %15 : vector<2x64xf32>
    %17 = vector.extract_strided_slice %7 {offsets = [16, 0], sizes = [16, 128], strides = [1, 1]} : vector<32x128xf32> to vector<16x128xf32>
    %18 = vector.shape_cast %17 : vector<16x128xf32> to vector<2x8x128xf32>
    %cst_12 = arith.constant dense<0xFF800000> : vector<2x128xf32>
    %19 = vector.multi_reduction <maximumf>, %18, %cst_12 [1] : vector<2x8x128xf32> to vector<2x128xf32>
    %20 = arith.truncf %19 : vector<2x128xf32> to vector<2x128xbf16>
    %c1 = arith.constant 1 : index
    %c0_13 = arith.constant 0 : index
    %c0_14 = arith.constant 0 : index
    %21 = vector.load %arg4[%c1, %c0_13, %c0_14] : memref<2x128x64xbf16, #tpu.memory_space<vmem>>, vector<1x128x64xbf16>
    %22 = vector.shape_cast %21 : vector<1x128x64xbf16> to vector<128x64xbf16>
    %cst_15 = arith.constant dense<0.000000e+00> : vector<2x64xf32>
    %23 = tpu.matmul %20, %22, %cst_15 {dimension_numbers = #tpu.dot_dimension_numbers<[1], [0], [0], [1], [0, 0, 1, 1], [], []>} : vector<2x128xbf16>, vector<128x64xbf16>, vector<2x64xf32> -> vector<2x64xf32>
    %24 = arith.addf %16, %23 : vector<2x64xf32>
    %c0_16 = arith.constant 0 : index
    %c0_17 = arith.constant 0 : index
    %25 = vector.load %arg5[%c0_16, %c0_17] : memref<1x64xf32, #tpu.memory_space<vmem>>, vector<1x64xf32>
    %26 = vector.broadcast %25 : vector<1x64xf32> to vector<2x64xf32>
    %27 = arith.addf %24, %26 : vector<2x64xf32>
    %cst_18 = arith.constant 0.000000e+00 : f32
    %28 = vector.broadcast %cst_18 : f32 to vector<2x64xf32>
    %29 = arith.maximumf %27, %28 : vector<2x64xf32>
    %30 = arith.truncf %29 : vector<2x64xf32> to vector<2x64xbf16>
    %c0_19 = arith.constant 0 : index
    %c0_20 = arith.constant 0 : index
    %31 = vector.load %arg6[%c0_19, %c0_20] : memref<64x3xbf16, #tpu.memory_space<vmem>>, vector<64x3xbf16>
    %cst_21 = arith.constant dense<0.000000e+00> : vector<2x3xf32>
    %32 = tpu.matmul %30, %31, %cst_21 {dimension_numbers = #tpu.dot_dimension_numbers<[1], [0], [0], [1], [0, 0, 1, 1], [], []>} : vector<2x64xbf16>, vector<64x3xbf16>, vector<2x3xf32> -> vector<2x3xf32>
    %c0_22 = arith.constant 0 : index
    %c0_23 = arith.constant 0 : index
    %33 = vector.load %arg7[%c0_22, %c0_23] : memref<1x3xf32, #tpu.memory_space<vmem>>, vector<1x3xf32>
    %34 = vector.broadcast %33 : vector<1x3xf32> to vector<2x3xf32>
    %35 = arith.addf %32, %34 : vector<2x3xf32>
    %cst_24 = arith.constant dense<0xFF800000> : vector<2xf32>
    %36 = vector.multi_reduction <maximumf>, %35, %cst_24 [1] : vector<2x3xf32> to vector<2xf32>
    %37 = vector.shape_cast %36 : vector<2xf32> to vector<2x1xf32>
    %38 = vector.broadcast %37 : vector<2x1xf32> to vector<2x3xf32>
    %39 = arith.subf %35, %38 : vector<2x3xf32>
    %40 = math.exp %39 : vector<2x3xf32>
    %cst_25 = arith.constant dense<0.000000e+00> : vector<2xf32>
    %41 = vector.multi_reduction <add>, %40, %cst_25 [1] : vector<2x3xf32> to vector<2xf32>
    %42 = vector.shape_cast %41 : vector<2xf32> to vector<2x1xf32>
    %43 = vector.broadcast %42 : vector<2x1xf32> to vector<2x3xf32>
    %44 = arith.divf %40, %43 : vector<2x3xf32>
    %c0_26 = arith.constant 0 : index
    %c0_27 = arith.constant 0 : index
    %45 = vector.load %arg8[%c0_26, %c0_27] : memref<2x3xf32, #tpu.memory_space<vmem>>, vector<2x3xf32>
    tpu.vector_store %arg8[%c0_26, %c0_27], %44 {strides = array<i32>} : memref<2x3xf32, #tpu.memory_space<vmem>>, vector<2x3xf32>,
    return
  }
  func.func @transform_0(%arg0: i32) -> (i32, i32) {
    %c0_i32 = arith.constant 0 : i32
    %c0_i32_0 = arith.constant 0 : i32
    %c0_i32_1 = arith.constant 0 : i32
    return %c0_i32, %c0_i32_0 : i32, i32
  }
  func.func @transform_1(%arg0: i32) -> (i32, i32) {
    %c0_i32 = arith.constant 0 : i32
    %c0_i32_0 = arith.constant 0 : i32
    %c0_i32_1 = arith.constant 0 : i32
    return %c0_i32, %c0_i32_0 : i32, i32
  }
  func.func @transform_2(%arg0: i32) -> (i32, i32) {
    %c0_i32 = arith.constant 0 : i32
    %c0_i32_0 = arith.constant 0 : i32
    %c0_i32_1 = arith.constant 0 : i32
    return %c0_i32, %c0_i32_0 : i32, i32
  }
  func.func @transform_3(%arg0: i32) -> (i32, i32, i32) {
    %c0_i32 = arith.constant 0 : i32
    %c0_i32_0 = arith.constant 0 : i32
    %c0_i32_1 = arith.constant 0 : i32
    %c0_i32_2 = arith.constant 0 : i32
    return %c0_i32, %c0_i32_0, %c0_i32_1 : i32, i32, i32
  }
  func.func @transform_4(%arg0: i32) -> (i32, i32) {
    %c0_i32 = arith.constant 0 : i32
    %c0_i32_0 = arith.constant 0 : i32
    %c0_i32_1 = arith.constant 0 : i32
    return %c0_i32, %c0_i32_0 : i32, i32
  }
  func.func @transform_5(%arg0: i32) -> (i32, i32) {
    %c0_i32 = arith.constant 0 : i32
    %c0_i32_0 = arith.constant 0 : i32
    %c0_i32_1 = arith.constant 0 : i32
    return %c0_i32, %c0_i32_0 : i32, i32
  }
  func.func @transform_6(%arg0: i32) -> (i32, i32) {
    %c0_i32 = arith.constant 0 : i32
    %c0_i32_0 = arith.constant 0 : i32
    %c0_i32_1 = arith.constant 0 : i32
    return %c0_i32, %c0_i32_0 : i32, i32
  }
  func.func @transform_7(%arg0: i32) -> (i32, i32) {
    %c0_i32 = arith.constant 0 : i32
    %c0_i32_0 = arith.constant 0 : i32
    %c0_i32_1 = arith.constant 0 : i32
    return %c0_i32, %c0_i32_0 : i32, i32
  }
}

</mosaic_0001>

<llo_original>
// kernel: domain_classifier_forward.3
$region0: #{domain_classifier_forward.3}
  #allocation0 [shape = 'u32[]', space=smem, size = 0x4, offset = 0x4, fixed_abs, tag = 'smem constant byte address 0x4 - core index']
  #allocation1 [shape = 'u32[144,128]{1,0:T(1,128)}', space=vmem, size = 0x12000, scoped, tag = 'internal scratch']
  %s0 = inlined_call_operand.vmem [shape: bf16[5760,128], index: 0, kind: input, shape index: {}]
  %s1 = inlined_call_operand.vmem [shape: bf16[128,128], index: 1, kind: input, shape index: {}]
  %s2 = inlined_call_operand.vmem [shape: f32[1,128], index: 2, kind: input, shape index: {}]
  %s3 = inlined_call_operand.vmem [shape: bf16[720,128], index: 3, kind: output, shape index: {}]
  %s4 = sld [smem:[#allocation0]]
  $region45: #{domain_classifier_forward.3} parent=0
    _
  %s6 = ssub.s32 1, %s4
  %s7 = scalar_select 0, %s6, %s4
  loop: start=0, step=1, limit=4
  $region2: #{domain_classifier_forward.3} parent=0 // loop_pre_header
    _
  $region3: #{domain_classifier_forward.3} parent=0 // loop_header
    %s9 = sphi 0, %s13
    %p10 = scmp.ge.s32.totalorder %s9, 4
    %s19 = sphi 0, %s21
    %s22 = sphi 0, %s19
    %s23 = sphi 0, %s22
    %s39 = sphi 0, %s23
    %s43 = sphi 0, %s43
    %s45 = sphi 0, %s43
    %s46 = sphi 0, %s45
    %s60 = sphi 0, %s46
    %s64 = sphi 0, %s64
    %s66 = sphi 0, %s64
    %s67 = sphi 0, %s66
    %s81 = sphi 0, %s67
    %s87 = sphi 0, %s89
    %s90 = sphi 0, %s87
    %s91 = sphi 0, %s90
    %s107 = sphi 0, %s91
  $region4: #{domain_classifier_forward.3} parent=0 // loop_header_branch
    %12 = sbr.rel (%p10) target = $region8
  $region5: #{domain_classifier_forward.3} parent=0 // loop_body
    %s14 = ssub.s32 %s9, 1
    %s15 = ssub.s32 %s9, 2
    %s16 = sadd.s32 %s9, 1
    %s17 = ssub.s32 %s9, %s16
    %p18 = scmp.eq.s32.totalorder %s17, 0
    %s20 = sadd.s32 %s19, 1
    %s21 = scalar_select %p18, %s19, %s20
    %p24 = pneg %p18
    %p25 = scmp.eq.s32.totalorder %s9, 1
    %p26 = por %p24, %p25
    %p27 = scmp.ne.s32.totalorder %s19, %s22
    %p28 = scmp.eq.s32.totalorder %s9, 0
    %p29 = por %p27, %p28
    %p30 = scmp.ne.s32.totalorder %s19, %s22
    %p31 = scmp.eq.s32.totalorder %s14, 1
    %p32 = por %p30, %p31
    %p33 = scmp.ne.s32.totalorder %s22, %s23
    %p34 = scmp.eq.s32.totalorder %s14, 0
    %p35 = por %p33, %p34
    %p36 = scmp.ne.s32.totalorder %s22, %s23
    %p37 = scmp.eq.s32.totalorder %s15, 1
    %p38 = por %p36, %p37
    %p40 = scmp.ne.s32.totalorder %s23, %s39
    %p41 = scmp.eq.s32.totalorder %s15, 0
    %p42 = por %p40, %p41
    %s44 = sadd.s32 %s43, 1
    %p47 = scmp.eq.s32.totalorder %s9, 1
    %p48 = scmp.ne.s32.totalorder %s43, %s45
    %p49 = scmp.eq.s32.totalorder %s9, 0
    %p50 = por %p48, %p49
    %p51 = scmp.ne.s32.totalorder %s43, %s45
    %p52 = scmp.eq.s32.totalorder %s14, 1
    %p53 = por %p51, %p52
    %p54 = scmp.ne.s32.totalorder %s45, %s46
    %p55 = scmp.eq.s32.totalorder %s14, 0
    %p56 = por %p54, %p55
    %p57 = scmp.ne.s32.totalorder %s45, %s46
    %p58 = scmp.eq.s32.totalorder %s15, 1
    %p59 = por %p57, %p58
    %p61 = scmp.ne.s32.totalorder %s46, %s60
    %p62 = scmp.eq.s32.totalorder %s15, 0
    %p63 = por %p61, %p62
    %s65 = sadd.s32 %s64, 1
    %p68 = scmp.eq.s32.totalorder %s9, 1
    %p69 = scmp.ne.s32.totalorder %s64, %s66
    %p70 = scmp.eq.s32.totalorder %s9, 0
    %p71 = por %p69, %p70
    %p72 = scmp.ne.s32.totalorder %s64, %s66
    %p73 = scmp.eq.s32.totalorder %s14, 1
    %p74 = por %p72, %p73
    %p75 = scmp.ne.s32.totalorder %s66, %s67
    %p76 = scmp.eq.s32.totalorder %s14, 0
    %p77 = por %p75, %p76
    %p78 = scmp.ne.s32.totalorder %s66, %s67
    %p79 = scmp.eq.s32.totalorder %s15, 1
    %p80 = por %p78, %p79
    %p82 = scmp.ne.s32.totalorder %s67, %s81
    %p83 = scmp.eq.s32.totalorder %s15, 0
    %p84 = por %p82, %p83
    %s85 = ssub.s32 %s9, %s16
    %p86 = scmp.eq.s32.totalorder %s85, 0
    %s88 = sadd.s32 %s87, 1
    %s89 = scalar_select %p86, %s87, %s88
    %p92 = pneg %p86
    %p93 = scmp.eq.s32.totalorder %s9, 1
    %p94 = por %p92, %p93
    %p95 = scmp.ne.s32.totalorder %s87, %s90
    %p96 = scmp.eq.s32.totalorder %s9, 0
    %p97 = por %p95, %p96
    %p98 = scmp.ne.s32.totalorder %s87, %s90
    %p99 = scmp.eq.s32.totalorder %s14, 1
    %p100 = por %p98, %p99
    %p101 = scmp.ne.s32.totalorder %s90, %s91
    %p102 = scmp.eq.s32.totalorder %s14, 0
    %p103 = por %p101, %p102
    %p104 = scmp.ne.s32.totalorder %s90, %s91
    %p105 = scmp.eq.s32.totalorder %s15, 1
    %p106 = por %p104, %p105
    %p108 = scmp.ne.s32.totalorder %s91, %s107
    %p109 = scmp.eq.s32.totalorder %s15, 0
    %p110 = por %p108, %p109
    %p111 = scmp.le.s32.totalorder 1, %s9
    %p112 = scmp.lt.s32.totalorder %s9, 3
    %p113 = pnand %p111, %p112
    %p114 = pneg %p113
    // Predicated region
    $region9: #{domain_classifier_forward.3} parent=5 // pred_check
      _
    $region10: #{domain_classifier_forward.3} parent=5 // pred_check_branch
      %116 = sbr.rel (%p113) target = $region12
    $region11: #{domain_classifier_forward.3} parent=5 // pred_region
      %s117 = ssub.s32 %s9, 1
      // Predicated region
      $region13: #{domain_classifier_forward.3} parent=11 // pred_check
        %p118 = pneg %p56
      $region14: #{domain_classifier_forward.3} parent=11 // pred_check_branch
        %120 = sbr.rel (%p118) target = $region16
      $region15: #{domain_classifier_forward.3} parent=11 // pred_region
        _
      $region16: #{domain_classifier_forward.3} parent=11 // pred_fallthru
        _
      // Predicated region
      $region17: #{domain_classifier_forward.3} parent=11 // pred_check
        %p121 = pneg %p77
      $region18: #{domain_classifier_forward.3} parent=11 // pred_check_branch
        %123 = sbr.rel (%p121) target = $region20
      $region19: #{domain_classifier_forward.3} parent=11 // pred_region
        _
      $region20: #{domain_classifier_forward.3} parent=11 // pred_fallthru
        _
    $region12: #{domain_classifier_forward.3} parent=5 // pred_fallthru
      _
    %p124 = scmp.lt.s32.totalorder %s9, 2
    // Predicated region
    $region21: #{domain_classifier_forward.3} parent=5 // pred_check
      %p125 = pneg %p124
    $region22: #{domain_classifier_forward.3} parent=5 // pred_check_branch
      %127 = sbr.rel (%p125) target = $region24
    $region23: #{domain_classifier_forward.3} parent=5 // pred_region
      // Predicated region
      $region25: #{domain_classifier_forward.3} parent=23 // pred_check
        %p128 = pneg %p29
      $region26: #{domain_classifier_forward.3} parent=23 // pred_check_branch
        %130 = sbr.rel (%p128) target = $region28
      $region27: #{domain_classifier_forward.3} parent=23 // pred_region
        %s131 = smul.u32 360, %s9
        %p132 = scmp.lt.s32.totalorder %s131, 719
        %s133 = scalar_select %p132, %s131, 719
        %s134 = smul.addr %s133, 4
        %s135 = scalar_lea.vmem %s0, %s134
        %s136 = smul.u32 360, %s9
      $region28: #{domain_classifier_forward.3} parent=23 // pred_fallthru
        _
    $region24: #{domain_classifier_forward.3} parent=5 // pred_fallthru
      _
    %p137 = scmp.le.s32.totalorder 1, %s9
    %p138 = scmp.lt.s32.totalorder %s9, 3
    %p139 = pnand %p137, %p138
    %p140 = pneg %p139
    // Predicated region
    $region29: #{domain_classifier_forward.3} parent=5 // pred_check
      _
    $region30: #{domain_classifier_forward.3} parent=5 // pred_check_branch
      %142 = sbr.rel (%p139) target = $region32
    $region31: #{domain_classifier_forward.3} parent=5 // pred_region
      %s143 = ssub.s32 %s9, 1
      %s144 = smul.u32 360, %s14
      %p145 = scmp.lt.s32.totalorder %s144, 719
      %s146 = scalar_select %p145, %s144, 719
      %s147 = smul.addr %s146, 4
      %s148 = scalar_lea.vmem %s0, %s147
      %p149 = pneg %p35
      %p150 = pneg %p32
      %p151 = pneg %p56
      %p152 = pneg %p53
      %p153 = pneg %p77
      %p154 = pneg %p74
      %p155 = pneg %p103
      %p156 = pneg %p100
      %s157 = smul.u32 45, %s14
      %p158 = scmp.lt.s32.totalorder %s157, 89
      %s159 = scalar_select %p158, %s157, 89
      %s160 = smul.addr %s159, 4
      %s161 = scalar_lea.vmem %s3, %s160
      %s162 = smul.u32 360, %s14
      %p163 = scmp.lt.s32.totalorder %s162, 719
      %s164 = scalar_select %p163, %s162, 719
      %s165 = smul.addr %s164, 4
      %s166 = scalar_lea.vmem %s0, %s165
      %s167 = smul.u32 360, %s14
      %s168 = smul.u32 45, %s14
      %p169 = scmp.lt.s32.totalorder %s168, 89
      %s170 = scalar_select %p169, %s168, 89
      %s171 = smul.addr %s170, 4
      %s172 = scalar_lea.vmem %s3, %s171
      %s173 = smul.u32 45, %s14
      %v175 = vld [vmem:[%s166] sm:$0xf]
      %v176 = vld [vmem:[%s166 + $0x4] sm:$0xf]
      %v177 = vld [vmem:[%s166 + $0x8] sm:$0xf]
      %v178 = vld [vmem:[%s166 + $0xc] sm:$0xf]
      %v179 = vld [vmem:[%s166 + $0x10] sm:$0xf]
      %v180 = vld [vmem:[%s166 + $0x14] sm:$0xf]
      %v181 = vld [vmem:[%s166 + $0x18] sm:$0xf]
      %v182 = vld [vmem:[%s166 + $0x1c] sm:$0xf]
      %v183 = vld [vmem:[%s166 + $0x20] sm:$0xf]
      %v184 = vld [vmem:[%s166 + $0x24] sm:$0xf]
      %v185 = vld [vmem:[%s166 + $0x28] sm:$0xf]
      %v186 = vld [vmem:[%s166 + $0x2c] sm:$0xf]
      %v187 = vld [vmem:[%s166 + $0x30] sm:$0xf]
      %v188 = vld [vmem:[%s166 + $0x34] sm:$0xf]
      %v189 = vld [vmem:[%s166 + $0x38] sm:$0xf]
      %v190 = vld [vmem:[%s166 + $0x3c] sm:$0xf]
      %v191 = vld [vmem:[%s166 + $0x40] sm:$0xf]
      %v192 = vld [vmem:[%s166 + $0x44] sm:$0xf]
      %v193 = vld [vmem:[%s166 + $0x48] sm:$0xf]
      %v194 = vld [vmem:[%s166 + $0x4c] sm:$0xf]
      %v195 = vld [vmem:[%s166 + $0x50] sm:$0xf]
      %v196 = vld [vmem:[%s166 + $0x54] sm:$0xf]
      %v197 = vld [vmem:[%s166 + $0x58] sm:$0xf]
      %v198 = vld [vmem:[%s166 + $0x5c] sm:$0xf]
      %v199 = vld [vmem:[%s166 + $0x60] sm:$0xf]
      %v200 = vld [vmem:[%s166 + $0x64] sm:$0xf]
      %v201 = vld [vmem:[%s166 + $0x68] sm:$0xf]
      %v202 = vld [vmem:[%s166 + $0x6c] sm:$0xf]
      %v203 = vld [vmem:[%s166 + $0x70] sm:$0xf]
      %v204 = vld [vmem:[%s166 + $0x74] sm:$0xf]
      %v205 = vld [vmem:[%s166 + $0x78] sm:$0xf]
      %v206 = vld [vmem:[%s166 + $0x7c] sm:$0xf]
      %v207 = vld [vmem:[%s166 + $0x80] sm:$0xf]
      %v208 = vld [vmem:[%s166 + $0x84] sm:$0xf]
      %v209 = vld [vmem:[%s166 + $0x88] sm:$0xf]
      %v210 = vld [vmem:[%s166 + $0x8c] sm:$0xf]
      %v211 = vld [vmem:[%s166 + $0x90] sm:$0xf]
      %v212 = vld [vmem:[%s166 + $0x94] sm:$0xf]
      %v213 = vld [vmem:[%s166 + $0x98] sm:$0xf]
      %v214 = vld [vmem:[%s166 + $0x9c] sm:$0xf]
      %v215 = vld [vmem:[%s166 + $0xa0] sm:$0xf]
      %v216 = vld [vmem:[%s166 + $0xa4] sm:$0xf]
      %v217 = vld [vmem:[%s166 + $0xa8] sm:$0xf]
      %v218 = vld [vmem:[%s166 + $0xac] sm:$0xf]
      %v219 = vld [vmem:[%s166 + $0xb0] sm:$0xf]
      %v220 = vld [vmem:[%s166 + $0xb4] sm:$0xf]
      %v221 = vld [vmem:[%s166 + $0xb8] sm:$0xf]
      %v222 = vld [vmem:[%s166 + $0xbc] sm:$0xf]
      %v223 = vld [vmem:[%s166 + $0xc0] sm:$0xf]
      %v224 = vld [vmem:[%s166 + $0xc4] sm:$0xf]
      %v225 = vld [vmem:[%s166 + $0xc8] sm:$0xf]
      %v226 = vld [vmem:[%s166 + $0xcc] sm:$0xf]
      %v227 = vld [vmem:[%s166 + $0xd0] sm:$0xf]
      %v228 = vld [vmem:[%s166 + $0xd4] sm:$0xf]
      %v229 = vld [vmem:[%s166 + $0xd8] sm:$0xf]
      %v230 = vld [vmem:[%s166 + $0xdc] sm:$0xf]
      %v231 = vld [vmem:[%s166 + $0xe0] sm:$0xf]
      %v232 = vld [vmem:[%s166 + $0xe4] sm:$0xf]
      %v233 = vld [vmem:[%s166 + $0xe8] sm:$0xf]
      %v234 = vld [vmem:[%s166 + $0xec] sm:$0xf]
      %v235 = vld [vmem:[%s166 + $0xf0] sm:$0xf]
      %v236 = vld [vmem:[%s166 + $0xf4] sm:$0xf]
      %v237 = vld [vmem:[%s166 + $0xf8] sm:$0xf]
      %v238 = vld [vmem:[%s166 + $0xfc] sm:$0xf]
      %v239 = vld [vmem:[%s166 + $0x100] sm:$0xf]
      %v240 = vld [vmem:[%s166 + $0x104] sm:$0xf]
      %v241 = vld [vmem:[%s166 + $0x108] sm:$0xf]
      %v242 = vld [vmem:[%s166 + $0x10c] sm:$0xf]
      %v243 = vld [vmem:[%s166 + $0x110] sm:$0xf]
      %v244 = vld [vmem:[%s166 + $0x114] sm:$0xf]
      %v245 = vld [vmem:[%s166 + $0x118] sm:$0xf]
      %v246 = vld [vmem:[%s166 + $0x11c] sm:$0xf]
      %v247 = vld [vmem:[%s166 + $0x120] sm:$0xf]
      %v248 = vld [vmem:[%s166 + $0x124] sm:$0xf]
      %v249 = vld [vmem:[%s166 + $0x128] sm:$0xf]
      %v250 = vld [vmem:[%s166 + $0x12c] sm:$0xf]
      %v251 = vld [vmem:[%s166 + $0x130] sm:$0xf]
      %v252 = vld [vmem:[%s166 + $0x134] sm:$0xf]
      %v253 = vld [vmem:[%s166 + $0x138] sm:$0xf]
      %v254 = vld [vmem:[%s166 + $0x13c] sm:$0xf]
      %v255 = vld [vmem:[%s166 + $0x140] sm:$0xf]
      %v256 = vld [vmem:[%s166 + $0x144] sm:$0xf]
      %v257 = vld [vmem:[%s166 + $0x148] sm:$0xf]
      %v258 = vld [vmem:[%s166 + $0x14c] sm:$0xf]
      %v259 = vld [vmem:[%s166 + $0x150] sm:$0xf]
      %v260 = vld [vmem:[%s166 + $0x154] sm:$0xf]
      %v261 = vld [vmem:[%s166 + $0x158] sm:$0xf]
      %v262 = vld [vmem:[%s166 + $0x15c] sm:$0xf]
      %v263 = vld [vmem:[%s166 + $0x160] sm:$0xf]
      %v264 = vld [vmem:[%s166 + $0x164] sm:$0xf]
      %v265 = vld [vmem:[%s166 + $0x168] sm:$0xf]
      %v266 = vld [vmem:[%s166 + $0x16c] sm:$0xf]
      %v267 = vld [vmem:[%s166 + $0x170] sm:$0xf]
      %v268 = vld [vmem:[%s166 + $0x174] sm:$0xf]
      %v269 = vld [vmem:[%s166 + $0x178] sm:$0xf]
      %v270 = vld [vmem:[%s166 + $0x17c] sm:$0xf]
      %v271 = vld [vmem:[%s166 + $0x180] sm:$0xf]
      %v272 = vld [vmem:[%s166 + $0x184] sm:$0xf]
      %v273 = vld [vmem:[%s166 + $0x188] sm:$0xf]
      %v274 = vld [vmem:[%s166 + $0x18c] sm:$0xf]
      %v275 = vld [vmem:[%s166 + $0x190] sm:$0xf]
      %v276 = vld [vmem:[%s166 + $0x194] sm:$0xf]
      %v277 = vld [vmem:[%s166 + $0x198] sm:$0xf]
      %v278 = vld [vmem:[%s166 + $0x19c] sm:$0xf]
      %v279 = vld [vmem:[%s166 + $0x1a0] sm:$0xf]
      %v280 = vld [vmem:[%s166 + $0x1a4] sm:$0xf]
      %v281 = vld [vmem:[%s166 + $0x1a8] sm:$0xf]
      %v282 = vld [vmem:[%s166 + $0x1ac] sm:$0xf]
      %v283 = vld [vmem:[%s166 + $0x1b0] sm:$0xf]
      %v284 = vld [vmem:[%s166 + $0x1b4] sm:$0xf]
      %v285 = vld [vmem:[%s166 + $0x1b8] sm:$0xf]
      %v286 = vld [vmem:[%s166 + $0x1bc] sm:$0xf]
      %v287 = vld [vmem:[%s166 + $0x1c0] sm:$0xf]
      %v288 = vld [vmem:[%s166 + $0x1c4] sm:$0xf]
      %v289 = vld [vmem:[%s166 + $0x1c8] sm:$0xf]
      %v290 = vld [vmem:[%s166 + $0x1cc] sm:$0xf]
      %v291 = vld [vmem:[%s166 + $0x1d0] sm:$0xf]
      %v292 = vld [vmem:[%s166 + $0x1d4] sm:$0xf]
      %v293 = vld [vmem:[%s166 + $0x1d8] sm:$0xf]
      %v294 = vld [vmem:[%s166 + $0x1dc] sm:$0xf]
      %v295 = vld [vmem:[%s166 + $0x1e0] sm:$0xf]
      %v296 = vld [vmem:[%s166 + $0x1e4] sm:$0xf]
      %v297 = vld [vmem:[%s166 + $0x1e8] sm:$0xf]
      %v298 = vld [vmem:[%s166 + $0x1ec] sm:$0xf]
      %v299 = vld [vmem:[%s166 + $0x1f0] sm:$0xf]
      %v300 = vld [vmem:[%s166 + $0x1f4] sm:$0xf]
      %v301 = vld [vmem:[%s166 + $0x1f8] sm:$0xf]
      %v302 = vld [vmem:[%s166 + $0x1fc] sm:$0xf]
      %v303 = vld [vmem:[%s166 + $0x200] sm:$0xf]
      %v304 = vld [vmem:[%s166 + $0x204] sm:$0xf]
      %v305 = vld [vmem:[%s166 + $0x208] sm:$0xf]
      %v306 = vld [vmem:[%s166 + $0x20c] sm:$0xf]
      %v307 = vld [vmem:[%s166 + $0x210] sm:$0xf]
      %v308 = vld [vmem:[%s166 + $0x214] sm:$0xf]
      %v309 = vld [vmem:[%s166 + $0x218] sm:$0xf]
      %v310 = vld [vmem:[%s166 + $0x21c] sm:$0xf]
      %v311 = vld [vmem:[%s166 + $0x220] sm:$0xf]
      %v312 = vld [vmem:[%s166 + $0x224] sm:$0xf]
      %v313 = vld [vmem:[%s166 + $0x228] sm:$0xf]
      %v314 = vld [vmem:[%s166 + $0x22c] sm:$0xf]
      %v315 = vld [vmem:[%s166 + $0x230] sm:$0xf]
      %v316 = vld [vmem:[%s166 + $0x234] sm:$0xf]
      %v317 = vld [vmem:[%s166 + $0x238] sm:$0xf]
      %v318 = vld [vmem:[%s166 + $0x23c] sm:$0xf]
      %v319 = vld [vmem:[%s166 + $0x240] sm:$0xf]
      %v320 = vld [vmem:[%s166 + $0x244] sm:$0xf]
      %v321 = vld [vmem:[%s166 + $0x248] sm:$0xf]
      %v322 = vld [vmem:[%s166 + $0x24c] sm:$0xf]
      %v323 = vld [vmem:[%s166 + $0x250] sm:$0xf]
      %v324 = vld [vmem:[%s166 + $0x254] sm:$0xf]
      %v325 = vld [vmem:[%s166 + $0x258] sm:$0xf]
      %v326 = vld [vmem:[%s166 + $0x25c] sm:$0xf]
      %v327 = vld [vmem:[%s166 + $0x260] sm:$0xf]
      %v328 = vld [vmem:[%s166 + $0x264] sm:$0xf]
      %v329 = vld [vmem:[%s166 + $0x268] sm:$0xf]
      %v330 = vld [vmem:[%s166 + $0x26c] sm:$0xf]
      %v331 = vld [vmem:[%s166 + $0x270] sm:$0xf]
      %v332 = vld [vmem:[%s166 + $0x274] sm:$0xf]
      %v333 = vld [vmem:[%s166 + $0x278] sm:$0xf]
      %v334 = vld [vmem:[%s166 + $0x27c] sm:$0xf]
      %v335 = vld [vmem:[%s166 + $0x280] sm:$0xf]
      %v336 = vld [vmem:[%s166 + $0x284] sm:$0xf]
      %v337 = vld [vmem:[%s166 + $0x288] sm:$0xf]
      %v338 = vld [vmem:[%s166 + $0x28c] sm:$0xf]
      %v339 = vld [vmem:[%s166 + $0x290] sm:$0xf]
      %v340 = vld [vmem:[%s166 + $0x294] sm:$0xf]
      %v341 = vld [vmem:[%s166 + $0x298] sm:$0xf]
      %v342 = vld [vmem:[%s166 + $0x29c] sm:$0xf]
      %v343 = vld [vmem:[%s166 + $0x2a0] sm:$0xf]
      %v344 = vld [vmem:[%s166 + $0x2a4] sm:$0xf]
      %v345 = vld [vmem:[%s166 + $0x2a8] sm:$0xf]
      %v346 = vld [vmem:[%s166 + $0x2ac] sm:$0xf]
      %v347 = vld [vmem:[%s166 + $0x2b0] sm:$0xf]
      %v348 = vld [vmem:[%s166 + $0x2b4] sm:$0xf]
      %v349 = vld [vmem:[%s166 + $0x2b8] sm:$0xf]
      %v350 = vld [vmem:[%s166 + $0x2bc] sm:$0xf]
      %v351 = vld [vmem:[%s166 + $0x2c0] sm:$0xf]
      %v352 = vld [vmem:[%s166 + $0x2c4] sm:$0xf]
      %v353 = vld [vmem:[%s166 + $0x2c8] sm:$0xf]
      %v354 = vld [vmem:[%s166 + $0x2cc] sm:$0xf]
      %v355 = vld [vmem:[%s166 + $0x2d0] sm:$0xf]
      %v356 = vld [vmem:[%s166 + $0x2d4] sm:$0xf]
      %v357 = vld [vmem:[%s166 + $0x2d8] sm:$0xf]
      %v358 = vld [vmem:[%s166 + $0x2dc] sm:$0xf]
      %v359 = vld [vmem:[%s166 + $0x2e0] sm:$0xf]
      %v360 = vld [vmem:[%s166 + $0x2e4] sm:$0xf]
      %v361 = vld [vmem:[%s166 + $0x2e8] sm:$0xf]
      %v362 = vld [vmem:[%s166 + $0x2ec] sm:$0xf]
      %v363 = vld [vmem:[%s166 + $0x2f0] sm:$0xf]
      %v364 = vld [vmem:[%s166 + $0x2f4] sm:$0xf]
      %v365 = vld [vmem:[%s166 + $0x2f8] sm:$0xf]
      %v366 = vld [vmem:[%s166 + $0x2fc] sm:$0xf]
      %v367 = vld [vmem:[%s166 + $0x300] sm:$0xf]
      %v368 = vld [vmem:[%s166 + $0x304] sm:$0xf]
      %v369 = vld [vmem:[%s166 + $0x308] sm:$0xf]
      %v370 = vld [vmem:[%s166 + $0x30c] sm:$0xf]
      %v371 = vld [vmem:[%s166 + $0x310] sm:$0xf]
      %v372 = vld [vmem:[%s166 + $0x314] sm:$0xf]
      %v373 = vld [vmem:[%s166 + $0x318] sm:$0xf]
      %v374 = vld [vmem:[%s166 + $0x31c] sm:$0xf]
      %v375 = vld [vmem:[%s166 + $0x320] sm:$0xf]
      %v376 = vld [vmem:[%s166 + $0x324] sm:$0xf]
      %v377 = vld [vmem:[%s166 + $0x328] sm:$0xf]
      %v378 = vld [vmem:[%s166 + $0x32c] sm:$0xf]
      %v379 = vld [vmem:[%s166 + $0x330] sm:$0xf]
      %v380 = vld [vmem:[%s166 + $0x334] sm:$0xf]
      %v381 = vld [vmem:[%s166 + $0x338] sm:$0xf]
      %v382 = vld [vmem:[%s166 + $0x33c] sm:$0xf]
      %v383 = vld [vmem:[%s166 + $0x340] sm:$0xf]
      %v384 = vld [vmem:[%s166 + $0x344] sm:$0xf]
      %v385 = vld [vmem:[%s166 + $0x348] sm:$0xf]
      %v386 = vld [vmem:[%s166 + $0x34c] sm:$0xf]
      %v387 = vld [vmem:[%s166 + $0x350] sm:$0xf]
      %v388 = vld [vmem:[%s166 + $0x354] sm:$0xf]
      %v389 = vld [vmem:[%s166 + $0x358] sm:$0xf]
      %v390 = vld [vmem:[%s166 + $0x35c] sm:$0xf]
      %v391 = vld [vmem:[%s166 + $0x360] sm:$0xf]
      %v392 = vld [vmem:[%s166 + $0x364] sm:$0xf]
      %v393 = vld [vmem:[%s166 + $0x368] sm:$0xf]
      %v394 = vld [vmem:[%s166 + $0x36c] sm:$0xf]
      %v395 = vld [vmem:[%s166 + $0x370] sm:$0xf]
      %v396 = vld [vmem:[%s166 + $0x374] sm:$0xf]
      %v397 = vld [vmem:[%s166 + $0x378] sm:$0xf]
      %v398 = vld [vmem:[%s166 + $0x37c] sm:$0xf]
      %v399 = vld [vmem:[%s166 + $0x380] sm:$0xf]
      %v400 = vld [vmem:[%s166 + $0x384] sm:$0xf]
      %v401 = vld [vmem:[%s166 + $0x388] sm:$0xf]
      %v402 = vld [vmem:[%s166 + $0x38c] sm:$0xf]
      %v403 = vld [vmem:[%s166 + $0x390] sm:$0xf]
      %v404 = vld [vmem:[%s166 + $0x394] sm:$0xf]
      %v405 = vld [vmem:[%s166 + $0x398] sm:$0xf]
      %v406 = vld [vmem:[%s166 + $0x39c] sm:$0xf]
      %v407 = vld [vmem:[%s166 + $0x3a0] sm:$0xf]
      %v408 = vld [vmem:[%s166 + $0x3a4] sm:$0xf]
      %v409 = vld [vmem:[%s166 + $0x3a8] sm:$0xf]
      %v410 = vld [vmem:[%s166 + $0x3ac] sm:$0xf]
      %v411 = vld [vmem:[%s166 + $0x3b0] sm:$0xf]
      %v412 = vld [vmem:[%s166 + $0x3b4] sm:$0xf]
      %v413 = vld [vmem:[%s166 + $0x3b8] sm:$0xf]
      %v414 = vld [vmem:[%s166 + $0x3bc] sm:$0xf]
      %v415 = vld [vmem:[%s166 + $0x3c0] sm:$0xf]
      %v416 = vld [vmem:[%s166 + $0x3c4] sm:$0xf]
      %v417 = vld [vmem:[%s166 + $0x3c8] sm:$0xf]
      %v418 = vld [vmem:[%s166 + $0x3cc] sm:$0xf]
      %v419 = vld [vmem:[%s166 + $0x3d0] sm:$0xf]
      %v420 = vld [vmem:[%s166 + $0x3d4] sm:$0xf]
      %v421 = vld [vmem:[%s166 + $0x3d8] sm:$0xf]
      %v422 = vld [vmem:[%s166 + $0x3dc] sm:$0xf]
      %v423 = vld [vmem:[%s166 + $0x3e0] sm:$0xf]
      %v424 = vld [vmem:[%s166 + $0x3e4] sm:$0xf]
      %v425 = vld [vmem:[%s166 + $0x3e8] sm:$0xf]
      %v426 = vld [vmem:[%s166 + $0x3ec] sm:$0xf]
      %v427 = vld [vmem:[%s166 + $0x3f0] sm:$0xf]
      %v428 = vld [vmem:[%s166 + $0x3f4] sm:$0xf]
      %v429 = vld [vmem:[%s166 + $0x3f8] sm:$0xf]
      %v430 = vld [vmem:[%s166 + $0x3fc] sm:$0xf]
      %v431 = vld [vmem:[%s166 + $0x400] sm:$0xf]
      %v432 = vld [vmem:[%s166 + $0x404] sm:$0xf]
      %v433 = vld [vmem:[%s166 + $0x408] sm:$0xf]
      %v434 = vld [vmem:[%s166 + $0x40c] sm:$0xf]
      %v435 = vld [vmem:[%s166 + $0x410] sm:$0xf]
      %v436 = vld [vmem:[%s166 + $0x414] sm:$0xf]
      %v437 = vld [vmem:[%s166 + $0x418] sm:$0xf]
      %v438 = vld [vmem:[%s166 + $0x41c] sm:$0xf]
      %v439 = vld [vmem:[%s166 + $0x420] sm:$0xf]
      %v440 = vld [vmem:[%s166 + $0x424] sm:$0xf]
      %v441 = vld [vmem:[%s166 + $0x428] sm:$0xf]
      %v442 = vld [vmem:[%s166 + $0x42c] sm:$0xf]
      %v443 = vld [vmem:[%s166 + $0x430] sm:$0xf]
      %v444 = vld [vmem:[%s166 + $0x434] sm:$0xf]
      %v445 = vld [vmem:[%s166 + $0x438] sm:$0xf]
      %v446 = vld [vmem:[%s166 + $0x43c] sm:$0xf]
      %v447 = vld [vmem:[%s166 + $0x440] sm:$0xf]
      %v448 = vld [vmem:[%s166 + $0x444] sm:$0xf]
      %v449 = vld [vmem:[%s166 + $0x448] sm:$0xf]
      %v450 = vld [vmem:[%s166 + $0x44c] sm:$0xf]
      %v451 = vld [vmem:[%s166 + $0x450] sm:$0xf]
      %v452 = vld [vmem:[%s166 + $0x454] sm:$0xf]
      %v453 = vld [vmem:[%s166 + $0x458] sm:$0xf]
      %v454 = vld [vmem:[%s166 + $0x45c] sm:$0xf]
      %v455 = vld [vmem:[%s166 + $0x460] sm:$0xf]
      %v456 = vld [vmem:[%s166 + $0x464] sm:$0xf]
      %v457 = vld [vmem:[%s166 + $0x468] sm:$0xf]
      %v458 = vld [vmem:[%s166 + $0x46c] sm:$0xf]
      %v459 = vld [vmem:[%s166 + $0x470] sm:$0xf]
      %v460 = vld [vmem:[%s166 + $0x474] sm:$0xf]
      %v461 = vld [vmem:[%s166 + $0x478] sm:$0xf]
      %v462 = vld [vmem:[%s166 + $0x47c] sm:$0xf]
      %v463 = vld [vmem:[%s166 + $0x480] sm:$0xf]
      %v464 = vld [vmem:[%s166 + $0x484] sm:$0xf]
      %v465 = vld [vmem:[%s166 + $0x488] sm:$0xf]
      %v466 = vld [vmem:[%s166 + $0x48c] sm:$0xf]
      %v467 = vld [vmem:[%s166 + $0x490] sm:$0xf]
      %v468 = vld [vmem:[%s166 + $0x494] sm:$0xf]
      %v469 = vld [vmem:[%s166 + $0x498] sm:$0xf]
      %v470 = vld [vmem:[%s166 + $0x49c] sm:$0xf]
      %v471 = vld [vmem:[%s166 + $0x4a0] sm:$0xf]
      %v472 = vld [vmem:[%s166 + $0x4a4] sm:$0xf]
      %v473 = vld [vmem:[%s166 + $0x4a8] sm:$0xf]
      %v474 = vld [vmem:[%s166 + $0x4ac] sm:$0xf]
      %v475 = vld [vmem:[%s166 + $0x4b0] sm:$0xf]
      %v476 = vld [vmem:[%s166 + $0x4b4] sm:$0xf]
      %v477 = vld [vmem:[%s166 + $0x4b8] sm:$0xf]
      %v478 = vld [vmem:[%s166 + $0x4bc] sm:$0xf]
      %v479 = vld [vmem:[%s166 + $0x4c0] sm:$0xf]
      %v480 = vld [vmem:[%s166 + $0x4c4] sm:$0xf]
      %v481 = vld [vmem:[%s166 + $0x4c8] sm:$0xf]
      %v482 = vld [vmem:[%s166 + $0x4cc] sm:$0xf]
      %v483 = vld [vmem:[%s166 + $0x4d0] sm:$0xf]
      %v484 = vld [vmem:[%s166 + $0x4d4] sm:$0xf]
      %v485 = vld [vmem:[%s166 + $0x4d8] sm:$0xf]
      %v486 = vld [vmem:[%s166 + $0x4dc] sm:$0xf]
      %v487 = vld [vmem:[%s166 + $0x4e0] sm:$0xf]
      %v488 = vld [vmem:[%s166 + $0x4e4] sm:$0xf]
      %v489 = vld [vmem:[%s166 + $0x4e8] sm:$0xf]
      %v490 = vld [vmem:[%s166 + $0x4ec] sm:$0xf]
      %v491 = vld [vmem:[%s166 + $0x4f0] sm:$0xf]
      %v492 = vld [vmem:[%s166 + $0x4f4] sm:$0xf]
      %v493 = vld [vmem:[%s166 + $0x4f8] sm:$0xf]
      %v494 = vld [vmem:[%s166 + $0x4fc] sm:$0xf]
      %v495 = vld [vmem:[%s166 + $0x500] sm:$0xf]
      %v496 = vld [vmem:[%s166 + $0x504] sm:$0xf]
      %v497 = vld [vmem:[%s166 + $0x508] sm:$0xf]
      %v498 = vld [vmem:[%s166 + $0x50c] sm:$0xf]
      %v499 = vld [vmem:[%s166 + $0x510] sm:$0xf]
      %v500 = vld [vmem:[%s166 + $0x514] sm:$0xf]
      %v501 = vld [vmem:[%s166 + $0x518] sm:$0xf]
      %v502 = vld [vmem:[%s166 + $0x51c] sm:$0xf]
      %v503 = vld [vmem:[%s166 + $0x520] sm:$0xf]
      %v504 = vld [vmem:[%s166 + $0x524] sm:$0xf]
      %v505 = vld [vmem:[%s166 + $0x528] sm:$0xf]
      %v506 = vld [vmem:[%s166 + $0x52c] sm:$0xf]
      %v507 = vld [vmem:[%s166 + $0x530] sm:$0xf]
      %v508 = vld [vmem:[%s166 + $0x534] sm:$0xf]
      %v509 = vld [vmem:[%s166 + $0x538] sm:$0xf]
      %v510 = vld [vmem:[%s166 + $0x53c] sm:$0xf]
      %v511 = vld [vmem:[%s166 + $0x540] sm:$0xf]
      %v512 = vld [vmem:[%s166 + $0x544] sm:$0xf]
      %v513 = vld [vmem:[%s166 + $0x548] sm:$0xf]
      %v514 = vld [vmem:[%s166 + $0x54c] sm:$0xf]
      %v515 = vld [vmem:[%s166 + $0x550] sm:$0xf]
      %v516 = vld [vmem:[%s166 + $0x554] sm:$0xf]
      %v517 = vld [vmem:[%s166 + $0x558] sm:$0xf]
      %v518 = vld [vmem:[%s166 + $0x55c] sm:$0xf]
      %v519 = vld [vmem:[%s166 + $0x560] sm:$0xf]
      %v520 = vld [vmem:[%s166 + $0x564] sm:$0xf]
      %v521 = vld [vmem:[%s166 + $0x568] sm:$0xf]
      %v522 = vld [vmem:[%s166 + $0x56c] sm:$0xf]
      %v523 = vld [vmem:[%s166 + $0x570] sm:$0xf]
      %v524 = vld [vmem:[%s166 + $0x574] sm:$0xf]
      %v525 = vld [vmem:[%s166 + $0x578] sm:$0xf]
      %v526 = vld [vmem:[%s166 + $0x57c] sm:$0xf]
      %v527 = vld [vmem:[%s166 + $0x580] sm:$0xf]
      %v528 = vld [vmem:[%s166 + $0x584] sm:$0xf]
      %v529 = vld [vmem:[%s166 + $0x588] sm:$0xf]
      %v530 = vld [vmem:[%s166 + $0x58c] sm:$0xf]
      %v531 = vld [vmem:[%s166 + $0x590] sm:$0xf]
      %v532 = vld [vmem:[%s166 + $0x594] sm:$0xf]
      %v533 = vld [vmem:[%s166 + $0x598] sm:$0xf]
      %v534 = vld [vmem:[%s166 + $0x59c] sm:$0xf]
      %v535 = vld [vmem:[%s1] sm:$0xf]
      %v536 = vld [vmem:[%s1 + $0x4] sm:$0xf]
      %v537 = vld [vmem:[%s1 + $0x8] sm:$0xf]
      %v538 = vld [vmem:[%s1 + $0xc] sm:$0xf]
      %v539 = vld [vmem:[%s1 + $0x10] sm:$0xf]
      %v540 = vld [vmem:[%s1 + $0x14] sm:$0xf]
      %v541 = vld [vmem:[%s1 + $0x18] sm:$0xf]
      %v542 = vld [vmem:[%s1 + $0x1c] sm:$0xf]
      %v543 = vld [vmem:[%s1 + $0x20] sm:$0xf]
      %v544 = vld [vmem:[%s1 + $0x24] sm:$0xf]
      %v545 = vld [vmem:[%s1 + $0x28] sm:$0xf]
      %v546 = vld [vmem:[%s1 + $0x2c] sm:$0xf]
      %v547 = vld [vmem:[%s1 + $0x30] sm:$0xf]
      %v548 = vld [vmem:[%s1 + $0x34] sm:$0xf]
      %v549 = vld [vmem:[%s1 + $0x38] sm:$0xf]
      %v550 = vld [vmem:[%s1 + $0x3c] sm:$0xf]
      %v551 = vld [vmem:[%s2] sm:$0x1]
      %v553 = vlaneseq
      %v554 = vshrl.u32 %v553, 7
      %v555 = vsub.s32 0, %v554
      %v556 = vrot.slane %v551, %v555
      %v918 = vunpack.c.l.b16 %v175
      %v919 = vunpack.c.l.b16 %v176
      %v920 = vunpack.c.l.b16 %v177
      %v921 = vunpack.c.l.b16 %v178
      %v922 = vunpack.c.l.b16 %v179
      %v923 = vunpack.c.l.b16 %v180
      %v924 = vunpack.c.l.b16 %v181
      %v925 = vunpack.c.l.b16 %v182
      %v926 = vunpack.c.l.b16 %v183
      %v927 = vunpack.c.l.b16 %v184
      %v928 = vunpack.c.l.b16 %v185
      %v929 = vunpack.c.l.b16 %v186
      %v930 = vunpack.c.l.b16 %v187
      %v931 = vunpack.c.l.b16 %v188
      %v932 = vunpack.c.l.b16 %v189
      %v933 = vunpack.c.l.b16 %v190
      %v934 = vunpack.c.l.b16 %v191
      %v935 = vunpack.c.l.b16 %v192
      %v936 = vunpack.c.l.b16 %v193
      %v937 = vunpack.c.l.b16 %v194
      %v938 = vunpack.c.l.b16 %v195
      %v939 = vunpack.c.l.b16 %v196
      %v940 = vunpack.c.l.b16 %v197
      %v941 = vunpack.c.l.b16 %v198
      %v942 = vunpack.c.l.b16 %v199
      %v943 = vunpack.c.l.b16 %v200
      %v944 = vunpack.c.l.b16 %v201
      %v945 = vunpack.c.l.b16 %v202
      %v946 = vunpack.c.l.b16 %v203
      %v947 = vunpack.c.l.b16 %v204
      %v948 = vunpack.c.l.b16 %v205
      %v949 = vunpack.c.l.b16 %v206
      %v950 = vunpack.c.l.b16 %v207
      %v951 = vunpack.c.l.b16 %v208
      %v952 = vunpack.c.l.b16 %v209
      %v953 = vunpack.c.l.b16 %v210
      %v954 = vunpack.c.l.b16 %v211
      %v955 = vunpack.c.l.b16 %v212
      %v956 = vunpack.c.l.b16 %v213
      %v957 = vunpack.c.l.b16 %v214
      %v958 = vunpack.c.l.b16 %v215
      %v959 = vunpack.c.l.b16 %v216
      %v960 = vunpack.c.l.b16 %v217
      %v961 = vunpack.c.l.b16 %v218
      %v962 = vunpack.c.l.b16 %v219
      %v963 = vunpack.c.l.b16 %v220
      %v964 = vunpack.c.l.b16 %v221
      %v965 = vunpack.c.l.b16 %v222
      %v966 = vunpack.c.l.b16 %v223
      %v967 = vunpack.c.l.b16 %v224
      %v968 = vunpack.c.l.b16 %v225
      %v969 = vunpack.c.l.b16 %v226
      %v970 = vunpack.c.l.b16 %v227
      %v971 = vunpack.c.l.b16 %v228
      %v972 = vunpack.c.l.b16 %v229
      %v973 = vunpack.c.l.b16 %v230
      %v974 = vunpack.c.l.b16 %v231
      %v975 = vunpack.c.l.b16 %v232
      %v976 = vunpack.c.l.b16 %v233
      %v977 = vunpack.c.l.b16 %v234
      %v978 = vunpack.c.l.b16 %v235
      %v979 = vunpack.c.l.b16 %v236
      %v980 = vunpack.c.l.b16 %v237
      %v981 = vunpack.c.l.b16 %v238
      %v982 = vunpack.c.l.b16 %v239
      %v983 = vunpack.c.l.b16 %v240
      %v984 = vunpack.c.l.b16 %v241
      %v985 = vunpack.c.l.b16 %v242
      %v986 = vunpack.c.l.b16 %v243
      %v987 = vunpack.c.l.b16 %v244
      %v988 = vunpack.c.l.b16 %v245
      %v989 = vunpack.c.l.b16 %v246
      %v990 = vunpack.c.l.b16 %v247
      %v991 = vunpack.c.l.b16 %v248
      %v992 = vunpack.c.l.b16 %v249
      %v993 = vunpack.c.l.b16 %v250
      %v994 = vunpack.c.l.b16 %v251
      %v995 = vunpack.c.l.b16 %v252
      %v996 = vunpack.c.l.b16 %v253
      %v997 = vunpack.c.l.b16 %v254
      %v998 = vunpack.c.l.b16 %v255
      %v999 = vunpack.c.l.b16 %v256
      %v1000 = vunpack.c.l.b16 %v257
      %v1001 = vunpack.c.l.b16 %v258
      %v1002 = vunpack.c.l.b16 %v259
      %v1003 = vunpack.c.l.b16 %v260
      %v1004 = vunpack.c.l.b16 %v261
      %v1005 = vunpack.c.l.b16 %v262
      %v1006 = vunpack.c.l.b16 %v263
      %v1007 = vunpack.c.l.b16 %v264
      %v1008 = vunpack.c.l.b16 %v265
      %v1009 = vunpack.c.l.b16 %v266
      %v1010 = vunpack.c.l.b16 %v267
      %v1011 = vunpack.c.l.b16 %v268
      %v1012 = vunpack.c.l.b16 %v269
      %v1013 = vunpack.c.l.b16 %v270
      %v1014 = vunpack.c.l.b16 %v271
      %v1015 = vunpack.c.l.b16 %v272
      %v1016 = vunpack.c.l.b16 %v273
      %v1017 = vunpack.c.l.b16 %v274
      %v1018 = vunpack.c.l.b16 %v275
      %v1019 = vunpack.c.l.b16 %v276
      %v1020 = vunpack.c.l.b16 %v277
      %v1021 = vunpack.c.l.b16 %v278
      %v1022 = vunpack.c.l.b16 %v279
      %v1023 = vunpack.c.l.b16 %v280
      %v1024 = vunpack.c.l.b16 %v281
      %v1025 = vunpack.c.l.b16 %v282
      %v1026 = vunpack.c.l.b16 %v283
      %v1027 = vunpack.c.l.b16 %v284
      %v1028 = vunpack.c.l.b16 %v285
      %v1029 = vunpack.c.l.b16 %v286
      %v1030 = vunpack.c.l.b16 %v287
      %v1031 = vunpack.c.l.b16 %v288
      %v1032 = vunpack.c.l.b16 %v289
      %v1033 = vunpack.c.l.b16 %v290
      %v1034 = vunpack.c.l.b16 %v291
      %v1035 = vunpack.c.l.b16 %v292
      %v1036 = vunpack.c.l.b16 %v293
      %v1037 = vunpack.c.l.b16 %v294
      %v1038 = vunpack.c.l.b16 %v295
      %v1039 = vunpack.c.l.b16 %v296
      %v1040 = vunpack.c.l.b16 %v297
      %v1041 = vunpack.c.l.b16 %v298
      %v1042 = vunpack.c.l.b16 %v299
      %v1043 = vunpack.c.l.b16 %v300
      %v1044 = vunpack.c.l.b16 %v301
      %v1045 = vunpack.c.l.b16 %v302
      %v1046 = vunpack.c.l.b16 %v303
      %v1047 = vunpack.c.l.b16 %v304
      %v1048 = vunpack.c.l.b16 %v305
      %v1049 = vunpack.c.l.b16 %v306
      %v1050 = vunpack.c.l.b16 %v307
      %v1051 = vunpack.c.l.b16 %v308
      %v1052 = vunpack.c.l.b16 %v309
      %v1053 = vunpack.c.l.b16 %v310
      %v1054 = vunpack.c.l.b16 %v311
      %v1055 = vunpack.c.l.b16 %v312
      %v1056 = vunpack.c.l.b16 %v313
      %v1057 = vunpack.c.l.b16 %v314
      %v1058 = vunpack.c.l.b16 %v315
      %v1059 = vunpack.c.l.b16 %v316
      %v1060 = vunpack.c.l.b16 %v317
      %v1061 = vunpack.c.l.b16 %v318
      %v1062 = vunpack.c.l.b16 %v319
      %v1063 = vunpack.c.l.b16 %v320
      %v1064 = vunpack.c.l.b16 %v321
      %v1065 = vunpack.c.l.b16 %v322
      %v1066 = vunpack.c.l.b16 %v323
      %v1067 = vunpack.c.l.b16 %v324
      %v1068 = vunpack.c.l.b16 %v325
      %v1069 = vunpack.c.l.b16 %v326
      %v1070 = vunpack.c.l.b16 %v327
      %v1071 = vunpack.c.l.b16 %v328
      %v1072 = vunpack.c.l.b16 %v329
      %v1073 = vunpack.c.l.b16 %v330
      %v1074 = vunpack.c.l.b16 %v331
      %v1075 = vunpack.c.l.b16 %v332
      %v1076 = vunpack.c.l.b16 %v333
      %v1077 = vunpack.c.l.b16 %v334
      %v1078 = vunpack.c.l.b16 %v335
      %v1079 = vunpack.c.l.b16 %v336
      %v1080 = vunpack.c.l.b16 %v337
      %v1081 = vunpack.c.l.b16 %v338
      %v1082 = vunpack.c.l.b16 %v339
      %v1083 = vunpack.c.l.b16 %v340
      %v1084 = vunpack.c.l.b16 %v341
      %v1085 = vunpack.c.l.b16 %v342
      %v1086 = vunpack.c.l.b16 %v343
      %v1087 = vunpack.c.l.b16 %v344
      %v1088 = vunpack.c.l.b16 %v345
      %v1089 = vunpack.c.l.b16 %v346
      %v1090 = vunpack.c.l.b16 %v347
      %v1091 = vunpack.c.l.b16 %v348
      %v1092 = vunpack.c.l.b16 %v349
      %v1093 = vunpack.c.l.b16 %v350
      %v1094 = vunpack.c.l.b16 %v351
      %v1095 = vunpack.c.l.b16 %v352
      %v1096 = vunpack.c.l.b16 %v353
      %v1097 = vunpack.c.l.b16 %v354
      %v1098 = vunpack.c.l.b16 %v355
      %v1099 = vunpack.c.l.b16 %v356
      %v1100 = vunpack.c.l.b16 %v357
      %v1101 = vunpack.c.l.b16 %v358
      %v1102 = vunpack.c.l.b16 %v359
      %v1103 = vunpack.c.l.b16 %v360
      %v1104 = vunpack.c.l.b16 %v361
      %v1105 = vunpack.c.l.b16 %v362
      %v1106 = vunpack.c.l.b16 %v363
      %v1107 = vunpack.c.l.b16 %v364
      %v1108 = vunpack.c.l.b16 %v365
      %v1109 = vunpack.c.l.b16 %v366
      %v1110 = vunpack.c.l.b16 %v367
      %v1111 = vunpack.c.l.b16 %v368
      %v1112 = vunpack.c.l.b16 %v369
      %v1113 = vunpack.c.l.b16 %v370
      %v1114 = vunpack.c.l.b16 %v371
      %v1115 = vunpack.c.l.b16 %v372
      %v1116 = vunpack.c.l.b16 %v373
      %v1117 = vunpack.c.l.b16 %v374
      %v1118 = vunpack.c.l.b16 %v375
      %v1119 = vunpack.c.l.b16 %v376
      %v1120 = vunpack.c.l.b16 %v377
      %v1121 = vunpack.c.l.b16 %v378
      %v1122 = vunpack.c.l.b16 %v379
      %v1123 = vunpack.c.l.b16 %v380
      %v1124 = vunpack.c.l.b16 %v381
      %v1125 = vunpack.c.l.b16 %v382
      %v1126 = vunpack.c.l.b16 %v383
      %v1127 = vunpack.c.l.b16 %v384
      %v1128 = vunpack.c.l.b16 %v385
      %v1129 = vunpack.c.l.b16 %v386
      %v1130 = vunpack.c.l.b16 %v387
      %v1131 = vunpack.c.l.b16 %v388
      %v1132 = vunpack.c.l.b16 %v389
      %v1133 = vunpack.c.l.b16 %v390
      %v1134 = vunpack.c.l.b16 %v391
      %v1135 = vunpack.c.l.b16 %v392
      %v1136 = vunpack.c.l.b16 %v393
      %v1137 = vunpack.c.l.b16 %v394
      %v1138 = vunpack.c.l.b16 %v395
      %v1139 = vunpack.c.l.b16 %v396
      %v1140 = vunpack.c.l.b16 %v397
      %v1141 = vunpack.c.l.b16 %v398
      %v1142 = vunpack.c.l.b16 %v399
      %v1143 = vunpack.c.l.b16 %v400
      %v1144 = vunpack.c.l.b16 %v401
      %v1145 = vunpack.c.l.b16 %v402
      %v1146 = vunpack.c.l.b16 %v403
      %v1147 = vunpack.c.l.b16 %v404
      %v1148 = vunpack.c.l.b16 %v405
      %v1149 = vunpack.c.l.b16 %v406
      %v1150 = vunpack.c.l.b16 %v407
      %v1151 = vunpack.c.l.b16 %v408
      %v1152 = vunpack.c.l.b16 %v409
      %v1153 = vunpack.c.l.b16 %v410
      %v1154 = vunpack.c.l.b16 %v411
      %v1155 = vunpack.c.l.b16 %v412
      %v1156 = vunpack.c.l.b16 %v413
      %v1157 = vunpack.c.l.b16 %v414
      %v1158 = vunpack.c.l.b16 %v415
      %v1159 = vunpack.c.l.b16 %v416
      %v1160 = vunpack.c.l.b16 %v417
      %v1161 = vunpack.c.l.b16 %v418
      %v1162 = vunpack.c.l.b16 %v419
      %v1163 = vunpack.c.l.b16 %v420
      %v1164 = vunpack.c.l.b16 %v421
      %v1165 = vunpack.c.l.b16 %v422
      %v1166 = vunpack.c.l.b16 %v423
      %v1167 = vunpack.c.l.b16 %v424
      %v1168 = vunpack.c.l.b16 %v425
      %v1169 = vunpack.c.l.b16 %v426
      %v1170 = vunpack.c.l.b16 %v427
      %v1171 = vunpack.c.l.b16 %v428
      %v1172 = vunpack.c.l.b16 %v429
      %v1173 = vunpack.c.l.b16 %v430
      %v1174 = vunpack.c.l.b16 %v431
      %v1175 = vunpack.c.l.b16 %v432
      %v1176 = vunpack.c.l.b16 %v433
      %v1177 = vunpack.c.l.b16 %v434
      %v1178 = vunpack.c.l.b16 %v435
      %v1179 = vunpack.c.l.b16 %v436
      %v1180 = vunpack.c.l.b16 %v437
      %v1181 = vunpack.c.l.b16 %v438
      %v1182 = vunpack.c.l.b16 %v439
      %v1183 = vunpack.c.l.b16 %v440
      %v1184 = vunpack.c.l.b16 %v441
      %v1185 = vunpack.c.l.b16 %v442
      %v1186 = vunpack.c.l.b16 %v443
      %v1187 = vunpack.c.l.b16 %v444
      %v1188 = vunpack.c.l.b16 %v445
      %v1189 = vunpack.c.l.b16 %v446
      %v1190 = vunpack.c.l.b16 %v447
      %v1191 = vunpack.c.l.b16 %v448
      %v1192 = vunpack.c.l.b16 %v449
      %v1193 = vunpack.c.l.b16 %v450
      %v1194 = vunpack.c.l.b16 %v451
      %v1195 = vunpack.c.l.b16 %v452
      %v1196 = vunpack.c.l.b16 %v453
      %v1197 = vunpack.c.l.b16 %v454
      %v1198 = vunpack.c.l.b16 %v455
      %v1199 = vunpack.c.l.b16 %v456
      %v1200 = vunpack.c.l.b16 %v457
      %v1201 = vunpack.c.l.b16 %v458
      %v1202 = vunpack.c.l.b16 %v459
      %v1203 = vunpack.c.l.b16 %v460
      %v1204 = vunpack.c.l.b16 %v461
      %v1205 = vunpack.c.l.b16 %v462
      %v1206 = vunpack.c.l.b16 %v463
      %v1207 = vunpack.c.l.b16 %v464
      %v1208 = vunpack.c.l.b16 %v465
      %v1209 = vunpack.c.l.b16 %v466
      %v1210 = vunpack.c.l.b16 %v467
      %v1211 = vunpack.c.l.b16 %v468
      %v1212 = vunpack.c.l.b16 %v469
      %v1213 = vunpack.c.l.b16 %v470
      %v1214 = vunpack.c.l.b16 %v471
      %v1215 = vunpack.c.l.b16 %v472
      %v1216 = vunpack.c.l.b16 %v473
      %v1217 = vunpack.c.l.b16 %v474
      %v1218 = vunpack.c.l.b16 %v475
      %v1219 = vunpack.c.l.b16 %v476
      %v1220 = vunpack.c.l.b16 %v477
      %v1221 = vunpack.c.l.b16 %v478
      %v1222 = vunpack.c.l.b16 %v479
      %v1223 = vunpack.c.l.b16 %v480
      %v1224 = vunpack.c.l.b16 %v481
      %v1225 = vunpack.c.l.b16 %v482
      %v1226 = vunpack.c.l.b16 %v483
      %v1227 = vunpack.c.l.b16 %v484
      %v1228 = vunpack.c.l.b16 %v485
      %v1229 = vunpack.c.l.b16 %v486
      %v1230 = vunpack.c.l.b16 %v487
      %v1231 = vunpack.c.l.b16 %v488
      %v1232 = vunpack.c.l.b16 %v489
      %v1233 = vunpack.c.l.b16 %v490
      %v1234 = vunpack.c.l.b16 %v491
      %v1235 = vunpack.c.l.b16 %v492
      %v1236 = vunpack.c.l.b16 %v493
      %v1237 = vunpack.c.l.b16 %v494
      %v1238 = vunpack.c.l.b16 %v495
      %v1239 = vunpack.c.l.b16 %v496
      %v1240 = vunpack.c.l.b16 %v497
      %v1241 = vunpack.c.l.b16 %v498
      %v1242 = vunpack.c.l.b16 %v499
      %v1243 = vunpack.c.l.b16 %v500
      %v1244 = vunpack.c.l.b16 %v501
      %v1245 = vunpack.c.l.b16 %v502
      %v1246 = vunpack.c.l.b16 %v503
      %v1247 = vunpack.c.l.b16 %v504
      %v1248 = vunpack.c.l.b16 %v505
      %v1249 = vunpack.c.l.b16 %v506
      %v1250 = vunpack.c.l.b16 %v507
      %v1251 = vunpack.c.l.b16 %v508
      %v1252 = vunpack.c.l.b16 %v509
      %v1253 = vunpack.c.l.b16 %v510
      %v1254 = vunpack.c.l.b16 %v511
      %v1255 = vunpack.c.l.b16 %v512
      %v1256 = vunpack.c.l.b16 %v513
      %v1257 = vunpack.c.l.b16 %v514
      %v1258 = vunpack.c.l.b16 %v515
      %v1259 = vunpack.c.l.b16 %v516
      %v1260 = vunpack.c.l.b16 %v517
      %v1261 = vunpack.c.l.b16 %v518
      %v1262 = vunpack.c.l.b16 %v519
      %v1263 = vunpack.c.l.b16 %v520
      %v1264 = vunpack.c.l.b16 %v521
      %v1265 = vunpack.c.l.b16 %v522
      %v1266 = vunpack.c.l.b16 %v523
      %v1267 = vunpack.c.l.b16 %v524
      %v1268 = vunpack.c.l.b16 %v525
      %v1269 = vunpack.c.l.b16 %v526
      %v1270 = vunpack.c.l.b16 %v527
      %v1271 = vunpack.c.l.b16 %v528
      %v1272 = vunpack.c.l.b16 %v529
      %v1273 = vunpack.c.l.b16 %v530
      %v1274 = vunpack.c.l.b16 %v531
      %v1275 = vunpack.c.l.b16 %v532
      %v1276 = vunpack.c.l.b16 %v533
      %v1277 = vunpack.c.l.b16 %v534
      %v1278 = vpack.c.b16 %v919, %v918
      %v1279 = vpack.c.b16 %v921, %v920
      %v1280 = vpack.c.b16 %v923, %v922
      %v1281 = vpack.c.b16 %v925, %v924
      %v1282 = vpack.c.b16 %v927, %v926
      %v1283 = vpack.c.b16 %v929, %v928
      %v1284 = vpack.c.b16 %v931, %v930
      %v1285 = vpack.c.b16 %v933, %v932
      %v1286 = vpack.c.b16 %v935, %v934
      %v1287 = vpack.c.b16 %v937, %v936
      %v1288 = vpack.c.b16 %v939, %v938
      %v1289 = vpack.c.b16 %v941, %v940
      %v1290 = vpack.c.b16 %v943, %v942
      %v1291 = vpack.c.b16 %v945, %v944
      %v1292 = vpack.c.b16 %v947, %v946
      %v1293 = vpack.c.b16 %v949, %v948
      %v1294 = vpack.c.b16 %v951, %v950
      %v1295 = vpack.c.b16 %v953, %v952
      %v1296 = vpack.c.b16 %v955, %v954
      %v1297 = vpack.c.b16 %v957, %v956
      %v1298 = vpack.c.b16 %v959, %v958
      %v1299 = vpack.c.b16 %v961, %v960
      %v1300 = vpack.c.b16 %v963, %v962
      %v1301 = vpack.c.b16 %v965, %v964
      %v1302 = vpack.c.b16 %v967, %v966
      %v1303 = vpack.c.b16 %v969, %v968
      %v1304 = vpack.c.b16 %v971, %v970
      %v1305 = vpack.c.b16 %v973, %v972
      %v1306 = vpack.c.b16 %v975, %v974
      %v1307 = vpack.c.b16 %v977, %v976
      %v1308 = vpack.c.b16 %v979, %v978
      %v1309 = vpack.c.b16 %v981, %v980
      %v1310 = vpack.c.b16 %v983, %v982
      %v1311 = vpack.c.b16 %v985, %v984
      %v1312 = vpack.c.b16 %v987, %v986
      %v1313 = vpack.c.b16 %v989, %v988
      %v1314 = vpack.c.b16 %v991, %v990
      %v1315 = vpack.c.b16 %v993, %v992
      %v1316 = vpack.c.b16 %v995, %v994
      %v1317 = vpack.c.b16 %v997, %v996
      %v1318 = vpack.c.b16 %v999, %v998
      %v1319 = vpack.c.b16 %v1001, %v1000
      %v1320 = vpack.c.b16 %v1003, %v1002
      %v1321 = vpack.c.b16 %v1005, %v1004
      %v1322 = vpack.c.b16 %v1007, %v1006
      %v1323 = vpack.c.b16 %v1009, %v1008
      %v1324 = vpack.c.b16 %v1011, %v1010
      %v1325 = vpack.c.b16 %v1013, %v1012
      %v1326 = vpack.c.b16 %v1015, %v1014
      %v1327 = vpack.c.b16 %v1017, %v1016
      %v1328 = vpack.c.b16 %v1019, %v1018
      %v1329 = vpack.c.b16 %v1021, %v1020
      %v1330 = vpack.c.b16 %v1023, %v1022
      %v1331 = vpack.c.b16 %v1025, %v1024
      %v1332 = vpack.c.b16 %v1027, %v1026
      %v1333 = vpack.c.b16 %v1029, %v1028
      %v1334 = vpack.c.b16 %v1031, %v1030
      %v1335 = vpack.c.b16 %v1033, %v1032
      %v1336 = vpack.c.b16 %v1035, %v1034
      %v1337 = vpack.c.b16 %v1037, %v1036
      %v1338 = vpack.c.b16 %v1039, %v1038
      %v1339 = vpack.c.b16 %v1041, %v1040
      %v1340 = vpack.c.b16 %v1043, %v1042
      %v1341 = vpack.c.b16 %v1045, %v1044
      %v1342 = vpack.c.b16 %v1047, %v1046
      %v1343 = vpack.c.b16 %v1049, %v1048
      %v1344 = vpack.c.b16 %v1051, %v1050
      %v1345 = vpack.c.b16 %v1053, %v1052
      %v1346 = vpack.c.b16 %v1055, %v1054
      %v1347 = vpack.c.b16 %v1057, %v1056
      %v1348 = vpack.c.b16 %v1059, %v1058
      %v1349 = vpack.c.b16 %v1061, %v1060
      %v1350 = vpack.c.b16 %v1063, %v1062
      %v1351 = vpack.c.b16 %v1065, %v1064
      %v1352 = vpack.c.b16 %v1067, %v1066
      %v1353 = vpack.c.b16 %v1069, %v1068
      %v1354 = vpack.c.b16 %v1071, %v1070
      %v1355 = vpack.c.b16 %v1073, %v1072
      %v1356 = vpack.c.b16 %v1075, %v1074
      %v1357 = vpack.c.b16 %v1077, %v1076
      %v1358 = vpack.c.b16 %v1079, %v1078
      %v1359 = vpack.c.b16 %v1081, %v1080
      %v1360 = vpack.c.b16 %v1083, %v1082
      %v1361 = vpack.c.b16 %v1085, %v1084
      %v1362 = vpack.c.b16 %v1087, %v1086
      %v1363 = vpack.c.b16 %v1089, %v1088
      %v1364 = vpack.c.b16 %v1091, %v1090
      %v1365 = vpack.c.b16 %v1093, %v1092
      %v1366 = vpack.c.b16 %v1095, %v1094
      %v1367 = vpack.c.b16 %v1097, %v1096
      %v1368 = vpack.c.b16 %v1099, %v1098
      %v1369 = vpack.c.b16 %v1101, %v1100
      %v1370 = vpack.c.b16 %v1103, %v1102
      %v1371 = vpack.c.b16 %v1105, %v1104
      %v1372 = vpack.c.b16 %v1107, %v1106
      %v1373 = vpack.c.b16 %v1109, %v1108
      %v1374 = vpack.c.b16 %v1111, %v1110
      %v1375 = vpack.c.b16 %v1113, %v1112
      %v1376 = vpack.c.b16 %v1115, %v1114
      %v1377 = vpack.c.b16 %v1117, %v1116
      %v1378 = vpack.c.b16 %v1119, %v1118
      %v1379 = vpack.c.b16 %v1121, %v1120
      %v1380 = vpack.c.b16 %v1123, %v1122
      %v1381 = vpack.c.b16 %v1125, %v1124
      %v1382 = vpack.c.b16 %v1127, %v1126
      %v1383 = vpack.c.b16 %v1129, %v1128
      %v1384 = vpack.c.b16 %v1131, %v1130
      %v1385 = vpack.c.b16 %v1133, %v1132
      %v1386 = vpack.c.b16 %v1135, %v1134
      %v1387 = vpack.c.b16 %v1137, %v1136
      %v1388 = vpack.c.b16 %v1139, %v1138
      %v1389 = vpack.c.b16 %v1141, %v1140
      %v1390 = vpack.c.b16 %v1143, %v1142
      %v1391 = vpack.c.b16 %v1145, %v1144
      %v1392 = vpack.c.b16 %v1147, %v1146
      %v1393 = vpack.c.b16 %v1149, %v1148
      %v1394 = vpack.c.b16 %v1151, %v1150
      %v1395 = vpack.c.b16 %v1153, %v1152
      %v1396 = vpack.c.b16 %v1155, %v1154
      %v1397 = vpack.c.b16 %v1157, %v1156
      %v1398 = vpack.c.b16 %v1159, %v1158
      %v1399 = vpack.c.b16 %v1161, %v1160
      %v1400 = vpack.c.b16 %v1163, %v1162
      %v1401 = vpack.c.b16 %v1165, %v1164
      %v1402 = vpack.c.b16 %v1167, %v1166
      %v1403 = vpack.c.b16 %v1169, %v1168
      %v1404 = vpack.c.b16 %v1171, %v1170
      %v1405 = vpack.c.b16 %v1173, %v1172
      %v1406 = vpack.c.b16 %v1175, %v1174
      %v1407 = vpack.c.b16 %v1177, %v1176
      %v1408 = vpack.c.b16 %v1179, %v1178
      %v1409 = vpack.c.b16 %v1181, %v1180
      %v1410 = vpack.c.b16 %v1183, %v1182
      %v1411 = vpack.c.b16 %v1185, %v1184
      %v1412 = vpack.c.b16 %v1187, %v1186
      %v1413 = vpack.c.b16 %v1189, %v1188
      %v1414 = vpack.c.b16 %v1191, %v1190
      %v1415 = vpack.c.b16 %v1193, %v1192
      %v1416 = vpack.c.b16 %v1195, %v1194
      %v1417 = vpack.c.b16 %v1197, %v1196
      %v1418 = vpack.c.b16 %v1199, %v1198
      %v1419 = vpack.c.b16 %v1201, %v1200
      %v1420 = vpack.c.b16 %v1203, %v1202
      %v1421 = vpack.c.b16 %v1205, %v1204
      %v1422 = vpack.c.b16 %v1207, %v1206
      %v1423 = vpack.c.b16 %v1209, %v1208
      %v1424 = vpack.c.b16 %v1211, %v1210
      %v1425 = vpack.c.b16 %v1213, %v1212
      %v1426 = vpack.c.b16 %v1215, %v1214
      %v1427 = vpack.c.b16 %v1217, %v1216
      %v1428 = vpack.c.b16 %v1219, %v1218
      %v1429 = vpack.c.b16 %v1221, %v1220
      %v1430 = vpack.c.b16 %v1223, %v1222
      %v1431 = vpack.c.b16 %v1225, %v1224
      %v1432 = vpack.c.b16 %v1227, %v1226
      %v1433 = vpack.c.b16 %v1229, %v1228
      %v1434 = vpack.c.b16 %v1231, %v1230
      %v1435 = vpack.c.b16 %v1233, %v1232
      %v1436 = vpack.c.b16 %v1235, %v1234
      %v1437 = vpack.c.b16 %v1237, %v1236
      %v1438 = vpack.c.b16 %v1239, %v1238
      %v1439 = vpack.c.b16 %v1241, %v1240
      %v1440 = vpack.c.b16 %v1243, %v1242
      %v1441 = vpack.c.b16 %v1245, %v1244
      %v1442 = vpack.c.b16 %v1247, %v1246
      %v1443 = vpack.c.b16 %v1249, %v1248
      %v1444 = vpack.c.b16 %v1251, %v1250
      %v1445 = vpack.c.b16 %v1253, %v1252
      %v1446 = vpack.c.b16 %v1255, %v1254
      %v1447 = vpack.c.b16 %v1257, %v1256
      %v1448 = vpack.c.b16 %v1259, %v1258
      %v1449 = vpack.c.b16 %v1261, %v1260
      %v1450 = vpack.c.b16 %v1263, %v1262
      %v1451 = vpack.c.b16 %v1265, %v1264
      %v1452 = vpack.c.b16 %v1267, %v1266
      %v1453 = vpack.c.b16 %v1269, %v1268
      %v1454 = vpack.c.b16 %v1271, %v1270
      %v1455 = vpack.c.b16 %v1273, %v1272
      %v1456 = vpack.c.b16 %v1275, %v1274
      %v1457 = vpack.c.b16 %v1277, %v1276
      %v1654 = vunpack.c.l.b16 %v535
      %v1655 = vunpack.c.l.b16 %v536
      %v1656 = vunpack.c.l.b16 %v537
      %v1657 = vunpack.c.l.b16 %v538
      %v1658 = vunpack.c.l.b16 %v539
      %v1659 = vunpack.c.l.b16 %v540
      %v1660 = vunpack.c.l.b16 %v541
      %v1661 = vunpack.c.l.b16 %v542
      %v1662 = vunpack.c.l.b16 %v543
      %v1663 = vunpack.c.l.b16 %v544
      %v1664 = vunpack.c.l.b16 %v545
      %v1665 = vunpack.c.l.b16 %v546
      %v1666 = vunpack.c.l.b16 %v547
      %v1667 = vunpack.c.l.b16 %v548
      %v1668 = vunpack.c.l.b16 %v549
      %v1669 = vunpack.c.l.b16 %v550
      %v1670 = vpack.c.b16 %v1655, %v1654
      %v1671 = vpack.c.b16 %v1657, %v1656
      %v1672 = vpack.c.b16 %v1659, %v1658
      %v1673 = vpack.c.b16 %v1661, %v1660
      %v1674 = vpack.c.b16 %v1663, %v1662
      %v1675 = vpack.c.b16 %v1665, %v1664
      %v1676 = vpack.c.b16 %v1667, %v1666
      %v1677 = vpack.c.b16 %v1669, %v1668
      %1686 = vmatprep.subr.bf16.mxu0 0
      %1687 = vmatpush1.bf16.msra.mxu0 %v1670
      %1688 = vmatprep.subr.bf16.mxu0 0
      %1689 = vmatpush1.bf16.msra.mxu0 %v1671
      %1690 = vmatprep.subr.bf16.mxu0 0
      %1691 = vmatpush1.bf16.msra.mxu0 %v1672
      %1692 = vmatprep.subr.bf16.mxu0 0
      %1693 = vmatpush1.bf16.msra.mxu0 %v1673
      %1694 = vmatprep.subr.bf16.mxu0 0
      %1695 = vmatpush1.bf16.msra.mxu0 %v1674
      %1696 = vmatprep.subr.bf16.mxu0 0
      %1697 = vmatpush1.bf16.msra.mxu0 %v1675
      %1698 = vmatprep.subr.bf16.mxu0 0
      %1699 = vmatpush1.bf16.msra.mxu0 %v1676
      %1700 = vmatprep.subr.bf16.mxu0 0
      %1701 = vmatpush1.bf16.msra.mxu0 %v1677
      %1702 = vmatprep.subr.bf16.mxu0 0
      %1703 = vmatpush1.bf16.msra.mxu0 0
      %1704 = vmatprep.subr.bf16.mxu0 0
      %1705 = vmatpush1.bf16.msra.mxu0 0
      %1706 = vmatprep.subr.bf16.mxu0 0
      %1707 = vmatpush1.bf16.msra.mxu0 0
      %1708 = vmatprep.subr.bf16.mxu0 0
      %1709 = vmatpush1.bf16.msra.mxu0 0
      %1710 = vmatprep.subr.bf16.mxu0 0
      %1711 = vmatpush1.bf16.msra.mxu0 0
      %1712 = vmatprep.subr.bf16.mxu0 0
      %1713 = vmatpush1.bf16.msra.mxu0 0
      %1714 = vmatprep.subr.bf16.mxu0 0
      %1715 = vmatpush1.bf16.msra.mxu0 0
      %1716 = vmatprep.subr.bf16.mxu0 0
      %1717 = vmatpush1.bf16.msra.mxu0 0
      %1718 = vmatprep.mubr.bf16.mxu0 0
      %1719 = vmatmul.mubr.bf16.gmra.mrb[0].mxu0 %v1278
      %v1720 = vpop.f32.mrb[0].mxu0
      %v1721 = vadd.f32 %v556, %v1720
      %v1722 = vpop.f32.mrb[0].mxu0
      %v1723 = vpop.f32.mrb[0].mxu0
      %v1724 = vadd.f32 %v556, %v1723
      %v1725 = vpop.f32.mrb[0].mxu0
      %1726 = vmatprep.mubr.bf16.mxu0 0
      %1727 = vmatmul.mubr.bf16.gmra.mrb[0].mxu0 %v1279
      %v1728 = vpop.f32.mrb[0].mxu0
      %v1729 = vadd.f32 %v556, %v1728
      %v1730 = vpop.f32.mrb[0].mxu0
      %v1731 = vpop.f32.mrb[0].mxu0
      %v1732 = vadd.f32 %v556, %v1731
      %v1733 = vpop.f32.mrb[0].mxu0
      %1734 = vmatprep.mubr.bf16.mxu0 0
      %1735 = vmatmul.mubr.bf16.gmra.mrb[0].mxu0 %v1280
      %v1736 = vpop.f32.mrb[0].mxu0
      %v1737 = vadd.f32 %v556, %v1736
      %v1738 = vpop.f32.mrb[0].mxu0
      %v1739 = vpop.f32.mrb[0].mxu0
      %v1740 = vadd.f32 %v556, %v1739
      %v1741 = vpop.f32.mrb[0].mxu0
      %1742 = vmatprep.mubr.bf16.mxu0 0
      %1743 = vmatmul.mubr.bf16.gmra.mrb[0].mxu0 %v1281
      %v1744 = vpop.f32.mrb[0].mxu0
      %v1745 = vadd.f32 %v556, %v1744
      %v1746 = vpop.f32.mrb[0].mxu0
      %v1747 = vpop.f32.mrb[0].mxu0
      %v1748 = vadd.f32 %v556, %v1747
      %v1749 = vpop.f32.mrb[0].mxu0
      %1750 = vmatprep.mubr.bf16.mxu0 0
      %1751 = vmatmul.mubr.bf16.gmra.mrb[0].mxu0 %v1282
      %v1752 = vpop.f32.mrb[0].mxu0
      %v1753 = vadd.f32 %v556, %v1752
      %v1754 = vpop.f32.mrb[0].mxu0
      %v1755 = vpop.f32.mrb[0].mxu0
      %v1756 = vadd.f32 %v556, %v1755
      %v1757 = vpop.f32.mrb[0].mxu0
      %1758 = vmatprep.mubr.bf16.mxu0 0
      %1759 = vmatmul.mubr.bf16.gmra.mrb[0].mxu0 %v1283
      %v1760 = vpop.f32.mrb[0].mxu0
      %v1761 = vadd.f32 %v556, %v1760
      %v1762 = vpop.f32.mrb[0].mxu0
      %v1763 = vpop.f32.mrb[0].mxu0
      %v1764 = vadd.f32 %v556, %v1763
      %v1765 = vpop.f32.mrb[0].mxu0
      %1766 = vmatprep.mubr.bf16.mxu0 0
      %1767 = vmatmul.mubr.bf16.gmra.mrb[0].mxu0 %v1284
      %v1768 = vpop.f32.mrb[0].mxu0
      %v1769 = vadd.f32 %v556, %v1768
      %v1770 = vpop.f32.mrb[0].mxu0
      %v1771 = vpop.f32.mrb[0].mxu0
      %v1772 = vadd.f32 %v556, %v1771
      %v1773 = vpop.f32.mrb[0].mxu0
      %1774 = vmatprep.mubr.bf16.mxu0 0
      %1775 = vmatmul.mubr.bf16.gmra.mrb[0].mxu0 %v1285
      %v1776 = vpop.f32.mrb[0].mxu0
      %v1777 = vadd.f32 %v556, %v1776
      %v1778 = vpop.f32.mrb[0].mxu0
      %v1779 = vpop.f32.mrb[0].mxu0
      %v1780 = vadd.f32 %v556, %v1779
      %v1781 = vpop.f32.mrb[0].mxu0
      %1782 = vmatprep.mubr.bf16.mxu0 0
      %1783 = vmatmul.mubr.bf16.gmra.mrb[0].mxu0 %v1286
      %v1784 = vpop.f32.mrb[0].mxu0
      %v1785 = vadd.f32 %v556, %v1784
      %v1786 = vpop.f32.mrb[0].mxu0
      %v1787 = vpop.f32.mrb[0].mxu0
      %v1788 = vadd.f32 %v556, %v1787
      %v1789 = vpop.f32.mrb[0].mxu0
      %1790 = vmatprep.mubr.bf16.mxu0 0
      %1791 = vmatmul.mubr.bf16.gmra.mrb[0].mxu0 %v1287
      %v1792 = vpop.f32.mrb[0].mxu0
      %v1793 = vadd.f32 %v556, %v1792
      %v1794 = vpop.f32.mrb[0].mxu0
      %v1795 = vpop.f32.mrb[0].mxu0
      %v1796 = vadd.f32 %v556, %v1795
      %v1797 = vpop.f32.mrb[0].mxu0
      %1798 = vmatprep.mubr.bf16.mxu0 0
      %1799 = vmatmul.mubr.bf16.gmra.mrb[0].mxu0 %v1288
      %v1800 = vpop.f32.mrb[0].mxu0
      %v1801 = vadd.f32 %v556, %v1800
      %v1802 = vpop.f32.mrb[0].mxu0
      %v1803 = vpop.f32.mrb[0].mxu0
      %v1804 = vadd.f32 %v556, %v1803
      %v1805 = vpop.f32.mrb[0].mxu0
      %1806 = vmatprep.mubr.bf16.mxu0 0
      %1807 = vmatmul.mubr.bf16.gmra.mrb[0].mxu0 %v1289
      %v1808 = vpop.f32.mrb[0].mxu0
      %v1809 = vadd.f32 %v556, %v1808
      %v1810 = vpop.f32.mrb[0].mxu0
      %v1811 = vpop.f32.mrb[0].mxu0
      %v1812 = vadd.f32 %v556, %v1811
      %v1813 = vpop.f32.mrb[0].mxu0
      %1814 = vmatprep.mubr.bf16.mxu0 0
      %1815 = vmatmul.mubr.bf16.gmra.mrb[0].mxu0 %v1290
      %v1816 = vpop.f32.mrb[0].mxu0
      %v1817 = vadd.f32 %v556, %v1816
      %v1818 = vpop.f32.mrb[0].mxu0
      %v1819 = vpop.f32.mrb[0].mxu0
      %v1820 = vadd.f32 %v556, %v1819
      %v1821 = vpop.f32.mrb[0].mxu0
      %1822 = vmatprep.mubr.bf16.mxu0 0
      %1823 = vmatmul.mubr.bf16.gmra.mrb[0].mxu0 %v1291
      %v1824 = vpop.f32.mrb[0].mxu0
      %v1825 = vadd.f32 %v556, %v1824
      %v1826 = vpop.f32.mrb[0].mxu0
      %v1827 = vpop.f32.mrb[0].mxu0
      %v1828 = vadd.f32 %v556, %v1827
      %v1829 = vpop.f32.mrb[0].mxu0
      %1830 = vmatprep.mubr.bf16.mxu0 0
      %1831 = vmatmul.mubr.bf16.gmra.mrb[0].mxu0 %v1292
      %v1832 = vpop.f32.mrb[0].mxu0
      %v1833 = vadd.f32 %v556, %v1832
      %v1834 = vpop.f32.mrb[0].mxu0
      %v1835 = vpop.f32.mrb[0].mxu0
      %v1836 = vadd.f32 %v556, %v1835
      %v1837 = vpop.f32.mrb[0].mxu0
      %1838 = vmatprep.mubr.bf16.mxu0 0
      %1839 = vmatmul.mubr.bf16.gmra.mrb[0].mxu0 %v1293
      %v1840 = vpop.f32.mrb[0].mxu0
      %v1841 = vadd.f32 %v556, %v1840
      %v1842 = vpop.f32.mrb[0].mxu0
      %v1843 = vpop.f32.mrb[0].mxu0
      %v1844 = vadd.f32 %v556, %v1843
      %v1845 = vpop.f32.mrb[0].mxu0
      %1846 = vmatprep.mubr.bf16.mxu0 0
      %1847 = vmatmul.mubr.bf16.gmra.mrb[0].mxu0 %v1294
      %v1848 = vpop.f32.mrb[0].mxu0
      %v1849 = vadd.f32 %v556, %v1848
      %v1850 = vpop.f32.mrb[0].mxu0
      %v1851 = vpop.f32.mrb[0].mxu0
      %v1852 = vadd.f32 %v556, %v1851
      %v1853 = vpop.f32.mrb[0].mxu0
      %1854 = vmatprep.mubr.bf16.mxu0 0
      %1855 = vmatmul.mubr.bf16.gmra.mrb[0].mxu0 %v1295
      %v1856 = vpop.f32.mrb[0].mxu0
      %v1857 = vadd.f32 %v556, %v1856
      %v1858 = vpop.f32.mrb[0].mxu0
      %v1859 = vpop.f32.mrb[0].mxu0
      %v1860 = vadd.f32 %v556, %v1859
      %v1861 = vpop.f32.mrb[0].mxu0
      %1862 = vmatprep.mubr.bf16.mxu0 0
      %1863 = vmatmul.mubr.bf16.gmra.mrb[0].mxu0 %v1296
      %v1864 = vpop.f32.mrb[0].mxu0
      %v1865 = vadd.f32 %v556, %v1864
      %v1866 = vpop.f32.mrb[0].mxu0
      %v1867 = vpop.f32.mrb[0].mxu0
      %v1868 = vadd.f32 %v556, %v1867
      %v1869 = vpop.f32.mrb[0].mxu0
      %1870 = vmatprep.mubr.bf16.mxu0 0
      %1871 = vmatmul.mubr.bf16.gmra.mrb[0].mxu0 %v1297
      %v1872 = vpop.f32.mrb[0].mxu0
      %v1873 = vadd.f32 %v556, %v1872
      %v1874 = vpop.f32.mrb[0].mxu0
      %v1875 = vpop.f32.mrb[0].mxu0
      %v1876 = vadd.f32 %v556, %v1875
      %v1877 = vpop.f32.mrb[0].mxu0
      %1878 = vmatprep.mubr.bf16.mxu0 0
      %1879 = vmatmul.mubr.bf16.gmra.mrb[0].mxu0 %v1298
      %v1880 = vpop.f32.mrb[0].mxu0
      %v1881 = vadd.f32 %v556, %v1880
      %v1882 = vpop.f32.mrb[0].mxu0
      %v1883 = vpop.f32.mrb[0].mxu0
      %v1884 = vadd.f32 %v556, %v1883
      %v1885 = vpop.f32.mrb[0].mxu0
      %1886 = vmatprep.mubr.bf16.mxu0 0
      %1887 = vmatmul.mubr.bf16.gmra.mrb[0].mxu0 %v1299
      %v1888 = vpop.f32.mrb[0].mxu0
      %v1889 = vadd.f32 %v556, %v1888
      %v1890 = vpop.f32.mrb[0].mxu0
      %v1891 = vpop.f32.mrb[0].mxu0
      %v1892 = vadd.f32 %v556, %v1891
      %v1893 = vpop.f32.mrb[0].mxu0
      %1894 = vmatprep.mubr.bf16.mxu0 0
      %1895 = vmatmul.mubr.bf16.gmra.mrb[0].mxu0 %v1300
      %v1896 = vpop.f32.mrb[0].mxu0
      %v1897 = vadd.f32 %v556, %v1896
      %v1898 = vpop.f32.mrb[0].mxu0
      %v1899 = vpop.f32.mrb[0].mxu0
      %v1900 = vadd.f32 %v556, %v1899
      %v1901 = vpop.f32.mrb[0].mxu0
      %1902 = vmatprep.mubr.bf16.mxu0 0
      %1903 = vmatmul.mubr.bf16.gmra.mrb[0].mxu0 %v1301
      %v1904 = vpop.f32.mrb[0].mxu0
      %v1905 = vadd.f32 %v556, %v1904
      %v1906 = vpop.f32.mrb[0].mxu0
      %v1907 = vpop.f32.mrb[0].mxu0
      %v1908 = vadd.f32 %v556, %v1907
      %v1909 = vpop.f32.mrb[0].mxu0
      %1910 = vmatprep.mubr.bf16.mxu0 0
      %1911 = vmatmul.mubr.bf16.gmra.mrb[0].mxu0 %v1302
      %v1912 = vpop.f32.mrb[0].mxu0
      %v1913 = vadd.f32 %v556, %v1912
      %v1914 = vpop.f32.mrb[0].mxu0
      %v1915 = vpop.f32.mrb[0].mxu0
      %v1916 = vadd.f32 %v556, %v1915
      %v1917 = vpop.f32.mrb[0].mxu0
      %1918 = vmatprep.mubr.bf16.mxu0 0
      %1919 = vmatmul.mubr.bf16.gmra.mrb[0].mxu0 %v1303
      %v1920 = vpop.f32.mrb[0].mxu0
      %v1921 = vadd.f32 %v556, %v1920
      %v1922 = vpop.f32.mrb[0].mxu0
      %v1923 = vpop.f32.mrb[0].mxu0
      %v1924 = vadd.f32 %v556, %v1923
      %v1925 = vpop.f32.mrb[0].mxu0
      %1926 = vmatprep.mubr.bf16.mxu0 0
      %1927 = vmatmul.mubr.bf16.gmra.mrb[0].mxu0 %v1304
      %v1928 = vpop.f32.mrb[0].mxu0
      %v1929 = vadd.f32 %v556, %v1928
      %v1930 = vpop.f32.mrb[0].mxu0
      %v1931 = vpop.f32.mrb[0].mxu0
      %v1932 = vadd.f32 %v556, %v1931
      %v1933 = vpop.f32.mrb[0].mxu0
      %1934 = vmatprep.mubr.bf16.mxu0 0
      %1935 = vmatmul.mubr.bf16.gmra.mrb[0].mxu0 %v1305
      %v1936 = vpop.f32.mrb[0].mxu0
      %v1937 = vadd.f32 %v556, %v1936
      %v1938 = vpop.f32.mrb[0].mxu0
      %v1939 = vpop.f32.mrb[0].mxu0
      %v1940 = vadd.f32 %v556, %v1939
      %v1941 = vpop.f32.mrb[0].mxu0
      %1942 = vmatprep.mubr.bf16.mxu0 0
      %1943 = vmatmul.mubr.bf16.gmra.mrb[0].mxu0 %v1306
      %v1944 = vpop.f32.mrb[0].mxu0
      %v1945 = vadd.f32 %v556, %v1944
      %v1946 = vpop.f32.mrb[0].mxu0
      %v1947 = vpop.f32.mrb[0].mxu0
      %v1948 = vadd.f32 %v556, %v1947
      %v1949 = vpop.f32.mrb[0].mxu0
      %1950 = vmatprep.mubr.bf16.mxu0 0
      %1951 = vmatmul.mubr.bf16.gmra.mrb[0].mxu0 %v1307
      %v1952 = vpop.f32.mrb[0].mxu0
      %v1953 = vadd.f32 %v556, %v1952
      %v1954 = vpop.f32.mrb[0].mxu0
      %v1955 = vpop.f32.mrb[0].mxu0
      %v1956 = vadd.f32 %v556, %v1955
      %v1957 = vpop.f32.mrb[0].mxu0
      %1958 = vmatprep.mubr.bf16.mxu0 0
      %1959 = vmatmul.mubr.bf16.gmra.mrb[0].mxu0 %v1308
      %v1960 = vpop.f32.mrb[0].mxu0
      %v1961 = vadd.f32 %v556, %v1960
      %v1962 = vpop.f32.mrb[0].mxu0
      %v1963 = vpop.f32.mrb[0].mxu0
      %v1964 = vadd.f32 %v556, %v1963
      %v1965 = vpop.f32.mrb[0].mxu0
      %1966 = vmatprep.mubr.bf16.mxu0 0
      %1967 = vmatmul.mubr.bf16.gmra.mrb[0].mxu0 %v1309
      %v1968 = vpop.f32.mrb[0].mxu0
      %v1969 = vadd.f32 %v556, %v1968
      %v1970 = vpop.f32.mrb[0].mxu0
      %v1971 = vpop.f32.mrb[0].mxu0
      %v1972 = vadd.f32 %v556, %v1971
      %v1973 = vpop.f32.mrb[0].mxu0
      %1974 = vmatprep.mubr.bf16.mxu0 0
      %1975 = vmatmul.mubr.bf16.gmra.mrb[0].mxu0 %v1310
      %v1976 = vpop.f32.mrb[0].mxu0
      %v1977 = vadd.f32 %v556, %v1976
      %v1978 = vpop.f32.mrb[0].mxu0
      %v1979 = vpop.f32.mrb[0].mxu0
      %v1980 = vadd.f32 %v556, %v1979
      %v1981 = vpop.f32.mrb[0].mxu0
      %1982 = vmatprep.mubr.bf16.mxu0 0
      %1983 = vmatmul.mubr.bf16.gmra.mrb[0].mxu0 %v1311
      %v1984 = vpop.f32.mrb[0].mxu0
      %v1985 = vadd.f32 %v556, %v1984
      %v1986 = vpop.f32.mrb[0].mxu0
      %v1987 = vpop.f32.mrb[0].mxu0
      %v1988 = vadd.f32 %v556, %v1987
      %v1989 = vpop.f32.mrb[0].mxu0
      %1990 = vmatprep.mubr.bf16.mxu0 0
      %1991 = vmatmul.mubr.bf16.gmra.mrb[0].mxu0 %v1312
      %v1992 = vpop.f32.mrb[0].mxu0
      %v1993 = vadd.f32 %v556, %v1992
      %v1994 = vpop.f32.mrb[0].mxu0
      %v1995 = vpop.f32.mrb[0].mxu0
      %v1996 = vadd.f32 %v556, %v1995
      %v1997 = vpop.f32.mrb[0].mxu0
      %1998 = vmatprep.mubr.bf16.mxu0 0
      %1999 = vmatmul.mubr.bf16.gmra.mrb[0].mxu0 %v1313
      %v2000 = vpop.f32.mrb[0].mxu0
      %v2001 = vadd.f32 %v556, %v2000
      %v2002 = vpop.f32.mrb[0].mxu0
      %v2003 = vpop.f32.mrb[0].mxu0
      %v2004 = vadd.f32 %v556, %v2003
      %v2005 = vpop.f32.mrb[0].mxu0
      %2006 = vmatprep.mubr.bf16.mxu0 0
      %2007 = vmatmul.mubr.bf16.gmra.mrb[0].mxu0 %v1314
      %v2008 = vpop.f32.mrb[0].mxu0
      %v2009 = vadd.f32 %v556, %v2008
      %v2010 = vpop.f32.mrb[0].mxu0
      %v2011 = vpop.f32.mrb[0].mxu0
      %v2012 = vadd.f32 %v556, %v2011
      %v2013 = vpop.f32.mrb[0].mxu0
      %2014 = vmatprep.mubr.bf16.mxu0 0
      %2015 = vmatmul.mubr.bf16.gmra.mrb[0].mxu0 %v1315
      %v2016 = vpop.f32.mrb[0].mxu0
      %v2017 = vadd.f32 %v556, %v2016
      %v2018 = vpop.f32.mrb[0].mxu0
      %v2019 = vpop.f32.mrb[0].mxu0
      %v2020 = vadd.f32 %v556, %v2019
      %v2021 = vpop.f32.mrb[0].mxu0
      %2022 = vmatprep.mubr.bf16.mxu0 0
      %2023 = vmatmul.mubr.bf16.gmra.mrb[0].mxu0 %v1316
      %v2024 = vpop.f32.mrb[0].mxu0
      %v2025 = vadd.f32 %v556, %v2024
      %v2026 = vpop.f32.mrb[0].mxu0
      %v2027 = vpop.f32.mrb[0].mxu0
      %v2028 = vadd.f32 %v556, %v2027
      %v2029 = vpop.f32.mrb[0].mxu0
      %2030 = vmatprep.mubr.bf16.mxu0 0
      %2031 = vmatmul.mubr.bf16.gmra.mrb[0].mxu0 %v1317
      %v2032 = vpop.f32.mrb[0].mxu0
      %v2033 = vadd.f32 %v556, %v2032
      %v2034 = vpop.f32.mrb[0].mxu0
      %v2035 = vpop.f32.mrb[0].mxu0
      %v2036 = vadd.f32 %v556, %v2035
      %v2037 = vpop.f32.mrb[0].mxu0
      %2038 = vmatprep.mubr.bf16.mxu0 0
      %2039 = vmatmul.mubr.bf16.gmra.mrb[0].mxu0 %v1318
      %v2040 = vpop.f32.mrb[0].mxu0
      %v2041 = vadd.f32 %v556, %v2040
      %v2042 = vpop.f32.mrb[0].mxu0
      %v2043 = vpop.f32.mrb[0].mxu0
      %v2044 = vadd.f32 %v556, %v2043
      %v2045 = vpop.f32.mrb[0].mxu0
      %2046 = vmatprep.mubr.bf16.mxu0 0
      %2047 = vmatmul.mubr.bf16.gmra.mrb[0].mxu0 %v1319
      %v2048 = vpop.f32.mrb[0].mxu0
      %v2049 = vadd.f32 %v556, %v2048
      %v2050 = vpop.f32.mrb[0].mxu0
      %v2051 = vpop.f32.mrb[0].mxu0
      %v2052 = vadd.f32 %v556, %v2051
      %v2053 = vpop.f32.mrb[0].mxu0
      %2054 = vmatprep.mubr.bf16.mxu0 0
      %2055 = vmatmul.mubr.bf16.gmra.mrb[0].mxu0 %v1320
      %v2056 = vpop.f32.mrb[0].mxu0
      %v2057 = vadd.f32 %v556, %v2056
      %v2058 = vpop.f32.mrb[0].mxu0
      %v2059 = vpop.f32.mrb[0].mxu0
      %v2060 = vadd.f32 %v556, %v2059
      %v2061 = vpop.f32.mrb[0].mxu0
      %2062 = vmatprep.mubr.bf16.mxu0 0
      %2063 = vmatmul.mubr.bf16.gmra.mrb[0].mxu0 %v1321
      %v2064 = vpop.f32.mrb[0].mxu0
      %v2065 = vadd.f32 %v556, %v2064
      %v2066 = vpop.f32.mrb[0].mxu0
      %v2067 = vpop.f32.mrb[0].mxu0
      %v2068 = vadd.f32 %v556, %v2067
      %v2069 = vpop.f32.mrb[0].mxu0
      %2070 = vmatprep.mubr.bf16.mxu0 0
      %2071 = vmatmul.mubr.bf16.gmra.mrb[0].mxu0 %v1322
      %v2072 = vpop.f32.mrb[0].mxu0
      %v2073 = vadd.f32 %v556, %v2072
      %v2074 = vpop.f32.mrb[0].mxu0
      %v2075 = vpop.f32.mrb[0].mxu0
      %v2076 = vadd.f32 %v556, %v2075
      %v2077 = vpop.f32.mrb[0].mxu0
      %2078 = vmatprep.mubr.bf16.mxu0 0
      %2079 = vmatmul.mubr.bf16.gmra.mrb[0].mxu0 %v1323
      %v2080 = vpop.f32.mrb[0].mxu0
      %v2081 = vadd.f32 %v556, %v2080
      %v2082 = vpop.f32.mrb[0].mxu0
      %v2083 = vpop.f32.mrb[0].mxu0
      %v2084 = vadd.f32 %v556, %v2083
      %v2085 = vpop.f32.mrb[0].mxu0
      %2086 = vmatprep.mubr.bf16.mxu0 0
      %2087 = vmatmul.mubr.bf16.gmra.mrb[0].mxu0 %v1324
      %v2088 = vpop.f32.mrb[0].mxu0
      %v2089 = vadd.f32 %v556, %v2088
      %v2090 = vpop.f32.mrb[0].mxu0
      %v2091 = vpop.f32.mrb[0].mxu0
      %v2092 = vadd.f32 %v556, %v2091
      %v2093 = vpop.f32.mrb[0].mxu0
      %2094 = vmatprep.mubr.bf16.mxu0 0
      %2095 = vmatmul.mubr.bf16.gmra.mrb[0].mxu0 %v1325
      %v2096 = vpop.f32.mrb[0].mxu0
      %v2097 = vadd.f32 %v556, %v2096
      %v2098 = vpop.f32.mrb[0].mxu0
      %v2099 = vpop.f32.mrb[0].mxu0
      %v2100 = vadd.f32 %v556, %v2099
      %v2101 = vpop.f32.mrb[0].mxu0
      %2102 = vmatprep.mubr.bf16.mxu0 0
      %2103 = vmatmul.mubr.bf16.gmra.mrb[0].mxu0 %v1326
      %v2104 = vpop.f32.mrb[0].mxu0
      %v2105 = vadd.f32 %v556, %v2104
      %v2106 = vpop.f32.mrb[0].mxu0
      %v2107 = vpop.f32.mrb[0].mxu0
      %v2108 = vadd.f32 %v556, %v2107
      %v2109 = vpop.f32.mrb[0].mxu0
      %2110 = vmatprep.mubr.bf16.mxu0 0
      %2111 = vmatmul.mubr.bf16.gmra.mrb[0].mxu0 %v1327
      %v2112 = vpop.f32.mrb[0].mxu0
      %v2113 = vadd.f32 %v556, %v2112
      %v2114 = vpop.f32.mrb[0].mxu0
      %v2115 = vpop.f32.mrb[0].mxu0
      %v2116 = vadd.f32 %v556, %v2115
      %v2117 = vpop.f32.mrb[0].mxu0
      %2118 = vmatprep.mubr.bf16.mxu0 0
      %2119 = vmatmul.mubr.bf16.gmra.mrb[0].mxu0 %v1328
      %v2120 = vpop.f32.mrb[0].mxu0
      %v2121 = vadd.f32 %v556, %v2120
      %v2122 = vpop.f32.mrb[0].mxu0
      %v2123 = vpop.f32.mrb[0].mxu0
      %v2124 = vadd.f32 %v556, %v2123
      %v2125 = vpop.f32.mrb[0].mxu0
      %2126 = vmatprep.mubr.bf16.mxu0 0
      %2127 = vmatmul.mubr.bf16.gmra.mrb[0].mxu0 %v1329
      %v2128 = vpop.f32.mrb[0].mxu0
      %v2129 = vadd.f32 %v556, %v2128
      %v2130 = vpop.f32.mrb[0].mxu0
      %v2131 = vpop.f32.mrb[0].mxu0
      %v2132 = vadd.f32 %v556, %v2131
      %v2133 = vpop.f32.mrb[0].mxu0
      %2134 = vmatprep.mubr.bf16.mxu0 0
      %2135 = vmatmul.mubr.bf16.gmra.mrb[0].mxu0 %v1330
      %v2136 = vpop.f32.mrb[0].mxu0
      %v2137 = vadd.f32 %v556, %v2136
      %v2138 = vpop.f32.mrb[0].mxu0
      %v2139 = vpop.f32.mrb[0].mxu0
      %v2140 = vadd.f32 %v556, %v2139
      %v2141 = vpop.f32.mrb[0].mxu0
      %2142 = vmatprep.mubr.bf16.mxu0 0
      %2143 = vmatmul.mubr.bf16.gmra.mrb[0].mxu0 %v1331
      %v2144 = vpop.f32.mrb[0].mxu0
      %v2145 = vadd.f32 %v556, %v2144
      %v2146 = vpop.f32.mrb[0].mxu0
      %v2147 = vpop.f32.mrb[0].mxu0
      %v2148 = vadd.f32 %v556, %v2147
      %v2149 = vpop.f32.mrb[0].mxu0
      %2150 = vmatprep.mubr.bf16.mxu0 0
      %2151 = vmatmul.mubr.bf16.gmra.mrb[0].mxu0 %v1332
      %v2152 = vpop.f32.mrb[0].mxu0
      %v2153 = vadd.f32 %v556, %v2152
      %v2154 = vpop.f32.mrb[0].mxu0
      %v2155 = vpop.f32.mrb[0].mxu0
      %v2156 = vadd.f32 %v556, %v2155
      %v2157 = vpop.f32.mrb[0].mxu0
      %2158 = vmatprep.mubr.bf16.mxu0 0
      %2159 = vmatmul.mubr.bf16.gmra.mrb[0].mxu0 %v1333
      %v2160 = vpop.f32.mrb[0].mxu0
      %v2161 = vadd.f32 %v556, %v2160
      %v2162 = vpop.f32.mrb[0].mxu0
      %v2163 = vpop.f32.mrb[0].mxu0
      %v2164 = vadd.f32 %v556, %v2163
      %v2165 = vpop.f32.mrb[0].mxu0
      %2166 = vmatprep.mubr.bf16.mxu0 0
      %2167 = vmatmul.mubr.bf16.gmra.mrb[0].mxu0 %v1334
      %v2168 = vpop.f32.mrb[0].mxu0
      %v2169 = vadd.f32 %v556, %v2168
      %v2170 = vpop.f32.mrb[0].mxu0
      %v2171 = vpop.f32.mrb[0].mxu0
      %v2172 = vadd.f32 %v556, %v2171
      %v2173 = vpop.f32.mrb[0].mxu0
      %2174 = vmatprep.mubr.bf16.mxu0 0
      %2175 = vmatmul.mubr.bf16.gmra.mrb[0].mxu0 %v1335
      %v2176 = vpop.f32.mrb[0].mxu0
      %v2177 = vadd.f32 %v556, %v2176
      %v2178 = vpop.f32.mrb[0].mxu0
      %v2179 = vpop.f32.mrb[0].mxu0
      %v2180 = vadd.f32 %v556, %v2179
      %v2181 = vpop.f32.mrb[0].mxu0
      %2182 = vmatprep.mubr.bf16.mxu0 0
      %2183 = vmatmul.mubr.bf16.gmra.mrb[0].mxu0 %v1336
      %v2184 = vpop.f32.mrb[0].mxu0
      %v2185 = vadd.f32 %v556, %v2184
      %v2186 = vpop.f32.mrb[0].mxu0
      %v2187 = vpop.f32.mrb[0].mxu0
      %v2188 = vadd.f32 %v556, %v2187
      %v2189 = vpop.f32.mrb[0].mxu0
      %2190 = vmatprep.mubr.bf16.mxu0 0
      %2191 = vmatmul.mubr.bf16.gmra.mrb[0].mxu0 %v1337
      %v2192 = vpop.f32.mrb[0].mxu0
      %v2193 = vadd.f32 %v556, %v2192
      %v2194 = vpop.f32.mrb[0].mxu0
      %v2195 = vpop.f32.mrb[0].mxu0
      %v2196 = vadd.f32 %v556, %v2195
      %v2197 = vpop.f32.mrb[0].mxu0
      %2198 = vmatprep.mubr.bf16.mxu0 0
      %2199 = vmatmul.mubr.bf16.gmra.mrb[0].mxu0 %v1338
      %v2200 = vpop.f32.mrb[0].mxu0
      %v2201 = vadd.f32 %v556, %v2200
      %v2202 = vpop.f32.mrb[0].mxu0
      %v2203 = vpop.f32.mrb[0].mxu0
      %v2204 = vadd.f32 %v556, %v2203
      %v2205 = vpop.f32.mrb[0].mxu0
      %2206 = vmatprep.mubr.bf16.mxu0 0
      %2207 = vmatmul.mubr.bf16.gmra.mrb[0].mxu0 %v1339
      %v2208 = vpop.f32.mrb[0].mxu0
      %v2209 = vadd.f32 %v556, %v2208
      %v2210 = vpop.f32.mrb[0].mxu0
      %v2211 = vpop.f32.mrb[0].mxu0
      %v2212 = vadd.f32 %v556, %v2211
      %v2213 = vpop.f32.mrb[0].mxu0
      %2214 = vmatprep.mubr.bf16.mxu0 0
      %2215 = vmatmul.mubr.bf16.gmra.mrb[0].mxu0 %v1340
      %v2216 = vpop.f32.mrb[0].mxu0
      %v2217 = vadd.f32 %v556, %v2216
      %v2218 = vpop.f32.mrb[0].mxu0
      %v2219 = vpop.f32.mrb[0].mxu0
      %v2220 = vadd.f32 %v556, %v2219
      %v2221 = vpop.f32.mrb[0].mxu0
      %2222 = vmatprep.mubr.bf16.mxu0 0
      %2223 = vmatmul.mubr.bf16.gmra.mrb[0].mxu0 %v1341
      %v2224 = vpop.f32.mrb[0].mxu0
      %v2225 = vadd.f32 %v556, %v2224
      %v2226 = vpop.f32.mrb[0].mxu0
      %v2227 = vpop.f32.mrb[0].mxu0
      %v2228 = vadd.f32 %v556, %v2227
      %v2229 = vpop.f32.mrb[0].mxu0
      %2230 = vmatprep.mubr.bf16.mxu0 0
      %2231 = vmatmul.mubr.bf16.gmra.mrb[0].mxu0 %v1342
      %v2232 = vpop.f32.mrb[0].mxu0
      %v2233 = vadd.f32 %v556, %v2232
      %v2234 = vpop.f32.mrb[0].mxu0
      %v2235 = vpop.f32.mrb[0].mxu0
      %v2236 = vadd.f32 %v556, %v2235
      %v2237 = vpop.f32.mrb[0].mxu0
      %2238 = vmatprep.mubr.bf16.mxu0 0
      %2239 = vmatmul.mubr.bf16.gmra.mrb[0].mxu0 %v1343
      %v2240 = vpop.f32.mrb[0].mxu0
      %v2241 = vadd.f32 %v556, %v2240
      %v2242 = vpop.f32.mrb[0].mxu0
      %v2243 = vpop.f32.mrb[0].mxu0
      %v2244 = vadd.f32 %v556, %v2243
      %v2245 = vpop.f32.mrb[0].mxu0
      %2246 = vmatprep.mubr.bf16.mxu0 0
      %2247 = vmatmul.mubr.bf16.gmra.mrb[0].mxu0 %v1344
      %v2248 = vpop.f32.mrb[0].mxu0
      %v2249 = vadd.f32 %v556, %v2248
      %v2250 = vpop.f32.mrb[0].mxu0
      %v2251 = vpop.f32.mrb[0].mxu0
      %v2252 = vadd.f32 %v556, %v2251
      %v2253 = vpop.f32.mrb[0].mxu0
      %2254 = vmatprep.mubr.bf16.mxu0 0
      %2255 = vmatmul.mubr.bf16.gmra.mrb[0].mxu0 %v1345
      %v2256 = vpop.f32.mrb[0].mxu0
      %v2257 = vadd.f32 %v556, %v2256
      %v2258 = vpop.f32.mrb[0].mxu0
      %v2259 = vpop.f32.mrb[0].mxu0
      %v2260 = vadd.f32 %v556, %v2259
      %v2261 = vpop.f32.mrb[0].mxu0
      %2262 = vmatprep.mubr.bf16.mxu0 0
      %2263 = vmatmul.mubr.bf16.gmra.mrb[0].mxu0 %v1346
      %v2264 = vpop.f32.mrb[0].mxu0
      %v2265 = vadd.f32 %v556, %v2264
      %v2266 = vpop.f32.mrb[0].mxu0
      %v2267 = vpop.f32.mrb[0].mxu0
      %v2268 = vadd.f32 %v556, %v2267
      %v2269 = vpop.f32.mrb[0].mxu0
      %2270 = vmatprep.mubr.bf16.mxu0 0
      %2271 = vmatmul.mubr.bf16.gmra.mrb[0].mxu0 %v1347
      %v2272 = vpop.f32.mrb[0].mxu0
      %v2273 = vadd.f32 %v556, %v2272
      %v2274 = vpop.f32.mrb[0].mxu0
      %v2275 = vpop.f32.mrb[0].mxu0
      %v2276 = vadd.f32 %v556, %v2275
      %v2277 = vpop.f32.mrb[0].mxu0
      %2278 = vmatprep.mubr.bf16.mxu0 0
      %2279 = vmatmul.mubr.bf16.gmra.mrb[0].mxu0 %v1348
      %v2280 = vpop.f32.mrb[0].mxu0
      %v2281 = vadd.f32 %v556, %v2280
      %v2282 = vpop.f32.mrb[0].mxu0
      %v2283 = vpop.f32.mrb[0].mxu0
      %v2284 = vadd.f32 %v556, %v2283
      %v2285 = vpop.f32.mrb[0].mxu0
      %2286 = vmatprep.mubr.bf16.mxu0 0
      %2287 = vmatmul.mubr.bf16.gmra.mrb[0].mxu0 %v1349
      %v2288 = vpop.f32.mrb[0].mxu0
      %v2289 = vadd.f32 %v556, %v2288
      %v2290 = vpop.f32.mrb[0].mxu0
      %v2291 = vpop.f32.mrb[0].mxu0
      %v2292 = vadd.f32 %v556, %v2291
      %v2293 = vpop.f32.mrb[0].mxu0
      %2294 = vmatprep.mubr.bf16.mxu0 0
      %2295 = vmatmul.mubr.bf16.gmra.mrb[0].mxu0 %v1350
      %v2296 = vpop.f32.mrb[0].mxu0
      %v2297 = vadd.f32 %v556, %v2296
      %v2298 = vpop.f32.mrb[0].mxu0
      %v2299 = vpop.f32.mrb[0].mxu0
      %v2300 = vadd.f32 %v556, %v2299
      %v2301 = vpop.f32.mrb[0].mxu0
      %2302 = vmatprep.mubr.bf16.mxu0 0
      %2303 = vmatmul.mubr.bf16.gmra.mrb[0].mxu0 %v1351
      %v2304 = vpop.f32.mrb[0].mxu0
      %v2305 = vadd.f32 %v556, %v2304
      %v2306 = vpop.f32.mrb[0].mxu0
      %v2307 = vpop.f32.mrb[0].mxu0
      %v2308 = vadd.f32 %v556, %v2307
      %v2309 = vpop.f32.mrb[0].mxu0
      %2310 = vmatprep.mubr.bf16.mxu0 0
      %2311 = vmatmul.mubr.bf16.gmra.mrb[0].mxu0 %v1352
      %v2312 = vpop.f32.mrb[0].mxu0
      %v2313 = vadd.f32 %v556, %v2312
      %v2314 = vpop.f32.mrb[0].mxu0
      %v2315 = vpop.f32.mrb[0].mxu0
      %v2316 = vadd.f32 %v556, %v2315
      %v2317 = vpop.f32.mrb[0].mxu0
      %2318 = vmatprep.mubr.bf16.mxu0 0
      %2319 = vmatmul.mubr.bf16.gmra.mrb[0].mxu0 %v1353
      %v2320 = vpop.f32.mrb[0].mxu0
      %v2321 = vadd.f32 %v556, %v2320
      %v2322 = vpop.f32.mrb[0].mxu0
      %v2323 = vpop.f32.mrb[0].mxu0
      %v2324 = vadd.f32 %v556, %v2323
      %v2325 = vpop.f32.mrb[0].mxu0
      %2326 = vmatprep.mubr.bf16.mxu0 0
      %2327 = vmatmul.mubr.bf16.gmra.mrb[0].mxu0 %v1354
      %v2328 = vpop.f32.mrb[0].mxu0
      %v2329 = vadd.f32 %v556, %v2328
      %v2330 = vpop.f32.mrb[0].mxu0
      %v2331 = vpop.f32.mrb[0].mxu0
      %v2332 = vadd.f32 %v556, %v2331
      %v2333 = vpop.f32.mrb[0].mxu0
      %2334 = vmatprep.mubr.bf16.mxu0 0
      %2335 = vmatmul.mubr.bf16.gmra.mrb[0].mxu0 %v1355
      %v2336 = vpop.f32.mrb[0].mxu0
      %v2337 = vadd.f32 %v556, %v2336
      %v2338 = vpop.f32.mrb[0].mxu0
      %v2339 = vpop.f32.mrb[0].mxu0
      %v2340 = vadd.f32 %v556, %v2339
      %v2341 = vpop.f32.mrb[0].mxu0
      %2342 = vmatprep.mubr.bf16.mxu0 0
      %2343 = vmatmul.mubr.bf16.gmra.mrb[0].mxu0 %v1356
      %v2344 = vpop.f32.mrb[0].mxu0
      %v2345 = vadd.f32 %v556, %v2344
      %v2346 = vpop.f32.mrb[0].mxu0
      %v2347 = vpop.f32.mrb[0].mxu0
      %v2348 = vadd.f32 %v556, %v2347
      %v2349 = vpop.f32.mrb[0].mxu0
      %2350 = vmatprep.mubr.bf16.mxu0 0
      %2351 = vmatmul.mubr.bf16.gmra.mrb[0].mxu0 %v1357
      %v2352 = vpop.f32.mrb[0].mxu0
      %v2353 = vadd.f32 %v556, %v2352
      %v2354 = vpop.f32.mrb[0].mxu0
      %v2355 = vpop.f32.mrb[0].mxu0
      %v2356 = vadd.f32 %v556, %v2355
      %v2357 = vpop.f32.mrb[0].mxu0
      %2358 = vmatprep.mubr.bf16.mxu0 0
      %2359 = vmatmul.mubr.bf16.gmra.mrb[0].mxu0 %v1358
      %v2360 = vpop.f32.mrb[0].mxu0
      %v2361 = vadd.f32 %v556, %v2360
      %v2362 = vpop.f32.mrb[0].mxu0
      %v2363 = vpop.f32.mrb[0].mxu0
      %v2364 = vadd.f32 %v556, %v2363
      %v2365 = vpop.f32.mrb[0].mxu0
      %2366 = vmatprep.mubr.bf16.mxu0 0
      %2367 = vmatmul.mubr.bf16.gmra.mrb[0].mxu0 %v1359
      %v2368 = vpop.f32.mrb[0].mxu0
      %v2369 = vadd.f32 %v556, %v2368
      %v2370 = vpop.f32.mrb[0].mxu0
      %v2371 = vpop.f32.mrb[0].mxu0
      %v2372 = vadd.f32 %v556, %v2371
      %v2373 = vpop.f32.mrb[0].mxu0
      %2374 = vmatprep.mubr.bf16.mxu0 0
      %2375 = vmatmul.mubr.bf16.gmra.mrb[0].mxu0 %v1360
      %v2376 = vpop.f32.mrb[0].mxu0
      %v2377 = vadd.f32 %v556, %v2376
      %v2378 = vpop.f32.mrb[0].mxu0
      %v2379 = vpop.f32.mrb[0].mxu0
      %v2380 = vadd.f32 %v556, %v2379
      %v2381 = vpop.f32.mrb[0].mxu0
      %2382 = vmatprep.mubr.bf16.mxu0 0
      %2383 = vmatmul.mubr.bf16.gmra.mrb[0].mxu0 %v1361
      %v2384 = vpop.f32.mrb[0].mxu0
      %v2385 = vadd.f32 %v556, %v2384
      %v2386 = vpop.f32.mrb[0].mxu0
      %v2387 = vpop.f32.mrb[0].mxu0
      %v2388 = vadd.f32 %v556, %v2387
      %v2389 = vpop.f32.mrb[0].mxu0
      %2390 = vmatprep.mubr.bf16.mxu0 0
      %2391 = vmatmul.mubr.bf16.gmra.mrb[0].mxu0 %v1362
      %v2392 = vpop.f32.mrb[0].mxu0
      %v2393 = vadd.f32 %v556, %v2392
      %v2394 = vpop.f32.mrb[0].mxu0
      %v2395 = vpop.f32.mrb[0].mxu0
      %v2396 = vadd.f32 %v556, %v2395
      %v2397 = vpop.f32.mrb[0].mxu0
      %2398 = vmatprep.mubr.bf16.mxu0 0
      %2399 = vmatmul.mubr.bf16.gmra.mrb[0].mxu0 %v1363
      %v2400 = vpop.f32.mrb[0].mxu0
      %v2401 = vadd.f32 %v556, %v2400
      %v2402 = vpop.f32.mrb[0].mxu0
      %v2403 = vpop.f32.mrb[0].mxu0
      %v2404 = vadd.f32 %v556, %v2403
      %v2405 = vpop.f32.mrb[0].mxu0
      %2406 = vmatprep.mubr.bf16.mxu0 0
      %2407 = vmatmul.mubr.bf16.gmra.mrb[0].mxu0 %v1364
      %v2408 = vpop.f32.mrb[0].mxu0
      %v2409 = vadd.f32 %v556, %v2408
      %v2410 = vpop.f32.mrb[0].mxu0
      %v2411 = vpop.f32.mrb[0].mxu0
      %v2412 = vadd.f32 %v556, %v2411
      %v2413 = vpop.f32.mrb[0].mxu0
      %2414 = vmatprep.mubr.bf16.mxu0 0
      %2415 = vmatmul.mubr.bf16.gmra.mrb[0].mxu0 %v1365
      %v2416 = vpop.f32.mrb[0].mxu0
      %v2417 = vadd.f32 %v556, %v2416
      %v2418 = vpop.f32.mrb[0].mxu0
      %v2419 = vpop.f32.mrb[0].mxu0
      %v2420 = vadd.f32 %v556, %v2419
      %v2421 = vpop.f32.mrb[0].mxu0
      %2422 = vmatprep.mubr.bf16.mxu0 0
      %2423 = vmatmul.mubr.bf16.gmra.mrb[0].mxu0 %v1366
      %v2424 = vpop.f32.mrb[0].mxu0
      %v2425 = vadd.f32 %v556, %v2424
      %v2426 = vpop.f32.mrb[0].mxu0
      %v2427 = vpop.f32.mrb[0].mxu0
      %v2428 = vadd.f32 %v556, %v2427
      %v2429 = vpop.f32.mrb[0].mxu0
      %2430 = vmatprep.mubr.bf16.mxu0 0
      %2431 = vmatmul.mubr.bf16.gmra.mrb[0].mxu0 %v1367
      %v2432 = vpop.f32.mrb[0].mxu0
      %v2433 = vadd.f32 %v556, %v2432
      %v2434 = vpop.f32.mrb[0].mxu0
      %v2435 = vpop.f32.mrb[0].mxu0
      %v2436 = vadd.f32 %v556, %v2435
      %v2437 = vpop.f32.mrb[0].mxu0
      %2438 = vmatprep.mubr.bf16.mxu0 0
      %2439 = vmatmul.mubr.bf16.gmra.mrb[0].mxu0 %v1368
      %v2440 = vpop.f32.mrb[0].mxu0
      %v2441 = vadd.f32 %v556, %v2440
      %v2442 = vpop.f32.mrb[0].mxu0
      %v2443 = vpop.f32.mrb[0].mxu0
      %v2444 = vadd.f32 %v556, %v2443
      %v2445 = vpop.f32.mrb[0].mxu0
      %2446 = vmatprep.mubr.bf16.mxu0 0
      %2447 = vmatmul.mubr.bf16.gmra.mrb[0].mxu0 %v1369
      %v2448 = vpop.f32.mrb[0].mxu0
      %v2449 = vadd.f32 %v556, %v2448
      %v2450 = vpop.f32.mrb[0].mxu0
      %v2451 = vpop.f32.mrb[0].mxu0
      %v2452 = vadd.f32 %v556, %v2451
      %v2453 = vpop.f32.mrb[0].mxu0
      %2454 = vmatprep.mubr.bf16.mxu0 0
      %2455 = vmatmul.mubr.bf16.gmra.mrb[0].mxu0 %v1370
      %v2456 = vpop.f32.mrb[0].mxu0
      %v2457 = vadd.f32 %v556, %v2456
      %v2458 = vpop.f32.mrb[0].mxu0
      %v2459 = vpop.f32.mrb[0].mxu0
      %v2460 = vadd.f32 %v556, %v2459
      %v2461 = vpop.f32.mrb[0].mxu0
      %2462 = vmatprep.mubr.bf16.mxu0 0
      %2463 = vmatmul.mubr.bf16.gmra.mrb[0].mxu0 %v1371
      %v2464 = vpop.f32.mrb[0].mxu0
      %v2465 = vadd.f32 %v556, %v2464
      %v2466 = vpop.f32.mrb[0].mxu0
      %v2467 = vpop.f32.mrb[0].mxu0
      %v2468 = vadd.f32 %v556, %v2467
      %v2469 = vpop.f32.mrb[0].mxu0
      %2470 = vmatprep.mubr.bf16.mxu0 0
      %2471 = vmatmul.mubr.bf16.gmra.mrb[0].mxu0 %v1372
      %v2472 = vpop.f32.mrb[0].mxu0
      %v2473 = vadd.f32 %v556, %v2472
      %v2474 = vpop.f32.mrb[0].mxu0
      %v2475 = vpop.f32.mrb[0].mxu0
      %v2476 = vadd.f32 %v556, %v2475
      %v2477 = vpop.f32.mrb[0].mxu0
      %2478 = vmatprep.mubr.bf16.mxu0 0
      %2479 = vmatmul.mubr.bf16.gmra.mrb[0].mxu0 %v1373
      %v2480 = vpop.f32.mrb[0].mxu0
      %v2481 = vadd.f32 %v556, %v2480
      %v2482 = vpop.f32.mrb[0].mxu0
      %v2483 = vpop.f32.mrb[0].mxu0
      %v2484 = vadd.f32 %v556, %v2483
      %v2485 = vpop.f32.mrb[0].mxu0
      %2486 = vmatprep.mubr.bf16.mxu0 0
      %2487 = vmatmul.mubr.bf16.gmra.mrb[0].mxu0 %v1374
      %v2488 = vpop.f32.mrb[0].mxu0
      %v2489 = vadd.f32 %v556, %v2488
      %v2490 = vpop.f32.mrb[0].mxu0
      %v2491 = vpop.f32.mrb[0].mxu0
      %v2492 = vadd.f32 %v556, %v2491
      %v2493 = vpop.f32.mrb[0].mxu0
      %2494 = vmatprep.mubr.bf16.mxu0 0
      %2495 = vmatmul.mubr.bf16.gmra.mrb[0].mxu0 %v1375
      %v2496 = vpop.f32.mrb[0].mxu0
      %v2497 = vadd.f32 %v556, %v2496
      %v2498 = vpop.f32.mrb[0].mxu0
      %v2499 = vpop.f32.mrb[0].mxu0
      %v2500 = vadd.f32 %v556, %v2499
      %v2501 = vpop.f32.mrb[0].mxu0
      %2502 = vmatprep.mubr.bf16.mxu0 0
      %2503 = vmatmul.mubr.bf16.gmra.mrb[0].mxu0 %v1376
      %v2504 = vpop.f32.mrb[0].mxu0
      %v2505 = vadd.f32 %v556, %v2504
      %v2506 = vpop.f32.mrb[0].mxu0
      %v2507 = vpop.f32.mrb[0].mxu0
      %v2508 = vadd.f32 %v556, %v2507
      %v2509 = vpop.f32.mrb[0].mxu0
      %2510 = vmatprep.mubr.bf16.mxu0 0
      %2511 = vmatmul.mubr.bf16.gmra.mrb[0].mxu0 %v1377
      %v2512 = vpop.f32.mrb[0].mxu0
      %v2513 = vadd.f32 %v556, %v2512
      %v2514 = vpop.f32.mrb[0].mxu0
      %v2515 = vpop.f32.mrb[0].mxu0
      %v2516 = vadd.f32 %v556, %v2515
      %v2517 = vpop.f32.mrb[0].mxu0
      %2518 = vmatprep.mubr.bf16.mxu0 0
      %2519 = vmatmul.mubr.bf16.gmra.mrb[0].mxu0 %v1378
      %v2520 = vpop.f32.mrb[0].mxu0
      %v2521 = vadd.f32 %v556, %v2520
      %v2522 = vpop.f32.mrb[0].mxu0
      %v2523 = vpop.f32.mrb[0].mxu0
      %v2524 = vadd.f32 %v556, %v2523
      %v2525 = vpop.f32.mrb[0].mxu0
      %2526 = vmatprep.mubr.bf16.mxu0 0
      %2527 = vmatmul.mubr.bf16.gmra.mrb[0].mxu0 %v1379
      %v2528 = vpop.f32.mrb[0].mxu0
      %v2529 = vadd.f32 %v556, %v2528
      %v2530 = vpop.f32.mrb[0].mxu0
      %v2531 = vpop.f32.mrb[0].mxu0
      %v2532 = vadd.f32 %v556, %v2531
      %v2533 = vpop.f32.mrb[0].mxu0
      %2534 = vmatprep.mubr.bf16.mxu0 0
      %2535 = vmatmul.mubr.bf16.gmra.mrb[0].mxu0 %v1380
      %v2536 = vpop.f32.mrb[0].mxu0
      %v2537 = vadd.f32 %v556, %v2536
      %v2538 = vpop.f32.mrb[0].mxu0
      %v2539 = vpop.f32.mrb[0].mxu0
      %v2540 = vadd.f32 %v556, %v2539
      %v2541 = vpop.f32.mrb[0].mxu0
      %2542 = vmatprep.mubr.bf16.mxu0 0
      %2543 = vmatmul.mubr.bf16.gmra.mrb[0].mxu0 %v1381
      %v2544 = vpop.f32.mrb[0].mxu0
      %v2545 = vadd.f32 %v556, %v2544
      %v2546 = vpop.f32.mrb[0].mxu0
      %v2547 = vpop.f32.mrb[0].mxu0
      %v2548 = vadd.f32 %v556, %v2547
      %v2549 = vpop.f32.mrb[0].mxu0
      %2550 = vmatprep.mubr.bf16.mxu0 0
      %2551 = vmatmul.mubr.bf16.gmra.mrb[0].mxu0 %v1382
      %v2552 = vpop.f32.mrb[0].mxu0
      %v2553 = vadd.f32 %v556, %v2552
      %v2554 = vpop.f32.mrb[0].mxu0
      %v2555 = vpop.f32.mrb[0].mxu0
      %v2556 = vadd.f32 %v556, %v2555
      %v2557 = vpop.f32.mrb[0].mxu0
      %2558 = vmatprep.mubr.bf16.mxu0 0
      %2559 = vmatmul.mubr.bf16.gmra.mrb[0].mxu0 %v1383
      %v2560 = vpop.f32.mrb[0].mxu0
      %v2561 = vadd.f32 %v556, %v2560
      %v2562 = vpop.f32.mrb[0].mxu0
      %v2563 = vpop.f32.mrb[0].mxu0
      %v2564 = vadd.f32 %v556, %v2563
      %v2565 = vpop.f32.mrb[0].mxu0
      %2566 = vmatprep.mubr.bf16.mxu0 0
      %2567 = vmatmul.mubr.bf16.gmra.mrb[0].mxu0 %v1384
      %v2568 = vpop.f32.mrb[0].mxu0
      %v2569 = vadd.f32 %v556, %v2568
      %v2570 = vpop.f32.mrb[0].mxu0
      %v2571 = vpop.f32.mrb[0].mxu0
      %v2572 = vadd.f32 %v556, %v2571
      %v2573 = vpop.f32.mrb[0].mxu0
      %2574 = vmatprep.mubr.bf16.mxu0 0
      %2575 = vmatmul.mubr.bf16.gmra.mrb[0].mxu0 %v1385
      %v2576 = vpop.f32.mrb[0].mxu0
      %v2577 = vadd.f32 %v556, %v2576
      %v2578 = vpop.f32.mrb[0].mxu0
      %v2579 = vpop.f32.mrb[0].mxu0
      %v2580 = vadd.f32 %v556, %v2579
      %v2581 = vpop.f32.mrb[0].mxu0
      %2582 = vmatprep.mubr.bf16.mxu0 0
      %2583 = vmatmul.mubr.bf16.gmra.mrb[0].mxu0 %v1386
      %v2584 = vpop.f32.mrb[0].mxu0
      %v2585 = vadd.f32 %v556, %v2584
      %v2586 = vpop.f32.mrb[0].mxu0
      %v2587 = vpop.f32.mrb[0].mxu0
      %v2588 = vadd.f32 %v556, %v2587
      %v2589 = vpop.f32.mrb[0].mxu0
      %2590 = vmatprep.mubr.bf16.mxu0 0
      %2591 = vmatmul.mubr.bf16.gmra.mrb[0].mxu0 %v1387
      %v2592 = vpop.f32.mrb[0].mxu0
      %v2593 = vadd.f32 %v556, %v2592
      %v2594 = vpop.f32.mrb[0].mxu0
      %v2595 = vpop.f32.mrb[0].mxu0
      %v2596 = vadd.f32 %v556, %v2595
      %v2597 = vpop.f32.mrb[0].mxu0
      %2598 = vmatprep.mubr.bf16.mxu0 0
      %2599 = vmatmul.mubr.bf16.gmra.mrb[0].mxu0 %v1388
      %v2600 = vpop.f32.mrb[0].mxu0
      %v2601 = vadd.f32 %v556, %v2600
      %v2602 = vpop.f32.mrb[0].mxu0
      %v2603 = vpop.f32.mrb[0].mxu0
      %v2604 = vadd.f32 %v556, %v2603
      %v2605 = vpop.f32.mrb[0].mxu0
      %2606 = vmatprep.mubr.bf16.mxu0 0
      %2607 = vmatmul.mubr.bf16.gmra.mrb[0].mxu0 %v1389
      %v2608 = vpop.f32.mrb[0].mxu0
      %v2609 = vadd.f32 %v556, %v2608
      %v2610 = vpop.f32.mrb[0].mxu0
      %v2611 = vpop.f32.mrb[0].mxu0
      %v2612 = vadd.f32 %v556, %v2611
      %v2613 = vpop.f32.mrb[0].mxu0
      %2614 = vmatprep.mubr.bf16.mxu0 0
      %2615 = vmatmul.mubr.bf16.gmra.mrb[0].mxu0 %v1390
      %v2616 = vpop.f32.mrb[0].mxu0
      %v2617 = vadd.f32 %v556, %v2616
      %v2618 = vpop.f32.mrb[0].mxu0
      %v2619 = vpop.f32.mrb[0].mxu0
      %v2620 = vadd.f32 %v556, %v2619
      %v2621 = vpop.f32.mrb[0].mxu0
      %2622 = vmatprep.mubr.bf16.mxu0 0
      %2623 = vmatmul.mubr.bf16.gmra.mrb[0].mxu0 %v1391
      %v2624 = vpop.f32.mrb[0].mxu0
      %v2625 = vadd.f32 %v556, %v2624
      %v2626 = vpop.f32.mrb[0].mxu0
      %v2627 = vpop.f32.mrb[0].mxu0
      %v2628 = vadd.f32 %v556, %v2627
      %v2629 = vpop.f32.mrb[0].mxu0
      %2630 = vmatprep.mubr.bf16.mxu0 0
      %2631 = vmatmul.mubr.bf16.gmra.mrb[0].mxu0 %v1392
      %v2632 = vpop.f32.mrb[0].mxu0
      %v2633 = vadd.f32 %v556, %v2632
      %v2634 = vpop.f32.mrb[0].mxu0
      %v2635 = vpop.f32.mrb[0].mxu0
      %v2636 = vadd.f32 %v556, %v2635
      %v2637 = vpop.f32.mrb[0].mxu0
      %2638 = vmatprep.mubr.bf16.mxu0 0
      %2639 = vmatmul.mubr.bf16.gmra.mrb[0].mxu0 %v1393
      %v2640 = vpop.f32.mrb[0].mxu0
      %v2641 = vadd.f32 %v556, %v2640
      %v2642 = vpop.f32.mrb[0].mxu0
      %v2643 = vpop.f32.mrb[0].mxu0
      %v2644 = vadd.f32 %v556, %v2643
      %v2645 = vpop.f32.mrb[0].mxu0
      %2646 = vmatprep.mubr.bf16.mxu0 0
      %2647 = vmatmul.mubr.bf16.gmra.mrb[0].mxu0 %v1394
      %v2648 = vpop.f32.mrb[0].mxu0
      %v2649 = vadd.f32 %v556, %v2648
      %v2650 = vpop.f32.mrb[0].mxu0
      %v2651 = vpop.f32.mrb[0].mxu0
      %v2652 = vadd.f32 %v556, %v2651
      %v2653 = vpop.f32.mrb[0].mxu0
      %2654 = vmatprep.mubr.bf16.mxu0 0
      %2655 = vmatmul.mubr.bf16.gmra.mrb[0].mxu0 %v1395
      %v2656 = vpop.f32.mrb[0].mxu0
      %v2657 = vadd.f32 %v556, %v2656
      %v2658 = vpop.f32.mrb[0].mxu0
      %v2659 = vpop.f32.mrb[0].mxu0
      %v2660 = vadd.f32 %v556, %v2659
      %v2661 = vpop.f32.mrb[0].mxu0
      %2662 = vmatprep.mubr.bf16.mxu0 0
      %2663 = vmatmul.mubr.bf16.gmra.mrb[0].mxu0 %v1396
      %v2664 = vpop.f32.mrb[0].mxu0
      %v2665 = vadd.f32 %v556, %v2664
      %v2666 = vpop.f32.mrb[0].mxu0
      %v2667 = vpop.f32.mrb[0].mxu0
      %v2668 = vadd.f32 %v556, %v2667
      %v2669 = vpop.f32.mrb[0].mxu0
      %2670 = vmatprep.mubr.bf16.mxu0 0
      %2671 = vmatmul.mubr.bf16.gmra.mrb[0].mxu0 %v1397
      %v2672 = vpop.f32.mrb[0].mxu0
      %v2673 = vadd.f32 %v556, %v2672
      %v2674 = vpop.f32.mrb[0].mxu0
      %v2675 = vpop.f32.mrb[0].mxu0
      %v2676 = vadd.f32 %v556, %v2675
      %v2677 = vpop.f32.mrb[0].mxu0
      %2678 = vmatprep.mubr.bf16.mxu0 0
      %2679 = vmatmul.mubr.bf16.gmra.mrb[0].mxu0 %v1398
      %v2680 = vpop.f32.mrb[0].mxu0
      %v2681 = vadd.f32 %v556, %v2680
      %v2682 = vpop.f32.mrb[0].mxu0
      %v2683 = vpop.f32.mrb[0].mxu0
      %v2684 = vadd.f32 %v556, %v2683
      %v2685 = vpop.f32.mrb[0].mxu0
      %2686 = vmatprep.mubr.bf16.mxu0 0
      %2687 = vmatmul.mubr.bf16.gmra.mrb[0].mxu0 %v1399
      %v2688 = vpop.f32.mrb[0].mxu0
      %v2689 = vadd.f32 %v556, %v2688
      %v2690 = vpop.f32.mrb[0].mxu0
      %v2691 = vpop.f32.mrb[0].mxu0
      %v2692 = vadd.f32 %v556, %v2691
      %v2693 = vpop.f32.mrb[0].mxu0
      %2694 = vmatprep.mubr.bf16.mxu0 0
      %2695 = vmatmul.mubr.bf16.gmra.mrb[0].mxu0 %v1400
      %v2696 = vpop.f32.mrb[0].mxu0
      %v2697 = vadd.f32 %v556, %v2696
      %v2698 = vpop.f32.mrb[0].mxu0
      %v2699 = vpop.f32.mrb[0].mxu0
      %v2700 = vadd.f32 %v556, %v2699
      %v2701 = vpop.f32.mrb[0].mxu0
      %2702 = vmatprep.mubr.bf16.mxu0 0
      %2703 = vmatmul.mubr.bf16.gmra.mrb[0].mxu0 %v1401
      %v2704 = vpop.f32.mrb[0].mxu0
      %v2705 = vadd.f32 %v556, %v2704
      %v2706 = vpop.f32.mrb[0].mxu0
      %v2707 = vpop.f32.mrb[0].mxu0
      %v2708 = vadd.f32 %v556, %v2707
      %v2709 = vpop.f32.mrb[0].mxu0
      %2710 = vmatprep.mubr.bf16.mxu0 0
      %2711 = vmatmul.mubr.bf16.gmra.mrb[0].mxu0 %v1402
      %v2712 = vpop.f32.mrb[0].mxu0
      %v2713 = vadd.f32 %v556, %v2712
      %v2714 = vpop.f32.mrb[0].mxu0
      %v2715 = vpop.f32.mrb[0].mxu0
      %v2716 = vadd.f32 %v556, %v2715
      %v2717 = vpop.f32.mrb[0].mxu0
      %2718 = vmatprep.mubr.bf16.mxu0 0
      %2719 = vmatmul.mubr.bf16.gmra.mrb[0].mxu0 %v1403
      %v2720 = vpop.f32.mrb[0].mxu0
      %v2721 = vadd.f32 %v556, %v2720
      %v2722 = vpop.f32.mrb[0].mxu0
      %v2723 = vpop.f32.mrb[0].mxu0
      %v2724 = vadd.f32 %v556, %v2723
      %v2725 = vpop.f32.mrb[0].mxu0
      %2726 = vmatprep.mubr.bf16.mxu0 0
      %2727 = vmatmul.mubr.bf16.gmra.mrb[0].mxu0 %v1404
      %v2728 = vpop.f32.mrb[0].mxu0
      %v2729 = vadd.f32 %v556, %v2728
      %v2730 = vpop.f32.mrb[0].mxu0
      %v2731 = vpop.f32.mrb[0].mxu0
      %v2732 = vadd.f32 %v556, %v2731
      %v2733 = vpop.f32.mrb[0].mxu0
      %2734 = vmatprep.mubr.bf16.mxu0 0
      %2735 = vmatmul.mubr.bf16.gmra.mrb[0].mxu0 %v1405
      %v2736 = vpop.f32.mrb[0].mxu0
      %v2737 = vadd.f32 %v556, %v2736
      %v2738 = vpop.f32.mrb[0].mxu0
      %v2739 = vpop.f32.mrb[0].mxu0
      %v2740 = vadd.f32 %v556, %v2739
      %v2741 = vpop.f32.mrb[0].mxu0
      %2742 = vmatprep.mubr.bf16.mxu0 0
      %2743 = vmatmul.mubr.bf16.gmra.mrb[0].mxu0 %v1406
      %v2744 = vpop.f32.mrb[0].mxu0
      %v2745 = vadd.f32 %v556, %v2744
      %v2746 = vpop.f32.mrb[0].mxu0
      %v2747 = vpop.f32.mrb[0].mxu0
      %v2748 = vadd.f32 %v556, %v2747
      %v2749 = vpop.f32.mrb[0].mxu0
      %2750 = vmatprep.mubr.bf16.mxu0 0
      %2751 = vmatmul.mubr.bf16.gmra.mrb[0].mxu0 %v1407
      %v2752 = vpop.f32.mrb[0].mxu0
      %v2753 = vadd.f32 %v556, %v2752
      %v2754 = vpop.f32.mrb[0].mxu0
      %v2755 = vpop.f32.mrb[0].mxu0
      %v2756 = vadd.f32 %v556, %v2755
      %v2757 = vpop.f32.mrb[0].mxu0
      %2758 = vmatprep.mubr.bf16.mxu0 0
      %2759 = vmatmul.mubr.bf16.gmra.mrb[0].mxu0 %v1408
      %v2760 = vpop.f32.mrb[0].mxu0
      %v2761 = vadd.f32 %v556, %v2760
      %v2762 = vpop.f32.mrb[0].mxu0
      %v2763 = vpop.f32.mrb[0].mxu0
      %v2764 = vadd.f32 %v556, %v2763
      %v2765 = vpop.f32.mrb[0].mxu0
      %2766 = vmatprep.mubr.bf16.mxu0 0
      %2767 = vmatmul.mubr.bf16.gmra.mrb[0].mxu0 %v1409
      %v2768 = vpop.f32.mrb[0].mxu0
      %v2769 = vadd.f32 %v556, %v2768
      %v2770 = vpop.f32.mrb[0].mxu0
      %v2771 = vpop.f32.mrb[0].mxu0
      %v2772 = vadd.f32 %v556, %v2771
      %v2773 = vpop.f32.mrb[0].mxu0
      %2774 = vmatprep.mubr.bf16.mxu0 0
      %2775 = vmatmul.mubr.bf16.gmra.mrb[0].mxu0 %v1410
      %v2776 = vpop.f32.mrb[0].mxu0
      %v2777 = vadd.f32 %v556, %v2776
      %v2778 = vpop.f32.mrb[0].mxu0
      %v2779 = vpop.f32.mrb[0].mxu0
      %v2780 = vadd.f32 %v556, %v2779
      %v2781 = vpop.f32.mrb[0].mxu0
      %2782 = vmatprep.mubr.bf16.mxu0 0
      %2783 = vmatmul.mubr.bf16.gmra.mrb[0].mxu0 %v1411
      %v2784 = vpop.f32.mrb[0].mxu0
      %v2785 = vadd.f32 %v556, %v2784
      %v2786 = vpop.f32.mrb[0].mxu0
      %v2787 = vpop.f32.mrb[0].mxu0
      %v2788 = vadd.f32 %v556, %v2787
      %v2789 = vpop.f32.mrb[0].mxu0
      %2790 = vmatprep.mubr.bf16.mxu0 0
      %2791 = vmatmul.mubr.bf16.gmra.mrb[0].mxu0 %v1412
      %v2792 = vpop.f32.mrb[0].mxu0
      %v2793 = vadd.f32 %v556, %v2792
      %v2794 = vpop.f32.mrb[0].mxu0
      %v2795 = vpop.f32.mrb[0].mxu0
      %v2796 = vadd.f32 %v556, %v2795
      %v2797 = vpop.f32.mrb[0].mxu0
      %2798 = vmatprep.mubr.bf16.mxu0 0
      %2799 = vmatmul.mubr.bf16.gmra.mrb[0].mxu0 %v1413
      %v2800 = vpop.f32.mrb[0].mxu0
      %v2801 = vadd.f32 %v556, %v2800
      %v2802 = vpop.f32.mrb[0].mxu0
      %v2803 = vpop.f32.mrb[0].mxu0
      %v2804 = vadd.f32 %v556, %v2803
      %v2805 = vpop.f32.mrb[0].mxu0
      %2806 = vmatprep.mubr.bf16.mxu0 0
      %2807 = vmatmul.mubr.bf16.gmra.mrb[0].mxu0 %v1414
      %v2808 = vpop.f32.mrb[0].mxu0
      %v2809 = vadd.f32 %v556, %v2808
      %v2810 = vpop.f32.mrb[0].mxu0
      %v2811 = vpop.f32.mrb[0].mxu0
      %v2812 = vadd.f32 %v556, %v2811
      %v2813 = vpop.f32.mrb[0].mxu0
      %2814 = vmatprep.mubr.bf16.mxu0 0
      %2815 = vmatmul.mubr.bf16.gmra.mrb[0].mxu0 %v1415
      %v2816 = vpop.f32.mrb[0].mxu0
      %v2817 = vadd.f32 %v556, %v2816
      %v2818 = vpop.f32.mrb[0].mxu0
      %v2819 = vpop.f32.mrb[0].mxu0
      %v2820 = vadd.f32 %v556, %v2819
      %v2821 = vpop.f32.mrb[0].mxu0
      %2822 = vmatprep.mubr.bf16.mxu0 0
      %2823 = vmatmul.mubr.bf16.gmra.mrb[0].mxu0 %v1416
      %v2824 = vpop.f32.mrb[0].mxu0
      %v2825 = vadd.f32 %v556, %v2824
      %v2826 = vpop.f32.mrb[0].mxu0
      %v2827 = vpop.f32.mrb[0].mxu0
      %v2828 = vadd.f32 %v556, %v2827
      %v2829 = vpop.f32.mrb[0].mxu0
      %2830 = vmatprep.mubr.bf16.mxu0 0
      %2831 = vmatmul.mubr.bf16.gmra.mrb[0].mxu0 %v1417
      %v2832 = vpop.f32.mrb[0].mxu0
      %v2833 = vadd.f32 %v556, %v2832
      %v2834 = vpop.f32.mrb[0].mxu0
      %v2835 = vpop.f32.mrb[0].mxu0
      %v2836 = vadd.f32 %v556, %v2835
      %v2837 = vpop.f32.mrb[0].mxu0
      %2838 = vmatprep.mubr.bf16.mxu0 0
      %2839 = vmatmul.mubr.bf16.gmra.mrb[0].mxu0 %v1418
      %v2840 = vpop.f32.mrb[0].mxu0
      %v2841 = vadd.f32 %v556, %v2840
      %v2842 = vpop.f32.mrb[0].mxu0
      %v2843 = vpop.f32.mrb[0].mxu0
      %v2844 = vadd.f32 %v556, %v2843
      %v2845 = vpop.f32.mrb[0].mxu0
      %2846 = vmatprep.mubr.bf16.mxu0 0
      %2847 = vmatmul.mubr.bf16.gmra.mrb[0].mxu0 %v1419
      %v2848 = vpop.f32.mrb[0].mxu0
      %v2849 = vadd.f32 %v556, %v2848
      %v2850 = vpop.f32.mrb[0].mxu0
      %v2851 = vpop.f32.mrb[0].mxu0
      %v2852 = vadd.f32 %v556, %v2851
      %v2853 = vpop.f32.mrb[0].mxu0
      %2854 = vmatprep.mubr.bf16.mxu0 0
      %2855 = vmatmul.mubr.bf16.gmra.mrb[0].mxu0 %v1420
      %v2856 = vpop.f32.mrb[0].mxu0
      %v2857 = vadd.f32 %v556, %v2856
      %v2858 = vpop.f32.mrb[0].mxu0
      %v2859 = vpop.f32.mrb[0].mxu0
      %v2860 = vadd.f32 %v556, %v2859
      %v2861 = vpop.f32.mrb[0].mxu0
      %2862 = vmatprep.mubr.bf16.mxu0 0
      %2863 = vmatmul.mubr.bf16.gmra.mrb[0].mxu0 %v1421
      %v2864 = vpop.f32.mrb[0].mxu0
      %v2865 = vadd.f32 %v556, %v2864
      %v2866 = vpop.f32.mrb[0].mxu0
      %v2867 = vpop.f32.mrb[0].mxu0
      %v2868 = vadd.f32 %v556, %v2867
      %v2869 = vpop.f32.mrb[0].mxu0
      %2870 = vmatprep.mubr.bf16.mxu0 0
      %2871 = vmatmul.mubr.bf16.gmra.mrb[0].mxu0 %v1422
      %v2872 = vpop.f32.mrb[0].mxu0
      %v2873 = vadd.f32 %v556, %v2872
      %v2874 = vpop.f32.mrb[0].mxu0
      %v2875 = vpop.f32.mrb[0].mxu0
      %v2876 = vadd.f32 %v556, %v2875
      %v2877 = vpop.f32.mrb[0].mxu0
      %2878 = vmatprep.mubr.bf16.mxu0 0
      %2879 = vmatmul.mubr.bf16.gmra.mrb[0].mxu0 %v1423
      %v2880 = vpop.f32.mrb[0].mxu0
      %v2881 = vadd.f32 %v556, %v2880
      %v2882 = vpop.f32.mrb[0].mxu0
      %v2883 = vpop.f32.mrb[0].mxu0
      %v2884 = vadd.f32 %v556, %v2883
      %v2885 = vpop.f32.mrb[0].mxu0
      %2886 = vmatprep.mubr.bf16.mxu0 0
      %2887 = vmatmul.mubr.bf16.gmra.mrb[0].mxu0 %v1424
      %v2888 = vpop.f32.mrb[0].mxu0
      %v2889 = vadd.f32 %v556, %v2888
      %v2890 = vpop.f32.mrb[0].mxu0
      %v2891 = vpop.f32.mrb[0].mxu0
      %v2892 = vadd.f32 %v556, %v2891
      %v2893 = vpop.f32.mrb[0].mxu0
      %2894 = vmatprep.mubr.bf16.mxu0 0
      %2895 = vmatmul.mubr.bf16.gmra.mrb[0].mxu0 %v1425
      %v2896 = vpop.f32.mrb[0].mxu0
      %v2897 = vadd.f32 %v556, %v2896
      %v2898 = vpop.f32.mrb[0].mxu0
      %v2899 = vpop.f32.mrb[0].mxu0
      %v2900 = vadd.f32 %v556, %v2899
      %v2901 = vpop.f32.mrb[0].mxu0
      %2902 = vmatprep.mubr.bf16.mxu0 0
      %2903 = vmatmul.mubr.bf16.gmra.mrb[0].mxu0 %v1426
      %v2904 = vpop.f32.mrb[0].mxu0
      %v2905 = vadd.f32 %v556, %v2904
      %v2906 = vpop.f32.mrb[0].mxu0
      %v2907 = vpop.f32.mrb[0].mxu0
      %v2908 = vadd.f32 %v556, %v2907
      %v2909 = vpop.f32.mrb[0].mxu0
      %2910 = vmatprep.mubr.bf16.mxu0 0
      %2911 = vmatmul.mubr.bf16.gmra.mrb[0].mxu0 %v1427
      %v2912 = vpop.f32.mrb[0].mxu0
      %v2913 = vadd.f32 %v556, %v2912
      %v2914 = vpop.f32.mrb[0].mxu0
      %v2915 = vpop.f32.mrb[0].mxu0
      %v2916 = vadd.f32 %v556, %v2915
      %v2917 = vpop.f32.mrb[0].mxu0
      %2918 = vmatprep.mubr.bf16.mxu0 0
      %2919 = vmatmul.mubr.bf16.gmra.mrb[0].mxu0 %v1428
      %v2920 = vpop.f32.mrb[0].mxu0
      %v2921 = vadd.f32 %v556, %v2920
      %v2922 = vpop.f32.mrb[0].mxu0
      %v2923 = vpop.f32.mrb[0].mxu0
      %v2924 = vadd.f32 %v556, %v2923
      %v2925 = vpop.f32.mrb[0].mxu0
      %2926 = vmatprep.mubr.bf16.mxu0 0
      %2927 = vmatmul.mubr.bf16.gmra.mrb[0].mxu0 %v1429
      %v2928 = vpop.f32.mrb[0].mxu0
      %v2929 = vadd.f32 %v556, %v2928
      %v2930 = vpop.f32.mrb[0].mxu0
      %v2931 = vpop.f32.mrb[0].mxu0
      %v2932 = vadd.f32 %v556, %v2931
      %v2933 = vpop.f32.mrb[0].mxu0
      %2934 = vmatprep.mubr.bf16.mxu0 0
      %2935 = vmatmul.mubr.bf16.gmra.mrb[0].mxu0 %v1430
      %v2936 = vpop.f32.mrb[0].mxu0
      %v2937 = vadd.f32 %v556, %v2936
      %v2938 = vpop.f32.mrb[0].mxu0
      %v2939 = vpop.f32.mrb[0].mxu0
      %v2940 = vadd.f32 %v556, %v2939
      %v2941 = vpop.f32.mrb[0].mxu0
      %2942 = vmatprep.mubr.bf16.mxu0 0
      %2943 = vmatmul.mubr.bf16.gmra.mrb[0].mxu0 %v1431
      %v2944 = vpop.f32.mrb[0].mxu0
      %v2945 = vadd.f32 %v556, %v2944
      %v2946 = vpop.f32.mrb[0].mxu0
      %v2947 = vpop.f32.mrb[0].mxu0
      %v2948 = vadd.f32 %v556, %v2947
      %v2949 = vpop.f32.mrb[0].mxu0
      %2950 = vmatprep.mubr.bf16.mxu0 0
      %2951 = vmatmul.mubr.bf16.gmra.mrb[0].mxu0 %v1432
      %v2952 = vpop.f32.mrb[0].mxu0
      %v2953 = vadd.f32 %v556, %v2952
      %v2954 = vpop.f32.mrb[0].mxu0
      %v2955 = vpop.f32.mrb[0].mxu0
      %v2956 = vadd.f32 %v556, %v2955
      %v2957 = vpop.f32.mrb[0].mxu0
      %2958 = vmatprep.mubr.bf16.mxu0 0
      %2959 = vmatmul.mubr.bf16.gmra.mrb[0].mxu0 %v1433
      %v2960 = vpop.f32.mrb[0].mxu0
      %v2961 = vadd.f32 %v556, %v2960
      %v2962 = vpop.f32.mrb[0].mxu0
      %v2963 = vpop.f32.mrb[0].mxu0
      %v2964 = vadd.f32 %v556, %v2963
      %v2965 = vpop.f32.mrb[0].mxu0
      %2966 = vmatprep.mubr.bf16.mxu0 0
      %2967 = vmatmul.mubr.bf16.gmra.mrb[0].mxu0 %v1434
      %v2968 = vpop.f32.mrb[0].mxu0
      %v2969 = vadd.f32 %v556, %v2968
      %v2970 = vpop.f32.mrb[0].mxu0
      %v2971 = vpop.f32.mrb[0].mxu0
      %v2972 = vadd.f32 %v556, %v2971
      %v2973 = vpop.f32.mrb[0].mxu0
      %2974 = vmatprep.mubr.bf16.mxu0 0
      %2975 = vmatmul.mubr.bf16.gmra.mrb[0].mxu0 %v1435
      %v2976 = vpop.f32.mrb[0].mxu0
      %v2977 = vadd.f32 %v556, %v2976
      %v2978 = vpop.f32.mrb[0].mxu0
      %v2979 = vpop.f32.mrb[0].mxu0
      %v2980 = vadd.f32 %v556, %v2979
      %v2981 = vpop.f32.mrb[0].mxu0
      %2982 = vmatprep.mubr.bf16.mxu0 0
      %2983 = vmatmul.mubr.bf16.gmra.mrb[0].mxu0 %v1436
      %v2984 = vpop.f32.mrb[0].mxu0
      %v2985 = vadd.f32 %v556, %v2984
      %v2986 = vpop.f32.mrb[0].mxu0
      %v2987 = vpop.f32.mrb[0].mxu0
      %v2988 = vadd.f32 %v556, %v2987
      %v2989 = vpop.f32.mrb[0].mxu0
      %2990 = vmatprep.mubr.bf16.mxu0 0
      %2991 = vmatmul.mubr.bf16.gmra.mrb[0].mxu0 %v1437
      %v2992 = vpop.f32.mrb[0].mxu0
      %v2993 = vadd.f32 %v556, %v2992
      %v2994 = vpop.f32.mrb[0].mxu0
      %v2995 = vpop.f32.mrb[0].mxu0
      %v2996 = vadd.f32 %v556, %v2995
      %v2997 = vpop.f32.mrb[0].mxu0
      %2998 = vmatprep.mubr.bf16.mxu0 0
      %2999 = vmatmul.mubr.bf16.gmra.mrb[0].mxu0 %v1438
      %v3000 = vpop.f32.mrb[0].mxu0
      %v3001 = vadd.f32 %v556, %v3000
      %v3002 = vpop.f32.mrb[0].mxu0
      %v3003 = vpop.f32.mrb[0].mxu0
      %v3004 = vadd.f32 %v556, %v3003
      %v3005 = vpop.f32.mrb[0].mxu0
      %3006 = vmatprep.mubr.bf16.mxu0 0
      %3007 = vmatmul.mubr.bf16.gmra.mrb[0].mxu0 %v1439
      %v3008 = vpop.f32.mrb[0].mxu0
      %v3009 = vadd.f32 %v556, %v3008
      %v3010 = vpop.f32.mrb[0].mxu0
      %v3011 = vpop.f32.mrb[0].mxu0
      %v3012 = vadd.f32 %v556, %v3011
      %v3013 = vpop.f32.mrb[0].mxu0
      %3014 = vmatprep.mubr.bf16.mxu0 0
      %3015 = vmatmul.mubr.bf16.gmra.mrb[0].mxu0 %v1440
      %v3016 = vpop.f32.mrb[0].mxu0
      %v3017 = vadd.f32 %v556, %v3016
      %v3018 = vpop.f32.mrb[0].mxu0
      %v3019 = vpop.f32.mrb[0].mxu0
      %v3020 = vadd.f32 %v556, %v3019
      %v3021 = vpop.f32.mrb[0].mxu0
      %3022 = vmatprep.mubr.bf16.mxu0 0
      %3023 = vmatmul.mubr.bf16.gmra.mrb[0].mxu0 %v1441
      %v3024 = vpop.f32.mrb[0].mxu0
      %v3025 = vadd.f32 %v556, %v3024
      %v3026 = vpop.f32.mrb[0].mxu0
      %v3027 = vpop.f32.mrb[0].mxu0
      %v3028 = vadd.f32 %v556, %v3027
      %v3029 = vpop.f32.mrb[0].mxu0
      %3030 = vmatprep.mubr.bf16.mxu0 0
      %3031 = vmatmul.mubr.bf16.gmra.mrb[0].mxu0 %v1442
      %v3032 = vpop.f32.mrb[0].mxu0
      %v3033 = vadd.f32 %v556, %v3032
      %v3034 = vpop.f32.mrb[0].mxu0
      %v3035 = vpop.f32.mrb[0].mxu0
      %v3036 = vadd.f32 %v556, %v3035
      %v3037 = vpop.f32.mrb[0].mxu0
      %3038 = vmatprep.mubr.bf16.mxu0 0
      %3039 = vmatmul.mubr.bf16.gmra.mrb[0].mxu0 %v1443
      %v3040 = vpop.f32.mrb[0].mxu0
      %v3041 = vadd.f32 %v556, %v3040
      %v3042 = vpop.f32.mrb[0].mxu0
      %v3043 = vpop.f32.mrb[0].mxu0
      %v3044 = vadd.f32 %v556, %v3043
      %v3045 = vpop.f32.mrb[0].mxu0
      %3046 = vmatprep.mubr.bf16.mxu0 0
      %3047 = vmatmul.mubr.bf16.gmra.mrb[0].mxu0 %v1444
      %v3048 = vpop.f32.mrb[0].mxu0
      %v3049 = vadd.f32 %v556, %v3048
      %v3050 = vpop.f32.mrb[0].mxu0
      %v3051 = vpop.f32.mrb[0].mxu0
      %v3052 = vadd.f32 %v556, %v3051
      %v3053 = vpop.f32.mrb[0].mxu0
      %3054 = vmatprep.mubr.bf16.mxu0 0
      %3055 = vmatmul.mubr.bf16.gmra.mrb[0].mxu0 %v1445
      %v3056 = vpop.f32.mrb[0].mxu0
      %v3057 = vadd.f32 %v556, %v3056
      %v3058 = vpop.f32.mrb[0].mxu0
      %v3059 = vpop.f32.mrb[0].mxu0
      %v3060 = vadd.f32 %v556, %v3059
      %v3061 = vpop.f32.mrb[0].mxu0
      %3062 = vmatprep.mubr.bf16.mxu0 0
      %3063 = vmatmul.mubr.bf16.gmra.mrb[0].mxu0 %v1446
      %v3064 = vpop.f32.mrb[0].mxu0
      %v3065 = vadd.f32 %v556, %v3064
      %v3066 = vpop.f32.mrb[0].mxu0
      %v3067 = vpop.f32.mrb[0].mxu0
      %v3068 = vadd.f32 %v556, %v3067
      %v3069 = vpop.f32.mrb[0].mxu0
      %3070 = vmatprep.mubr.bf16.mxu0 0
      %3071 = vmatmul.mubr.bf16.gmra.mrb[0].mxu0 %v1447
      %v3072 = vpop.f32.mrb[0].mxu0
      %v3073 = vadd.f32 %v556, %v3072
      %v3074 = vpop.f32.mrb[0].mxu0
      %v3075 = vpop.f32.mrb[0].mxu0
      %v3076 = vadd.f32 %v556, %v3075
      %v3077 = vpop.f32.mrb[0].mxu0
      %3078 = vmatprep.mubr.bf16.mxu0 0
      %3079 = vmatmul.mubr.bf16.gmra.mrb[0].mxu0 %v1448
      %v3080 = vpop.f32.mrb[0].mxu0
      %v3081 = vadd.f32 %v556, %v3080
      %v3082 = vpop.f32.mrb[0].mxu0
      %v3083 = vpop.f32.mrb[0].mxu0
      %v3084 = vadd.f32 %v556, %v3083
      %v3085 = vpop.f32.mrb[0].mxu0
      %3086 = vmatprep.mubr.bf16.mxu0 0
      %3087 = vmatmul.mubr.bf16.gmra.mrb[0].mxu0 %v1449
      %v3088 = vpop.f32.mrb[0].mxu0
      %v3089 = vadd.f32 %v556, %v3088
      %v3090 = vpop.f32.mrb[0].mxu0
      %v3091 = vpop.f32.mrb[0].mxu0
      %v3092 = vadd.f32 %v556, %v3091
      %v3093 = vpop.f32.mrb[0].mxu0
      %3094 = vmatprep.mubr.bf16.mxu0 0
      %3095 = vmatmul.mubr.bf16.gmra.mrb[0].mxu0 %v1450
      %v3096 = vpop.f32.mrb[0].mxu0
      %v3097 = vadd.f32 %v556, %v3096
      %v3098 = vpop.f32.mrb[0].mxu0
      %v3099 = vpop.f32.mrb[0].mxu0
      %v3100 = vadd.f32 %v556, %v3099
      %v3101 = vpop.f32.mrb[0].mxu0
      %3102 = vmatprep.mubr.bf16.mxu0 0
      %3103 = vmatmul.mubr.bf16.gmra.mrb[0].mxu0 %v1451
      %v3104 = vpop.f32.mrb[0].mxu0
      %v3105 = vadd.f32 %v556, %v3104
      %v3106 = vpop.f32.mrb[0].mxu0
      %v3107 = vpop.f32.mrb[0].mxu0
      %v3108 = vadd.f32 %v556, %v3107
      %v3109 = vpop.f32.mrb[0].mxu0
      %3110 = vmatprep.mubr.bf16.mxu0 0
      %3111 = vmatmul.mubr.bf16.gmra.mrb[0].mxu0 %v1452
      %v3112 = vpop.f32.mrb[0].mxu0
      %v3113 = vadd.f32 %v556, %v3112
      %v3114 = vpop.f32.mrb[0].mxu0
      %v3115 = vpop.f32.mrb[0].mxu0
      %v3116 = vadd.f32 %v556, %v3115
      %v3117 = vpop.f32.mrb[0].mxu0
      %3118 = vmatprep.mubr.bf16.mxu0 0
      %3119 = vmatmul.mubr.bf16.gmra.mrb[0].mxu0 %v1453
      %v3120 = vpop.f32.mrb[0].mxu0
      %v3121 = vadd.f32 %v556, %v3120
      %v3122 = vpop.f32.mrb[0].mxu0
      %v3123 = vpop.f32.mrb[0].mxu0
      %v3124 = vadd.f32 %v556, %v3123
      %v3125 = vpop.f32.mrb[0].mxu0
      %3126 = vmatprep.mubr.bf16.mxu0 0
      %3127 = vmatmul.mubr.bf16.gmra.mrb[0].mxu0 %v1454
      %v3128 = vpop.f32.mrb[0].mxu0
      %v3129 = vadd.f32 %v556, %v3128
      %v3130 = vpop.f32.mrb[0].mxu0
      %v3131 = vpop.f32.mrb[0].mxu0
      %v3132 = vadd.f32 %v556, %v3131
      %v3133 = vpop.f32.mrb[0].mxu0
      %3134 = vmatprep.mubr.bf16.mxu0 0
      %3135 = vmatmul.mubr.bf16.gmra.mrb[0].mxu0 %v1455
      %v3136 = vpop.f32.mrb[0].mxu0
      %v3137 = vadd.f32 %v556, %v3136
      %v3138 = vpop.f32.mrb[0].mxu0
      %v3139 = vpop.f32.mrb[0].mxu0
      %v3140 = vadd.f32 %v556, %v3139
      %v3141 = vpop.f32.mrb[0].mxu0
      %3142 = vmatprep.mubr.bf16.mxu0 0
      %3143 = vmatmul.mubr.bf16.gmra.mrb[0].mxu0 %v1456
      %v3144 = vpop.f32.mrb[0].mxu0
      %v3145 = vadd.f32 %v556, %v3144
      %v3146 = vpop.f32.mrb[0].mxu0
      %v3147 = vpop.f32.mrb[0].mxu0
      %v3148 = vadd.f32 %v556, %v3147
      %v3149 = vpop.f32.mrb[0].mxu0
      %3150 = vmatprep.mubr.bf16.mxu0 0
      %3151 = vmatmul.mubr.bf16.gmra.mrb[0].mxu0 %v1457
      %v3152 = vpop.f32.mrb[0].mxu0
      %v3153 = vadd.f32 %v556, %v3152
      %v3154 = vpop.f32.mrb[0].mxu0
      %v3155 = vpop.f32.mrb[0].mxu0
      %v3156 = vadd.f32 %v556, %v3155
      %v3157 = vpop.f32.mrb[0].mxu0
      %3158 = vdwg.mxu0
      %v3159 = vmax.f32 %v1721, 0.0
      %v3160 = vmax.f32 %v1724, 0.0
      %v3161 = vmax.f32 %v1729, 0.0
      %v3162 = vmax.f32 %v1732, 0.0
      %v3163 = vmax.f32 %v1737, 0.0
      %v3164 = vmax.f32 %v1740, 0.0
      %v3165 = vmax.f32 %v1745, 0.0
      %v3166 = vmax.f32 %v1748, 0.0
      %v3167 = vmax.f32 %v1753, 0.0
      %v3168 = vmax.f32 %v1756, 0.0
      %v3169 = vmax.f32 %v1761, 0.0
      %v3170 = vmax.f32 %v1764, 0.0
      %v3171 = vmax.f32 %v1769, 0.0
      %v3172 = vmax.f32 %v1772, 0.0
      %v3173 = vmax.f32 %v1777, 0.0
      %v3174 = vmax.f32 %v1780, 0.0
      %v3175 = vmax.f32 %v1785, 0.0
      %v3176 = vmax.f32 %v1788, 0.0
      %v3177 = vmax.f32 %v1793, 0.0
      %v3178 = vmax.f32 %v1796, 0.0
      %v3179 = vmax.f32 %v1801, 0.0
      %v3180 = vmax.f32 %v1804, 0.0
      %v3181 = vmax.f32 %v1809, 0.0
      %v3182 = vmax.f32 %v1812, 0.0
      %v3183 = vmax.f32 %v1817, 0.0
      %v3184 = vmax.f32 %v1820, 0.0
      %v3185 = vmax.f32 %v1825, 0.0
      %v3186 = vmax.f32 %v1828, 0.0
      %v3187 = vmax.f32 %v1833, 0.0
      %v3188 = vmax.f32 %v1836, 0.0
      %v3189 = vmax.f32 %v1841, 0.0
      %v3190 = vmax.f32 %v1844, 0.0
      %v3191 = vmax.f32 %v1849, 0.0
      %v3192 = vmax.f32 %v1852, 0.0
      %v3193 = vmax.f32 %v1857, 0.0
      %v3194 = vmax.f32 %v1860, 0.0
      %v3195 = vmax.f32 %v1865, 0.0
      %v3196 = vmax.f32 %v1868, 0.0
      %v3197 = vmax.f32 %v1873, 0.0
      %v3198 = vmax.f32 %v1876, 0.0
      %v3199 = vmax.f32 %v1881, 0.0
      %v3200 = vmax.f32 %v1884, 0.0
      %v3201 = vmax.f32 %v1889, 0.0
      %v3202 = vmax.f32 %v1892, 0.0
      %v3203 = vmax.f32 %v1897, 0.0
      %v3204 = vmax.f32 %v1900, 0.0
      %v3205 = vmax.f32 %v1905, 0.0
      %v3206 = vmax.f32 %v1908, 0.0
      %v3207 = vmax.f32 %v1913, 0.0
      %v3208 = vmax.f32 %v1916, 0.0
      %v3209 = vmax.f32 %v1921, 0.0
      %v3210 = vmax.f32 %v1924, 0.0
      %v3211 = vmax.f32 %v1929, 0.0
      %v3212 = vmax.f32 %v1932, 0.0
      %v3213 = vmax.f32 %v1937, 0.0
      %v3214 = vmax.f32 %v1940, 0.0
      %v3215 = vmax.f32 %v1945, 0.0
      %v3216 = vmax.f32 %v1948, 0.0
      %v3217 = vmax.f32 %v1953, 0.0
      %v3218 = vmax.f32 %v1956, 0.0
      %v3219 = vmax.f32 %v1961, 0.0
      %v3220 = vmax.f32 %v1964, 0.0
      %v3221 = vmax.f32 %v1969, 0.0
      %v3222 = vmax.f32 %v1972, 0.0
      %v3223 = vmax.f32 %v1977, 0.0
      %v3224 = vmax.f32 %v1980, 0.0
      %v3225 = vmax.f32 %v1985, 0.0
      %v3226 = vmax.f32 %v1988, 0.0
      %v3227 = vmax.f32 %v1993, 0.0
      %v3228 = vmax.f32 %v1996, 0.0
      %v3229 = vmax.f32 %v2001, 0.0
      %v3230 = vmax.f32 %v2004, 0.0
      %v3231 = vmax.f32 %v2009, 0.0
      %v3232 = vmax.f32 %v2012, 0.0
      %v3233 = vmax.f32 %v2017, 0.0
      %v3234 = vmax.f32 %v2020, 0.0
      %v3235 = vmax.f32 %v2025, 0.0
      %v3236 = vmax.f32 %v2028, 0.0
      %v3237 = vmax.f32 %v2033, 0.0
      %v3238 = vmax.f32 %v2036, 0.0
      %v3239 = vmax.f32 %v2041, 0.0
      %v3240 = vmax.f32 %v2044, 0.0
      %v3241 = vmax.f32 %v2049, 0.0
      %v3242 = vmax.f32 %v2052, 0.0
      %v3243 = vmax.f32 %v2057, 0.0
      %v3244 = vmax.f32 %v2060, 0.0
      %v3245 = vmax.f32 %v2065, 0.0
      %v3246 = vmax.f32 %v2068, 0.0
      %v3247 = vmax.f32 %v2073, 0.0
      %v3248 = vmax.f32 %v2076, 0.0
      %v3249 = vmax.f32 %v2081, 0.0
      %v3250 = vmax.f32 %v2084, 0.0
      %v3251 = vmax.f32 %v2089, 0.0
      %v3252 = vmax.f32 %v2092, 0.0
      %v3253 = vmax.f32 %v2097, 0.0
      %v3254 = vmax.f32 %v2100, 0.0
      %v3255 = vmax.f32 %v2105, 0.0
      %v3256 = vmax.f32 %v2108, 0.0
      %v3257 = vmax.f32 %v2113, 0.0
      %v3258 = vmax.f32 %v2116, 0.0
      %v3259 = vmax.f32 %v2121, 0.0
      %v3260 = vmax.f32 %v2124, 0.0
      %v3261 = vmax.f32 %v2129, 0.0
      %v3262 = vmax.f32 %v2132, 0.0
      %v3263 = vmax.f32 %v2137, 0.0
      %v3264 = vmax.f32 %v2140, 0.0
      %v3265 = vmax.f32 %v2145, 0.0
      %v3266 = vmax.f32 %v2148, 0.0
      %v3267 = vmax.f32 %v2153, 0.0
      %v3268 = vmax.f32 %v2156, 0.0
      %v3269 = vmax.f32 %v2161, 0.0
      %v3270 = vmax.f32 %v2164, 0.0
      %v3271 = vmax.f32 %v2169, 0.0
      %v3272 = vmax.f32 %v2172, 0.0
      %v3273 = vmax.f32 %v2177, 0.0
      %v3274 = vmax.f32 %v2180, 0.0
      %v3275 = vmax.f32 %v2185, 0.0
      %v3276 = vmax.f32 %v2188, 0.0
      %v3277 = vmax.f32 %v2193, 0.0
      %v3278 = vmax.f32 %v2196, 0.0
      %v3279 = vmax.f32 %v2201, 0.0
      %v3280 = vmax.f32 %v2204, 0.0
      %v3281 = vmax.f32 %v2209, 0.0
      %v3282 = vmax.f32 %v2212, 0.0
      %v3283 = vmax.f32 %v2217, 0.0
      %v3284 = vmax.f32 %v2220, 0.0
      %v3285 = vmax.f32 %v2225, 0.0
      %v3286 = vmax.f32 %v2228, 0.0
      %v3287 = vmax.f32 %v2233, 0.0
      %v3288 = vmax.f32 %v2236, 0.0
      %v3289 = vmax.f32 %v2241, 0.0
      %v3290 = vmax.f32 %v2244, 0.0
      %v3291 = vmax.f32 %v2249, 0.0
      %v3292 = vmax.f32 %v2252, 0.0
      %v3293 = vmax.f32 %v2257, 0.0
      %v3294 = vmax.f32 %v2260, 0.0
      %v3295 = vmax.f32 %v2265, 0.0
      %v3296 = vmax.f32 %v2268, 0.0
      %v3297 = vmax.f32 %v2273, 0.0
      %v3298 = vmax.f32 %v2276, 0.0
      %v3299 = vmax.f32 %v2281, 0.0
      %v3300 = vmax.f32 %v2284, 0.0
      %v3301 = vmax.f32 %v2289, 0.0
      %v3302 = vmax.f32 %v2292, 0.0
      %v3303 = vmax.f32 %v2297, 0.0
      %v3304 = vmax.f32 %v2300, 0.0
      %v3305 = vmax.f32 %v2305, 0.0
      %v3306 = vmax.f32 %v2308, 0.0
      %v3307 = vmax.f32 %v2313, 0.0
      %v3308 = vmax.f32 %v2316, 0.0
      %v3309 = vmax.f32 %v2321, 0.0
      %v3310 = vmax.f32 %v2324, 0.0
      %v3311 = vmax.f32 %v2329, 0.0
      %v3312 = vmax.f32 %v2332, 0.0
      %v3313 = vmax.f32 %v2337, 0.0
      %v3314 = vmax.f32 %v2340, 0.0
      %v3315 = vmax.f32 %v2345, 0.0
      %v3316 = vmax.f32 %v2348, 0.0
      %v3317 = vmax.f32 %v2353, 0.0
      %v3318 = vmax.f32 %v2356, 0.0
      %v3319 = vmax.f32 %v2361, 0.0
      %v3320 = vmax.f32 %v2364, 0.0
      %v3321 = vmax.f32 %v2369, 0.0
      %v3322 = vmax.f32 %v2372, 0.0
      %v3323 = vmax.f32 %v2377, 0.0
      %v3324 = vmax.f32 %v2380, 0.0
      %v3325 = vmax.f32 %v2385, 0.0
      %v3326 = vmax.f32 %v2388, 0.0
      %v3327 = vmax.f32 %v2393, 0.0
      %v3328 = vmax.f32 %v2396, 0.0
      %v3329 = vmax.f32 %v2401, 0.0
      %v3330 = vmax.f32 %v2404, 0.0
      %v3331 = vmax.f32 %v2409, 0.0
      %v3332 = vmax.f32 %v2412, 0.0
      %v3333 = vmax.f32 %v2417, 0.0
      %v3334 = vmax.f32 %v2420, 0.0
      %v3335 = vmax.f32 %v2425, 0.0
      %v3336 = vmax.f32 %v2428, 0.0
      %v3337 = vmax.f32 %v2433, 0.0
      %v3338 = vmax.f32 %v2436, 0.0
      %v3339 = vmax.f32 %v2441, 0.0
      %v3340 = vmax.f32 %v2444, 0.0
      %v3341 = vmax.f32 %v2449, 0.0
      %v3342 = vmax.f32 %v2452, 0.0
      %v3343 = vmax.f32 %v2457, 0.0
      %v3344 = vmax.f32 %v2460, 0.0
      %v3345 = vmax.f32 %v2465, 0.0
      %v3346 = vmax.f32 %v2468, 0.0
      %v3347 = vmax.f32 %v2473, 0.0
      %v3348 = vmax.f32 %v2476, 0.0
      %v3349 = vmax.f32 %v2481, 0.0
      %v3350 = vmax.f32 %v2484, 0.0
      %v3351 = vmax.f32 %v2489, 0.0
      %v3352 = vmax.f32 %v2492, 0.0
      %v3353 = vmax.f32 %v2497, 0.0
      %v3354 = vmax.f32 %v2500, 0.0
      %v3355 = vmax.f32 %v2505, 0.0
      %v3356 = vmax.f32 %v2508, 0.0
      %v3357 = vmax.f32 %v2513, 0.0
      %v3358 = vmax.f32 %v2516, 0.0
      %v3359 = vmax.f32 %v2521, 0.0
      %v3360 = vmax.f32 %v2524, 0.0
      %v3361 = vmax.f32 %v2529, 0.0
      %v3362 = vmax.f32 %v2532, 0.0
      %v3363 = vmax.f32 %v2537, 0.0
      %v3364 = vmax.f32 %v2540, 0.0
      %v3365 = vmax.f32 %v2545, 0.0
      %v3366 = vmax.f32 %v2548, 0.0
      %v3367 = vmax.f32 %v2553, 0.0
      %v3368 = vmax.f32 %v2556, 0.0
      %v3369 = vmax.f32 %v2561, 0.0
      %v3370 = vmax.f32 %v2564, 0.0
      %v3371 = vmax.f32 %v2569, 0.0
      %v3372 = vmax.f32 %v2572, 0.0
      %v3373 = vmax.f32 %v2577, 0.0
      %v3374 = vmax.f32 %v2580, 0.0
      %v3375 = vmax.f32 %v2585, 0.0
      %v3376 = vmax.f32 %v2588, 0.0
      %v3377 = vmax.f32 %v2593, 0.0
      %v3378 = vmax.f32 %v2596, 0.0
      %v3379 = vmax.f32 %v2601, 0.0
      %v3380 = vmax.f32 %v2604, 0.0
      %v3381 = vmax.f32 %v2609, 0.0
      %v3382 = vmax.f32 %v2612, 0.0
      %v3383 = vmax.f32 %v2617, 0.0
      %v3384 = vmax.f32 %v2620, 0.0
      %v3385 = vmax.f32 %v2625, 0.0
      %v3386 = vmax.f32 %v2628, 0.0
      %v3387 = vmax.f32 %v2633, 0.0
      %v3388 = vmax.f32 %v2636, 0.0
      %v3389 = vmax.f32 %v2641, 0.0
      %v3390 = vmax.f32 %v2644, 0.0
      %v3391 = vmax.f32 %v2649, 0.0
      %v3392 = vmax.f32 %v2652, 0.0
      %v3393 = vmax.f32 %v2657, 0.0
      %v3394 = vmax.f32 %v2660, 0.0
      %v3395 = vmax.f32 %v2665, 0.0
      %v3396 = vmax.f32 %v2668, 0.0
      %v3397 = vmax.f32 %v2673, 0.0
      %v3398 = vmax.f32 %v2676, 0.0
      %v3399 = vmax.f32 %v2681, 0.0
      %v3400 = vmax.f32 %v2684, 0.0
      %v3401 = vmax.f32 %v2689, 0.0
      %v3402 = vmax.f32 %v2692, 0.0
      %v3403 = vmax.f32 %v2697, 0.0
      %v3404 = vmax.f32 %v2700, 0.0
      %v3405 = vmax.f32 %v2705, 0.0
      %v3406 = vmax.f32 %v2708, 0.0
      %v3407 = vmax.f32 %v2713, 0.0
      %v3408 = vmax.f32 %v2716, 0.0
      %v3409 = vmax.f32 %v2721, 0.0
      %v3410 = vmax.f32 %v2724, 0.0
      %v3411 = vmax.f32 %v2729, 0.0
      %v3412 = vmax.f32 %v2732, 0.0
      %v3413 = vmax.f32 %v2737, 0.0
      %v3414 = vmax.f32 %v2740, 0.0
      %v3415 = vmax.f32 %v2745, 0.0
      %v3416 = vmax.f32 %v2748, 0.0
      %v3417 = vmax.f32 %v2753, 0.0
      %v3418 = vmax.f32 %v2756, 0.0
      %v3419 = vmax.f32 %v2761, 0.0
      %v3420 = vmax.f32 %v2764, 0.0
      %v3421 = vmax.f32 %v2769, 0.0
      %v3422 = vmax.f32 %v2772, 0.0
      %v3423 = vmax.f32 %v2777, 0.0
      %v3424 = vmax.f32 %v2780, 0.0
      %v3425 = vmax.f32 %v2785, 0.0
      %v3426 = vmax.f32 %v2788, 0.0
      %v3427 = vmax.f32 %v2793, 0.0
      %v3428 = vmax.f32 %v2796, 0.0
      %v3429 = vmax.f32 %v2801, 0.0
      %v3430 = vmax.f32 %v2804, 0.0
      %v3431 = vmax.f32 %v2809, 0.0
      %v3432 = vmax.f32 %v2812, 0.0
      %v3433 = vmax.f32 %v2817, 0.0
      %v3434 = vmax.f32 %v2820, 0.0
      %v3435 = vmax.f32 %v2825, 0.0
      %v3436 = vmax.f32 %v2828, 0.0
      %v3437 = vmax.f32 %v2833, 0.0
      %v3438 = vmax.f32 %v2836, 0.0
      %v3439 = vmax.f32 %v2841, 0.0
      %v3440 = vmax.f32 %v2844, 0.0
      %v3441 = vmax.f32 %v2849, 0.0
      %v3442 = vmax.f32 %v2852, 0.0
      %v3443 = vmax.f32 %v2857, 0.0
      %v3444 = vmax.f32 %v2860, 0.0
      %v3445 = vmax.f32 %v2865, 0.0
      %v3446 = vmax.f32 %v2868, 0.0
      %v3447 = vmax.f32 %v2873, 0.0
      %v3448 = vmax.f32 %v2876, 0.0
      %v3449 = vmax.f32 %v2881, 0.0
      %v3450 = vmax.f32 %v2884, 0.0
      %v3451 = vmax.f32 %v2889, 0.0
      %v3452 = vmax.f32 %v2892, 0.0
      %v3453 = vmax.f32 %v2897, 0.0
      %v3454 = vmax.f32 %v2900, 0.0
      %v3455 = vmax.f32 %v2905, 0.0
      %v3456 = vmax.f32 %v2908, 0.0
      %v3457 = vmax.f32 %v2913, 0.0
      %v3458 = vmax.f32 %v2916, 0.0
      %v3459 = vmax.f32 %v2921, 0.0
      %v3460 = vmax.f32 %v2924, 0.0
      %v3461 = vmax.f32 %v2929, 0.0
      %v3462 = vmax.f32 %v2932, 0.0
      %v3463 = vmax.f32 %v2937, 0.0
      %v3464 = vmax.f32 %v2940, 0.0
      %v3465 = vmax.f32 %v2945, 0.0
      %v3466 = vmax.f32 %v2948, 0.0
      %v3467 = vmax.f32 %v2953, 0.0
      %v3468 = vmax.f32 %v2956, 0.0
      %v3469 = vmax.f32 %v2961, 0.0
      %v3470 = vmax.f32 %v2964, 0.0
      %v3471 = vmax.f32 %v2969, 0.0
      %v3472 = vmax.f32 %v2972, 0.0
      %v3473 = vmax.f32 %v2977, 0.0
      %v3474 = vmax.f32 %v2980, 0.0
      %v3475 = vmax.f32 %v2985, 0.0
      %v3476 = vmax.f32 %v2988, 0.0
      %v3477 = vmax.f32 %v2993, 0.0
      %v3478 = vmax.f32 %v2996, 0.0
      %v3479 = vmax.f32 %v3001, 0.0
      %v3480 = vmax.f32 %v3004, 0.0
      %v3481 = vmax.f32 %v3009, 0.0
      %v3482 = vmax.f32 %v3012, 0.0
      %v3483 = vmax.f32 %v3017, 0.0
      %v3484 = vmax.f32 %v3020, 0.0
      %v3485 = vmax.f32 %v3025, 0.0
      %v3486 = vmax.f32 %v3028, 0.0
      %v3487 = vmax.f32 %v3033, 0.0
      %v3488 = vmax.f32 %v3036, 0.0
      %v3489 = vmax.f32 %v3041, 0.0
      %v3490 = vmax.f32 %v3044, 0.0
      %v3491 = vmax.f32 %v3049, 0.0
      %v3492 = vmax.f32 %v3052, 0.0
      %v3493 = vmax.f32 %v3057, 0.0
      %v3494 = vmax.f32 %v3060, 0.0
      %v3495 = vmax.f32 %v3065, 0.0
      %v3496 = vmax.f32 %v3068, 0.0
      %v3497 = vmax.f32 %v3073, 0.0
      %v3498 = vmax.f32 %v3076, 0.0
      %v3499 = vmax.f32 %v3081, 0.0
      %v3500 = vmax.f32 %v3084, 0.0
      %v3501 = vmax.f32 %v3089, 0.0
      %v3502 = vmax.f32 %v3092, 0.0
      %v3503 = vmax.f32 %v3097, 0.0
      %v3504 = vmax.f32 %v3100, 0.0
      %v3505 = vmax.f32 %v3105, 0.0
      %v3506 = vmax.f32 %v3108, 0.0
      %v3507 = vmax.f32 %v3113, 0.0
      %v3508 = vmax.f32 %v3116, 0.0
      %v3509 = vmax.f32 %v3121, 0.0
      %v3510 = vmax.f32 %v3124, 0.0
      %v3511 = vmax.f32 %v3129, 0.0
      %v3512 = vmax.f32 %v3132, 0.0
      %v3513 = vmax.f32 %v3137, 0.0
      %v3514 = vmax.f32 %v3140, 0.0
      %v3515 = vmax.f32 %v3145, 0.0
      %v3516 = vmax.f32 %v3148, 0.0
      %v3517 = vmax.f32 %v3153, 0.0
      %v3518 = vmax.f32 %v3156, 0.0
      %v3519 = vrot.slane %v3159, 4
      %v3520 = vmax.f32 %v3159, %v3519
      %v3521 = vrot.slane %v3520, 2
      %v3522 = vmax.f32 %v3520, %v3521
      %v3523 = vrot.slane %v3522, 1
      %v3524 = vmax.f32 %v3522, %v3523
      %v3525 = vrot.slane %v3160, 4
      %v3526 = vmax.f32 %v3160, %v3525
      %v3527 = vrot.slane %v3526, 2
      %v3528 = vmax.f32 %v3526, %v3527
      %v3529 = vrot.slane %v3528, 1
      %v3530 = vmax.f32 %v3528, %v3529
      %v3531 = vrot.slane %v3161, 4
      %v3532 = vmax.f32 %v3161, %v3531
      %v3533 = vrot.slane %v3532, 2
      %v3534 = vmax.f32 %v3532, %v3533
      %v3535 = vrot.slane %v3534, 1
      %v3536 = vmax.f32 %v3534, %v3535
      %v3537 = vrot.slane %v3162, 4
      %v3538 = vmax.f32 %v3162, %v3537
      %v3539 = vrot.slane %v3538, 2
      %v3540 = vmax.f32 %v3538, %v3539
      %v3541 = vrot.slane %v3540, 1
      %v3542 = vmax.f32 %v3540, %v3541
      %v3543 = vrot.slane %v3163, 4
      %v3544 = vmax.f32 %v3163, %v3543
      %v3545 = vrot.slane %v3544, 2
      %v3546 = vmax.f32 %v3544, %v3545
      %v3547 = vrot.slane %v3546, 1
      %v3548 = vmax.f32 %v3546, %v3547
      %v3549 = vrot.slane %v3164, 4
      %v3550 = vmax.f32 %v3164, %v3549
      %v3551 = vrot.slane %v3550, 2
      %v3552 = vmax.f32 %v3550, %v3551
      %v3553 = vrot.slane %v3552, 1
      %v3554 = vmax.f32 %v3552, %v3553
      %v3555 = vrot.slane %v3165, 4
      %v3556 = vmax.f32 %v3165, %v3555
      %v3557 = vrot.slane %v3556, 2
      %v3558 = vmax.f32 %v3556, %v3557
      %v3559 = vrot.slane %v3558, 1
      %v3560 = vmax.f32 %v3558, %v3559
      %v3561 = vrot.slane %v3166, 4
      %v3562 = vmax.f32 %v3166, %v3561
      %v3563 = vrot.slane %v3562, 2
      %v3564 = vmax.f32 %v3562, %v3563
      %v3565 = vrot.slane %v3564, 1
      %v3566 = vmax.f32 %v3564, %v3565
      %v3567 = vrot.slane %v3167, 4
      %v3568 = vmax.f32 %v3167, %v3567
      %v3569 = vrot.slane %v3568, 2
      %v3570 = vmax.f32 %v3568, %v3569
      %v3571 = vrot.slane %v3570, 1
      %v3572 = vmax.f32 %v3570, %v3571
      %v3573 = vrot.slane %v3168, 4
      %v3574 = vmax.f32 %v3168, %v3573
      %v3575 = vrot.slane %v3574, 2
      %v3576 = vmax.f32 %v3574, %v3575
      %v3577 = vrot.slane %v3576, 1
      %v3578 = vmax.f32 %v3576, %v3577
      %v3579 = vrot.slane %v3169, 4
      %v3580 = vmax.f32 %v3169, %v3579
      %v3581 = vrot.slane %v3580, 2
      %v3582 = vmax.f32 %v3580, %v3581
      %v3583 = vrot.slane %v3582, 1
      %v3584 = vmax.f32 %v3582, %v3583
      %v3585 = vrot.slane %v3170, 4
      %v3586 = vmax.f32 %v3170, %v3585
      %v3587 = vrot.slane %v3586, 2
      %v3588 = vmax.f32 %v3586, %v3587
      %v3589 = vrot.slane %v3588, 1
      %v3590 = vmax.f32 %v3588, %v3589
      %v3591 = vrot.slane %v3171, 4
      %v3592 = vmax.f32 %v3171, %v3591
      %v3593 = vrot.slane %v3592, 2
      %v3594 = vmax.f32 %v3592, %v3593
      %v3595 = vrot.slane %v3594, 1
      %v3596 = vmax.f32 %v3594, %v3595
      %v3597 = vrot.slane %v3172, 4
      %v3598 = vmax.f32 %v3172, %v3597
      %v3599 = vrot.slane %v3598, 2
      %v3600 = vmax.f32 %v3598, %v3599
      %v3601 = vrot.slane %v3600, 1
      %v3602 = vmax.f32 %v3600, %v3601
      %v3603 = vrot.slane %v3173, 4
      %v3604 = vmax.f32 %v3173, %v3603
      %v3605 = vrot.slane %v3604, 2
      %v3606 = vmax.f32 %v3604, %v3605
      %v3607 = vrot.slane %v3606, 1
      %v3608 = vmax.f32 %v3606, %v3607
      %v3609 = vrot.slane %v3174, 4
      %v3610 = vmax.f32 %v3174, %v3609
      %v3611 = vrot.slane %v3610, 2
      %v3612 = vmax.f32 %v3610, %v3611
      %v3613 = vrot.slane %v3612, 1
      %v3614 = vmax.f32 %v3612, %v3613
      %v3615 = vrot.slane %v3175, 4
      %v3616 = vmax.f32 %v3175, %v3615
      %v3617 = vrot.slane %v3616, 2
      %v3618 = vmax.f32 %v3616, %v3617
      %v3619 = vrot.slane %v3618, 1
      %v3620 = vmax.f32 %v3618, %v3619
      %v3621 = vrot.slane %v3176, 4
      %v3622 = vmax.f32 %v3176, %v3621
      %v3623 = vrot.slane %v3622, 2
      %v3624 = vmax.f32 %v3622, %v3623
      %v3625 = vrot.slane %v3624, 1
      %v3626 = vmax.f32 %v3624, %v3625
      %v3627 = vrot.slane %v3177, 4
      %v3628 = vmax.f32 %v3177, %v3627
      %v3629 = vrot.slane %v3628, 2
      %v3630 = vmax.f32 %v3628, %v3629
      %v3631 = vrot.slane %v3630, 1
      %v3632 = vmax.f32 %v3630, %v3631
      %v3633 = vrot.slane %v3178, 4
      %v3634 = vmax.f32 %v3178, %v3633
      %v3635 = vrot.slane %v3634, 2
      %v3636 = vmax.f32 %v3634, %v3635
      %v3637 = vrot.slane %v3636, 1
      %v3638 = vmax.f32 %v3636, %v3637
      %v3639 = vrot.slane %v3179, 4
      %v3640 = vmax.f32 %v3179, %v3639
      %v3641 = vrot.slane %v3640, 2
      %v3642 = vmax.f32 %v3640, %v3641
      %v3643 = vrot.slane %v3642, 1
      %v3644 = vmax.f32 %v3642, %v3643
      %v3645 = vrot.slane %v3180, 4
      %v3646 = vmax.f32 %v3180, %v3645
      %v3647 = vrot.slane %v3646, 2
      %v3648 = vmax.f32 %v3646, %v3647
      %v3649 = vrot.slane %v3648, 1
      %v3650 = vmax.f32 %v3648, %v3649
      %v3651 = vrot.slane %v3181, 4
      %v3652 = vmax.f32 %v3181, %v3651
      %v3653 = vrot.slane %v3652, 2
      %v3654 = vmax.f32 %v3652, %v3653
      %v3655 = vrot.slane %v3654, 1
      %v3656 = vmax.f32 %v3654, %v3655
      %v3657 = vrot.slane %v3182, 4
      %v3658 = vmax.f32 %v3182, %v3657
      %v3659 = vrot.slane %v3658, 2
      %v3660 = vmax.f32 %v3658, %v3659
      %v3661 = vrot.slane %v3660, 1
      %v3662 = vmax.f32 %v3660, %v3661
      %v3663 = vrot.slane %v3183, 4
      %v3664 = vmax.f32 %v3183, %v3663
      %v3665 = vrot.slane %v3664, 2
      %v3666 = vmax.f32 %v3664, %v3665
      %v3667 = vrot.slane %v3666, 1
      %v3668 = vmax.f32 %v3666, %v3667
      %v3669 = vrot.slane %v3184, 4
      %v3670 = vmax.f32 %v3184, %v3669
      %v3671 = vrot.slane %v3670, 2
      %v3672 = vmax.f32 %v3670, %v3671
      %v3673 = vrot.slane %v3672, 1
      %v3674 = vmax.f32 %v3672, %v3673
      %v3675 = vrot.slane %v3185, 4
      %v3676 = vmax.f32 %v3185, %v3675
      %v3677 = vrot.slane %v3676, 2
      %v3678 = vmax.f32 %v3676, %v3677
      %v3679 = vrot.slane %v3678, 1
      %v3680 = vmax.f32 %v3678, %v3679
      %v3681 = vrot.slane %v3186, 4
      %v3682 = vmax.f32 %v3186, %v3681
      %v3683 = vrot.slane %v3682, 2
      %v3684 = vmax.f32 %v3682, %v3683
      %v3685 = vrot.slane %v3684, 1
      %v3686 = vmax.f32 %v3684, %v3685
      %v3687 = vrot.slane %v3187, 4
      %v3688 = vmax.f32 %v3187, %v3687
      %v3689 = vrot.slane %v3688, 2
      %v3690 = vmax.f32 %v3688, %v3689
      %v3691 = vrot.slane %v3690, 1
      %v3692 = vmax.f32 %v3690, %v3691
      %v3693 = vrot.slane %v3188, 4
      %v3694 = vmax.f32 %v3188, %v3693
      %v3695 = vrot.slane %v3694, 2
      %v3696 = vmax.f32 %v3694, %v3695
      %v3697 = vrot.slane %v3696, 1
      %v3698 = vmax.f32 %v3696, %v3697
      %v3699 = vrot.slane %v3189, 4
      %v3700 = vmax.f32 %v3189, %v3699
      %v3701 = vrot.slane %v3700, 2
      %v3702 = vmax.f32 %v3700, %v3701
      %v3703 = vrot.slane %v3702, 1
      %v3704 = vmax.f32 %v3702, %v3703
      %v3705 = vrot.slane %v3190, 4
      %v3706 = vmax.f32 %v3190, %v3705
      %v3707 = vrot.slane %v3706, 2
      %v3708 = vmax.f32 %v3706, %v3707
      %v3709 = vrot.slane %v3708, 1
      %v3710 = vmax.f32 %v3708, %v3709
      %v3711 = vrot.slane %v3191, 4
      %v3712 = vmax.f32 %v3191, %v3711
      %v3713 = vrot.slane %v3712, 2
      %v3714 = vmax.f32 %v3712, %v3713
      %v3715 = vrot.slane %v3714, 1
      %v3716 = vmax.f32 %v3714, %v3715
      %v3717 = vrot.slane %v3192, 4
      %v3718 = vmax.f32 %v3192, %v3717
      %v3719 = vrot.slane %v3718, 2
      %v3720 = vmax.f32 %v3718, %v3719
      %v3721 = vrot.slane %v3720, 1
      %v3722 = vmax.f32 %v3720, %v3721
      %v3723 = vrot.slane %v3193, 4
      %v3724 = vmax.f32 %v3193, %v3723
      %v3725 = vrot.slane %v3724, 2
      %v3726 = vmax.f32 %v3724, %v3725
      %v3727 = vrot.slane %v3726, 1
      %v3728 = vmax.f32 %v3726, %v3727
      %v3729 = vrot.slane %v3194, 4
      %v3730 = vmax.f32 %v3194, %v3729
      %v3731 = vrot.slane %v3730, 2
      %v3732 = vmax.f32 %v3730, %v3731
      %v3733 = vrot.slane %v3732, 1
      %v3734 = vmax.f32 %v3732, %v3733
      %v3735 = vrot.slane %v3195, 4
      %v3736 = vmax.f32 %v3195, %v3735
      %v3737 = vrot.slane %v3736, 2
      %v3738 = vmax.f32 %v3736, %v3737
      %v3739 = vrot.slane %v3738, 1
      %v3740 = vmax.f32 %v3738, %v3739
      %v3741 = vrot.slane %v3196, 4
      %v3742 = vmax.f32 %v3196, %v3741
      %v3743 = vrot.slane %v3742, 2
      %v3744 = vmax.f32 %v3742, %v3743
      %v3745 = vrot.slane %v3744, 1
      %v3746 = vmax.f32 %v3744, %v3745
      %v3747 = vrot.slane %v3197, 4
      %v3748 = vmax.f32 %v3197, %v3747
      %v3749 = vrot.slane %v3748, 2
      %v3750 = vmax.f32 %v3748, %v3749
      %v3751 = vrot.slane %v3750, 1
      %v3752 = vmax.f32 %v3750, %v3751
      %v3753 = vrot.slane %v3198, 4
      %v3754 = vmax.f32 %v3198, %v3753
      %v3755 = vrot.slane %v3754, 2
      %v3756 = vmax.f32 %v3754, %v3755
      %v3757 = vrot.slane %v3756, 1
      %v3758 = vmax.f32 %v3756, %v3757
      %v3759 = vrot.slane %v3199, 4
      %v3760 = vmax.f32 %v3199, %v3759
      %v3761 = vrot.slane %v3760, 2
      %v3762 = vmax.f32 %v3760, %v3761
      %v3763 = vrot.slane %v3762, 1
      %v3764 = vmax.f32 %v3762, %v3763
      %v3765 = vrot.slane %v3200, 4
      %v3766 = vmax.f32 %v3200, %v3765
      %v3767 = vrot.slane %v3766, 2
      %v3768 = vmax.f32 %v3766, %v3767
      %v3769 = vrot.slane %v3768, 1
      %v3770 = vmax.f32 %v3768, %v3769
      %v3771 = vrot.slane %v3201, 4
      %v3772 = vmax.f32 %v3201, %v3771
      %v3773 = vrot.slane %v3772, 2
      %v3774 = vmax.f32 %v3772, %v3773
      %v3775 = vrot.slane %v3774, 1
      %v3776 = vmax.f32 %v3774, %v3775
      %v3777 = vrot.slane %v3202, 4
      %v3778 = vmax.f32 %v3202, %v3777
      %v3779 = vrot.slane %v3778, 2
      %v3780 = vmax.f32 %v3778, %v3779
      %v3781 = vrot.slane %v3780, 1
      %v3782 = vmax.f32 %v3780, %v3781
      %v3783 = vrot.slane %v3203, 4
      %v3784 = vmax.f32 %v3203, %v3783
      %v3785 = vrot.slane %v3784, 2
      %v3786 = vmax.f32 %v3784, %v3785
      %v3787 = vrot.slane %v3786, 1
      %v3788 = vmax.f32 %v3786, %v3787
      %v3789 = vrot.slane %v3204, 4
      %v3790 = vmax.f32 %v3204, %v3789
      %v3791 = vrot.slane %v3790, 2
      %v3792 = vmax.f32 %v3790, %v3791
      %v3793 = vrot.slane %v3792, 1
      %v3794 = vmax.f32 %v3792, %v3793
      %v3795 = vrot.slane %v3205, 4
      %v3796 = vmax.f32 %v3205, %v3795
      %v3797 = vrot.slane %v3796, 2
      %v3798 = vmax.f32 %v3796, %v3797
      %v3799 = vrot.slane %v3798, 1
      %v3800 = vmax.f32 %v3798, %v3799
      %v3801 = vrot.slane %v3206, 4
      %v3802 = vmax.f32 %v3206, %v3801
      %v3803 = vrot.slane %v3802, 2
      %v3804 = vmax.f32 %v3802, %v3803
      %v3805 = vrot.slane %v3804, 1
      %v3806 = vmax.f32 %v3804, %v3805
      %v3807 = vrot.slane %v3207, 4
      %v3808 = vmax.f32 %v3207, %v3807
      %v3809 = vrot.slane %v3808, 2
      %v3810 = vmax.f32 %v3808, %v3809
      %v3811 = vrot.slane %v3810, 1
      %v3812 = vmax.f32 %v3810, %v3811
      %v3813 = vrot.slane %v3208, 4
      %v3814 = vmax.f32 %v3208, %v3813
      %v3815 = vrot.slane %v3814, 2
      %v3816 = vmax.f32 %v3814, %v3815
      %v3817 = vrot.slane %v3816, 1
      %v3818 = vmax.f32 %v3816, %v3817
      %v3819 = vrot.slane %v3209, 4
      %v3820 = vmax.f32 %v3209, %v3819
      %v3821 = vrot.slane %v3820, 2
      %v3822 = vmax.f32 %v3820, %v3821
      %v3823 = vrot.slane %v3822, 1
      %v3824 = vmax.f32 %v3822, %v3823
      %v3825 = vrot.slane %v3210, 4
      %v3826 = vmax.f32 %v3210, %v3825
      %v3827 = vrot.slane %v3826, 2
      %v3828 = vmax.f32 %v3826, %v3827
      %v3829 = vrot.slane %v3828, 1
      %v3830 = vmax.f32 %v3828, %v3829
      %v3831 = vrot.slane %v3211, 4
      %v3832 = vmax.f32 %v3211, %v3831
      %v3833 = vrot.slane %v3832, 2
      %v3834 = vmax.f32 %v3832, %v3833
      %v3835 = vrot.slane %v3834, 1
      %v3836 = vmax.f32 %v3834, %v3835
      %v3837 = vrot.slane %v3212, 4
      %v3838 = vmax.f32 %v3212, %v3837
      %v3839 = vrot.slane %v3838, 2
      %v3840 = vmax.f32 %v3838, %v3839
      %v3841 = vrot.slane %v3840, 1
      %v3842 = vmax.f32 %v3840, %v3841
      %v3843 = vrot.slane %v3213, 4
      %v3844 = vmax.f32 %v3213, %v3843
      %v3845 = vrot.slane %v3844, 2
      %v3846 = vmax.f32 %v3844, %v3845
      %v3847 = vrot.slane %v3846, 1
      %v3848 = vmax.f32 %v3846, %v3847
      %v3849 = vrot.slane %v3214, 4
      %v3850 = vmax.f32 %v3214, %v3849
      %v3851 = vrot.slane %v3850, 2
      %v3852 = vmax.f32 %v3850, %v3851
      %v3853 = vrot.slane %v3852, 1
      %v3854 = vmax.f32 %v3852, %v3853
      %v3855 = vrot.slane %v3215, 4
      %v3856 = vmax.f32 %v3215, %v3855
      %v3857 = vrot.slane %v3856, 2
      %v3858 = vmax.f32 %v3856, %v3857
      %v3859 = vrot.slane %v3858, 1
      %v3860 = vmax.f32 %v3858, %v3859
      %v3861 = vrot.slane %v3216, 4
      %v3862 = vmax.f32 %v3216, %v3861
      %v3863 = vrot.slane %v3862, 2
      %v3864 = vmax.f32 %v3862, %v3863
      %v3865 = vrot.slane %v3864, 1
      %v3866 = vmax.f32 %v3864, %v3865
      %v3867 = vrot.slane %v3217, 4
      %v3868 = vmax.f32 %v3217, %v3867
      %v3869 = vrot.slane %v3868, 2
      %v3870 = vmax.f32 %v3868, %v3869
      %v3871 = vrot.slane %v3870, 1
      %v3872 = vmax.f32 %v3870, %v3871
      %v3873 = vrot.slane %v3218, 4
      %v3874 = vmax.f32 %v3218, %v3873
      %v3875 = vrot.slane %v3874, 2
      %v3876 = vmax.f32 %v3874, %v3875
      %v3877 = vrot.slane %v3876, 1
      %v3878 = vmax.f32 %v3876, %v3877
      %v3879 = vrot.slane %v3219, 4
      %v3880 = vmax.f32 %v3219, %v3879
      %v3881 = vrot.slane %v3880, 2
      %v3882 = vmax.f32 %v3880, %v3881
      %v3883 = vrot.slane %v3882, 1
      %v3884 = vmax.f32 %v3882, %v3883
      %v3885 = vrot.slane %v3220, 4
      %v3886 = vmax.f32 %v3220, %v3885
      %v3887 = vrot.slane %v3886, 2
      %v3888 = vmax.f32 %v3886, %v3887
      %v3889 = vrot.slane %v3888, 1
      %v3890 = vmax.f32 %v3888, %v3889
      %v3891 = vrot.slane %v3221, 4
      %v3892 = vmax.f32 %v3221, %v3891
      %v3893 = vrot.slane %v3892, 2
      %v3894 = vmax.f32 %v3892, %v3893
      %v3895 = vrot.slane %v3894, 1
      %v3896 = vmax.f32 %v3894, %v3895
      %v3897 = vrot.slane %v3222, 4
      %v3898 = vmax.f32 %v3222, %v3897
      %v3899 = vrot.slane %v3898, 2
      %v3900 = vmax.f32 %v3898, %v3899
      %v3901 = vrot.slane %v3900, 1
      %v3902 = vmax.f32 %v3900, %v3901
      %v3903 = vrot.slane %v3223, 4
      %v3904 = vmax.f32 %v3223, %v3903
      %v3905 = vrot.slane %v3904, 2
      %v3906 = vmax.f32 %v3904, %v3905
      %v3907 = vrot.slane %v3906, 1
      %v3908 = vmax.f32 %v3906, %v3907
      %v3909 = vrot.slane %v3224, 4
      %v3910 = vmax.f32 %v3224, %v3909
      %v3911 = vrot.slane %v3910, 2
      %v3912 = vmax.f32 %v3910, %v3911
      %v3913 = vrot.slane %v3912, 1
      %v3914 = vmax.f32 %v3912, %v3913
      %v3915 = vrot.slane %v3225, 4
      %v3916 = vmax.f32 %v3225, %v3915
      %v3917 = vrot.slane %v3916, 2
      %v3918 = vmax.f32 %v3916, %v3917
      %v3919 = vrot.slane %v3918, 1
      %v3920 = vmax.f32 %v3918, %v3919
      %v3921 = vrot.slane %v3226, 4
      %v3922 = vmax.f32 %v3226, %v3921
      %v3923 = vrot.slane %v3922, 2
      %v3924 = vmax.f32 %v3922, %v3923
      %v3925 = vrot.slane %v3924, 1
      %v3926 = vmax.f32 %v3924, %v3925
      %v3927 = vrot.slane %v3227, 4
      %v3928 = vmax.f32 %v3227, %v3927
      %v3929 = vrot.slane %v3928, 2
      %v3930 = vmax.f32 %v3928, %v3929
      %v3931 = vrot.slane %v3930, 1
      %v3932 = vmax.f32 %v3930, %v3931
      %v3933 = vrot.slane %v3228, 4
      %v3934 = vmax.f32 %v3228, %v3933
      %v3935 = vrot.slane %v3934, 2
      %v3936 = vmax.f32 %v3934, %v3935
      %v3937 = vrot.slane %v3936, 1
      %v3938 = vmax.f32 %v3936, %v3937
      %v3939 = vrot.slane %v3229, 4
      %v3940 = vmax.f32 %v3229, %v3939
      %v3941 = vrot.slane %v3940, 2
      %v3942 = vmax.f32 %v3940, %v3941
      %v3943 = vrot.slane %v3942, 1
      %v3944 = vmax.f32 %v3942, %v3943
      %v3945 = vrot.slane %v3230, 4
      %v3946 = vmax.f32 %v3230, %v3945
      %v3947 = vrot.slane %v3946, 2
      %v3948 = vmax.f32 %v3946, %v3947
      %v3949 = vrot.slane %v3948, 1
      %v3950 = vmax.f32 %v3948, %v3949
      %v3951 = vrot.slane %v3231, 4
      %v3952 = vmax.f32 %v3231, %v3951
      %v3953 = vrot.slane %v3952, 2
      %v3954 = vmax.f32 %v3952, %v3953
      %v3955 = vrot.slane %v3954, 1
      %v3956 = vmax.f32 %v3954, %v3955
      %v3957 = vrot.slane %v3232, 4
      %v3958 = vmax.f32 %v3232, %v3957
      %v3959 = vrot.slane %v3958, 2
      %v3960 = vmax.f32 %v3958, %v3959
      %v3961 = vrot.slane %v3960, 1
      %v3962 = vmax.f32 %v3960, %v3961
      %v3963 = vrot.slane %v3233, 4
      %v3964 = vmax.f32 %v3233, %v3963
      %v3965 = vrot.slane %v3964, 2
      %v3966 = vmax.f32 %v3964, %v3965
      %v3967 = vrot.slane %v3966, 1
      %v3968 = vmax.f32 %v3966, %v3967
      %v3969 = vrot.slane %v3234, 4
      %v3970 = vmax.f32 %v3234, %v3969
      %v3971 = vrot.slane %v3970, 2
      %v3972 = vmax.f32 %v3970, %v3971
      %v3973 = vrot.slane %v3972, 1
      %v3974 = vmax.f32 %v3972, %v3973
      %v3975 = vrot.slane %v3235, 4
      %v3976 = vmax.f32 %v3235, %v3975
      %v3977 = vrot.slane %v3976, 2
      %v3978 = vmax.f32 %v3976, %v3977
      %v3979 = vrot.slane %v3978, 1
      %v3980 = vmax.f32 %v3978, %v3979
      %v3981 = vrot.slane %v3236, 4
      %v3982 = vmax.f32 %v3236, %v3981
      %v3983 = vrot.slane %v3982, 2
      %v3984 = vmax.f32 %v3982, %v3983
      %v3985 = vrot.slane %v3984, 1
      %v3986 = vmax.f32 %v3984, %v3985
      %v3987 = vrot.slane %v3237, 4
      %v3988 = vmax.f32 %v3237, %v3987
      %v3989 = vrot.slane %v3988, 2
      %v3990 = vmax.f32 %v3988, %v3989
      %v3991 = vrot.slane %v3990, 1
      %v3992 = vmax.f32 %v3990, %v3991
      %v3993 = vrot.slane %v3238, 4
      %v3994 = vmax.f32 %v3238, %v3993
      %v3995 = vrot.slane %v3994, 2
      %v3996 = vmax.f32 %v3994, %v3995
      %v3997 = vrot.slane %v3996, 1
      %v3998 = vmax.f32 %v3996, %v3997
      %v3999 = vrot.slane %v3239, 4
      %v4000 = vmax.f32 %v3239, %v3999
      %v4001 = vrot.slane %v4000, 2
      %v4002 = vmax.f32 %v4000, %v4001
      %v4003 = vrot.slane %v4002, 1
      %v4004 = vmax.f32 %v4002, %v4003
      %v4005 = vrot.slane %v3240, 4
      %v4006 = vmax.f32 %v3240, %v4005
      %v4007 = vrot.slane %v4006, 2
      %v4008 = vmax.f32 %v4006, %v4007
      %v4009 = vrot.slane %v4008, 1
      %v4010 = vmax.f32 %v4008, %v4009
      %v4011 = vrot.slane %v3241, 4
      %v4012 = vmax.f32 %v3241, %v4011
      %v4013 = vrot.slane %v4012, 2
      %v4014 = vmax.f32 %v4012, %v4013
      %v4015 = vrot.slane %v4014, 1
      %v4016 = vmax.f32 %v4014, %v4015
      %v4017 = vrot.slane %v3242, 4
      %v4018 = vmax.f32 %v3242, %v4017
      %v4019 = vrot.slane %v4018, 2
      %v4020 = vmax.f32 %v4018, %v4019
      %v4021 = vrot.slane %v4020, 1
      %v4022 = vmax.f32 %v4020, %v4021
      %v4023 = vrot.slane %v3243, 4
      %v4024 = vmax.f32 %v3243, %v4023
      %v4025 = vrot.slane %v4024, 2
      %v4026 = vmax.f32 %v4024, %v4025
      %v4027 = vrot.slane %v4026, 1
      %v4028 = vmax.f32 %v4026, %v4027
      %v4029 = vrot.slane %v3244, 4
      %v4030 = vmax.f32 %v3244, %v4029
      %v4031 = vrot.slane %v4030, 2
      %v4032 = vmax.f32 %v4030, %v4031
      %v4033 = vrot.slane %v4032, 1
      %v4034 = vmax.f32 %v4032, %v4033
      %v4035 = vrot.slane %v3245, 4
      %v4036 = vmax.f32 %v3245, %v4035
      %v4037 = vrot.slane %v4036, 2
      %v4038 = vmax.f32 %v4036, %v4037
      %v4039 = vrot.slane %v4038, 1
      %v4040 = vmax.f32 %v4038, %v4039
      %v4041 = vrot.slane %v3246, 4
      %v4042 = vmax.f32 %v3246, %v4041
      %v4043 = vrot.slane %v4042, 2
      %v4044 = vmax.f32 %v4042, %v4043
      %v4045 = vrot.slane %v4044, 1
      %v4046 = vmax.f32 %v4044, %v4045
      %v4047 = vrot.slane %v3247, 4
      %v4048 = vmax.f32 %v3247, %v4047
      %v4049 = vrot.slane %v4048, 2
      %v4050 = vmax.f32 %v4048, %v4049
      %v4051 = vrot.slane %v4050, 1
      %v4052 = vmax.f32 %v4050, %v4051
      %v4053 = vrot.slane %v3248, 4
      %v4054 = vmax.f32 %v3248, %v4053
      %v4055 = vrot.slane %v4054, 2
      %v4056 = vmax.f32 %v4054, %v4055
      %v4057 = vrot.slane %v4056, 1
      %v4058 = vmax.f32 %v4056, %v4057
      %v4059 = vrot.slane %v3249, 4
      %v4060 = vmax.f32 %v3249, %v4059
      %v4061 = vrot.slane %v4060, 2
      %v4062 = vmax.f32 %v4060, %v4061
      %v4063 = vrot.slane %v4062, 1
      %v4064 = vmax.f32 %v4062, %v4063
      %v4065 = vrot.slane %v3250, 4
      %v4066 = vmax.f32 %v3250, %v4065
      %v4067 = vrot.slane %v4066, 2
      %v4068 = vmax.f32 %v4066, %v4067
      %v4069 = vrot.slane %v4068, 1
      %v4070 = vmax.f32 %v4068, %v4069
      %v4071 = vrot.slane %v3251, 4
      %v4072 = vmax.f32 %v3251, %v4071
      %v4073 = vrot.slane %v4072, 2
      %v4074 = vmax.f32 %v4072, %v4073
      %v4075 = vrot.slane %v4074, 1
      %v4076 = vmax.f32 %v4074, %v4075
      %v4077 = vrot.slane %v3252, 4
      %v4078 = vmax.f32 %v3252, %v4077
      %v4079 = vrot.slane %v4078, 2
      %v4080 = vmax.f32 %v4078, %v4079
      %v4081 = vrot.slane %v4080, 1
      %v4082 = vmax.f32 %v4080, %v4081
      %v4083 = vrot.slane %v3253, 4
      %v4084 = vmax.f32 %v3253, %v4083
      %v4085 = vrot.slane %v4084, 2
      %v4086 = vmax.f32 %v4084, %v4085
      %v4087 = vrot.slane %v4086, 1
      %v4088 = vmax.f32 %v4086, %v4087
      %v4089 = vrot.slane %v3254, 4
      %v4090 = vmax.f32 %v3254, %v4089
      %v4091 = vrot.slane %v4090, 2
      %v4092 = vmax.f32 %v4090, %v4091
      %v4093 = vrot.slane %v4092, 1
      %v4094 = vmax.f32 %v4092, %v4093
      %v4095 = vrot.slane %v3255, 4
      %v4096 = vmax.f32 %v3255, %v4095
      %v4097 = vrot.slane %v4096, 2
      %v4098 = vmax.f32 %v4096, %v4097
      %v4099 = vrot.slane %v4098, 1
      %v4100 = vmax.f32 %v4098, %v4099
      %v4101 = vrot.slane %v3256, 4
      %v4102 = vmax.f32 %v3256, %v4101
      %v4103 = vrot.slane %v4102, 2
      %v4104 = vmax.f32 %v4102, %v4103
      %v4105 = vrot.slane %v4104, 1
      %v4106 = vmax.f32 %v4104, %v4105
      %v4107 = vrot.slane %v3257, 4
      %v4108 = vmax.f32 %v3257, %v4107
      %v4109 = vrot.slane %v4108, 2
      %v4110 = vmax.f32 %v4108, %v4109
      %v4111 = vrot.slane %v4110, 1
      %v4112 = vmax.f32 %v4110, %v4111
      %v4113 = vrot.slane %v3258, 4
      %v4114 = vmax.f32 %v3258, %v4113
      %v4115 = vrot.slane %v4114, 2
      %v4116 = vmax.f32 %v4114, %v4115
      %v4117 = vrot.slane %v4116, 1
      %v4118 = vmax.f32 %v4116, %v4117
      %v4119 = vrot.slane %v3259, 4
      %v4120 = vmax.f32 %v3259, %v4119
      %v4121 = vrot.slane %v4120, 2
      %v4122 = vmax.f32 %v4120, %v4121
      %v4123 = vrot.slane %v4122, 1
      %v4124 = vmax.f32 %v4122, %v4123
      %v4125 = vrot.slane %v3260, 4
      %v4126 = vmax.f32 %v3260, %v4125
      %v4127 = vrot.slane %v4126, 2
      %v4128 = vmax.f32 %v4126, %v4127
      %v4129 = vrot.slane %v4128, 1
      %v4130 = vmax.f32 %v4128, %v4129
      %v4131 = vrot.slane %v3261, 4
      %v4132 = vmax.f32 %v3261, %v4131
      %v4133 = vrot.slane %v4132, 2
      %v4134 = vmax.f32 %v4132, %v4133
      %v4135 = vrot.slane %v4134, 1
      %v4136 = vmax.f32 %v4134, %v4135
      %v4137 = vrot.slane %v3262, 4
      %v4138 = vmax.f32 %v3262, %v4137
      %v4139 = vrot.slane %v4138, 2
      %v4140 = vmax.f32 %v4138, %v4139
      %v4141 = vrot.slane %v4140, 1
      %v4142 = vmax.f32 %v4140, %v4141
      %v4143 = vrot.slane %v3263, 4
      %v4144 = vmax.f32 %v3263, %v4143
      %v4145 = vrot.slane %v4144, 2
      %v4146 = vmax.f32 %v4144, %v4145
      %v4147 = vrot.slane %v4146, 1
      %v4148 = vmax.f32 %v4146, %v4147
      %v4149 = vrot.slane %v3264, 4
      %v4150 = vmax.f32 %v3264, %v4149
      %v4151 = vrot.slane %v4150, 2
      %v4152 = vmax.f32 %v4150, %v4151
      %v4153 = vrot.slane %v4152, 1
      %v4154 = vmax.f32 %v4152, %v4153
      %v4155 = vrot.slane %v3265, 4
      %v4156 = vmax.f32 %v3265, %v4155
      %v4157 = vrot.slane %v4156, 2
      %v4158 = vmax.f32 %v4156, %v4157
      %v4159 = vrot.slane %v4158, 1
      %v4160 = vmax.f32 %v4158, %v4159
      %v4161 = vrot.slane %v3266, 4
      %v4162 = vmax.f32 %v3266, %v4161
      %v4163 = vrot.slane %v4162, 2
      %v4164 = vmax.f32 %v4162, %v4163
      %v4165 = vrot.slane %v4164, 1
      %v4166 = vmax.f32 %v4164, %v4165
      %v4167 = vrot.slane %v3267, 4
      %v4168 = vmax.f32 %v3267, %v4167
      %v4169 = vrot.slane %v4168, 2
      %v4170 = vmax.f32 %v4168, %v4169
      %v4171 = vrot.slane %v4170, 1
      %v4172 = vmax.f32 %v4170, %v4171
      %v4173 = vrot.slane %v3268, 4
      %v4174 = vmax.f32 %v3268, %v4173
      %v4175 = vrot.slane %v4174, 2
      %v4176 = vmax.f32 %v4174, %v4175
      %v4177 = vrot.slane %v4176, 1
      %v4178 = vmax.f32 %v4176, %v4177
      %v4179 = vrot.slane %v3269, 4
      %v4180 = vmax.f32 %v3269, %v4179
      %v4181 = vrot.slane %v4180, 2
      %v4182 = vmax.f32 %v4180, %v4181
      %v4183 = vrot.slane %v4182, 1
      %v4184 = vmax.f32 %v4182, %v4183
      %v4185 = vrot.slane %v3270, 4
      %v4186 = vmax.f32 %v3270, %v4185
      %v4187 = vrot.slane %v4186, 2
      %v4188 = vmax.f32 %v4186, %v4187
      %v4189 = vrot.slane %v4188, 1
      %v4190 = vmax.f32 %v4188, %v4189
      %v4191 = vrot.slane %v3271, 4
      %v4192 = vmax.f32 %v3271, %v4191
      %v4193 = vrot.slane %v4192, 2
      %v4194 = vmax.f32 %v4192, %v4193
      %v4195 = vrot.slane %v4194, 1
      %v4196 = vmax.f32 %v4194, %v4195
      %v4197 = vrot.slane %v3272, 4
      %v4198 = vmax.f32 %v3272, %v4197
      %v4199 = vrot.slane %v4198, 2
      %v4200 = vmax.f32 %v4198, %v4199
      %v4201 = vrot.slane %v4200, 1
      %v4202 = vmax.f32 %v4200, %v4201
      %v4203 = vrot.slane %v3273, 4
      %v4204 = vmax.f32 %v3273, %v4203
      %v4205 = vrot.slane %v4204, 2
      %v4206 = vmax.f32 %v4204, %v4205
      %v4207 = vrot.slane %v4206, 1
      %v4208 = vmax.f32 %v4206, %v4207
      %v4209 = vrot.slane %v3274, 4
      %v4210 = vmax.f32 %v3274, %v4209
      %v4211 = vrot.slane %v4210, 2
      %v4212 = vmax.f32 %v4210, %v4211
      %v4213 = vrot.slane %v4212, 1
      %v4214 = vmax.f32 %v4212, %v4213
      %v4215 = vrot.slane %v3275, 4
      %v4216 = vmax.f32 %v3275, %v4215
      %v4217 = vrot.slane %v4216, 2
      %v4218 = vmax.f32 %v4216, %v4217
      %v4219 = vrot.slane %v4218, 1
      %v4220 = vmax.f32 %v4218, %v4219
      %v4221 = vrot.slane %v3276, 4
      %v4222 = vmax.f32 %v3276, %v4221
      %v4223 = vrot.slane %v4222, 2
      %v4224 = vmax.f32 %v4222, %v4223
      %v4225 = vrot.slane %v4224, 1
      %v4226 = vmax.f32 %v4224, %v4225
      %v4227 = vrot.slane %v3277, 4
      %v4228 = vmax.f32 %v3277, %v4227
      %v4229 = vrot.slane %v4228, 2
      %v4230 = vmax.f32 %v4228, %v4229
      %v4231 = vrot.slane %v4230, 1
      %v4232 = vmax.f32 %v4230, %v4231
      %v4233 = vrot.slane %v3278, 4
      %v4234 = vmax.f32 %v3278, %v4233
      %v4235 = vrot.slane %v4234, 2
      %v4236 = vmax.f32 %v4234, %v4235
      %v4237 = vrot.slane %v4236, 1
      %v4238 = vmax.f32 %v4236, %v4237
      %v4239 = vrot.slane %v3279, 4
      %v4240 = vmax.f32 %v3279, %v4239
      %v4241 = vrot.slane %v4240, 2
      %v4242 = vmax.f32 %v4240, %v4241
      %v4243 = vrot.slane %v4242, 1
      %v4244 = vmax.f32 %v4242, %v4243
      %v4245 = vrot.slane %v3280, 4
      %v4246 = vmax.f32 %v3280, %v4245
      %v4247 = vrot.slane %v4246, 2
      %v4248 = vmax.f32 %v4246, %v4247
      %v4249 = vrot.slane %v4248, 1
      %v4250 = vmax.f32 %v4248, %v4249
      %v4251 = vrot.slane %v3281, 4
      %v4252 = vmax.f32 %v3281, %v4251
      %v4253 = vrot.slane %v4252, 2
      %v4254 = vmax.f32 %v4252, %v4253
      %v4255 = vrot.slane %v4254, 1
      %v4256 = vmax.f32 %v4254, %v4255
      %v4257 = vrot.slane %v3282, 4
      %v4258 = vmax.f32 %v3282, %v4257
      %v4259 = vrot.slane %v4258, 2
      %v4260 = vmax.f32 %v4258, %v4259
      %v4261 = vrot.slane %v4260, 1
      %v4262 = vmax.f32 %v4260, %v4261
      %v4263 = vrot.slane %v3283, 4
      %v4264 = vmax.f32 %v3283, %v4263
      %v4265 = vrot.slane %v4264, 2
      %v4266 = vmax.f32 %v4264, %v4265
      %v4267 = vrot.slane %v4266, 1
      %v4268 = vmax.f32 %v4266, %v4267
      %v4269 = vrot.slane %v3284, 4
      %v4270 = vmax.f32 %v3284, %v4269
      %v4271 = vrot.slane %v4270, 2
      %v4272 = vmax.f32 %v4270, %v4271
      %v4273 = vrot.slane %v4272, 1
      %v4274 = vmax.f32 %v4272, %v4273
      %v4275 = vrot.slane %v3285, 4
      %v4276 = vmax.f32 %v3285, %v4275
      %v4277 = vrot.slane %v4276, 2
      %v4278 = vmax.f32 %v4276, %v4277
      %v4279 = vrot.slane %v4278, 1
      %v4280 = vmax.f32 %v4278, %v4279
      %v4281 = vrot.slane %v3286, 4
      %v4282 = vmax.f32 %v3286, %v4281
      %v4283 = vrot.slane %v4282, 2
      %v4284 = vmax.f32 %v4282, %v4283
      %v4285 = vrot.slane %v4284, 1
      %v4286 = vmax.f32 %v4284, %v4285
      %v4287 = vrot.slane %v3287, 4
      %v4288 = vmax.f32 %v3287, %v4287
      %v4289 = vrot.slane %v4288, 2
      %v4290 = vmax.f32 %v4288, %v4289
      %v4291 = vrot.slane %v4290, 1
      %v4292 = vmax.f32 %v4290, %v4291
      %v4293 = vrot.slane %v3288, 4
      %v4294 = vmax.f32 %v3288, %v4293
      %v4295 = vrot.slane %v4294, 2
      %v4296 = vmax.f32 %v4294, %v4295
      %v4297 = vrot.slane %v4296, 1
      %v4298 = vmax.f32 %v4296, %v4297
      %v4299 = vrot.slane %v3289, 4
      %v4300 = vmax.f32 %v3289, %v4299
      %v4301 = vrot.slane %v4300, 2
      %v4302 = vmax.f32 %v4300, %v4301
      %v4303 = vrot.slane %v4302, 1
      %v4304 = vmax.f32 %v4302, %v4303
      %v4305 = vrot.slane %v3290, 4
      %v4306 = vmax.f32 %v3290, %v4305
      %v4307 = vrot.slane %v4306, 2
      %v4308 = vmax.f32 %v4306, %v4307
      %v4309 = vrot.slane %v4308, 1
      %v4310 = vmax.f32 %v4308, %v4309
      %v4311 = vrot.slane %v3291, 4
      %v4312 = vmax.f32 %v3291, %v4311
      %v4313 = vrot.slane %v4312, 2
      %v4314 = vmax.f32 %v4312, %v4313
      %v4315 = vrot.slane %v4314, 1
      %v4316 = vmax.f32 %v4314, %v4315
      %v4317 = vrot.slane %v3292, 4
      %v4318 = vmax.f32 %v3292, %v4317
      %v4319 = vrot.slane %v4318, 2
      %v4320 = vmax.f32 %v4318, %v4319
      %v4321 = vrot.slane %v4320, 1
      %v4322 = vmax.f32 %v4320, %v4321
      %v4323 = vrot.slane %v3293, 4
      %v4324 = vmax.f32 %v3293, %v4323
      %v4325 = vrot.slane %v4324, 2
      %v4326 = vmax.f32 %v4324, %v4325
      %v4327 = vrot.slane %v4326, 1
      %v4328 = vmax.f32 %v4326, %v4327
      %v4329 = vrot.slane %v3294, 4
      %v4330 = vmax.f32 %v3294, %v4329
      %v4331 = vrot.slane %v4330, 2
      %v4332 = vmax.f32 %v4330, %v4331
      %v4333 = vrot.slane %v4332, 1
      %v4334 = vmax.f32 %v4332, %v4333
      %v4335 = vrot.slane %v3295, 4
      %v4336 = vmax.f32 %v3295, %v4335
      %v4337 = vrot.slane %v4336, 2
      %v4338 = vmax.f32 %v4336, %v4337
      %v4339 = vrot.slane %v4338, 1
      %v4340 = vmax.f32 %v4338, %v4339
      %v4341 = vrot.slane %v3296, 4
      %v4342 = vmax.f32 %v3296, %v4341
      %v4343 = vrot.slane %v4342, 2
      %v4344 = vmax.f32 %v4342, %v4343
      %v4345 = vrot.slane %v4344, 1
      %v4346 = vmax.f32 %v4344, %v4345
      %v4347 = vrot.slane %v3297, 4
      %v4348 = vmax.f32 %v3297, %v4347
      %v4349 = vrot.slane %v4348, 2
      %v4350 = vmax.f32 %v4348, %v4349
      %v4351 = vrot.slane %v4350, 1
      %v4352 = vmax.f32 %v4350, %v4351
      %v4353 = vrot.slane %v3298, 4
      %v4354 = vmax.f32 %v3298, %v4353
      %v4355 = vrot.slane %v4354, 2
      %v4356 = vmax.f32 %v4354, %v4355
      %v4357 = vrot.slane %v4356, 1
      %v4358 = vmax.f32 %v4356, %v4357
      %v4359 = vrot.slane %v3299, 4
      %v4360 = vmax.f32 %v3299, %v4359
      %v4361 = vrot.slane %v4360, 2
      %v4362 = vmax.f32 %v4360, %v4361
      %v4363 = vrot.slane %v4362, 1
      %v4364 = vmax.f32 %v4362, %v4363
      %v4365 = vrot.slane %v3300, 4
      %v4366 = vmax.f32 %v3300, %v4365
      %v4367 = vrot.slane %v4366, 2
      %v4368 = vmax.f32 %v4366, %v4367
      %v4369 = vrot.slane %v4368, 1
      %v4370 = vmax.f32 %v4368, %v4369
      %v4371 = vrot.slane %v3301, 4
      %v4372 = vmax.f32 %v3301, %v4371
      %v4373 = vrot.slane %v4372, 2
      %v4374 = vmax.f32 %v4372, %v4373
      %v4375 = vrot.slane %v4374, 1
      %v4376 = vmax.f32 %v4374, %v4375
      %v4377 = vrot.slane %v3302, 4
      %v4378 = vmax.f32 %v3302, %v4377
      %v4379 = vrot.slane %v4378, 2
      %v4380 = vmax.f32 %v4378, %v4379
      %v4381 = vrot.slane %v4380, 1
      %v4382 = vmax.f32 %v4380, %v4381
      %v4383 = vrot.slane %v3303, 4
      %v4384 = vmax.f32 %v3303, %v4383
      %v4385 = vrot.slane %v4384, 2
      %v4386 = vmax.f32 %v4384, %v4385
      %v4387 = vrot.slane %v4386, 1
      %v4388 = vmax.f32 %v4386, %v4387
      %v4389 = vrot.slane %v3304, 4
      %v4390 = vmax.f32 %v3304, %v4389
      %v4391 = vrot.slane %v4390, 2
      %v4392 = vmax.f32 %v4390, %v4391
      %v4393 = vrot.slane %v4392, 1
      %v4394 = vmax.f32 %v4392, %v4393
      %v4395 = vrot.slane %v3305, 4
      %v4396 = vmax.f32 %v3305, %v4395
      %v4397 = vrot.slane %v4396, 2
      %v4398 = vmax.f32 %v4396, %v4397
      %v4399 = vrot.slane %v4398, 1
      %v4400 = vmax.f32 %v4398, %v4399
      %v4401 = vrot.slane %v3306, 4
      %v4402 = vmax.f32 %v3306, %v4401
      %v4403 = vrot.slane %v4402, 2
      %v4404 = vmax.f32 %v4402, %v4403
      %v4405 = vrot.slane %v4404, 1
      %v4406 = vmax.f32 %v4404, %v4405
      %v4407 = vrot.slane %v3307, 4
      %v4408 = vmax.f32 %v3307, %v4407
      %v4409 = vrot.slane %v4408, 2
      %v4410 = vmax.f32 %v4408, %v4409
      %v4411 = vrot.slane %v4410, 1
      %v4412 = vmax.f32 %v4410, %v4411
      %v4413 = vrot.slane %v3308, 4
      %v4414 = vmax.f32 %v3308, %v4413
      %v4415 = vrot.slane %v4414, 2
      %v4416 = vmax.f32 %v4414, %v4415
      %v4417 = vrot.slane %v4416, 1
      %v4418 = vmax.f32 %v4416, %v4417
      %v4419 = vrot.slane %v3309, 4
      %v4420 = vmax.f32 %v3309, %v4419
      %v4421 = vrot.slane %v4420, 2
      %v4422 = vmax.f32 %v4420, %v4421
      %v4423 = vrot.slane %v4422, 1
      %v4424 = vmax.f32 %v4422, %v4423
      %v4425 = vrot.slane %v3310, 4
      %v4426 = vmax.f32 %v3310, %v4425
      %v4427 = vrot.slane %v4426, 2
      %v4428 = vmax.f32 %v4426, %v4427
      %v4429 = vrot.slane %v4428, 1
      %v4430 = vmax.f32 %v4428, %v4429
      %v4431 = vrot.slane %v3311, 4
      %v4432 = vmax.f32 %v3311, %v4431
      %v4433 = vrot.slane %v4432, 2
      %v4434 = vmax.f32 %v4432, %v4433
      %v4435 = vrot.slane %v4434, 1
      %v4436 = vmax.f32 %v4434, %v4435
      %v4437 = vrot.slane %v3312, 4
      %v4438 = vmax.f32 %v3312, %v4437
      %v4439 = vrot.slane %v4438, 2
      %v4440 = vmax.f32 %v4438, %v4439
      %v4441 = vrot.slane %v4440, 1
      %v4442 = vmax.f32 %v4440, %v4441
      %v4443 = vrot.slane %v3313, 4
      %v4444 = vmax.f32 %v3313, %v4443
      %v4445 = vrot.slane %v4444, 2
      %v4446 = vmax.f32 %v4444, %v4445
      %v4447 = vrot.slane %v4446, 1
      %v4448 = vmax.f32 %v4446, %v4447
      %v4449 = vrot.slane %v3314, 4
      %v4450 = vmax.f32 %v3314, %v4449
      %v4451 = vrot.slane %v4450, 2
      %v4452 = vmax.f32 %v4450, %v4451
      %v4453 = vrot.slane %v4452, 1
      %v4454 = vmax.f32 %v4452, %v4453
      %v4455 = vrot.slane %v3315, 4
      %v4456 = vmax.f32 %v3315, %v4455
      %v4457 = vrot.slane %v4456, 2
      %v4458 = vmax.f32 %v4456, %v4457
      %v4459 = vrot.slane %v4458, 1
      %v4460 = vmax.f32 %v4458, %v4459
      %v4461 = vrot.slane %v3316, 4
      %v4462 = vmax.f32 %v3316, %v4461
      %v4463 = vrot.slane %v4462, 2
      %v4464 = vmax.f32 %v4462, %v4463
      %v4465 = vrot.slane %v4464, 1
      %v4466 = vmax.f32 %v4464, %v4465
      %v4467 = vrot.slane %v3317, 4
      %v4468 = vmax.f32 %v3317, %v4467
      %v4469 = vrot.slane %v4468, 2
      %v4470 = vmax.f32 %v4468, %v4469
      %v4471 = vrot.slane %v4470, 1
      %v4472 = vmax.f32 %v4470, %v4471
      %v4473 = vrot.slane %v3318, 4
      %v4474 = vmax.f32 %v3318, %v4473
      %v4475 = vrot.slane %v4474, 2
      %v4476 = vmax.f32 %v4474, %v4475
      %v4477 = vrot.slane %v4476, 1
      %v4478 = vmax.f32 %v4476, %v4477
      %v4479 = vrot.slane %v3319, 4
      %v4480 = vmax.f32 %v3319, %v4479
      %v4481 = vrot.slane %v4480, 2
      %v4482 = vmax.f32 %v4480, %v4481
      %v4483 = vrot.slane %v4482, 1
      %v4484 = vmax.f32 %v4482, %v4483
      %v4485 = vrot.slane %v3320, 4
      %v4486 = vmax.f32 %v3320, %v4485
      %v4487 = vrot.slane %v4486, 2
      %v4488 = vmax.f32 %v4486, %v4487
      %v4489 = vrot.slane %v4488, 1
      %v4490 = vmax.f32 %v4488, %v4489
      %v4491 = vrot.slane %v3321, 4
      %v4492 = vmax.f32 %v3321, %v4491
      %v4493 = vrot.slane %v4492, 2
      %v4494 = vmax.f32 %v4492, %v4493
      %v4495 = vrot.slane %v4494, 1
      %v4496 = vmax.f32 %v4494, %v4495
      %v4497 = vrot.slane %v3322, 4
      %v4498 = vmax.f32 %v3322, %v4497
      %v4499 = vrot.slane %v4498, 2
      %v4500 = vmax.f32 %v4498, %v4499
      %v4501 = vrot.slane %v4500, 1
      %v4502 = vmax.f32 %v4500, %v4501
      %v4503 = vrot.slane %v3323, 4
      %v4504 = vmax.f32 %v3323, %v4503
      %v4505 = vrot.slane %v4504, 2
      %v4506 = vmax.f32 %v4504, %v4505
      %v4507 = vrot.slane %v4506, 1
      %v4508 = vmax.f32 %v4506, %v4507
      %v4509 = vrot.slane %v3324, 4
      %v4510 = vmax.f32 %v3324, %v4509
      %v4511 = vrot.slane %v4510, 2
      %v4512 = vmax.f32 %v4510, %v4511
      %v4513 = vrot.slane %v4512, 1
      %v4514 = vmax.f32 %v4512, %v4513
      %v4515 = vrot.slane %v3325, 4
      %v4516 = vmax.f32 %v3325, %v4515
      %v4517 = vrot.slane %v4516, 2
      %v4518 = vmax.f32 %v4516, %v4517
      %v4519 = vrot.slane %v4518, 1
      %v4520 = vmax.f32 %v4518, %v4519
      %v4521 = vrot.slane %v3326, 4
      %v4522 = vmax.f32 %v3326, %v4521
      %v4523 = vrot.slane %v4522, 2
      %v4524 = vmax.f32 %v4522, %v4523
      %v4525 = vrot.slane %v4524, 1
      %v4526 = vmax.f32 %v4524, %v4525
      %v4527 = vrot.slane %v3327, 4
      %v4528 = vmax.f32 %v3327, %v4527
      %v4529 = vrot.slane %v4528, 2
      %v4530 = vmax.f32 %v4528, %v4529
      %v4531 = vrot.slane %v4530, 1
      %v4532 = vmax.f32 %v4530, %v4531
      %v4533 = vrot.slane %v3328, 4
      %v4534 = vmax.f32 %v3328, %v4533
      %v4535 = vrot.slane %v4534, 2
      %v4536 = vmax.f32 %v4534, %v4535
      %v4537 = vrot.slane %v4536, 1
      %v4538 = vmax.f32 %v4536, %v4537
      %v4539 = vrot.slane %v3329, 4
      %v4540 = vmax.f32 %v3329, %v4539
      %v4541 = vrot.slane %v4540, 2
      %v4542 = vmax.f32 %v4540, %v4541
      %v4543 = vrot.slane %v4542, 1
      %v4544 = vmax.f32 %v4542, %v4543
      %v4545 = vrot.slane %v3330, 4
      %v4546 = vmax.f32 %v3330, %v4545
      %v4547 = vrot.slane %v4546, 2
      %v4548 = vmax.f32 %v4546, %v4547
      %v4549 = vrot.slane %v4548, 1
      %v4550 = vmax.f32 %v4548, %v4549
      %v4551 = vrot.slane %v3331, 4
      %v4552 = vmax.f32 %v3331, %v4551
      %v4553 = vrot.slane %v4552, 2
      %v4554 = vmax.f32 %v4552, %v4553
      %v4555 = vrot.slane %v4554, 1
      %v4556 = vmax.f32 %v4554, %v4555
      %v4557 = vrot.slane %v3332, 4
      %v4558 = vmax.f32 %v3332, %v4557
      %v4559 = vrot.slane %v4558, 2
      %v4560 = vmax.f32 %v4558, %v4559
      %v4561 = vrot.slane %v4560, 1
      %v4562 = vmax.f32 %v4560, %v4561
      %v4563 = vrot.slane %v3333, 4
      %v4564 = vmax.f32 %v3333, %v4563
      %v4565 = vrot.slane %v4564, 2
      %v4566 = vmax.f32 %v4564, %v4565
      %v4567 = vrot.slane %v4566, 1
      %v4568 = vmax.f32 %v4566, %v4567
      %v4569 = vrot.slane %v3334, 4
      %v4570 = vmax.f32 %v3334, %v4569
      %v4571 = vrot.slane %v4570, 2
      %v4572 = vmax.f32 %v4570, %v4571
      %v4573 = vrot.slane %v4572, 1
      %v4574 = vmax.f32 %v4572, %v4573
      %v4575 = vrot.slane %v3335, 4
      %v4576 = vmax.f32 %v3335, %v4575
      %v4577 = vrot.slane %v4576, 2
      %v4578 = vmax.f32 %v4576, %v4577
      %v4579 = vrot.slane %v4578, 1
      %v4580 = vmax.f32 %v4578, %v4579
      %v4581 = vrot.slane %v3336, 4
      %v4582 = vmax.f32 %v3336, %v4581
      %v4583 = vrot.slane %v4582, 2
      %v4584 = vmax.f32 %v4582, %v4583
      %v4585 = vrot.slane %v4584, 1
      %v4586 = vmax.f32 %v4584, %v4585
      %v4587 = vrot.slane %v3337, 4
      %v4588 = vmax.f32 %v3337, %v4587
      %v4589 = vrot.slane %v4588, 2
      %v4590 = vmax.f32 %v4588, %v4589
      %v4591 = vrot.slane %v4590, 1
      %v4592 = vmax.f32 %v4590, %v4591
      %v4593 = vrot.slane %v3338, 4
      %v4594 = vmax.f32 %v3338, %v4593
      %v4595 = vrot.slane %v4594, 2
      %v4596 = vmax.f32 %v4594, %v4595
      %v4597 = vrot.slane %v4596, 1
      %v4598 = vmax.f32 %v4596, %v4597
      %v4599 = vrot.slane %v3339, 4
      %v4600 = vmax.f32 %v3339, %v4599
      %v4601 = vrot.slane %v4600, 2
      %v4602 = vmax.f32 %v4600, %v4601
      %v4603 = vrot.slane %v4602, 1
      %v4604 = vmax.f32 %v4602, %v4603
      %v4605 = vrot.slane %v3340, 4
      %v4606 = vmax.f32 %v3340, %v4605
      %v4607 = vrot.slane %v4606, 2
      %v4608 = vmax.f32 %v4606, %v4607
      %v4609 = vrot.slane %v4608, 1
      %v4610 = vmax.f32 %v4608, %v4609
      %v4611 = vrot.slane %v3341, 4
      %v4612 = vmax.f32 %v3341, %v4611
      %v4613 = vrot.slane %v4612, 2
      %v4614 = vmax.f32 %v4612, %v4613
      %v4615 = vrot.slane %v4614, 1
      %v4616 = vmax.f32 %v4614, %v4615
      %v4617 = vrot.slane %v3342, 4
      %v4618 = vmax.f32 %v3342, %v4617
      %v4619 = vrot.slane %v4618, 2
      %v4620 = vmax.f32 %v4618, %v4619
      %v4621 = vrot.slane %v4620, 1
      %v4622 = vmax.f32 %v4620, %v4621
      %v4623 = vrot.slane %v3343, 4
      %v4624 = vmax.f32 %v3343, %v4623
      %v4625 = vrot.slane %v4624, 2
      %v4626 = vmax.f32 %v4624, %v4625
      %v4627 = vrot.slane %v4626, 1
      %v4628 = vmax.f32 %v4626, %v4627
      %v4629 = vrot.slane %v3344, 4
      %v4630 = vmax.f32 %v3344, %v4629
      %v4631 = vrot.slane %v4630, 2
      %v4632 = vmax.f32 %v4630, %v4631
      %v4633 = vrot.slane %v4632, 1
      %v4634 = vmax.f32 %v4632, %v4633
      %v4635 = vrot.slane %v3345, 4
      %v4636 = vmax.f32 %v3345, %v4635
      %v4637 = vrot.slane %v4636, 2
      %v4638 = vmax.f32 %v4636, %v4637
      %v4639 = vrot.slane %v4638, 1
      %v4640 = vmax.f32 %v4638, %v4639
      %v4641 = vrot.slane %v3346, 4
      %v4642 = vmax.f32 %v3346, %v4641
      %v4643 = vrot.slane %v4642, 2
      %v4644 = vmax.f32 %v4642, %v4643
      %v4645 = vrot.slane %v4644, 1
      %v4646 = vmax.f32 %v4644, %v4645
      %v4647 = vrot.slane %v3347, 4
      %v4648 = vmax.f32 %v3347, %v4647
      %v4649 = vrot.slane %v4648, 2
      %v4650 = vmax.f32 %v4648, %v4649
      %v4651 = vrot.slane %v4650, 1
      %v4652 = vmax.f32 %v4650, %v4651
      %v4653 = vrot.slane %v3348, 4
      %v4654 = vmax.f32 %v3348, %v4653
      %v4655 = vrot.slane %v4654, 2
      %v4656 = vmax.f32 %v4654, %v4655
      %v4657 = vrot.slane %v4656, 1
      %v4658 = vmax.f32 %v4656, %v4657
      %v4659 = vrot.slane %v3349, 4
      %v4660 = vmax.f32 %v3349, %v4659
      %v4661 = vrot.slane %v4660, 2
      %v4662 = vmax.f32 %v4660, %v4661
      %v4663 = vrot.slane %v4662, 1
      %v4664 = vmax.f32 %v4662, %v4663
      %v4665 = vrot.slane %v3350, 4
      %v4666 = vmax.f32 %v3350, %v4665
      %v4667 = vrot.slane %v4666, 2
      %v4668 = vmax.f32 %v4666, %v4667
      %v4669 = vrot.slane %v4668, 1
      %v4670 = vmax.f32 %v4668, %v4669
      %v4671 = vrot.slane %v3351, 4
      %v4672 = vmax.f32 %v3351, %v4671
      %v4673 = vrot.slane %v4672, 2
      %v4674 = vmax.f32 %v4672, %v4673
      %v4675 = vrot.slane %v4674, 1
      %v4676 = vmax.f32 %v4674, %v4675
      %v4677 = vrot.slane %v3352, 4
      %v4678 = vmax.f32 %v3352, %v4677
      %v4679 = vrot.slane %v4678, 2
      %v4680 = vmax.f32 %v4678, %v4679
      %v4681 = vrot.slane %v4680, 1
      %v4682 = vmax.f32 %v4680, %v4681
      %v4683 = vrot.slane %v3353, 4
      %v4684 = vmax.f32 %v3353, %v4683
      %v4685 = vrot.slane %v4684, 2
      %v4686 = vmax.f32 %v4684, %v4685
      %v4687 = vrot.slane %v4686, 1
      %v4688 = vmax.f32 %v4686, %v4687
      %v4689 = vrot.slane %v3354, 4
      %v4690 = vmax.f32 %v3354, %v4689
      %v4691 = vrot.slane %v4690, 2
      %v4692 = vmax.f32 %v4690, %v4691
      %v4693 = vrot.slane %v4692, 1
      %v4694 = vmax.f32 %v4692, %v4693
      %v4695 = vrot.slane %v3355, 4
      %v4696 = vmax.f32 %v3355, %v4695
      %v4697 = vrot.slane %v4696, 2
      %v4698 = vmax.f32 %v4696, %v4697
      %v4699 = vrot.slane %v4698, 1
      %v4700 = vmax.f32 %v4698, %v4699
      %v4701 = vrot.slane %v3356, 4
      %v4702 = vmax.f32 %v3356, %v4701
      %v4703 = vrot.slane %v4702, 2
      %v4704 = vmax.f32 %v4702, %v4703
      %v4705 = vrot.slane %v4704, 1
      %v4706 = vmax.f32 %v4704, %v4705
      %v4707 = vrot.slane %v3357, 4
      %v4708 = vmax.f32 %v3357, %v4707
      %v4709 = vrot.slane %v4708, 2
      %v4710 = vmax.f32 %v4708, %v4709
      %v4711 = vrot.slane %v4710, 1
      %v4712 = vmax.f32 %v4710, %v4711
      %v4713 = vrot.slane %v3358, 4
      %v4714 = vmax.f32 %v3358, %v4713
      %v4715 = vrot.slane %v4714, 2
      %v4716 = vmax.f32 %v4714, %v4715
      %v4717 = vrot.slane %v4716, 1
      %v4718 = vmax.f32 %v4716, %v4717
      %v4719 = vrot.slane %v3359, 4
      %v4720 = vmax.f32 %v3359, %v4719
      %v4721 = vrot.slane %v4720, 2
      %v4722 = vmax.f32 %v4720, %v4721
      %v4723 = vrot.slane %v4722, 1
      %v4724 = vmax.f32 %v4722, %v4723
      %v4725 = vrot.slane %v3360, 4
      %v4726 = vmax.f32 %v3360, %v4725
      %v4727 = vrot.slane %v4726, 2
      %v4728 = vmax.f32 %v4726, %v4727
      %v4729 = vrot.slane %v4728, 1
      %v4730 = vmax.f32 %v4728, %v4729
      %v4731 = vrot.slane %v3361, 4
      %v4732 = vmax.f32 %v3361, %v4731
      %v4733 = vrot.slane %v4732, 2
      %v4734 = vmax.f32 %v4732, %v4733
      %v4735 = vrot.slane %v4734, 1
      %v4736 = vmax.f32 %v4734, %v4735
      %v4737 = vrot.slane %v3362, 4
      %v4738 = vmax.f32 %v3362, %v4737
      %v4739 = vrot.slane %v4738, 2
      %v4740 = vmax.f32 %v4738, %v4739
      %v4741 = vrot.slane %v4740, 1
      %v4742 = vmax.f32 %v4740, %v4741
      %v4743 = vrot.slane %v3363, 4
      %v4744 = vmax.f32 %v3363, %v4743
      %v4745 = vrot.slane %v4744, 2
      %v4746 = vmax.f32 %v4744, %v4745
      %v4747 = vrot.slane %v4746, 1
      %v4748 = vmax.f32 %v4746, %v4747
      %v4749 = vrot.slane %v3364, 4
      %v4750 = vmax.f32 %v3364, %v4749
      %v4751 = vrot.slane %v4750, 2
      %v4752 = vmax.f32 %v4750, %v4751
      %v4753 = vrot.slane %v4752, 1
      %v4754 = vmax.f32 %v4752, %v4753
      %v4755 = vrot.slane %v3365, 4
      %v4756 = vmax.f32 %v3365, %v4755
      %v4757 = vrot.slane %v4756, 2
      %v4758 = vmax.f32 %v4756, %v4757
      %v4759 = vrot.slane %v4758, 1
      %v4760 = vmax.f32 %v4758, %v4759
      %v4761 = vrot.slane %v3366, 4
      %v4762 = vmax.f32 %v3366, %v4761
      %v4763 = vrot.slane %v4762, 2
      %v4764 = vmax.f32 %v4762, %v4763
      %v4765 = vrot.slane %v4764, 1
      %v4766 = vmax.f32 %v4764, %v4765
      %v4767 = vrot.slane %v3367, 4
      %v4768 = vmax.f32 %v3367, %v4767
      %v4769 = vrot.slane %v4768, 2
      %v4770 = vmax.f32 %v4768, %v4769
      %v4771 = vrot.slane %v4770, 1
      %v4772 = vmax.f32 %v4770, %v4771
      %v4773 = vrot.slane %v3368, 4
      %v4774 = vmax.f32 %v3368, %v4773
      %v4775 = vrot.slane %v4774, 2
      %v4776 = vmax.f32 %v4774, %v4775
      %v4777 = vrot.slane %v4776, 1
      %v4778 = vmax.f32 %v4776, %v4777
      %v4779 = vrot.slane %v3369, 4
      %v4780 = vmax.f32 %v3369, %v4779
      %v4781 = vrot.slane %v4780, 2
      %v4782 = vmax.f32 %v4780, %v4781
      %v4783 = vrot.slane %v4782, 1
      %v4784 = vmax.f32 %v4782, %v4783
      %v4785 = vrot.slane %v3370, 4
      %v4786 = vmax.f32 %v3370, %v4785
      %v4787 = vrot.slane %v4786, 2
      %v4788 = vmax.f32 %v4786, %v4787
      %v4789 = vrot.slane %v4788, 1
      %v4790 = vmax.f32 %v4788, %v4789
      %v4791 = vrot.slane %v3371, 4
      %v4792 = vmax.f32 %v3371, %v4791
      %v4793 = vrot.slane %v4792, 2
      %v4794 = vmax.f32 %v4792, %v4793
      %v4795 = vrot.slane %v4794, 1
      %v4796 = vmax.f32 %v4794, %v4795
      %v4797 = vrot.slane %v3372, 4
      %v4798 = vmax.f32 %v3372, %v4797
      %v4799 = vrot.slane %v4798, 2
      %v4800 = vmax.f32 %v4798, %v4799
      %v4801 = vrot.slane %v4800, 1
      %v4802 = vmax.f32 %v4800, %v4801
      %v4803 = vrot.slane %v3373, 4
      %v4804 = vmax.f32 %v3373, %v4803
      %v4805 = vrot.slane %v4804, 2
      %v4806 = vmax.f32 %v4804, %v4805
      %v4807 = vrot.slane %v4806, 1
      %v4808 = vmax.f32 %v4806, %v4807
      %v4809 = vrot.slane %v3374, 4
      %v4810 = vmax.f32 %v3374, %v4809
      %v4811 = vrot.slane %v4810, 2
      %v4812 = vmax.f32 %v4810, %v4811
      %v4813 = vrot.slane %v4812, 1
      %v4814 = vmax.f32 %v4812, %v4813
      %v4815 = vrot.slane %v3375, 4
      %v4816 = vmax.f32 %v3375, %v4815
      %v4817 = vrot.slane %v4816, 2
      %v4818 = vmax.f32 %v4816, %v4817
      %v4819 = vrot.slane %v4818, 1
      %v4820 = vmax.f32 %v4818, %v4819
      %v4821 = vrot.slane %v3376, 4
      %v4822 = vmax.f32 %v3376, %v4821
      %v4823 = vrot.slane %v4822, 2
      %v4824 = vmax.f32 %v4822, %v4823
      %v4825 = vrot.slane %v4824, 1
      %v4826 = vmax.f32 %v4824, %v4825
      %v4827 = vrot.slane %v3377, 4
      %v4828 = vmax.f32 %v3377, %v4827
      %v4829 = vrot.slane %v4828, 2
      %v4830 = vmax.f32 %v4828, %v4829
      %v4831 = vrot.slane %v4830, 1
      %v4832 = vmax.f32 %v4830, %v4831
      %v4833 = vrot.slane %v3378, 4
      %v4834 = vmax.f32 %v3378, %v4833
      %v4835 = vrot.slane %v4834, 2
      %v4836 = vmax.f32 %v4834, %v4835
      %v4837 = vrot.slane %v4836, 1
      %v4838 = vmax.f32 %v4836, %v4837
      %v4839 = vrot.slane %v3379, 4
      %v4840 = vmax.f32 %v3379, %v4839
      %v4841 = vrot.slane %v4840, 2
      %v4842 = vmax.f32 %v4840, %v4841
      %v4843 = vrot.slane %v4842, 1
      %v4844 = vmax.f32 %v4842, %v4843
      %v4845 = vrot.slane %v3380, 4
      %v4846 = vmax.f32 %v3380, %v4845
      %v4847 = vrot.slane %v4846, 2
      %v4848 = vmax.f32 %v4846, %v4847
      %v4849 = vrot.slane %v4848, 1
      %v4850 = vmax.f32 %v4848, %v4849
      %v4851 = vrot.slane %v3381, 4
      %v4852 = vmax.f32 %v3381, %v4851
      %v4853 = vrot.slane %v4852, 2
      %v4854 = vmax.f32 %v4852, %v4853
      %v4855 = vrot.slane %v4854, 1
      %v4856 = vmax.f32 %v4854, %v4855
      %v4857 = vrot.slane %v3382, 4
      %v4858 = vmax.f32 %v3382, %v4857
      %v4859 = vrot.slane %v4858, 2
      %v4860 = vmax.f32 %v4858, %v4859
      %v4861 = vrot.slane %v4860, 1
      %v4862 = vmax.f32 %v4860, %v4861
      %v4863 = vrot.slane %v3383, 4
      %v4864 = vmax.f32 %v3383, %v4863
      %v4865 = vrot.slane %v4864, 2
      %v4866 = vmax.f32 %v4864, %v4865
      %v4867 = vrot.slane %v4866, 1
      %v4868 = vmax.f32 %v4866, %v4867
      %v4869 = vrot.slane %v3384, 4
      %v4870 = vmax.f32 %v3384, %v4869
      %v4871 = vrot.slane %v4870, 2
      %v4872 = vmax.f32 %v4870, %v4871
      %v4873 = vrot.slane %v4872, 1
      %v4874 = vmax.f32 %v4872, %v4873
      %v4875 = vrot.slane %v3385, 4
      %v4876 = vmax.f32 %v3385, %v4875
      %v4877 = vrot.slane %v4876, 2
      %v4878 = vmax.f32 %v4876, %v4877
      %v4879 = vrot.slane %v4878, 1
      %v4880 = vmax.f32 %v4878, %v4879
      %v4881 = vrot.slane %v3386, 4
      %v4882 = vmax.f32 %v3386, %v4881
      %v4883 = vrot.slane %v4882, 2
      %v4884 = vmax.f32 %v4882, %v4883
      %v4885 = vrot.slane %v4884, 1
      %v4886 = vmax.f32 %v4884, %v4885
      %v4887 = vrot.slane %v3387, 4
      %v4888 = vmax.f32 %v3387, %v4887
      %v4889 = vrot.slane %v4888, 2
      %v4890 = vmax.f32 %v4888, %v4889
      %v4891 = vrot.slane %v4890, 1
      %v4892 = vmax.f32 %v4890, %v4891
      %v4893 = vrot.slane %v3388, 4
      %v4894 = vmax.f32 %v3388, %v4893
      %v4895 = vrot.slane %v4894, 2
      %v4896 = vmax.f32 %v4894, %v4895
      %v4897 = vrot.slane %v4896, 1
      %v4898 = vmax.f32 %v4896, %v4897
      %v4899 = vrot.slane %v3389, 4
      %v4900 = vmax.f32 %v3389, %v4899
      %v4901 = vrot.slane %v4900, 2
      %v4902 = vmax.f32 %v4900, %v4901
      %v4903 = vrot.slane %v4902, 1
      %v4904 = vmax.f32 %v4902, %v4903
      %v4905 = vrot.slane %v3390, 4
      %v4906 = vmax.f32 %v3390, %v4905
      %v4907 = vrot.slane %v4906, 2
      %v4908 = vmax.f32 %v4906, %v4907
      %v4909 = vrot.slane %v4908, 1
      %v4910 = vmax.f32 %v4908, %v4909
      %v4911 = vrot.slane %v3391, 4
      %v4912 = vmax.f32 %v3391, %v4911
      %v4913 = vrot.slane %v4912, 2
      %v4914 = vmax.f32 %v4912, %v4913
      %v4915 = vrot.slane %v4914, 1
      %v4916 = vmax.f32 %v4914, %v4915
      %v4917 = vrot.slane %v3392, 4
      %v4918 = vmax.f32 %v3392, %v4917
      %v4919 = vrot.slane %v4918, 2
      %v4920 = vmax.f32 %v4918, %v4919
      %v4921 = vrot.slane %v4920, 1
      %v4922 = vmax.f32 %v4920, %v4921
      %v4923 = vrot.slane %v3393, 4
      %v4924 = vmax.f32 %v3393, %v4923
      %v4925 = vrot.slane %v4924, 2
      %v4926 = vmax.f32 %v4924, %v4925
      %v4927 = vrot.slane %v4926, 1
      %v4928 = vmax.f32 %v4926, %v4927
      %v4929 = vrot.slane %v3394, 4
      %v4930 = vmax.f32 %v3394, %v4929
      %v4931 = vrot.slane %v4930, 2
      %v4932 = vmax.f32 %v4930, %v4931
      %v4933 = vrot.slane %v4932, 1
      %v4934 = vmax.f32 %v4932, %v4933
      %v4935 = vrot.slane %v3395, 4
      %v4936 = vmax.f32 %v3395, %v4935
      %v4937 = vrot.slane %v4936, 2
      %v4938 = vmax.f32 %v4936, %v4937
      %v4939 = vrot.slane %v4938, 1
      %v4940 = vmax.f32 %v4938, %v4939
      %v4941 = vrot.slane %v3396, 4
      %v4942 = vmax.f32 %v3396, %v4941
      %v4943 = vrot.slane %v4942, 2
      %v4944 = vmax.f32 %v4942, %v4943
      %v4945 = vrot.slane %v4944, 1
      %v4946 = vmax.f32 %v4944, %v4945
      %v4947 = vrot.slane %v3397, 4
      %v4948 = vmax.f32 %v3397, %v4947
      %v4949 = vrot.slane %v4948, 2
      %v4950 = vmax.f32 %v4948, %v4949
      %v4951 = vrot.slane %v4950, 1
      %v4952 = vmax.f32 %v4950, %v4951
      %v4953 = vrot.slane %v3398, 4
      %v4954 = vmax.f32 %v3398, %v4953
      %v4955 = vrot.slane %v4954, 2
      %v4956 = vmax.f32 %v4954, %v4955
      %v4957 = vrot.slane %v4956, 1
      %v4958 = vmax.f32 %v4956, %v4957
      %v4959 = vrot.slane %v3399, 4
      %v4960 = vmax.f32 %v3399, %v4959
      %v4961 = vrot.slane %v4960, 2
      %v4962 = vmax.f32 %v4960, %v4961
      %v4963 = vrot.slane %v4962, 1
      %v4964 = vmax.f32 %v4962, %v4963
      %v4965 = vrot.slane %v3400, 4
      %v4966 = vmax.f32 %v3400, %v4965
      %v4967 = vrot.slane %v4966, 2
      %v4968 = vmax.f32 %v4966, %v4967
      %v4969 = vrot.slane %v4968, 1
      %v4970 = vmax.f32 %v4968, %v4969
      %v4971 = vrot.slane %v3401, 4
      %v4972 = vmax.f32 %v3401, %v4971
      %v4973 = vrot.slane %v4972, 2
      %v4974 = vmax.f32 %v4972, %v4973
      %v4975 = vrot.slane %v4974, 1
      %v4976 = vmax.f32 %v4974, %v4975
      %v4977 = vrot.slane %v3402, 4
      %v4978 = vmax.f32 %v3402, %v4977
      %v4979 = vrot.slane %v4978, 2
      %v4980 = vmax.f32 %v4978, %v4979
      %v4981 = vrot.slane %v4980, 1
      %v4982 = vmax.f32 %v4980, %v4981
      %v4983 = vrot.slane %v3403, 4
      %v4984 = vmax.f32 %v3403, %v4983
      %v4985 = vrot.slane %v4984, 2
      %v4986 = vmax.f32 %v4984, %v4985
      %v4987 = vrot.slane %v4986, 1
      %v4988 = vmax.f32 %v4986, %v4987
      %v4989 = vrot.slane %v3404, 4
      %v4990 = vmax.f32 %v3404, %v4989
      %v4991 = vrot.slane %v4990, 2
      %v4992 = vmax.f32 %v4990, %v4991
      %v4993 = vrot.slane %v4992, 1
      %v4994 = vmax.f32 %v4992, %v4993
      %v4995 = vrot.slane %v3405, 4
      %v4996 = vmax.f32 %v3405, %v4995
      %v4997 = vrot.slane %v4996, 2
      %v4998 = vmax.f32 %v4996, %v4997
      %v4999 = vrot.slane %v4998, 1
      %v5000 = vmax.f32 %v4998, %v4999
      %v5001 = vrot.slane %v3406, 4
      %v5002 = vmax.f32 %v3406, %v5001
      %v5003 = vrot.slane %v5002, 2
      %v5004 = vmax.f32 %v5002, %v5003
      %v5005 = vrot.slane %v5004, 1
      %v5006 = vmax.f32 %v5004, %v5005
      %v5007 = vrot.slane %v3407, 4
      %v5008 = vmax.f32 %v3407, %v5007
      %v5009 = vrot.slane %v5008, 2
      %v5010 = vmax.f32 %v5008, %v5009
      %v5011 = vrot.slane %v5010, 1
      %v5012 = vmax.f32 %v5010, %v5011
      %v5013 = vrot.slane %v3408, 4
      %v5014 = vmax.f32 %v3408, %v5013
      %v5015 = vrot.slane %v5014, 2
      %v5016 = vmax.f32 %v5014, %v5015
      %v5017 = vrot.slane %v5016, 1
      %v5018 = vmax.f32 %v5016, %v5017
      %v5019 = vrot.slane %v3409, 4
      %v5020 = vmax.f32 %v3409, %v5019
      %v5021 = vrot.slane %v5020, 2
      %v5022 = vmax.f32 %v5020, %v5021
      %v5023 = vrot.slane %v5022, 1
      %v5024 = vmax.f32 %v5022, %v5023
      %v5025 = vrot.slane %v3410, 4
      %v5026 = vmax.f32 %v3410, %v5025
      %v5027 = vrot.slane %v5026, 2
      %v5028 = vmax.f32 %v5026, %v5027
      %v5029 = vrot.slane %v5028, 1
      %v5030 = vmax.f32 %v5028, %v5029
      %v5031 = vrot.slane %v3411, 4
      %v5032 = vmax.f32 %v3411, %v5031
      %v5033 = vrot.slane %v5032, 2
      %v5034 = vmax.f32 %v5032, %v5033
      %v5035 = vrot.slane %v5034, 1
      %v5036 = vmax.f32 %v5034, %v5035
      %v5037 = vrot.slane %v3412, 4
      %v5038 = vmax.f32 %v3412, %v5037
      %v5039 = vrot.slane %v5038, 2
      %v5040 = vmax.f32 %v5038, %v5039
      %v5041 = vrot.slane %v5040, 1
      %v5042 = vmax.f32 %v5040, %v5041
      %v5043 = vrot.slane %v3413, 4
      %v5044 = vmax.f32 %v3413, %v5043
      %v5045 = vrot.slane %v5044, 2
      %v5046 = vmax.f32 %v5044, %v5045
      %v5047 = vrot.slane %v5046, 1
      %v5048 = vmax.f32 %v5046, %v5047
      %v5049 = vrot.slane %v3414, 4
      %v5050 = vmax.f32 %v3414, %v5049
      %v5051 = vrot.slane %v5050, 2
      %v5052 = vmax.f32 %v5050, %v5051
      %v5053 = vrot.slane %v5052, 1
      %v5054 = vmax.f32 %v5052, %v5053
      %v5055 = vrot.slane %v3415, 4
      %v5056 = vmax.f32 %v3415, %v5055
      %v5057 = vrot.slane %v5056, 2
      %v5058 = vmax.f32 %v5056, %v5057
      %v5059 = vrot.slane %v5058, 1
      %v5060 = vmax.f32 %v5058, %v5059
      %v5061 = vrot.slane %v3416, 4
      %v5062 = vmax.f32 %v3416, %v5061
      %v5063 = vrot.slane %v5062, 2
      %v5064 = vmax.f32 %v5062, %v5063
      %v5065 = vrot.slane %v5064, 1
      %v5066 = vmax.f32 %v5064, %v5065
      %v5067 = vrot.slane %v3417, 4
      %v5068 = vmax.f32 %v3417, %v5067
      %v5069 = vrot.slane %v5068, 2
      %v5070 = vmax.f32 %v5068, %v5069
      %v5071 = vrot.slane %v5070, 1
      %v5072 = vmax.f32 %v5070, %v5071
      %v5073 = vrot.slane %v3418, 4
      %v5074 = vmax.f32 %v3418, %v5073
      %v5075 = vrot.slane %v5074, 2
      %v5076 = vmax.f32 %v5074, %v5075
      %v5077 = vrot.slane %v5076, 1
      %v5078 = vmax.f32 %v5076, %v5077
      %v5079 = vrot.slane %v3419, 4
      %v5080 = vmax.f32 %v3419, %v5079
      %v5081 = vrot.slane %v5080, 2
      %v5082 = vmax.f32 %v5080, %v5081
      %v5083 = vrot.slane %v5082, 1
      %v5084 = vmax.f32 %v5082, %v5083
      %v5085 = vrot.slane %v3420, 4
      %v5086 = vmax.f32 %v3420, %v5085
      %v5087 = vrot.slane %v5086, 2
      %v5088 = vmax.f32 %v5086, %v5087
      %v5089 = vrot.slane %v5088, 1
      %v5090 = vmax.f32 %v5088, %v5089
      %v5091 = vrot.slane %v3421, 4
      %v5092 = vmax.f32 %v3421, %v5091
      %v5093 = vrot.slane %v5092, 2
      %v5094 = vmax.f32 %v5092, %v5093
      %v5095 = vrot.slane %v5094, 1
      %v5096 = vmax.f32 %v5094, %v5095
      %v5097 = vrot.slane %v3422, 4
      %v5098 = vmax.f32 %v3422, %v5097
      %v5099 = vrot.slane %v5098, 2
      %v5100 = vmax.f32 %v5098, %v5099
      %v5101 = vrot.slane %v5100, 1
      %v5102 = vmax.f32 %v5100, %v5101
      %v5103 = vrot.slane %v3423, 4
      %v5104 = vmax.f32 %v3423, %v5103
      %v5105 = vrot.slane %v5104, 2
      %v5106 = vmax.f32 %v5104, %v5105
      %v5107 = vrot.slane %v5106, 1
      %v5108 = vmax.f32 %v5106, %v5107
      %v5109 = vrot.slane %v3424, 4
      %v5110 = vmax.f32 %v3424, %v5109
      %v5111 = vrot.slane %v5110, 2
      %v5112 = vmax.f32 %v5110, %v5111
      %v5113 = vrot.slane %v5112, 1
      %v5114 = vmax.f32 %v5112, %v5113
      %v5115 = vrot.slane %v3425, 4
      %v5116 = vmax.f32 %v3425, %v5115
      %v5117 = vrot.slane %v5116, 2
      %v5118 = vmax.f32 %v5116, %v5117
      %v5119 = vrot.slane %v5118, 1
      %v5120 = vmax.f32 %v5118, %v5119
      %v5121 = vrot.slane %v3426, 4
      %v5122 = vmax.f32 %v3426, %v5121
      %v5123 = vrot.slane %v5122, 2
      %v5124 = vmax.f32 %v5122, %v5123
      %v5125 = vrot.slane %v5124, 1
      %v5126 = vmax.f32 %v5124, %v5125
      %v5127 = vrot.slane %v3427, 4
      %v5128 = vmax.f32 %v3427, %v5127
      %v5129 = vrot.slane %v5128, 2
      %v5130 = vmax.f32 %v5128, %v5129
      %v5131 = vrot.slane %v5130, 1
      %v5132 = vmax.f32 %v5130, %v5131
      %v5133 = vrot.slane %v3428, 4
      %v5134 = vmax.f32 %v3428, %v5133
      %v5135 = vrot.slane %v5134, 2
      %v5136 = vmax.f32 %v5134, %v5135
      %v5137 = vrot.slane %v5136, 1
      %v5138 = vmax.f32 %v5136, %v5137
      %v5139 = vrot.slane %v3429, 4
      %v5140 = vmax.f32 %v3429, %v5139
      %v5141 = vrot.slane %v5140, 2
      %v5142 = vmax.f32 %v5140, %v5141
      %v5143 = vrot.slane %v5142, 1
      %v5144 = vmax.f32 %v5142, %v5143
      %v5145 = vrot.slane %v3430, 4
      %v5146 = vmax.f32 %v3430, %v5145
      %v5147 = vrot.slane %v5146, 2
      %v5148 = vmax.f32 %v5146, %v5147
      %v5149 = vrot.slane %v5148, 1
      %v5150 = vmax.f32 %v5148, %v5149
      %v5151 = vrot.slane %v3431, 4
      %v5152 = vmax.f32 %v3431, %v5151
      %v5153 = vrot.slane %v5152, 2
      %v5154 = vmax.f32 %v5152, %v5153
      %v5155 = vrot.slane %v5154, 1
      %v5156 = vmax.f32 %v5154, %v5155
      %v5157 = vrot.slane %v3432, 4
      %v5158 = vmax.f32 %v3432, %v5157
      %v5159 = vrot.slane %v5158, 2
      %v5160 = vmax.f32 %v5158, %v5159
      %v5161 = vrot.slane %v5160, 1
      %v5162 = vmax.f32 %v5160, %v5161
      %v5163 = vrot.slane %v3433, 4
      %v5164 = vmax.f32 %v3433, %v5163
      %v5165 = vrot.slane %v5164, 2
      %v5166 = vmax.f32 %v5164, %v5165
      %v5167 = vrot.slane %v5166, 1
      %v5168 = vmax.f32 %v5166, %v5167
      %v5169 = vrot.slane %v3434, 4
      %v5170 = vmax.f32 %v3434, %v5169
      %v5171 = vrot.slane %v5170, 2
      %v5172 = vmax.f32 %v5170, %v5171
      %v5173 = vrot.slane %v5172, 1
      %v5174 = vmax.f32 %v5172, %v5173
      %v5175 = vrot.slane %v3435, 4
      %v5176 = vmax.f32 %v3435, %v5175
      %v5177 = vrot.slane %v5176, 2
      %v5178 = vmax.f32 %v5176, %v5177
      %v5179 = vrot.slane %v5178, 1
      %v5180 = vmax.f32 %v5178, %v5179
      %v5181 = vrot.slane %v3436, 4
      %v5182 = vmax.f32 %v3436, %v5181
      %v5183 = vrot.slane %v5182, 2
      %v5184 = vmax.f32 %v5182, %v5183
      %v5185 = vrot.slane %v5184, 1
      %v5186 = vmax.f32 %v5184, %v5185
      %v5187 = vrot.slane %v3437, 4
      %v5188 = vmax.f32 %v3437, %v5187
      %v5189 = vrot.slane %v5188, 2
      %v5190 = vmax.f32 %v5188, %v5189
      %v5191 = vrot.slane %v5190, 1
      %v5192 = vmax.f32 %v5190, %v5191
      %v5193 = vrot.slane %v3438, 4
      %v5194 = vmax.f32 %v3438, %v5193
      %v5195 = vrot.slane %v5194, 2
      %v5196 = vmax.f32 %v5194, %v5195
      %v5197 = vrot.slane %v5196, 1
      %v5198 = vmax.f32 %v5196, %v5197
      %v5199 = vrot.slane %v3439, 4
      %v5200 = vmax.f32 %v3439, %v5199
      %v5201 = vrot.slane %v5200, 2
      %v5202 = vmax.f32 %v5200, %v5201
      %v5203 = vrot.slane %v5202, 1
      %v5204 = vmax.f32 %v5202, %v5203
      %v5205 = vrot.slane %v3440, 4
      %v5206 = vmax.f32 %v3440, %v5205
      %v5207 = vrot.slane %v5206, 2
      %v5208 = vmax.f32 %v5206, %v5207
      %v5209 = vrot.slane %v5208, 1
      %v5210 = vmax.f32 %v5208, %v5209
      %v5211 = vrot.slane %v3441, 4
      %v5212 = vmax.f32 %v3441, %v5211
      %v5213 = vrot.slane %v5212, 2
      %v5214 = vmax.f32 %v5212, %v5213
      %v5215 = vrot.slane %v5214, 1
      %v5216 = vmax.f32 %v5214, %v5215
      %v5217 = vrot.slane %v3442, 4
      %v5218 = vmax.f32 %v3442, %v5217
      %v5219 = vrot.slane %v5218, 2
      %v5220 = vmax.f32 %v5218, %v5219
      %v5221 = vrot.slane %v5220, 1
      %v5222 = vmax.f32 %v5220, %v5221
      %v5223 = vrot.slane %v3443, 4
      %v5224 = vmax.f32 %v3443, %v5223
      %v5225 = vrot.slane %v5224, 2
      %v5226 = vmax.f32 %v5224, %v5225
      %v5227 = vrot.slane %v5226, 1
      %v5228 = vmax.f32 %v5226, %v5227
      %v5229 = vrot.slane %v3444, 4
      %v5230 = vmax.f32 %v3444, %v5229
      %v5231 = vrot.slane %v5230, 2
      %v5232 = vmax.f32 %v5230, %v5231
      %v5233 = vrot.slane %v5232, 1
      %v5234 = vmax.f32 %v5232, %v5233
      %v5235 = vrot.slane %v3445, 4
      %v5236 = vmax.f32 %v3445, %v5235
      %v5237 = vrot.slane %v5236, 2
      %v5238 = vmax.f32 %v5236, %v5237
      %v5239 = vrot.slane %v5238, 1
      %v5240 = vmax.f32 %v5238, %v5239
      %v5241 = vrot.slane %v3446, 4
      %v5242 = vmax.f32 %v3446, %v5241
      %v5243 = vrot.slane %v5242, 2
      %v5244 = vmax.f32 %v5242, %v5243
      %v5245 = vrot.slane %v5244, 1
      %v5246 = vmax.f32 %v5244, %v5245
      %v5247 = vrot.slane %v3447, 4
      %v5248 = vmax.f32 %v3447, %v5247
      %v5249 = vrot.slane %v5248, 2
      %v5250 = vmax.f32 %v5248, %v5249
      %v5251 = vrot.slane %v5250, 1
      %v5252 = vmax.f32 %v5250, %v5251
      %v5253 = vrot.slane %v3448, 4
      %v5254 = vmax.f32 %v3448, %v5253
      %v5255 = vrot.slane %v5254, 2
      %v5256 = vmax.f32 %v5254, %v5255
      %v5257 = vrot.slane %v5256, 1
      %v5258 = vmax.f32 %v5256, %v5257
      %v5259 = vrot.slane %v3449, 4
      %v5260 = vmax.f32 %v3449, %v5259
      %v5261 = vrot.slane %v5260, 2
      %v5262 = vmax.f32 %v5260, %v5261
      %v5263 = vrot.slane %v5262, 1
      %v5264 = vmax.f32 %v5262, %v5263
      %v5265 = vrot.slane %v3450, 4
      %v5266 = vmax.f32 %v3450, %v5265
      %v5267 = vrot.slane %v5266, 2
      %v5268 = vmax.f32 %v5266, %v5267
      %v5269 = vrot.slane %v5268, 1
      %v5270 = vmax.f32 %v5268, %v5269
      %v5271 = vrot.slane %v3451, 4
      %v5272 = vmax.f32 %v3451, %v5271
      %v5273 = vrot.slane %v5272, 2
      %v5274 = vmax.f32 %v5272, %v5273
      %v5275 = vrot.slane %v5274, 1
      %v5276 = vmax.f32 %v5274, %v5275
      %v5277 = vrot.slane %v3452, 4
      %v5278 = vmax.f32 %v3452, %v5277
      %v5279 = vrot.slane %v5278, 2
      %v5280 = vmax.f32 %v5278, %v5279
      %v5281 = vrot.slane %v5280, 1
      %v5282 = vmax.f32 %v5280, %v5281
      %v5283 = vrot.slane %v3453, 4
      %v5284 = vmax.f32 %v3453, %v5283
      %v5285 = vrot.slane %v5284, 2
      %v5286 = vmax.f32 %v5284, %v5285
      %v5287 = vrot.slane %v5286, 1
      %v5288 = vmax.f32 %v5286, %v5287
      %v5289 = vrot.slane %v3454, 4
      %v5290 = vmax.f32 %v3454, %v5289
      %v5291 = vrot.slane %v5290, 2
      %v5292 = vmax.f32 %v5290, %v5291
      %v5293 = vrot.slane %v5292, 1
      %v5294 = vmax.f32 %v5292, %v5293
      %v5295 = vrot.slane %v3455, 4
      %v5296 = vmax.f32 %v3455, %v5295
      %v5297 = vrot.slane %v5296, 2
      %v5298 = vmax.f32 %v5296, %v5297
      %v5299 = vrot.slane %v5298, 1
      %v5300 = vmax.f32 %v5298, %v5299
      %v5301 = vrot.slane %v3456, 4
      %v5302 = vmax.f32 %v3456, %v5301
      %v5303 = vrot.slane %v5302, 2
      %v5304 = vmax.f32 %v5302, %v5303
      %v5305 = vrot.slane %v5304, 1
      %v5306 = vmax.f32 %v5304, %v5305
      %v5307 = vrot.slane %v3457, 4
      %v5308 = vmax.f32 %v3457, %v5307
      %v5309 = vrot.slane %v5308, 2
      %v5310 = vmax.f32 %v5308, %v5309
      %v5311 = vrot.slane %v5310, 1
      %v5312 = vmax.f32 %v5310, %v5311
      %v5313 = vrot.slane %v3458, 4
      %v5314 = vmax.f32 %v3458, %v5313
      %v5315 = vrot.slane %v5314, 2
      %v5316 = vmax.f32 %v5314, %v5315
      %v5317 = vrot.slane %v5316, 1
      %v5318 = vmax.f32 %v5316, %v5317
      %v5319 = vrot.slane %v3459, 4
      %v5320 = vmax.f32 %v3459, %v5319
      %v5321 = vrot.slane %v5320, 2
      %v5322 = vmax.f32 %v5320, %v5321
      %v5323 = vrot.slane %v5322, 1
      %v5324 = vmax.f32 %v5322, %v5323
      %v5325 = vrot.slane %v3460, 4
      %v5326 = vmax.f32 %v3460, %v5325
      %v5327 = vrot.slane %v5326, 2
      %v5328 = vmax.f32 %v5326, %v5327
      %v5329 = vrot.slane %v5328, 1
      %v5330 = vmax.f32 %v5328, %v5329
      %v5331 = vrot.slane %v3461, 4
      %v5332 = vmax.f32 %v3461, %v5331
      %v5333 = vrot.slane %v5332, 2
      %v5334 = vmax.f32 %v5332, %v5333
      %v5335 = vrot.slane %v5334, 1
      %v5336 = vmax.f32 %v5334, %v5335
      %v5337 = vrot.slane %v3462, 4
      %v5338 = vmax.f32 %v3462, %v5337
      %v5339 = vrot.slane %v5338, 2
      %v5340 = vmax.f32 %v5338, %v5339
      %v5341 = vrot.slane %v5340, 1
      %v5342 = vmax.f32 %v5340, %v5341
      %v5343 = vrot.slane %v3463, 4
      %v5344 = vmax.f32 %v3463, %v5343
      %v5345 = vrot.slane %v5344, 2
      %v5346 = vmax.f32 %v5344, %v5345
      %v5347 = vrot.slane %v5346, 1
      %v5348 = vmax.f32 %v5346, %v5347
      %v5349 = vrot.slane %v3464, 4
      %v5350 = vmax.f32 %v3464, %v5349
      %v5351 = vrot.slane %v5350, 2
      %v5352 = vmax.f32 %v5350, %v5351
      %v5353 = vrot.slane %v5352, 1
      %v5354 = vmax.f32 %v5352, %v5353
      %v5355 = vrot.slane %v3465, 4
      %v5356 = vmax.f32 %v3465, %v5355
      %v5357 = vrot.slane %v5356, 2
      %v5358 = vmax.f32 %v5356, %v5357
      %v5359 = vrot.slane %v5358, 1
      %v5360 = vmax.f32 %v5358, %v5359
      %v5361 = vrot.slane %v3466, 4
      %v5362 = vmax.f32 %v3466, %v5361
      %v5363 = vrot.slane %v5362, 2
      %v5364 = vmax.f32 %v5362, %v5363
      %v5365 = vrot.slane %v5364, 1
      %v5366 = vmax.f32 %v5364, %v5365
      %v5367 = vrot.slane %v3467, 4
      %v5368 = vmax.f32 %v3467, %v5367
      %v5369 = vrot.slane %v5368, 2
      %v5370 = vmax.f32 %v5368, %v5369
      %v5371 = vrot.slane %v5370, 1
      %v5372 = vmax.f32 %v5370, %v5371
      %v5373 = vrot.slane %v3468, 4
      %v5374 = vmax.f32 %v3468, %v5373
      %v5375 = vrot.slane %v5374, 2
      %v5376 = vmax.f32 %v5374, %v5375
      %v5377 = vrot.slane %v5376, 1
      %v5378 = vmax.f32 %v5376, %v5377
      %v5379 = vrot.slane %v3469, 4
      %v5380 = vmax.f32 %v3469, %v5379
      %v5381 = vrot.slane %v5380, 2
      %v5382 = vmax.f32 %v5380, %v5381
      %v5383 = vrot.slane %v5382, 1
      %v5384 = vmax.f32 %v5382, %v5383
      %v5385 = vrot.slane %v3470, 4
      %v5386 = vmax.f32 %v3470, %v5385
      %v5387 = vrot.slane %v5386, 2
      %v5388 = vmax.f32 %v5386, %v5387
      %v5389 = vrot.slane %v5388, 1
      %v5390 = vmax.f32 %v5388, %v5389
      %v5391 = vrot.slane %v3471, 4
      %v5392 = vmax.f32 %v3471, %v5391
      %v5393 = vrot.slane %v5392, 2
      %v5394 = vmax.f32 %v5392, %v5393
      %v5395 = vrot.slane %v5394, 1
      %v5396 = vmax.f32 %v5394, %v5395
      %v5397 = vrot.slane %v3472, 4
      %v5398 = vmax.f32 %v3472, %v5397
      %v5399 = vrot.slane %v5398, 2
      %v5400 = vmax.f32 %v5398, %v5399
      %v5401 = vrot.slane %v5400, 1
      %v5402 = vmax.f32 %v5400, %v5401
      %v5403 = vrot.slane %v3473, 4
      %v5404 = vmax.f32 %v3473, %v5403
      %v5405 = vrot.slane %v5404, 2
      %v5406 = vmax.f32 %v5404, %v5405
      %v5407 = vrot.slane %v5406, 1
      %v5408 = vmax.f32 %v5406, %v5407
      %v5409 = vrot.slane %v3474, 4
      %v5410 = vmax.f32 %v3474, %v5409
      %v5411 = vrot.slane %v5410, 2
      %v5412 = vmax.f32 %v5410, %v5411
      %v5413 = vrot.slane %v5412, 1
      %v5414 = vmax.f32 %v5412, %v5413
      %v5415 = vrot.slane %v3475, 4
      %v5416 = vmax.f32 %v3475, %v5415
      %v5417 = vrot.slane %v5416, 2
      %v5418 = vmax.f32 %v5416, %v5417
      %v5419 = vrot.slane %v5418, 1
      %v5420 = vmax.f32 %v5418, %v5419
      %v5421 = vrot.slane %v3476, 4
      %v5422 = vmax.f32 %v3476, %v5421
      %v5423 = vrot.slane %v5422, 2
      %v5424 = vmax.f32 %v5422, %v5423
      %v5425 = vrot.slane %v5424, 1
      %v5426 = vmax.f32 %v5424, %v5425
      %v5427 = vrot.slane %v3477, 4
      %v5428 = vmax.f32 %v3477, %v5427
      %v5429 = vrot.slane %v5428, 2
      %v5430 = vmax.f32 %v5428, %v5429
      %v5431 = vrot.slane %v5430, 1
      %v5432 = vmax.f32 %v5430, %v5431
      %v5433 = vrot.slane %v3478, 4
      %v5434 = vmax.f32 %v3478, %v5433
      %v5435 = vrot.slane %v5434, 2
      %v5436 = vmax.f32 %v5434, %v5435
      %v5437 = vrot.slane %v5436, 1
      %v5438 = vmax.f32 %v5436, %v5437
      %v5439 = vrot.slane %v3479, 4
      %v5440 = vmax.f32 %v3479, %v5439
      %v5441 = vrot.slane %v5440, 2
      %v5442 = vmax.f32 %v5440, %v5441
      %v5443 = vrot.slane %v5442, 1
      %v5444 = vmax.f32 %v5442, %v5443
      %v5445 = vrot.slane %v3480, 4
      %v5446 = vmax.f32 %v3480, %v5445
      %v5447 = vrot.slane %v5446, 2
      %v5448 = vmax.f32 %v5446, %v5447
      %v5449 = vrot.slane %v5448, 1
      %v5450 = vmax.f32 %v5448, %v5449
      %v5451 = vrot.slane %v3481, 4
      %v5452 = vmax.f32 %v3481, %v5451
      %v5453 = vrot.slane %v5452, 2
      %v5454 = vmax.f32 %v5452, %v5453
      %v5455 = vrot.slane %v5454, 1
      %v5456 = vmax.f32 %v5454, %v5455
      %v5457 = vrot.slane %v3482, 4
      %v5458 = vmax.f32 %v3482, %v5457
      %v5459 = vrot.slane %v5458, 2
      %v5460 = vmax.f32 %v5458, %v5459
      %v5461 = vrot.slane %v5460, 1
      %v5462 = vmax.f32 %v5460, %v5461
      %v5463 = vrot.slane %v3483, 4
      %v5464 = vmax.f32 %v3483, %v5463
      %v5465 = vrot.slane %v5464, 2
      %v5466 = vmax.f32 %v5464, %v5465
      %v5467 = vrot.slane %v5466, 1
      %v5468 = vmax.f32 %v5466, %v5467
      %v5469 = vrot.slane %v3484, 4
      %v5470 = vmax.f32 %v3484, %v5469
      %v5471 = vrot.slane %v5470, 2
      %v5472 = vmax.f32 %v5470, %v5471
      %v5473 = vrot.slane %v5472, 1
      %v5474 = vmax.f32 %v5472, %v5473
      %v5475 = vrot.slane %v3485, 4
      %v5476 = vmax.f32 %v3485, %v5475
      %v5477 = vrot.slane %v5476, 2
      %v5478 = vmax.f32 %v5476, %v5477
      %v5479 = vrot.slane %v5478, 1
      %v5480 = vmax.f32 %v5478, %v5479
      %v5481 = vrot.slane %v3486, 4
      %v5482 = vmax.f32 %v3486, %v5481
      %v5483 = vrot.slane %v5482, 2
      %v5484 = vmax.f32 %v5482, %v5483
      %v5485 = vrot.slane %v5484, 1
      %v5486 = vmax.f32 %v5484, %v5485
      %v5487 = vrot.slane %v3487, 4
      %v5488 = vmax.f32 %v3487, %v5487
      %v5489 = vrot.slane %v5488, 2
      %v5490 = vmax.f32 %v5488, %v5489
      %v5491 = vrot.slane %v5490, 1
      %v5492 = vmax.f32 %v5490, %v5491
      %v5493 = vrot.slane %v3488, 4
      %v5494 = vmax.f32 %v3488, %v5493
      %v5495 = vrot.slane %v5494, 2
      %v5496 = vmax.f32 %v5494, %v5495
      %v5497 = vrot.slane %v5496, 1
      %v5498 = vmax.f32 %v5496, %v5497
      %v5499 = vrot.slane %v3489, 4
      %v5500 = vmax.f32 %v3489, %v5499
      %v5501 = vrot.slane %v5500, 2
      %v5502 = vmax.f32 %v5500, %v5501
      %v5503 = vrot.slane %v5502, 1
      %v5504 = vmax.f32 %v5502, %v5503
      %v5505 = vrot.slane %v3490, 4
      %v5506 = vmax.f32 %v3490, %v5505
      %v5507 = vrot.slane %v5506, 2
      %v5508 = vmax.f32 %v5506, %v5507
      %v5509 = vrot.slane %v5508, 1
      %v5510 = vmax.f32 %v5508, %v5509
      %v5511 = vrot.slane %v3491, 4
      %v5512 = vmax.f32 %v3491, %v5511
      %v5513 = vrot.slane %v5512, 2
      %v5514 = vmax.f32 %v5512, %v5513
      %v5515 = vrot.slane %v5514, 1
      %v5516 = vmax.f32 %v5514, %v5515
      %v5517 = vrot.slane %v3492, 4
      %v5518 = vmax.f32 %v3492, %v5517
      %v5519 = vrot.slane %v5518, 2
      %v5520 = vmax.f32 %v5518, %v5519
      %v5521 = vrot.slane %v5520, 1
      %v5522 = vmax.f32 %v5520, %v5521
      %v5523 = vrot.slane %v3493, 4
      %v5524 = vmax.f32 %v3493, %v5523
      %v5525 = vrot.slane %v5524, 2
      %v5526 = vmax.f32 %v5524, %v5525
      %v5527 = vrot.slane %v5526, 1
      %v5528 = vmax.f32 %v5526, %v5527
      %v5529 = vrot.slane %v3494, 4
      %v5530 = vmax.f32 %v3494, %v5529
      %v5531 = vrot.slane %v5530, 2
      %v5532 = vmax.f32 %v5530, %v5531
      %v5533 = vrot.slane %v5532, 1
      %v5534 = vmax.f32 %v5532, %v5533
      %v5535 = vrot.slane %v3495, 4
      %v5536 = vmax.f32 %v3495, %v5535
      %v5537 = vrot.slane %v5536, 2
      %v5538 = vmax.f32 %v5536, %v5537
      %v5539 = vrot.slane %v5538, 1
      %v5540 = vmax.f32 %v5538, %v5539
      %v5541 = vrot.slane %v3496, 4
      %v5542 = vmax.f32 %v3496, %v5541
      %v5543 = vrot.slane %v5542, 2
      %v5544 = vmax.f32 %v5542, %v5543
      %v5545 = vrot.slane %v5544, 1
      %v5546 = vmax.f32 %v5544, %v5545
      %v5547 = vrot.slane %v3497, 4
      %v5548 = vmax.f32 %v3497, %v5547
      %v5549 = vrot.slane %v5548, 2
      %v5550 = vmax.f32 %v5548, %v5549
      %v5551 = vrot.slane %v5550, 1
      %v5552 = vmax.f32 %v5550, %v5551
      %v5553 = vrot.slane %v3498, 4
      %v5554 = vmax.f32 %v3498, %v5553
      %v5555 = vrot.slane %v5554, 2
      %v5556 = vmax.f32 %v5554, %v5555
      %v5557 = vrot.slane %v5556, 1
      %v5558 = vmax.f32 %v5556, %v5557
      %v5559 = vrot.slane %v3499, 4
      %v5560 = vmax.f32 %v3499, %v5559
      %v5561 = vrot.slane %v5560, 2
      %v5562 = vmax.f32 %v5560, %v5561
      %v5563 = vrot.slane %v5562, 1
      %v5564 = vmax.f32 %v5562, %v5563
      %v5565 = vrot.slane %v3500, 4
      %v5566 = vmax.f32 %v3500, %v5565
      %v5567 = vrot.slane %v5566, 2
      %v5568 = vmax.f32 %v5566, %v5567
      %v5569 = vrot.slane %v5568, 1
      %v5570 = vmax.f32 %v5568, %v5569
      %v5571 = vrot.slane %v3501, 4
      %v5572 = vmax.f32 %v3501, %v5571
      %v5573 = vrot.slane %v5572, 2
      %v5574 = vmax.f32 %v5572, %v5573
      %v5575 = vrot.slane %v5574, 1
      %v5576 = vmax.f32 %v5574, %v5575
      %v5577 = vrot.slane %v3502, 4
      %v5578 = vmax.f32 %v3502, %v5577
      %v5579 = vrot.slane %v5578, 2
      %v5580 = vmax.f32 %v5578, %v5579
      %v5581 = vrot.slane %v5580, 1
      %v5582 = vmax.f32 %v5580, %v5581
      %v5583 = vrot.slane %v3503, 4
      %v5584 = vmax.f32 %v3503, %v5583
      %v5585 = vrot.slane %v5584, 2
      %v5586 = vmax.f32 %v5584, %v5585
      %v5587 = vrot.slane %v5586, 1
      %v5588 = vmax.f32 %v5586, %v5587
      %v5589 = vrot.slane %v3504, 4
      %v5590 = vmax.f32 %v3504, %v5589
      %v5591 = vrot.slane %v5590, 2
      %v5592 = vmax.f32 %v5590, %v5591
      %v5593 = vrot.slane %v5592, 1
      %v5594 = vmax.f32 %v5592, %v5593
      %v5595 = vrot.slane %v3505, 4
      %v5596 = vmax.f32 %v3505, %v5595
      %v5597 = vrot.slane %v5596, 2
      %v5598 = vmax.f32 %v5596, %v5597
      %v5599 = vrot.slane %v5598, 1
      %v5600 = vmax.f32 %v5598, %v5599
      %v5601 = vrot.slane %v3506, 4
      %v5602 = vmax.f32 %v3506, %v5601
      %v5603 = vrot.slane %v5602, 2
      %v5604 = vmax.f32 %v5602, %v5603
      %v5605 = vrot.slane %v5604, 1
      %v5606 = vmax.f32 %v5604, %v5605
      %v5607 = vrot.slane %v3507, 4
      %v5608 = vmax.f32 %v3507, %v5607
      %v5609 = vrot.slane %v5608, 2
      %v5610 = vmax.f32 %v5608, %v5609
      %v5611 = vrot.slane %v5610, 1
      %v5612 = vmax.f32 %v5610, %v5611
      %v5613 = vrot.slane %v3508, 4
      %v5614 = vmax.f32 %v3508, %v5613
      %v5615 = vrot.slane %v5614, 2
      %v5616 = vmax.f32 %v5614, %v5615
      %v5617 = vrot.slane %v5616, 1
      %v5618 = vmax.f32 %v5616, %v5617
      %v5619 = vrot.slane %v3509, 4
      %v5620 = vmax.f32 %v3509, %v5619
      %v5621 = vrot.slane %v5620, 2
      %v5622 = vmax.f32 %v5620, %v5621
      %v5623 = vrot.slane %v5622, 1
      %v5624 = vmax.f32 %v5622, %v5623
      %v5625 = vrot.slane %v3510, 4
      %v5626 = vmax.f32 %v3510, %v5625
      %v5627 = vrot.slane %v5626, 2
      %v5628 = vmax.f32 %v5626, %v5627
      %v5629 = vrot.slane %v5628, 1
      %v5630 = vmax.f32 %v5628, %v5629
      %v5631 = vrot.slane %v3511, 4
      %v5632 = vmax.f32 %v3511, %v5631
      %v5633 = vrot.slane %v5632, 2
      %v5634 = vmax.f32 %v5632, %v5633
      %v5635 = vrot.slane %v5634, 1
      %v5636 = vmax.f32 %v5634, %v5635
      %v5637 = vrot.slane %v3512, 4
      %v5638 = vmax.f32 %v3512, %v5637
      %v5639 = vrot.slane %v5638, 2
      %v5640 = vmax.f32 %v5638, %v5639
      %v5641 = vrot.slane %v5640, 1
      %v5642 = vmax.f32 %v5640, %v5641
      %v5643 = vrot.slane %v3513, 4
      %v5644 = vmax.f32 %v3513, %v5643
      %v5645 = vrot.slane %v5644, 2
      %v5646 = vmax.f32 %v5644, %v5645
      %v5647 = vrot.slane %v5646, 1
      %v5648 = vmax.f32 %v5646, %v5647
      %v5649 = vrot.slane %v3514, 4
      %v5650 = vmax.f32 %v3514, %v5649
      %v5651 = vrot.slane %v5650, 2
      %v5652 = vmax.f32 %v5650, %v5651
      %v5653 = vrot.slane %v5652, 1
      %v5654 = vmax.f32 %v5652, %v5653
      %v5655 = vrot.slane %v3515, 4
      %v5656 = vmax.f32 %v3515, %v5655
      %v5657 = vrot.slane %v5656, 2
      %v5658 = vmax.f32 %v5656, %v5657
      %v5659 = vrot.slane %v5658, 1
      %v5660 = vmax.f32 %v5658, %v5659
      %v5661 = vrot.slane %v3516, 4
      %v5662 = vmax.f32 %v3516, %v5661
      %v5663 = vrot.slane %v5662, 2
      %v5664 = vmax.f32 %v5662, %v5663
      %v5665 = vrot.slane %v5664, 1
      %v5666 = vmax.f32 %v5664, %v5665
      %v5667 = vrot.slane %v3517, 4
      %v5668 = vmax.f32 %v3517, %v5667
      %v5669 = vrot.slane %v5668, 2
      %v5670 = vmax.f32 %v5668, %v5669
      %v5671 = vrot.slane %v5670, 1
      %v5672 = vmax.f32 %v5670, %v5671
      %v5673 = vrot.slane %v3518, 4
      %v5674 = vmax.f32 %v3518, %v5673
      %v5675 = vrot.slane %v5674, 2
      %v5676 = vmax.f32 %v5674, %v5675
      %v5677 = vrot.slane %v5676, 1
      %v5678 = vmax.f32 %v5676, %v5677
      %v5679 = vpack.c.bf16 %v3524, %v3524
      %v5680 = vpack.c.bf16 %v3530, %v3530
      %v5681 = vpack.c.bf16 %v3536, %v3536
      %v5682 = vpack.c.bf16 %v3542, %v3542
      %v5683 = vpack.c.bf16 %v3548, %v3548
      %v5684 = vpack.c.bf16 %v3554, %v3554
      %v5685 = vpack.c.bf16 %v3560, %v3560
      %v5686 = vpack.c.bf16 %v3566, %v3566
      %v5687 = vpack.c.bf16 %v3572, %v3572
      %v5688 = vpack.c.bf16 %v3578, %v3578
      %v5689 = vpack.c.bf16 %v3584, %v3584
      %v5690 = vpack.c.bf16 %v3590, %v3590
      %v5691 = vpack.c.bf16 %v3596, %v3596
      %v5692 = vpack.c.bf16 %v3602, %v3602
      %v5693 = vpack.c.bf16 %v3608, %v3608
      %v5694 = vpack.c.bf16 %v3614, %v3614
      %v5695 = vpack.c.bf16 %v3620, %v3620
      %v5696 = vpack.c.bf16 %v3626, %v3626
      %v5697 = vpack.c.bf16 %v3632, %v3632
      %v5698 = vpack.c.bf16 %v3638, %v3638
      %v5699 = vpack.c.bf16 %v3644, %v3644
      %v5700 = vpack.c.bf16 %v3650, %v3650
      %v5701 = vpack.c.bf16 %v3656, %v3656
      %v5702 = vpack.c.bf16 %v3662, %v3662
      %v5703 = vpack.c.bf16 %v3668, %v3668
      %v5704 = vpack.c.bf16 %v3674, %v3674
      %v5705 = vpack.c.bf16 %v3680, %v3680
      %v5706 = vpack.c.bf16 %v3686, %v3686
      %v5707 = vpack.c.bf16 %v3692, %v3692
      %v5708 = vpack.c.bf16 %v3698, %v3698
      %v5709 = vpack.c.bf16 %v3704, %v3704
      %v5710 = vpack.c.bf16 %v3710, %v3710
      %v5711 = vpack.c.bf16 %v3716, %v3716
      %v5712 = vpack.c.bf16 %v3722, %v3722
      %v5713 = vpack.c.bf16 %v3728, %v3728
      %v5714 = vpack.c.bf16 %v3734, %v3734
      %v5715 = vpack.c.bf16 %v3740, %v3740
      %v5716 = vpack.c.bf16 %v3746, %v3746
      %v5717 = vpack.c.bf16 %v3752, %v3752
      %v5718 = vpack.c.bf16 %v3758, %v3758
      %v5719 = vpack.c.bf16 %v3764, %v3764
      %v5720 = vpack.c.bf16 %v3770, %v3770
      %v5721 = vpack.c.bf16 %v3776, %v3776
      %v5722 = vpack.c.bf16 %v3782, %v3782
      %v5723 = vpack.c.bf16 %v3788, %v3788
      %v5724 = vpack.c.bf16 %v3794, %v3794
      %v5725 = vpack.c.bf16 %v3800, %v3800
      %v5726 = vpack.c.bf16 %v3806, %v3806
      %v5727 = vpack.c.bf16 %v3812, %v3812
      %v5728 = vpack.c.bf16 %v3818, %v3818
      %v5729 = vpack.c.bf16 %v3824, %v3824
      %v5730 = vpack.c.bf16 %v3830, %v3830
      %v5731 = vpack.c.bf16 %v3836, %v3836
      %v5732 = vpack.c.bf16 %v3842, %v3842
      %v5733 = vpack.c.bf16 %v3848, %v3848
      %v5734 = vpack.c.bf16 %v3854, %v3854
      %v5735 = vpack.c.bf16 %v3860, %v3860
      %v5736 = vpack.c.bf16 %v3866, %v3866
      %v5737 = vpack.c.bf16 %v3872, %v3872
      %v5738 = vpack.c.bf16 %v3878, %v3878
      %v5739 = vpack.c.bf16 %v3884, %v3884
      %v5740 = vpack.c.bf16 %v3890, %v3890
      %v5741 = vpack.c.bf16 %v3896, %v3896
      %v5742 = vpack.c.bf16 %v3902, %v3902
      %v5743 = vpack.c.bf16 %v3908, %v3908
      %v5744 = vpack.c.bf16 %v3914, %v3914
      %v5745 = vpack.c.bf16 %v3920, %v3920
      %v5746 = vpack.c.bf16 %v3926, %v3926
      %v5747 = vpack.c.bf16 %v3932, %v3932
      %v5748 = vpack.c.bf16 %v3938, %v3938
      %v5749 = vpack.c.bf16 %v3944, %v3944
      %v5750 = vpack.c.bf16 %v3950, %v3950
      %v5751 = vpack.c.bf16 %v3956, %v3956
      %v5752 = vpack.c.bf16 %v3962, %v3962
      %v5753 = vpack.c.bf16 %v3968, %v3968
      %v5754 = vpack.c.bf16 %v3974, %v3974
      %v5755 = vpack.c.bf16 %v3980, %v3980
      %v5756 = vpack.c.bf16 %v3986, %v3986
      %v5757 = vpack.c.bf16 %v3992, %v3992
      %v5758 = vpack.c.bf16 %v3998, %v3998
      %v5759 = vpack.c.bf16 %v4004, %v4004
      %v5760 = vpack.c.bf16 %v4010, %v4010
      %v5761 = vpack.c.bf16 %v4016, %v4016
      %v5762 = vpack.c.bf16 %v4022, %v4022
      %v5763 = vpack.c.bf16 %v4028, %v4028
      %v5764 = vpack.c.bf16 %v4034, %v4034
      %v5765 = vpack.c.bf16 %v4040, %v4040
      %v5766 = vpack.c.bf16 %v4046, %v4046
      %v5767 = vpack.c.bf16 %v4052, %v4052
      %v5768 = vpack.c.bf16 %v4058, %v4058
      %v5769 = vpack.c.bf16 %v4064, %v4064
      %v5770 = vpack.c.bf16 %v4070, %v4070
      %v5771 = vpack.c.bf16 %v4076, %v4076
      %v5772 = vpack.c.bf16 %v4082, %v4082
      %v5773 = vpack.c.bf16 %v4088, %v4088
      %v5774 = vpack.c.bf16 %v4094, %v4094
      %v5775 = vpack.c.bf16 %v4100, %v4100
      %v5776 = vpack.c.bf16 %v4106, %v4106
      %v5777 = vpack.c.bf16 %v4112, %v4112
      %v5778 = vpack.c.bf16 %v4118, %v4118
      %v5779 = vpack.c.bf16 %v4124, %v4124
      %v5780 = vpack.c.bf16 %v4130, %v4130
      %v5781 = vpack.c.bf16 %v4136, %v4136
      %v5782 = vpack.c.bf16 %v4142, %v4142
      %v5783 = vpack.c.bf16 %v4148, %v4148
      %v5784 = vpack.c.bf16 %v4154, %v4154
      %v5785 = vpack.c.bf16 %v4160, %v4160
      %v5786 = vpack.c.bf16 %v4166, %v4166
      %v5787 = vpack.c.bf16 %v4172, %v4172
      %v5788 = vpack.c.bf16 %v4178, %v4178
      %v5789 = vpack.c.bf16 %v4184, %v4184
      %v5790 = vpack.c.bf16 %v4190, %v4190
      %v5791 = vpack.c.bf16 %v4196, %v4196
      %v5792 = vpack.c.bf16 %v4202, %v4202
      %v5793 = vpack.c.bf16 %v4208, %v4208
      %v5794 = vpack.c.bf16 %v4214, %v4214
      %v5795 = vpack.c.bf16 %v4220, %v4220
      %v5796 = vpack.c.bf16 %v4226, %v4226
      %v5797 = vpack.c.bf16 %v4232, %v4232
      %v5798 = vpack.c.bf16 %v4238, %v4238
      %v5799 = vpack.c.bf16 %v4244, %v4244
      %v5800 = vpack.c.bf16 %v4250, %v4250
      %v5801 = vpack.c.bf16 %v4256, %v4256
      %v5802 = vpack.c.bf16 %v4262, %v4262
      %v5803 = vpack.c.bf16 %v4268, %v4268
      %v5804 = vpack.c.bf16 %v4274, %v4274
      %v5805 = vpack.c.bf16 %v4280, %v4280
      %v5806 = vpack.c.bf16 %v4286, %v4286
      %v5807 = vpack.c.bf16 %v4292, %v4292
      %v5808 = vpack.c.bf16 %v4298, %v4298
      %v5809 = vpack.c.bf16 %v4304, %v4304
      %v5810 = vpack.c.bf16 %v4310, %v4310
      %v5811 = vpack.c.bf16 %v4316, %v4316
      %v5812 = vpack.c.bf16 %v4322, %v4322
      %v5813 = vpack.c.bf16 %v4328, %v4328
      %v5814 = vpack.c.bf16 %v4334, %v4334
      %v5815 = vpack.c.bf16 %v4340, %v4340
      %v5816 = vpack.c.bf16 %v4346, %v4346
      %v5817 = vpack.c.bf16 %v4352, %v4352
      %v5818 = vpack.c.bf16 %v4358, %v4358
      %v5819 = vpack.c.bf16 %v4364, %v4364
      %v5820 = vpack.c.bf16 %v4370, %v4370
      %v5821 = vpack.c.bf16 %v4376, %v4376
      %v5822 = vpack.c.bf16 %v4382, %v4382
      %v5823 = vpack.c.bf16 %v4388, %v4388
      %v5824 = vpack.c.bf16 %v4394, %v4394
      %v5825 = vpack.c.bf16 %v4400, %v4400
      %v5826 = vpack.c.bf16 %v4406, %v4406
      %v5827 = vpack.c.bf16 %v4412, %v4412
      %v5828 = vpack.c.bf16 %v4418, %v4418
      %v5829 = vpack.c.bf16 %v4424, %v4424
      %v5830 = vpack.c.bf16 %v4430, %v4430
      %v5831 = vpack.c.bf16 %v4436, %v4436
      %v5832 = vpack.c.bf16 %v4442, %v4442
      %v5833 = vpack.c.bf16 %v4448, %v4448
      %v5834 = vpack.c.bf16 %v4454, %v4454
      %v5835 = vpack.c.bf16 %v4460, %v4460
      %v5836 = vpack.c.bf16 %v4466, %v4466
      %v5837 = vpack.c.bf16 %v4472, %v4472
      %v5838 = vpack.c.bf16 %v4478, %v4478
      %v5839 = vpack.c.bf16 %v4484, %v4484
      %v5840 = vpack.c.bf16 %v4490, %v4490
      %v5841 = vpack.c.bf16 %v4496, %v4496
      %v5842 = vpack.c.bf16 %v4502, %v4502
      %v5843 = vpack.c.bf16 %v4508, %v4508
      %v5844 = vpack.c.bf16 %v4514, %v4514
      %v5845 = vpack.c.bf16 %v4520, %v4520
      %v5846 = vpack.c.bf16 %v4526, %v4526
      %v5847 = vpack.c.bf16 %v4532, %v4532
      %v5848 = vpack.c.bf16 %v4538, %v4538
      %v5849 = vpack.c.bf16 %v4544, %v4544
      %v5850 = vpack.c.bf16 %v4550, %v4550
      %v5851 = vpack.c.bf16 %v4556, %v4556
      %v5852 = vpack.c.bf16 %v4562, %v4562
      %v5853 = vpack.c.bf16 %v4568, %v4568
      %v5854 = vpack.c.bf16 %v4574, %v4574
      %v5855 = vpack.c.bf16 %v4580, %v4580
      %v5856 = vpack.c.bf16 %v4586, %v4586
      %v5857 = vpack.c.bf16 %v4592, %v4592
      %v5858 = vpack.c.bf16 %v4598, %v4598
      %v5859 = vpack.c.bf16 %v4604, %v4604
      %v5860 = vpack.c.bf16 %v4610, %v4610
      %v5861 = vpack.c.bf16 %v4616, %v4616
      %v5862 = vpack.c.bf16 %v4622, %v4622
      %v5863 = vpack.c.bf16 %v4628, %v4628
      %v5864 = vpack.c.bf16 %v4634, %v4634
      %v5865 = vpack.c.bf16 %v4640, %v4640
      %v5866 = vpack.c.bf16 %v4646, %v4646
      %v5867 = vpack.c.bf16 %v4652, %v4652
      %v5868 = vpack.c.bf16 %v4658, %v4658
      %v5869 = vpack.c.bf16 %v4664, %v4664
      %v5870 = vpack.c.bf16 %v4670, %v4670
      %v5871 = vpack.c.bf16 %v4676, %v4676
      %v5872 = vpack.c.bf16 %v4682, %v4682
      %v5873 = vpack.c.bf16 %v4688, %v4688
      %v5874 = vpack.c.bf16 %v4694, %v4694
      %v5875 = vpack.c.bf16 %v4700, %v4700
      %v5876 = vpack.c.bf16 %v4706, %v4706
      %v5877 = vpack.c.bf16 %v4712, %v4712
      %v5878 = vpack.c.bf16 %v4718, %v4718
      %v5879 = vpack.c.bf16 %v4724, %v4724
      %v5880 = vpack.c.bf16 %v4730, %v4730
      %v5881 = vpack.c.bf16 %v4736, %v4736
      %v5882 = vpack.c.bf16 %v4742, %v4742
      %v5883 = vpack.c.bf16 %v4748, %v4748
      %v5884 = vpack.c.bf16 %v4754, %v4754
      %v5885 = vpack.c.bf16 %v4760, %v4760
      %v5886 = vpack.c.bf16 %v4766, %v4766
      %v5887 = vpack.c.bf16 %v4772, %v4772
      %v5888 = vpack.c.bf16 %v4778, %v4778
      %v5889 = vpack.c.bf16 %v4784, %v4784
      %v5890 = vpack.c.bf16 %v4790, %v4790
      %v5891 = vpack.c.bf16 %v4796, %v4796
      %v5892 = vpack.c.bf16 %v4802, %v4802
      %v5893 = vpack.c.bf16 %v4808, %v4808
      %v5894 = vpack.c.bf16 %v4814, %v4814
      %v5895 = vpack.c.bf16 %v4820, %v4820
      %v5896 = vpack.c.bf16 %v4826, %v4826
      %v5897 = vpack.c.bf16 %v4832, %v4832
      %v5898 = vpack.c.bf16 %v4838, %v4838
      %v5899 = vpack.c.bf16 %v4844, %v4844
      %v5900 = vpack.c.bf16 %v4850, %v4850
      %v5901 = vpack.c.bf16 %v4856, %v4856
      %v5902 = vpack.c.bf16 %v4862, %v4862
      %v5903 = vpack.c.bf16 %v4868, %v4868
      %v5904 = vpack.c.bf16 %v4874, %v4874
      %v5905 = vpack.c.bf16 %v4880, %v4880
      %v5906 = vpack.c.bf16 %v4886, %v4886
      %v5907 = vpack.c.bf16 %v4892, %v4892
      %v5908 = vpack.c.bf16 %v4898, %v4898
      %v5909 = vpack.c.bf16 %v4904, %v4904
      %v5910 = vpack.c.bf16 %v4910, %v4910
      %v5911 = vpack.c.bf16 %v4916, %v4916
      %v5912 = vpack.c.bf16 %v4922, %v4922
      %v5913 = vpack.c.bf16 %v4928, %v4928
      %v5914 = vpack.c.bf16 %v4934, %v4934
      %v5915 = vpack.c.bf16 %v4940, %v4940
      %v5916 = vpack.c.bf16 %v4946, %v4946
      %v5917 = vpack.c.bf16 %v4952, %v4952
      %v5918 = vpack.c.bf16 %v4958, %v4958
      %v5919 = vpack.c.bf16 %v4964, %v4964
      %v5920 = vpack.c.bf16 %v4970, %v4970
      %v5921 = vpack.c.bf16 %v4976, %v4976
      %v5922 = vpack.c.bf16 %v4982, %v4982
      %v5923 = vpack.c.bf16 %v4988, %v4988
      %v5924 = vpack.c.bf16 %v4994, %v4994
      %v5925 = vpack.c.bf16 %v5000, %v5000
      %v5926 = vpack.c.bf16 %v5006, %v5006
      %v5927 = vpack.c.bf16 %v5012, %v5012
      %v5928 = vpack.c.bf16 %v5018, %v5018
      %v5929 = vpack.c.bf16 %v5024, %v5024
      %v5930 = vpack.c.bf16 %v5030, %v5030
      %v5931 = vpack.c.bf16 %v5036, %v5036
      %v5932 = vpack.c.bf16 %v5042, %v5042
      %v5933 = vpack.c.bf16 %v5048, %v5048
      %v5934 = vpack.c.bf16 %v5054, %v5054
      %v5935 = vpack.c.bf16 %v5060, %v5060
      %v5936 = vpack.c.bf16 %v5066, %v5066
      %v5937 = vpack.c.bf16 %v5072, %v5072
      %v5938 = vpack.c.bf16 %v5078, %v5078
      %v5939 = vpack.c.bf16 %v5084, %v5084
      %v5940 = vpack.c.bf16 %v5090, %v5090
      %v5941 = vpack.c.bf16 %v5096, %v5096
      %v5942 = vpack.c.bf16 %v5102, %v5102
      %v5943 = vpack.c.bf16 %v5108, %v5108
      %v5944 = vpack.c.bf16 %v5114, %v5114
      %v5945 = vpack.c.bf16 %v5120, %v5120
      %v5946 = vpack.c.bf16 %v5126, %v5126
      %v5947 = vpack.c.bf16 %v5132, %v5132
      %v5948 = vpack.c.bf16 %v5138, %v5138
      %v5949 = vpack.c.bf16 %v5144, %v5144
      %v5950 = vpack.c.bf16 %v5150, %v5150
      %v5951 = vpack.c.bf16 %v5156, %v5156
      %v5952 = vpack.c.bf16 %v5162, %v5162
      %v5953 = vpack.c.bf16 %v5168, %v5168
      %v5954 = vpack.c.bf16 %v5174, %v5174
      %v5955 = vpack.c.bf16 %v5180, %v5180
      %v5956 = vpack.c.bf16 %v5186, %v5186
      %v5957 = vpack.c.bf16 %v5192, %v5192
      %v5958 = vpack.c.bf16 %v5198, %v5198
      %v5959 = vpack.c.bf16 %v5204, %v5204
      %v5960 = vpack.c.bf16 %v5210, %v5210
      %v5961 = vpack.c.bf16 %v5216, %v5216
      %v5962 = vpack.c.bf16 %v5222, %v5222
      %v5963 = vpack.c.bf16 %v5228, %v5228
      %v5964 = vpack.c.bf16 %v5234, %v5234
      %v5965 = vpack.c.bf16 %v5240, %v5240
      %v5966 = vpack.c.bf16 %v5246, %v5246
      %v5967 = vpack.c.bf16 %v5252, %v5252
      %v5968 = vpack.c.bf16 %v5258, %v5258
      %v5969 = vpack.c.bf16 %v5264, %v5264
      %v5970 = vpack.c.bf16 %v5270, %v5270
      %v5971 = vpack.c.bf16 %v5276, %v5276
      %v5972 = vpack.c.bf16 %v5282, %v5282
      %v5973 = vpack.c.bf16 %v5288, %v5288
      %v5974 = vpack.c.bf16 %v5294, %v5294
      %v5975 = vpack.c.bf16 %v5300, %v5300
      %v5976 = vpack.c.bf16 %v5306, %v5306
      %v5977 = vpack.c.bf16 %v5312, %v5312
      %v5978 = vpack.c.bf16 %v5318, %v5318
      %v5979 = vpack.c.bf16 %v5324, %v5324
      %v5980 = vpack.c.bf16 %v5330, %v5330
      %v5981 = vpack.c.bf16 %v5336, %v5336
      %v5982 = vpack.c.bf16 %v5342, %v5342
      %v5983 = vpack.c.bf16 %v5348, %v5348
      %v5984 = vpack.c.bf16 %v5354, %v5354
      %v5985 = vpack.c.bf16 %v5360, %v5360
      %v5986 = vpack.c.bf16 %v5366, %v5366
      %v5987 = vpack.c.bf16 %v5372, %v5372
      %v5988 = vpack.c.bf16 %v5378, %v5378
      %v5989 = vpack.c.bf16 %v5384, %v5384
      %v5990 = vpack.c.bf16 %v5390, %v5390
      %v5991 = vpack.c.bf16 %v5396, %v5396
      %v5992 = vpack.c.bf16 %v5402, %v5402
      %v5993 = vpack.c.bf16 %v5408, %v5408
      %v5994 = vpack.c.bf16 %v5414, %v5414
      %v5995 = vpack.c.bf16 %v5420, %v5420
      %v5996 = vpack.c.bf16 %v5426, %v5426
      %v5997 = vpack.c.bf16 %v5432, %v5432
      %v5998 = vpack.c.bf16 %v5438, %v5438
      %v5999 = vpack.c.bf16 %v5444, %v5444
      %v6000 = vpack.c.bf16 %v5450, %v5450
      %v6001 = vpack.c.bf16 %v5456, %v5456
      %v6002 = vpack.c.bf16 %v5462, %v5462
      %v6003 = vpack.c.bf16 %v5468, %v5468
      %v6004 = vpack.c.bf16 %v5474, %v5474
      %v6005 = vpack.c.bf16 %v5480, %v5480
      %v6006 = vpack.c.bf16 %v5486, %v5486
      %v6007 = vpack.c.bf16 %v5492, %v5492
      %v6008 = vpack.c.bf16 %v5498, %v5498
      %v6009 = vpack.c.bf16 %v5504, %v5504
      %v6010 = vpack.c.bf16 %v5510, %v5510
      %v6011 = vpack.c.bf16 %v5516, %v5516
      %v6012 = vpack.c.bf16 %v5522, %v5522
      %v6013 = vpack.c.bf16 %v5528, %v5528
      %v6014 = vpack.c.bf16 %v5534, %v5534
      %v6015 = vpack.c.bf16 %v5540, %v5540
      %v6016 = vpack.c.bf16 %v5546, %v5546
      %v6017 = vpack.c.bf16 %v5552, %v5552
      %v6018 = vpack.c.bf16 %v5558, %v5558
      %v6019 = vpack.c.bf16 %v5564, %v5564
      %v6020 = vpack.c.bf16 %v5570, %v5570
      %v6021 = vpack.c.bf16 %v5576, %v5576
      %v6022 = vpack.c.bf16 %v5582, %v5582
      %v6023 = vpack.c.bf16 %v5588, %v5588
      %v6024 = vpack.c.bf16 %v5594, %v5594
      %v6025 = vpack.c.bf16 %v5600, %v5600
      %v6026 = vpack.c.bf16 %v5606, %v5606
      %v6027 = vpack.c.bf16 %v5612, %v5612
      %v6028 = vpack.c.bf16 %v5618, %v5618
      %v6029 = vpack.c.bf16 %v5624, %v5624
      %v6030 = vpack.c.bf16 %v5630, %v5630
      %v6031 = vpack.c.bf16 %v5636, %v5636
      %v6032 = vpack.c.bf16 %v5642, %v5642
      %v6033 = vpack.c.bf16 %v5648, %v5648
      %v6034 = vpack.c.bf16 %v5654, %v5654
      %v6035 = vpack.c.bf16 %v5660, %v5660
      %v6036 = vpack.c.bf16 %v5666, %v5666
      %v6037 = vpack.c.bf16 %v5672, %v5672
      %v6038 = vpack.c.bf16 %v5678, %v5678
      %v6399 = vunpack.c.l.b16 %v5679
      %v6400 = vunpack.c.l.b16 %v5680
      %v6401 = vunpack.c.l.b16 %v5681
      %v6402 = vunpack.c.l.b16 %v5682
      %v6403 = vunpack.c.l.b16 %v5683
      %v6404 = vunpack.c.l.b16 %v5684
      %v6405 = vunpack.c.l.b16 %v5685
      %v6406 = vunpack.c.l.b16 %v5686
      %v6407 = vunpack.c.l.b16 %v5687
      %v6408 = vunpack.c.l.b16 %v5688
      %v6409 = vunpack.c.l.b16 %v5689
      %v6410 = vunpack.c.l.b16 %v5690
      %v6411 = vunpack.c.l.b16 %v5691
      %v6412 = vunpack.c.l.b16 %v5692
      %v6413 = vunpack.c.l.b16 %v5693
      %v6414 = vunpack.c.l.b16 %v5694
      %v6415 = vunpack.c.l.b16 %v5695
      %v6416 = vunpack.c.l.b16 %v5696
      %v6417 = vunpack.c.l.b16 %v5697
      %v6418 = vunpack.c.l.b16 %v5698
      %v6419 = vunpack.c.l.b16 %v5699
      %v6420 = vunpack.c.l.b16 %v5700
      %v6421 = vunpack.c.l.b16 %v5701
      %v6422 = vunpack.c.l.b16 %v5702
      %v6423 = vunpack.c.l.b16 %v5703
      %v6424 = vunpack.c.l.b16 %v5704
      %v6425 = vunpack.c.l.b16 %v5705
      %v6426 = vunpack.c.l.b16 %v5706
      %v6427 = vunpack.c.l.b16 %v5707
      %v6428 = vunpack.c.l.b16 %v5708
      %v6429 = vunpack.c.l.b16 %v5709
      %v6430 = vunpack.c.l.b16 %v5710
      %v6431 = vunpack.c.l.b16 %v5711
      %v6432 = vunpack.c.l.b16 %v5712
      %v6433 = vunpack.c.l.b16 %v5713
      %v6434 = vunpack.c.l.b16 %v5714
      %v6435 = vunpack.c.l.b16 %v5715
      %v6436 = vunpack.c.l.b16 %v5716
      %v6437 = vunpack.c.l.b16 %v5717
      %v6438 = vunpack.c.l.b16 %v5718
      %v6439 = vunpack.c.l.b16 %v5719
      %v6440 = vunpack.c.l.b16 %v5720
      %v6441 = vunpack.c.l.b16 %v5721
      %v6442 = vunpack.c.l.b16 %v5722
      %v6443 = vunpack.c.l.b16 %v5723
      %v6444 = vunpack.c.l.b16 %v5724
      %v6445 = vunpack.c.l.b16 %v5725
      %v6446 = vunpack.c.l.b16 %v5726
      %v6447 = vunpack.c.l.b16 %v5727
      %v6448 = vunpack.c.l.b16 %v5728
      %v6449 = vunpack.c.l.b16 %v5729
      %v6450 = vunpack.c.l.b16 %v5730
      %v6451 = vunpack.c.l.b16 %v5731
      %v6452 = vunpack.c.l.b16 %v5732
      %v6453 = vunpack.c.l.b16 %v5733
      %v6454 = vunpack.c.l.b16 %v5734
      %v6455 = vunpack.c.l.b16 %v5735
      %v6456 = vunpack.c.l.b16 %v5736
      %v6457 = vunpack.c.l.b16 %v5737
      %v6458 = vunpack.c.l.b16 %v5738
      %v6459 = vunpack.c.l.b16 %v5739
      %v6460 = vunpack.c.l.b16 %v5740
      %v6461 = vunpack.c.l.b16 %v5741
      %v6462 = vunpack.c.l.b16 %v5742
      %v6463 = vunpack.c.l.b16 %v5743
      %v6464 = vunpack.c.l.b16 %v5744
      %v6465 = vunpack.c.l.b16 %v5745
      %v6466 = vunpack.c.l.b16 %v5746
      %v6467 = vunpack.c.l.b16 %v5747
      %v6468 = vunpack.c.l.b16 %v5748
      %v6469 = vunpack.c.l.b16 %v5749
      %v6470 = vunpack.c.l.b16 %v5750
      %v6471 = vunpack.c.l.b16 %v5751
      %v6472 = vunpack.c.l.b16 %v5752
      %v6473 = vunpack.c.l.b16 %v5753
      %v6474 = vunpack.c.l.b16 %v5754
      %v6475 = vunpack.c.l.b16 %v5755
      %v6476 = vunpack.c.l.b16 %v5756
      %v6477 = vunpack.c.l.b16 %v5757
      %v6478 = vunpack.c.l.b16 %v5758
      %v6479 = vunpack.c.l.b16 %v5759
      %v6480 = vunpack.c.l.b16 %v5760
      %v6481 = vunpack.c.l.b16 %v5761
      %v6482 = vunpack.c.l.b16 %v5762
      %v6483 = vunpack.c.l.b16 %v5763
      %v6484 = vunpack.c.l.b16 %v5764
      %v6485 = vunpack.c.l.b16 %v5765
      %v6486 = vunpack.c.l.b16 %v5766
      %v6487 = vunpack.c.l.b16 %v5767
      %v6488 = vunpack.c.l.b16 %v5768
      %v6489 = vunpack.c.l.b16 %v5769
      %v6490 = vunpack.c.l.b16 %v5770
      %v6491 = vunpack.c.l.b16 %v5771
      %v6492 = vunpack.c.l.b16 %v5772
      %v6493 = vunpack.c.l.b16 %v5773
      %v6494 = vunpack.c.l.b16 %v5774
      %v6495 = vunpack.c.l.b16 %v5775
      %v6496 = vunpack.c.l.b16 %v5776
      %v6497 = vunpack.c.l.b16 %v5777
      %v6498 = vunpack.c.l.b16 %v5778
      %v6499 = vunpack.c.l.b16 %v5779
      %v6500 = vunpack.c.l.b16 %v5780
      %v6501 = vunpack.c.l.b16 %v5781
      %v6502 = vunpack.c.l.b16 %v5782
      %v6503 = vunpack.c.l.b16 %v5783
      %v6504 = vunpack.c.l.b16 %v5784
      %v6505 = vunpack.c.l.b16 %v5785
      %v6506 = vunpack.c.l.b16 %v5786
      %v6507 = vunpack.c.l.b16 %v5787
      %v6508 = vunpack.c.l.b16 %v5788
      %v6509 = vunpack.c.l.b16 %v5789
      %v6510 = vunpack.c.l.b16 %v5790
      %v6511 = vunpack.c.l.b16 %v5791
      %v6512 = vunpack.c.l.b16 %v5792
      %v6513 = vunpack.c.l.b16 %v5793
      %v6514 = vunpack.c.l.b16 %v5794
      %v6515 = vunpack.c.l.b16 %v5795
      %v6516 = vunpack.c.l.b16 %v5796
      %v6517 = vunpack.c.l.b16 %v5797
      %v6518 = vunpack.c.l.b16 %v5798
      %v6519 = vunpack.c.l.b16 %v5799
      %v6520 = vunpack.c.l.b16 %v5800
      %v6521 = vunpack.c.l.b16 %v5801
      %v6522 = vunpack.c.l.b16 %v5802
      %v6523 = vunpack.c.l.b16 %v5803
      %v6524 = vunpack.c.l.b16 %v5804
      %v6525 = vunpack.c.l.b16 %v5805
      %v6526 = vunpack.c.l.b16 %v5806
      %v6527 = vunpack.c.l.b16 %v5807
      %v6528 = vunpack.c.l.b16 %v5808
      %v6529 = vunpack.c.l.b16 %v5809
      %v6530 = vunpack.c.l.b16 %v5810
      %v6531 = vunpack.c.l.b16 %v5811
      %v6532 = vunpack.c.l.b16 %v5812
      %v6533 = vunpack.c.l.b16 %v5813
      %v6534 = vunpack.c.l.b16 %v5814
      %v6535 = vunpack.c.l.b16 %v5815
      %v6536 = vunpack.c.l.b16 %v5816
      %v6537 = vunpack.c.l.b16 %v5817
      %v6538 = vunpack.c.l.b16 %v5818
      %v6539 = vunpack.c.l.b16 %v5819
      %v6540 = vunpack.c.l.b16 %v5820
      %v6541 = vunpack.c.l.b16 %v5821
      %v6542 = vunpack.c.l.b16 %v5822
      %v6543 = vunpack.c.l.b16 %v5823
      %v6544 = vunpack.c.l.b16 %v5824
      %v6545 = vunpack.c.l.b16 %v5825
      %v6546 = vunpack.c.l.b16 %v5826
      %v6547 = vunpack.c.l.b16 %v5827
      %v6548 = vunpack.c.l.b16 %v5828
      %v6549 = vunpack.c.l.b16 %v5829
      %v6550 = vunpack.c.l.b16 %v5830
      %v6551 = vunpack.c.l.b16 %v5831
      %v6552 = vunpack.c.l.b16 %v5832
      %v6553 = vunpack.c.l.b16 %v5833
      %v6554 = vunpack.c.l.b16 %v5834
      %v6555 = vunpack.c.l.b16 %v5835
      %v6556 = vunpack.c.l.b16 %v5836
      %v6557 = vunpack.c.l.b16 %v5837
      %v6558 = vunpack.c.l.b16 %v5838
      %v6559 = vunpack.c.l.b16 %v5839
      %v6560 = vunpack.c.l.b16 %v5840
      %v6561 = vunpack.c.l.b16 %v5841
      %v6562 = vunpack.c.l.b16 %v5842
      %v6563 = vunpack.c.l.b16 %v5843
      %v6564 = vunpack.c.l.b16 %v5844
      %v6565 = vunpack.c.l.b16 %v5845
      %v6566 = vunpack.c.l.b16 %v5846
      %v6567 = vunpack.c.l.b16 %v5847
      %v6568 = vunpack.c.l.b16 %v5848
      %v6569 = vunpack.c.l.b16 %v5849
      %v6570 = vunpack.c.l.b16 %v5850
      %v6571 = vunpack.c.l.b16 %v5851
      %v6572 = vunpack.c.l.b16 %v5852
      %v6573 = vunpack.c.l.b16 %v5853
      %v6574 = vunpack.c.l.b16 %v5854
      %v6575 = vunpack.c.l.b16 %v5855
      %v6576 = vunpack.c.l.b16 %v5856
      %v6577 = vunpack.c.l.b16 %v5857
      %v6578 = vunpack.c.l.b16 %v5858
      %v6579 = vunpack.c.l.b16 %v5859
      %v6580 = vunpack.c.l.b16 %v5860
      %v6581 = vunpack.c.l.b16 %v5861
      %v6582 = vunpack.c.l.b16 %v5862
      %v6583 = vunpack.c.l.b16 %v5863
      %v6584 = vunpack.c.l.b16 %v5864
      %v6585 = vunpack.c.l.b16 %v5865
      %v6586 = vunpack.c.l.b16 %v5866
      %v6587 = vunpack.c.l.b16 %v5867
      %v6588 = vunpack.c.l.b16 %v5868
      %v6589 = vunpack.c.l.b16 %v5869
      %v6590 = vunpack.c.l.b16 %v5870
      %v6591 = vunpack.c.l.b16 %v5871
      %v6592 = vunpack.c.l.b16 %v5872
      %v6593 = vunpack.c.l.b16 %v5873
      %v6594 = vunpack.c.l.b16 %v5874
      %v6595 = vunpack.c.l.b16 %v5875
      %v6596 = vunpack.c.l.b16 %v5876
      %v6597 = vunpack.c.l.b16 %v5877
      %v6598 = vunpack.c.l.b16 %v5878
      %v6599 = vunpack.c.l.b16 %v5879
      %v6600 = vunpack.c.l.b16 %v5880
      %v6601 = vunpack.c.l.b16 %v5881
      %v6602 = vunpack.c.l.b16 %v5882
      %v6603 = vunpack.c.l.b16 %v5883
      %v6604 = vunpack.c.l.b16 %v5884
      %v6605 = vunpack.c.l.b16 %v5885
      %v6606 = vunpack.c.l.b16 %v5886
      %v6607 = vunpack.c.l.b16 %v5887
      %v6608 = vunpack.c.l.b16 %v5888
      %v6609 = vunpack.c.l.b16 %v5889
      %v6610 = vunpack.c.l.b16 %v5890
      %v6611 = vunpack.c.l.b16 %v5891
      %v6612 = vunpack.c.l.b16 %v5892
      %v6613 = vunpack.c.l.b16 %v5893
      %v6614 = vunpack.c.l.b16 %v5894
      %v6615 = vunpack.c.l.b16 %v5895
      %v6616 = vunpack.c.l.b16 %v5896
      %v6617 = vunpack.c.l.b16 %v5897
      %v6618 = vunpack.c.l.b16 %v5898
      %v6619 = vunpack.c.l.b16 %v5899
      %v6620 = vunpack.c.l.b16 %v5900
      %v6621 = vunpack.c.l.b16 %v5901
      %v6622 = vunpack.c.l.b16 %v5902
      %v6623 = vunpack.c.l.b16 %v5903
      %v6624 = vunpack.c.l.b16 %v5904
      %v6625 = vunpack.c.l.b16 %v5905
      %v6626 = vunpack.c.l.b16 %v5906
      %v6627 = vunpack.c.l.b16 %v5907
      %v6628 = vunpack.c.l.b16 %v5908
      %v6629 = vunpack.c.l.b16 %v5909
      %v6630 = vunpack.c.l.b16 %v5910
      %v6631 = vunpack.c.l.b16 %v5911
      %v6632 = vunpack.c.l.b16 %v5912
      %v6633 = vunpack.c.l.b16 %v5913
      %v6634 = vunpack.c.l.b16 %v5914
      %v6635 = vunpack.c.l.b16 %v5915
      %v6636 = vunpack.c.l.b16 %v5916
      %v6637 = vunpack.c.l.b16 %v5917
      %v6638 = vunpack.c.l.b16 %v5918
      %v6639 = vunpack.c.l.b16 %v5919
      %v6640 = vunpack.c.l.b16 %v5920
      %v6641 = vunpack.c.l.b16 %v5921
      %v6642 = vunpack.c.l.b16 %v5922
      %v6643 = vunpack.c.l.b16 %v5923
      %v6644 = vunpack.c.l.b16 %v5924
      %v6645 = vunpack.c.l.b16 %v5925
      %v6646 = vunpack.c.l.b16 %v5926
      %v6647 = vunpack.c.l.b16 %v5927
      %v6648 = vunpack.c.l.b16 %v5928
      %v6649 = vunpack.c.l.b16 %v5929
      %v6650 = vunpack.c.l.b16 %v5930
      %v6651 = vunpack.c.l.b16 %v5931
      %v6652 = vunpack.c.l.b16 %v5932
      %v6653 = vunpack.c.l.b16 %v5933
      %v6654 = vunpack.c.l.b16 %v5934
      %v6655 = vunpack.c.l.b16 %v5935
      %v6656 = vunpack.c.l.b16 %v5936
      %v6657 = vunpack.c.l.b16 %v5937
      %v6658 = vunpack.c.l.b16 %v5938
      %v6659 = vunpack.c.l.b16 %v5939
      %v6660 = vunpack.c.l.b16 %v5940
      %v6661 = vunpack.c.l.b16 %v5941
      %v6662 = vunpack.c.l.b16 %v5942
      %v6663 = vunpack.c.l.b16 %v5943
      %v6664 = vunpack.c.l.b16 %v5944
      %v6665 = vunpack.c.l.b16 %v5945
      %v6666 = vunpack.c.l.b16 %v5946
      %v6667 = vunpack.c.l.b16 %v5947
      %v6668 = vunpack.c.l.b16 %v5948
      %v6669 = vunpack.c.l.b16 %v5949
      %v6670 = vunpack.c.l.b16 %v5950
      %v6671 = vunpack.c.l.b16 %v5951
      %v6672 = vunpack.c.l.b16 %v5952
      %v6673 = vunpack.c.l.b16 %v5953
      %v6674 = vunpack.c.l.b16 %v5954
      %v6675 = vunpack.c.l.b16 %v5955
      %v6676 = vunpack.c.l.b16 %v5956
      %v6677 = vunpack.c.l.b16 %v5957
      %v6678 = vunpack.c.l.b16 %v5958
      %v6679 = vunpack.c.l.b16 %v5959
      %v6680 = vunpack.c.l.b16 %v5960
      %v6681 = vunpack.c.l.b16 %v5961
      %v6682 = vunpack.c.l.b16 %v5962
      %v6683 = vunpack.c.l.b16 %v5963
      %v6684 = vunpack.c.l.b16 %v5964
      %v6685 = vunpack.c.l.b16 %v5965
      %v6686 = vunpack.c.l.b16 %v5966
      %v6687 = vunpack.c.l.b16 %v5967
      %v6688 = vunpack.c.l.b16 %v5968
      %v6689 = vunpack.c.l.b16 %v5969
      %v6690 = vunpack.c.l.b16 %v5970
      %v6691 = vunpack.c.l.b16 %v5971
      %v6692 = vunpack.c.l.b16 %v5972
      %v6693 = vunpack.c.l.b16 %v5973
      %v6694 = vunpack.c.l.b16 %v5974
      %v6695 = vunpack.c.l.b16 %v5975
      %v6696 = vunpack.c.l.b16 %v5976
      %v6697 = vunpack.c.l.b16 %v5977
      %v6698 = vunpack.c.l.b16 %v5978
      %v6699 = vunpack.c.l.b16 %v5979
      %v6700 = vunpack.c.l.b16 %v5980
      %v6701 = vunpack.c.l.b16 %v5981
      %v6702 = vunpack.c.l.b16 %v5982
      %v6703 = vunpack.c.l.b16 %v5983
      %v6704 = vunpack.c.l.b16 %v5984
      %v6705 = vunpack.c.l.b16 %v5985
      %v6706 = vunpack.c.l.b16 %v5986
      %v6707 = vunpack.c.l.b16 %v5987
      %v6708 = vunpack.c.l.b16 %v5988
      %v6709 = vunpack.c.l.b16 %v5989
      %v6710 = vunpack.c.l.b16 %v5990
      %v6711 = vunpack.c.l.b16 %v5991
      %v6712 = vunpack.c.l.b16 %v5992
      %v6713 = vunpack.c.l.b16 %v5993
      %v6714 = vunpack.c.l.b16 %v5994
      %v6715 = vunpack.c.l.b16 %v5995
      %v6716 = vunpack.c.l.b16 %v5996
      %v6717 = vunpack.c.l.b16 %v5997
      %v6718 = vunpack.c.l.b16 %v5998
      %v6719 = vunpack.c.l.b16 %v5999
      %v6720 = vunpack.c.l.b16 %v6000
      %v6721 = vunpack.c.l.b16 %v6001
      %v6722 = vunpack.c.l.b16 %v6002
      %v6723 = vunpack.c.l.b16 %v6003
      %v6724 = vunpack.c.l.b16 %v6004
      %v6725 = vunpack.c.l.b16 %v6005
      %v6726 = vunpack.c.l.b16 %v6006
      %v6727 = vunpack.c.l.b16 %v6007
      %v6728 = vunpack.c.l.b16 %v6008
      %v6729 = vunpack.c.l.b16 %v6009
      %v6730 = vunpack.c.l.b16 %v6010
      %v6731 = vunpack.c.l.b16 %v6011
      %v6732 = vunpack.c.l.b16 %v6012
      %v6733 = vunpack.c.l.b16 %v6013
      %v6734 = vunpack.c.l.b16 %v6014
      %v6735 = vunpack.c.l.b16 %v6015
      %v6736 = vunpack.c.l.b16 %v6016
      %v6737 = vunpack.c.l.b16 %v6017
      %v6738 = vunpack.c.l.b16 %v6018
      %v6739 = vunpack.c.l.b16 %v6019
      %v6740 = vunpack.c.l.b16 %v6020
      %v6741 = vunpack.c.l.b16 %v6021
      %v6742 = vunpack.c.l.b16 %v6022
      %v6743 = vunpack.c.l.b16 %v6023
      %v6744 = vunpack.c.l.b16 %v6024
      %v6745 = vunpack.c.l.b16 %v6025
      %v6746 = vunpack.c.l.b16 %v6026
      %v6747 = vunpack.c.l.b16 %v6027
      %v6748 = vunpack.c.l.b16 %v6028
      %v6749 = vunpack.c.l.b16 %v6029
      %v6750 = vunpack.c.l.b16 %v6030
      %v6751 = vunpack.c.l.b16 %v6031
      %v6752 = vunpack.c.l.b16 %v6032
      %v6753 = vunpack.c.l.b16 %v6033
      %v6754 = vunpack.c.l.b16 %v6034
      %v6755 = vunpack.c.l.b16 %v6035
      %v6756 = vunpack.c.l.b16 %v6036
      %v6757 = vunpack.c.l.b16 %v6037
      %v6758 = vunpack.c.l.b16 %v6038
      %v6759 = vpack.c.b16 %v6399, %v6399
      %v6760 = vpack.c.b16 %v6400, %v6400
      %v6761 = vpack.c.b16 %v6401, %v6401
      %v6762 = vpack.c.b16 %v6402, %v6402
      %v6763 = vpack.c.b16 %v6403, %v6403
      %v6764 = vpack.c.b16 %v6404, %v6404
      %v6765 = vpack.c.b16 %v6405, %v6405
      %v6766 = vpack.c.b16 %v6406, %v6406
      %v6767 = vpack.c.b16 %v6407, %v6407
      %v6768 = vpack.c.b16 %v6408, %v6408
      %v6769 = vpack.c.b16 %v6409, %v6409
      %v6770 = vpack.c.b16 %v6410, %v6410
      %v6771 = vpack.c.b16 %v6411, %v6411
      %v6772 = vpack.c.b16 %v6412, %v6412
      %v6773 = vpack.c.b16 %v6413, %v6413
      %v6774 = vpack.c.b16 %v6414, %v6414
      %v6775 = vpack.c.b16 %v6415, %v6415
      %v6776 = vpack.c.b16 %v6416, %v6416
      %v6777 = vpack.c.b16 %v6417, %v6417
      %v6778 = vpack.c.b16 %v6418, %v6418
      %v6779 = vpack.c.b16 %v6419, %v6419
      %v6780 = vpack.c.b16 %v6420, %v6420
      %v6781 = vpack.c.b16 %v6421, %v6421
      %v6782 = vpack.c.b16 %v6422, %v6422
      %v6783 = vpack.c.b16 %v6423, %v6423
      %v6784 = vpack.c.b16 %v6424, %v6424
      %v6785 = vpack.c.b16 %v6425, %v6425
      %v6786 = vpack.c.b16 %v6426, %v6426
      %v6787 = vpack.c.b16 %v6427, %v6427
      %v6788 = vpack.c.b16 %v6428, %v6428
      %v6789 = vpack.c.b16 %v6429, %v6429
      %v6790 = vpack.c.b16 %v6430, %v6430
      %v6791 = vpack.c.b16 %v6431, %v6431
      %v6792 = vpack.c.b16 %v6432, %v6432
      %v6793 = vpack.c.b16 %v6433, %v6433
      %v6794 = vpack.c.b16 %v6434, %v6434
      %v6795 = vpack.c.b16 %v6435, %v6435
      %v6796 = vpack.c.b16 %v6436, %v6436
      %v6797 = vpack.c.b16 %v6437, %v6437
      %v6798 = vpack.c.b16 %v6438, %v6438
      %v6799 = vpack.c.b16 %v6439, %v6439
      %v6800 = vpack.c.b16 %v6440, %v6440
      %v6801 = vpack.c.b16 %v6441, %v6441
      %v6802 = vpack.c.b16 %v6442, %v6442
      %v6803 = vpack.c.b16 %v6443, %v6443
      %v6804 = vpack.c.b16 %v6444, %v6444
      %v6805 = vpack.c.b16 %v6445, %v6445
      %v6806 = vpack.c.b16 %v6446, %v6446
      %v6807 = vpack.c.b16 %v6447, %v6447
      %v6808 = vpack.c.b16 %v6448, %v6448
      %v6809 = vpack.c.b16 %v6449, %v6449
      %v6810 = vpack.c.b16 %v6450, %v6450
      %v6811 = vpack.c.b16 %v6451, %v6451
      %v6812 = vpack.c.b16 %v6452, %v6452
      %v6813 = vpack.c.b16 %v6453, %v6453
      %v6814 = vpack.c.b16 %v6454, %v6454
      %v6815 = vpack.c.b16 %v6455, %v6455
      %v6816 = vpack.c.b16 %v6456, %v6456
      %v6817 = vpack.c.b16 %v6457, %v6457
      %v6818 = vpack.c.b16 %v6458, %v6458
      %v6819 = vpack.c.b16 %v6459, %v6459
      %v6820 = vpack.c.b16 %v6460, %v6460
      %v6821 = vpack.c.b16 %v6461, %v6461
      %v6822 = vpack.c.b16 %v6462, %v6462
      %v6823 = vpack.c.b16 %v6463, %v6463
      %v6824 = vpack.c.b16 %v6464, %v6464
      %v6825 = vpack.c.b16 %v6465, %v6465
      %v6826 = vpack.c.b16 %v6466, %v6466
      %v6827 = vpack.c.b16 %v6467, %v6467
      %v6828 = vpack.c.b16 %v6468, %v6468
      %v6829 = vpack.c.b16 %v6469, %v6469
      %v6830 = vpack.c.b16 %v6470, %v6470
      %v6831 = vpack.c.b16 %v6471, %v6471
      %v6832 = vpack.c.b16 %v6472, %v6472
      %v6833 = vpack.c.b16 %v6473, %v6473
      %v6834 = vpack.c.b16 %v6474, %v6474
      %v6835 = vpack.c.b16 %v6475, %v6475
      %v6836 = vpack.c.b16 %v6476, %v6476
      %v6837 = vpack.c.b16 %v6477, %v6477
      %v6838 = vpack.c.b16 %v6478, %v6478
      %v6839 = vpack.c.b16 %v6479, %v6479
      %v6840 = vpack.c.b16 %v6480, %v6480
      %v6841 = vpack.c.b16 %v6481, %v6481
      %v6842 = vpack.c.b16 %v6482, %v6482
      %v6843 = vpack.c.b16 %v6483, %v6483
      %v6844 = vpack.c.b16 %v6484, %v6484
      %v6845 = vpack.c.b16 %v6485, %v6485
      %v6846 = vpack.c.b16 %v6486, %v6486
      %v6847 = vpack.c.b16 %v6487, %v6487
      %v6848 = vpack.c.b16 %v6488, %v6488
      %v6849 = vpack.c.b16 %v6489, %v6489
      %v6850 = vpack.c.b16 %v6490, %v6490
      %v6851 = vpack.c.b16 %v6491, %v6491
      %v6852 = vpack.c.b16 %v6492, %v6492
      %v6853 = vpack.c.b16 %v6493, %v6493
      %v6854 = vpack.c.b16 %v6494, %v6494
      %v6855 = vpack.c.b16 %v6495, %v6495
      %v6856 = vpack.c.b16 %v6496, %v6496
      %v6857 = vpack.c.b16 %v6497, %v6497
      %v6858 = vpack.c.b16 %v6498, %v6498
      %v6859 = vpack.c.b16 %v6499, %v6499
      %v6860 = vpack.c.b16 %v6500, %v6500
      %v6861 = vpack.c.b16 %v6501, %v6501
      %v6862 = vpack.c.b16 %v6502, %v6502
      %v6863 = vpack.c.b16 %v6503, %v6503
      %v6864 = vpack.c.b16 %v6504, %v6504
      %v6865 = vpack.c.b16 %v6505, %v6505
      %v6866 = vpack.c.b16 %v6506, %v6506
      %v6867 = vpack.c.b16 %v6507, %v6507
      %v6868 = vpack.c.b16 %v6508, %v6508
      %v6869 = vpack.c.b16 %v6509, %v6509
      %v6870 = vpack.c.b16 %v6510, %v6510
      %v6871 = vpack.c.b16 %v6511, %v6511
      %v6872 = vpack.c.b16 %v6512, %v6512
      %v6873 = vpack.c.b16 %v6513, %v6513
      %v6874 = vpack.c.b16 %v6514, %v6514
      %v6875 = vpack.c.b16 %v6515, %v6515
      %v6876 = vpack.c.b16 %v6516, %v6516
      %v6877 = vpack.c.b16 %v6517, %v6517
      %v6878 = vpack.c.b16 %v6518, %v6518
      %v6879 = vpack.c.b16 %v6519, %v6519
      %v6880 = vpack.c.b16 %v6520, %v6520
      %v6881 = vpack.c.b16 %v6521, %v6521
      %v6882 = vpack.c.b16 %v6522, %v6522
      %v6883 = vpack.c.b16 %v6523, %v6523
      %v6884 = vpack.c.b16 %v6524, %v6524
      %v6885 = vpack.c.b16 %v6525, %v6525
      %v6886 = vpack.c.b16 %v6526, %v6526
      %v6887 = vpack.c.b16 %v6527, %v6527
      %v6888 = vpack.c.b16 %v6528, %v6528
      %v6889 = vpack.c.b16 %v6529, %v6529
      %v6890 = vpack.c.b16 %v6530, %v6530
      %v6891 = vpack.c.b16 %v6531, %v6531
      %v6892 = vpack.c.b16 %v6532, %v6532
      %v6893 = vpack.c.b16 %v6533, %v6533
      %v6894 = vpack.c.b16 %v6534, %v6534
      %v6895 = vpack.c.b16 %v6535, %v6535
      %v6896 = vpack.c.b16 %v6536, %v6536
      %v6897 = vpack.c.b16 %v6537, %v6537
      %v6898 = vpack.c.b16 %v6538, %v6538
      %v6899 = vpack.c.b16 %v6539, %v6539
      %v6900 = vpack.c.b16 %v6540, %v6540
      %v6901 = vpack.c.b16 %v6541, %v6541
      %v6902 = vpack.c.b16 %v6542, %v6542
      %v6903 = vpack.c.b16 %v6543, %v6543
      %v6904 = vpack.c.b16 %v6544, %v6544
      %v6905 = vpack.c.b16 %v6545, %v6545
      %v6906 = vpack.c.b16 %v6546, %v6546
      %v6907 = vpack.c.b16 %v6547, %v6547
      %v6908 = vpack.c.b16 %v6548, %v6548
      %v6909 = vpack.c.b16 %v6549, %v6549
      %v6910 = vpack.c.b16 %v6550, %v6550
      %v6911 = vpack.c.b16 %v6551, %v6551
      %v6912 = vpack.c.b16 %v6552, %v6552
      %v6913 = vpack.c.b16 %v6553, %v6553
      %v6914 = vpack.c.b16 %v6554, %v6554
      %v6915 = vpack.c.b16 %v6555, %v6555
      %v6916 = vpack.c.b16 %v6556, %v6556
      %v6917 = vpack.c.b16 %v6557, %v6557
      %v6918 = vpack.c.b16 %v6558, %v6558
      %v6919 = vpack.c.b16 %v6559, %v6559
      %v6920 = vpack.c.b16 %v6560, %v6560
      %v6921 = vpack.c.b16 %v6561, %v6561
      %v6922 = vpack.c.b16 %v6562, %v6562
      %v6923 = vpack.c.b16 %v6563, %v6563
      %v6924 = vpack.c.b16 %v6564, %v6564
      %v6925 = vpack.c.b16 %v6565, %v6565
      %v6926 = vpack.c.b16 %v6566, %v6566
      %v6927 = vpack.c.b16 %v6567, %v6567
      %v6928 = vpack.c.b16 %v6568, %v6568
      %v6929 = vpack.c.b16 %v6569, %v6569
      %v6930 = vpack.c.b16 %v6570, %v6570
      %v6931 = vpack.c.b16 %v6571, %v6571
      %v6932 = vpack.c.b16 %v6572, %v6572
      %v6933 = vpack.c.b16 %v6573, %v6573
      %v6934 = vpack.c.b16 %v6574, %v6574
      %v6935 = vpack.c.b16 %v6575, %v6575
      %v6936 = vpack.c.b16 %v6576, %v6576
      %v6937 = vpack.c.b16 %v6577, %v6577
      %v6938 = vpack.c.b16 %v6578, %v6578
      %v6939 = vpack.c.b16 %v6579, %v6579
      %v6940 = vpack.c.b16 %v6580, %v6580
      %v6941 = vpack.c.b16 %v6581, %v6581
      %v6942 = vpack.c.b16 %v6582, %v6582
      %v6943 = vpack.c.b16 %v6583, %v6583
      %v6944 = vpack.c.b16 %v6584, %v6584
      %v6945 = vpack.c.b16 %v6585, %v6585
      %v6946 = vpack.c.b16 %v6586, %v6586
      %v6947 = vpack.c.b16 %v6587, %v6587
      %v6948 = vpack.c.b16 %v6588, %v6588
      %v6949 = vpack.c.b16 %v6589, %v6589
      %v6950 = vpack.c.b16 %v6590, %v6590
      %v6951 = vpack.c.b16 %v6591, %v6591
      %v6952 = vpack.c.b16 %v6592, %v6592
      %v6953 = vpack.c.b16 %v6593, %v6593
      %v6954 = vpack.c.b16 %v6594, %v6594
      %v6955 = vpack.c.b16 %v6595, %v6595
      %v6956 = vpack.c.b16 %v6596, %v6596
      %v6957 = vpack.c.b16 %v6597, %v6597
      %v6958 = vpack.c.b16 %v6598, %v6598
      %v6959 = vpack.c.b16 %v6599, %v6599
      %v6960 = vpack.c.b16 %v6600, %v6600
      %v6961 = vpack.c.b16 %v6601, %v6601
      %v6962 = vpack.c.b16 %v6602, %v6602
      %v6963 = vpack.c.b16 %v6603, %v6603
      %v6964 = vpack.c.b16 %v6604, %v6604
      %v6965 = vpack.c.b16 %v6605, %v6605
      %v6966 = vpack.c.b16 %v6606, %v6606
      %v6967 = vpack.c.b16 %v6607, %v6607
      %v6968 = vpack.c.b16 %v6608, %v6608
      %v6969 = vpack.c.b16 %v6609, %v6609
      %v6970 = vpack.c.b16 %v6610, %v6610
      %v6971 = vpack.c.b16 %v6611, %v6611
      %v6972 = vpack.c.b16 %v6612, %v6612
      %v6973 = vpack.c.b16 %v6613, %v6613
      %v6974 = vpack.c.b16 %v6614, %v6614
      %v6975 = vpack.c.b16 %v6615, %v6615
      %v6976 = vpack.c.b16 %v6616, %v6616
      %v6977 = vpack.c.b16 %v6617, %v6617
      %v6978 = vpack.c.b16 %v6618, %v6618
      %v6979 = vpack.c.b16 %v6619, %v6619
      %v6980 = vpack.c.b16 %v6620, %v6620
      %v6981 = vpack.c.b16 %v6621, %v6621
      %v6982 = vpack.c.b16 %v6622, %v6622
      %v6983 = vpack.c.b16 %v6623, %v6623
      %v6984 = vpack.c.b16 %v6624, %v6624
      %v6985 = vpack.c.b16 %v6625, %v6625
      %v6986 = vpack.c.b16 %v6626, %v6626
      %v6987 = vpack.c.b16 %v6627, %v6627
      %v6988 = vpack.c.b16 %v6628, %v6628
      %v6989 = vpack.c.b16 %v6629, %v6629
      %v6990 = vpack.c.b16 %v6630, %v6630
      %v6991 = vpack.c.b16 %v6631, %v6631
      %v6992 = vpack.c.b16 %v6632, %v6632
      %v6993 = vpack.c.b16 %v6633, %v6633
      %v6994 = vpack.c.b16 %v6634, %v6634
      %v6995 = vpack.c.b16 %v6635, %v6635
      %v6996 = vpack.c.b16 %v6636, %v6636
      %v6997 = vpack.c.b16 %v6637, %v6637
      %v6998 = vpack.c.b16 %v6638, %v6638
      %v6999 = vpack.c.b16 %v6639, %v6639
      %v7000 = vpack.c.b16 %v6640, %v6640
      %v7001 = vpack.c.b16 %v6641, %v6641
      %v7002 = vpack.c.b16 %v6642, %v6642
      %v7003 = vpack.c.b16 %v6643, %v6643
      %v7004 = vpack.c.b16 %v6644, %v6644
      %v7005 = vpack.c.b16 %v6645, %v6645
      %v7006 = vpack.c.b16 %v6646, %v6646
      %v7007 = vpack.c.b16 %v6647, %v6647
      %v7008 = vpack.c.b16 %v6648, %v6648
      %v7009 = vpack.c.b16 %v6649, %v6649
      %v7010 = vpack.c.b16 %v6650, %v6650
      %v7011 = vpack.c.b16 %v6651, %v6651
      %v7012 = vpack.c.b16 %v6652, %v6652
      %v7013 = vpack.c.b16 %v6653, %v6653
      %v7014 = vpack.c.b16 %v6654, %v6654
      %v7015 = vpack.c.b16 %v6655, %v6655
      %v7016 = vpack.c.b16 %v6656, %v6656
      %v7017 = vpack.c.b16 %v6657, %v6657
      %v7018 = vpack.c.b16 %v6658, %v6658
      %v7019 = vpack.c.b16 %v6659, %v6659
      %v7020 = vpack.c.b16 %v6660, %v6660
      %v7021 = vpack.c.b16 %v6661, %v6661
      %v7022 = vpack.c.b16 %v6662, %v6662
      %v7023 = vpack.c.b16 %v6663, %v6663
      %v7024 = vpack.c.b16 %v6664, %v6664
      %v7025 = vpack.c.b16 %v6665, %v6665
      %v7026 = vpack.c.b16 %v6666, %v6666
      %v7027 = vpack.c.b16 %v6667, %v6667
      %v7028 = vpack.c.b16 %v6668, %v6668
      %v7029 = vpack.c.b16 %v6669, %v6669
      %v7030 = vpack.c.b16 %v6670, %v6670
      %v7031 = vpack.c.b16 %v6671, %v6671
      %v7032 = vpack.c.b16 %v6672, %v6672
      %v7033 = vpack.c.b16 %v6673, %v6673
      %v7034 = vpack.c.b16 %v6674, %v6674
      %v7035 = vpack.c.b16 %v6675, %v6675
      %v7036 = vpack.c.b16 %v6676, %v6676
      %v7037 = vpack.c.b16 %v6677, %v6677
      %v7038 = vpack.c.b16 %v6678, %v6678
      %v7039 = vpack.c.b16 %v6679, %v6679
      %v7040 = vpack.c.b16 %v6680, %v6680
      %v7041 = vpack.c.b16 %v6681, %v6681
      %v7042 = vpack.c.b16 %v6682, %v6682
      %v7043 = vpack.c.b16 %v6683, %v6683
      %v7044 = vpack.c.b16 %v6684, %v6684
      %v7045 = vpack.c.b16 %v6685, %v6685
      %v7046 = vpack.c.b16 %v6686, %v6686
      %v7047 = vpack.c.b16 %v6687, %v6687
      %v7048 = vpack.c.b16 %v6688, %v6688
      %v7049 = vpack.c.b16 %v6689, %v6689
      %v7050 = vpack.c.b16 %v6690, %v6690
      %v7051 = vpack.c.b16 %v6691, %v6691
      %v7052 = vpack.c.b16 %v6692, %v6692
      %v7053 = vpack.c.b16 %v6693, %v6693
      %v7054 = vpack.c.b16 %v6694, %v6694
      %v7055 = vpack.c.b16 %v6695, %v6695
      %v7056 = vpack.c.b16 %v6696, %v6696
      %v7057 = vpack.c.b16 %v6697, %v6697
      %v7058 = vpack.c.b16 %v6698, %v6698
      %v7059 = vpack.c.b16 %v6699, %v6699
      %v7060 = vpack.c.b16 %v6700, %v6700
      %v7061 = vpack.c.b16 %v6701, %v6701
      %v7062 = vpack.c.b16 %v6702, %v6702
      %v7063 = vpack.c.b16 %v6703, %v6703
      %v7064 = vpack.c.b16 %v6704, %v6704
      %v7065 = vpack.c.b16 %v6705, %v6705
      %v7066 = vpack.c.b16 %v6706, %v6706
      %v7067 = vpack.c.b16 %v6707, %v6707
      %v7068 = vpack.c.b16 %v6708, %v6708
      %v7069 = vpack.c.b16 %v6709, %v6709
      %v7070 = vpack.c.b16 %v6710, %v6710
      %v7071 = vpack.c.b16 %v6711, %v6711
      %v7072 = vpack.c.b16 %v6712, %v6712
      %v7073 = vpack.c.b16 %v6713, %v6713
      %v7074 = vpack.c.b16 %v6714, %v6714
      %v7075 = vpack.c.b16 %v6715, %v6715
      %v7076 = vpack.c.b16 %v6716, %v6716
      %v7077 = vpack.c.b16 %v6717, %v6717
      %v7078 = vpack.c.b16 %v6718, %v6718
      %v7079 = vpack.c.b16 %v6719, %v6719
      %v7080 = vpack.c.b16 %v6720, %v6720
      %v7081 = vpack.c.b16 %v6721, %v6721
      %v7082 = vpack.c.b16 %v6722, %v6722
      %v7083 = vpack.c.b16 %v6723, %v6723
      %v7084 = vpack.c.b16 %v6724, %v6724
      %v7085 = vpack.c.b16 %v6725, %v6725
      %v7086 = vpack.c.b16 %v6726, %v6726
      %v7087 = vpack.c.b16 %v6727, %v6727
      %v7088 = vpack.c.b16 %v6728, %v6728
      %v7089 = vpack.c.b16 %v6729, %v6729
      %v7090 = vpack.c.b16 %v6730, %v6730
      %v7091 = vpack.c.b16 %v6731, %v6731
      %v7092 = vpack.c.b16 %v6732, %v6732
      %v7093 = vpack.c.b16 %v6733, %v6733
      %v7094 = vpack.c.b16 %v6734, %v6734
      %v7095 = vpack.c.b16 %v6735, %v6735
      %v7096 = vpack.c.b16 %v6736, %v6736
      %v7097 = vpack.c.b16 %v6737, %v6737
      %v7098 = vpack.c.b16 %v6738, %v6738
      %v7099 = vpack.c.b16 %v6739, %v6739
      %v7100 = vpack.c.b16 %v6740, %v6740
      %v7101 = vpack.c.b16 %v6741, %v6741
      %v7102 = vpack.c.b16 %v6742, %v6742
      %v7103 = vpack.c.b16 %v6743, %v6743
      %v7104 = vpack.c.b16 %v6744, %v6744
      %v7105 = vpack.c.b16 %v6745, %v6745
      %v7106 = vpack.c.b16 %v6746, %v6746
      %v7107 = vpack.c.b16 %v6747, %v6747
      %v7108 = vpack.c.b16 %v6748, %v6748
      %v7109 = vpack.c.b16 %v6749, %v6749
      %v7110 = vpack.c.b16 %v6750, %v6750
      %v7111 = vpack.c.b16 %v6751, %v6751
      %v7112 = vpack.c.b16 %v6752, %v6752
      %v7113 = vpack.c.b16 %v6753, %v6753
      %v7114 = vpack.c.b16 %v6754, %v6754
      %v7115 = vpack.c.b16 %v6755, %v6755
      %v7116 = vpack.c.b16 %v6756, %v6756
      %v7117 = vpack.c.b16 %v6757, %v6757
      %v7118 = vpack.c.b16 %v6758, %v6758
      %v7119 = vunpack.c.l.b16 %v6759
      %v7120 = vunpack.c.l.b16 %v6760
      %v7121 = vunpack.c.l.b16 %v6761
      %v7122 = vunpack.c.l.b16 %v6762
      %v7123 = vunpack.c.l.b16 %v6763
      %v7124 = vunpack.c.l.b16 %v6764
      %v7125 = vunpack.c.l.b16 %v6765
      %v7126 = vunpack.c.l.b16 %v6766
      %v7127 = vunpack.c.l.b16 %v6767
      %v7128 = vunpack.c.l.b16 %v6768
      %v7129 = vunpack.c.l.b16 %v6769
      %v7130 = vunpack.c.l.b16 %v6770
      %v7131 = vunpack.c.l.b16 %v6771
      %v7132 = vunpack.c.l.b16 %v6772
      %v7133 = vunpack.c.l.b16 %v6773
      %v7134 = vunpack.c.l.b16 %v6774
      %v7135 = vunpack.c.l.b16 %v6775
      %v7136 = vunpack.c.l.b16 %v6776
      %v7137 = vunpack.c.l.b16 %v6777
      %v7138 = vunpack.c.l.b16 %v6778
      %v7139 = vunpack.c.l.b16 %v6779
      %v7140 = vunpack.c.l.b16 %v6780
      %v7141 = vunpack.c.l.b16 %v6781
      %v7142 = vunpack.c.l.b16 %v6782
      %v7143 = vunpack.c.l.b16 %v6783
      %v7144 = vunpack.c.l.b16 %v6784
      %v7145 = vunpack.c.l.b16 %v6785
      %v7146 = vunpack.c.l.b16 %v6786
      %v7147 = vunpack.c.l.b16 %v6787
      %v7148 = vunpack.c.l.b16 %v6788
      %v7149 = vunpack.c.l.b16 %v6789
      %v7150 = vunpack.c.l.b16 %v6790
      %v7151 = vunpack.c.l.b16 %v6791
      %v7152 = vunpack.c.l.b16 %v6792
      %v7153 = vunpack.c.l.b16 %v6793
      %v7154 = vunpack.c.l.b16 %v6794
      %v7155 = vunpack.c.l.b16 %v6795
      %v7156 = vunpack.c.l.b16 %v6796
      %v7157 = vunpack.c.l.b16 %v6797
      %v7158 = vunpack.c.l.b16 %v6798
      %v7159 = vunpack.c.l.b16 %v6799
      %v7160 = vunpack.c.l.b16 %v6800
      %v7161 = vunpack.c.l.b16 %v6801
      %v7162 = vunpack.c.l.b16 %v6802
      %v7163 = vunpack.c.l.b16 %v6803
      %v7164 = vunpack.c.l.b16 %v6804
      %v7165 = vunpack.c.l.b16 %v6805
      %v7166 = vunpack.c.l.b16 %v6806
      %v7167 = vunpack.c.l.b16 %v6807
      %v7168 = vunpack.c.l.b16 %v6808
      %v7169 = vunpack.c.l.b16 %v6809
      %v7170 = vunpack.c.l.b16 %v6810
      %v7171 = vunpack.c.l.b16 %v6811
      %v7172 = vunpack.c.l.b16 %v6812
      %v7173 = vunpack.c.l.b16 %v6813
      %v7174 = vunpack.c.l.b16 %v6814
      %v7175 = vunpack.c.l.b16 %v6815
      %v7176 = vunpack.c.l.b16 %v6816
      %v7177 = vunpack.c.l.b16 %v6817
      %v7178 = vunpack.c.l.b16 %v6818
      %v7179 = vunpack.c.l.b16 %v6819
      %v7180 = vunpack.c.l.b16 %v6820
      %v7181 = vunpack.c.l.b16 %v6821
      %v7182 = vunpack.c.l.b16 %v6822
      %v7183 = vunpack.c.l.b16 %v6823
      %v7184 = vunpack.c.l.b16 %v6824
      %v7185 = vunpack.c.l.b16 %v6825
      %v7186 = vunpack.c.l.b16 %v6826
      %v7187 = vunpack.c.l.b16 %v6827
      %v7188 = vunpack.c.l.b16 %v6828
      %v7189 = vunpack.c.l.b16 %v6829
      %v7190 = vunpack.c.l.b16 %v6830
      %v7191 = vunpack.c.l.b16 %v6831
      %v7192 = vunpack.c.l.b16 %v6832
      %v7193 = vunpack.c.l.b16 %v6833
      %v7194 = vunpack.c.l.b16 %v6834
      %v7195 = vunpack.c.l.b16 %v6835
      %v7196 = vunpack.c.l.b16 %v6836
      %v7197 = vunpack.c.l.b16 %v6837
      %v7198 = vunpack.c.l.b16 %v6838
      %v7199 = vunpack.c.l.b16 %v6839
      %v7200 = vunpack.c.l.b16 %v6840
      %v7201 = vunpack.c.l.b16 %v6841
      %v7202 = vunpack.c.l.b16 %v6842
      %v7203 = vunpack.c.l.b16 %v6843
      %v7204 = vunpack.c.l.b16 %v6844
      %v7205 = vunpack.c.l.b16 %v6845
      %v7206 = vunpack.c.l.b16 %v6846
      %v7207 = vunpack.c.l.b16 %v6847
      %v7208 = vunpack.c.l.b16 %v6848
      %v7209 = vunpack.c.l.b16 %v6849
      %v7210 = vunpack.c.l.b16 %v6850
      %v7211 = vunpack.c.l.b16 %v6851
      %v7212 = vunpack.c.l.b16 %v6852
      %v7213 = vunpack.c.l.b16 %v6853
      %v7214 = vunpack.c.l.b16 %v6854
      %v7215 = vunpack.c.l.b16 %v6855
      %v7216 = vunpack.c.l.b16 %v6856
      %v7217 = vunpack.c.l.b16 %v6857
      %v7218 = vunpack.c.l.b16 %v6858
      %v7219 = vunpack.c.l.b16 %v6859
      %v7220 = vunpack.c.l.b16 %v6860
      %v7221 = vunpack.c.l.b16 %v6861
      %v7222 = vunpack.c.l.b16 %v6862
      %v7223 = vunpack.c.l.b16 %v6863
      %v7224 = vunpack.c.l.b16 %v6864
      %v7225 = vunpack.c.l.b16 %v6865
      %v7226 = vunpack.c.l.b16 %v6866
      %v7227 = vunpack.c.l.b16 %v6867
      %v7228 = vunpack.c.l.b16 %v6868
      %v7229 = vunpack.c.l.b16 %v6869
      %v7230 = vunpack.c.l.b16 %v6870
      %v7231 = vunpack.c.l.b16 %v6871
      %v7232 = vunpack.c.l.b16 %v6872
      %v7233 = vunpack.c.l.b16 %v6873
      %v7234 = vunpack.c.l.b16 %v6874
      %v7235 = vunpack.c.l.b16 %v6875
      %v7236 = vunpack.c.l.b16 %v6876
      %v7237 = vunpack.c.l.b16 %v6877
      %v7238 = vunpack.c.l.b16 %v6878
      %v7239 = vunpack.c.l.b16 %v6879
      %v7240 = vunpack.c.l.b16 %v6880
      %v7241 = vunpack.c.l.b16 %v6881
      %v7242 = vunpack.c.l.b16 %v6882
      %v7243 = vunpack.c.l.b16 %v6883
      %v7244 = vunpack.c.l.b16 %v6884
      %v7245 = vunpack.c.l.b16 %v6885
      %v7246 = vunpack.c.l.b16 %v6886
      %v7247 = vunpack.c.l.b16 %v6887
      %v7248 = vunpack.c.l.b16 %v6888
      %v7249 = vunpack.c.l.b16 %v6889
      %v7250 = vunpack.c.l.b16 %v6890
      %v7251 = vunpack.c.l.b16 %v6891
      %v7252 = vunpack.c.l.b16 %v6892
      %v7253 = vunpack.c.l.b16 %v6893
      %v7254 = vunpack.c.l.b16 %v6894
      %v7255 = vunpack.c.l.b16 %v6895
      %v7256 = vunpack.c.l.b16 %v6896
      %v7257 = vunpack.c.l.b16 %v6897
      %v7258 = vunpack.c.l.b16 %v6898
      %v7259 = vunpack.c.l.b16 %v6899
      %v7260 = vunpack.c.l.b16 %v6900
      %v7261 = vunpack.c.l.b16 %v6901
      %v7262 = vunpack.c.l.b16 %v6902
      %v7263 = vunpack.c.l.b16 %v6903
      %v7264 = vunpack.c.l.b16 %v6904
      %v7265 = vunpack.c.l.b16 %v6905
      %v7266 = vunpack.c.l.b16 %v6906
      %v7267 = vunpack.c.l.b16 %v6907
      %v7268 = vunpack.c.l.b16 %v6908
      %v7269 = vunpack.c.l.b16 %v6909
      %v7270 = vunpack.c.l.b16 %v6910
      %v7271 = vunpack.c.l.b16 %v6911
      %v7272 = vunpack.c.l.b16 %v6912
      %v7273 = vunpack.c.l.b16 %v6913
      %v7274 = vunpack.c.l.b16 %v6914
      %v7275 = vunpack.c.l.b16 %v6915
      %v7276 = vunpack.c.l.b16 %v6916
      %v7277 = vunpack.c.l.b16 %v6917
      %v7278 = vunpack.c.l.b16 %v6918
      %v7279 = vunpack.c.l.b16 %v6919
      %v7280 = vunpack.c.l.b16 %v6920
      %v7281 = vunpack.c.l.b16 %v6921
      %v7282 = vunpack.c.l.b16 %v6922
      %v7283 = vunpack.c.l.b16 %v6923
      %v7284 = vunpack.c.l.b16 %v6924
      %v7285 = vunpack.c.l.b16 %v6925
      %v7286 = vunpack.c.l.b16 %v6926
      %v7287 = vunpack.c.l.b16 %v6927
      %v7288 = vunpack.c.l.b16 %v6928
      %v7289 = vunpack.c.l.b16 %v6929
      %v7290 = vunpack.c.l.b16 %v6930
      %v7291 = vunpack.c.l.b16 %v6931
      %v7292 = vunpack.c.l.b16 %v6932
      %v7293 = vunpack.c.l.b16 %v6933
      %v7294 = vunpack.c.l.b16 %v6934
      %v7295 = vunpack.c.l.b16 %v6935
      %v7296 = vunpack.c.l.b16 %v6936
      %v7297 = vunpack.c.l.b16 %v6937
      %v7298 = vunpack.c.l.b16 %v6938
      %v7299 = vunpack.c.l.b16 %v6939
      %v7300 = vunpack.c.l.b16 %v6940
      %v7301 = vunpack.c.l.b16 %v6941
      %v7302 = vunpack.c.l.b16 %v6942
      %v7303 = vunpack.c.l.b16 %v6943
      %v7304 = vunpack.c.l.b16 %v6944
      %v7305 = vunpack.c.l.b16 %v6945
      %v7306 = vunpack.c.l.b16 %v6946
      %v7307 = vunpack.c.l.b16 %v6947
      %v7308 = vunpack.c.l.b16 %v6948
      %v7309 = vunpack.c.l.b16 %v6949
      %v7310 = vunpack.c.l.b16 %v6950
      %v7311 = vunpack.c.l.b16 %v6951
      %v7312 = vunpack.c.l.b16 %v6952
      %v7313 = vunpack.c.l.b16 %v6953
      %v7314 = vunpack.c.l.b16 %v6954
      %v7315 = vunpack.c.l.b16 %v6955
      %v7316 = vunpack.c.l.b16 %v6956
      %v7317 = vunpack.c.l.b16 %v6957
      %v7318 = vunpack.c.l.b16 %v6958
      %v7319 = vunpack.c.l.b16 %v6959
      %v7320 = vunpack.c.l.b16 %v6960
      %v7321 = vunpack.c.l.b16 %v6961
      %v7322 = vunpack.c.l.b16 %v6962
      %v7323 = vunpack.c.l.b16 %v6963
      %v7324 = vunpack.c.l.b16 %v6964
      %v7325 = vunpack.c.l.b16 %v6965
      %v7326 = vunpack.c.l.b16 %v6966
      %v7327 = vunpack.c.l.b16 %v6967
      %v7328 = vunpack.c.l.b16 %v6968
      %v7329 = vunpack.c.l.b16 %v6969
      %v7330 = vunpack.c.l.b16 %v6970
      %v7331 = vunpack.c.l.b16 %v6971
      %v7332 = vunpack.c.l.b16 %v6972
      %v7333 = vunpack.c.l.b16 %v6973
      %v7334 = vunpack.c.l.b16 %v6974
      %v7335 = vunpack.c.l.b16 %v6975
      %v7336 = vunpack.c.l.b16 %v6976
      %v7337 = vunpack.c.l.b16 %v6977
      %v7338 = vunpack.c.l.b16 %v6978
      %v7339 = vunpack.c.l.b16 %v6979
      %v7340 = vunpack.c.l.b16 %v6980
      %v7341 = vunpack.c.l.b16 %v6981
      %v7342 = vunpack.c.l.b16 %v6982
      %v7343 = vunpack.c.l.b16 %v6983
      %v7344 = vunpack.c.l.b16 %v6984
      %v7345 = vunpack.c.l.b16 %v6985
      %v7346 = vunpack.c.l.b16 %v6986
      %v7347 = vunpack.c.l.b16 %v6987
      %v7348 = vunpack.c.l.b16 %v6988
      %v7349 = vunpack.c.l.b16 %v6989
      %v7350 = vunpack.c.l.b16 %v6990
      %v7351 = vunpack.c.l.b16 %v6991
      %v7352 = vunpack.c.l.b16 %v6992
      %v7353 = vunpack.c.l.b16 %v6993
      %v7354 = vunpack.c.l.b16 %v6994
      %v7355 = vunpack.c.l.b16 %v6995
      %v7356 = vunpack.c.l.b16 %v6996
      %v7357 = vunpack.c.l.b16 %v6997
      %v7358 = vunpack.c.l.b16 %v6998
      %v7359 = vunpack.c.l.b16 %v6999
      %v7360 = vunpack.c.l.b16 %v7000
      %v7361 = vunpack.c.l.b16 %v7001
      %v7362 = vunpack.c.l.b16 %v7002
      %v7363 = vunpack.c.l.b16 %v7003
      %v7364 = vunpack.c.l.b16 %v7004
      %v7365 = vunpack.c.l.b16 %v7005
      %v7366 = vunpack.c.l.b16 %v7006
      %v7367 = vunpack.c.l.b16 %v7007
      %v7368 = vunpack.c.l.b16 %v7008
      %v7369 = vunpack.c.l.b16 %v7009
      %v7370 = vunpack.c.l.b16 %v7010
      %v7371 = vunpack.c.l.b16 %v7011
      %v7372 = vunpack.c.l.b16 %v7012
      %v7373 = vunpack.c.l.b16 %v7013
      %v7374 = vunpack.c.l.b16 %v7014
      %v7375 = vunpack.c.l.b16 %v7015
      %v7376 = vunpack.c.l.b16 %v7016
      %v7377 = vunpack.c.l.b16 %v7017
      %v7378 = vunpack.c.l.b16 %v7018
      %v7379 = vunpack.c.l.b16 %v7019
      %v7380 = vunpack.c.l.b16 %v7020
      %v7381 = vunpack.c.l.b16 %v7021
      %v7382 = vunpack.c.l.b16 %v7022
      %v7383 = vunpack.c.l.b16 %v7023
      %v7384 = vunpack.c.l.b16 %v7024
      %v7385 = vunpack.c.l.b16 %v7025
      %v7386 = vunpack.c.l.b16 %v7026
      %v7387 = vunpack.c.l.b16 %v7027
      %v7388 = vunpack.c.l.b16 %v7028
      %v7389 = vunpack.c.l.b16 %v7029
      %v7390 = vunpack.c.l.b16 %v7030
      %v7391 = vunpack.c.l.b16 %v7031
      %v7392 = vunpack.c.l.b16 %v7032
      %v7393 = vunpack.c.l.b16 %v7033
      %v7394 = vunpack.c.l.b16 %v7034
      %v7395 = vunpack.c.l.b16 %v7035
      %v7396 = vunpack.c.l.b16 %v7036
      %v7397 = vunpack.c.l.b16 %v7037
      %v7398 = vunpack.c.l.b16 %v7038
      %v7399 = vunpack.c.l.b16 %v7039
      %v7400 = vunpack.c.l.b16 %v7040
      %v7401 = vunpack.c.l.b16 %v7041
      %v7402 = vunpack.c.l.b16 %v7042
      %v7403 = vunpack.c.l.b16 %v7043
      %v7404 = vunpack.c.l.b16 %v7044
      %v7405 = vunpack.c.l.b16 %v7045
      %v7406 = vunpack.c.l.b16 %v7046
      %v7407 = vunpack.c.l.b16 %v7047
      %v7408 = vunpack.c.l.b16 %v7048
      %v7409 = vunpack.c.l.b16 %v7049
      %v7410 = vunpack.c.l.b16 %v7050
      %v7411 = vunpack.c.l.b16 %v7051
      %v7412 = vunpack.c.l.b16 %v7052
      %v7413 = vunpack.c.l.b16 %v7053
      %v7414 = vunpack.c.l.b16 %v7054
      %v7415 = vunpack.c.l.b16 %v7055
      %v7416 = vunpack.c.l.b16 %v7056
      %v7417 = vunpack.c.l.b16 %v7057
      %v7418 = vunpack.c.l.b16 %v7058
      %v7419 = vunpack.c.l.b16 %v7059
      %v7420 = vunpack.c.l.b16 %v7060
      %v7421 = vunpack.c.l.b16 %v7061
      %v7422 = vunpack.c.l.b16 %v7062
      %v7423 = vunpack.c.l.b16 %v7063
      %v7424 = vunpack.c.l.b16 %v7064
      %v7425 = vunpack.c.l.b16 %v7065
      %v7426 = vunpack.c.l.b16 %v7066
      %v7427 = vunpack.c.l.b16 %v7067
      %v7428 = vunpack.c.l.b16 %v7068
      %v7429 = vunpack.c.l.b16 %v7069
      %v7430 = vunpack.c.l.b16 %v7070
      %v7431 = vunpack.c.l.b16 %v7071
      %v7432 = vunpack.c.l.b16 %v7072
      %v7433 = vunpack.c.l.b16 %v7073
      %v7434 = vunpack.c.l.b16 %v7074
      %v7435 = vunpack.c.l.b16 %v7075
      %v7436 = vunpack.c.l.b16 %v7076
      %v7437 = vunpack.c.l.b16 %v7077
      %v7438 = vunpack.c.l.b16 %v7078
      %v7439 = vunpack.c.l.b16 %v7079
      %v7440 = vunpack.c.l.b16 %v7080
      %v7441 = vunpack.c.l.b16 %v7081
      %v7442 = vunpack.c.l.b16 %v7082
      %v7443 = vunpack.c.l.b16 %v7083
      %v7444 = vunpack.c.l.b16 %v7084
      %v7445 = vunpack.c.l.b16 %v7085
      %v7446 = vunpack.c.l.b16 %v7086
      %v7447 = vunpack.c.l.b16 %v7087
      %v7448 = vunpack.c.l.b16 %v7088
      %v7449 = vunpack.c.l.b16 %v7089
      %v7450 = vunpack.c.l.b16 %v7090
      %v7451 = vunpack.c.l.b16 %v7091
      %v7452 = vunpack.c.l.b16 %v7092
      %v7453 = vunpack.c.l.b16 %v7093
      %v7454 = vunpack.c.l.b16 %v7094
      %v7455 = vunpack.c.l.b16 %v7095
      %v7456 = vunpack.c.l.b16 %v7096
      %v7457 = vunpack.c.l.b16 %v7097
      %v7458 = vunpack.c.l.b16 %v7098
      %v7459 = vunpack.c.l.b16 %v7099
      %v7460 = vunpack.c.l.b16 %v7100
      %v7461 = vunpack.c.l.b16 %v7101
      %v7462 = vunpack.c.l.b16 %v7102
      %v7463 = vunpack.c.l.b16 %v7103
      %v7464 = vunpack.c.l.b16 %v7104
      %v7465 = vunpack.c.l.b16 %v7105
      %v7466 = vunpack.c.l.b16 %v7106
      %v7467 = vunpack.c.l.b16 %v7107
      %v7468 = vunpack.c.l.b16 %v7108
      %v7469 = vunpack.c.l.b16 %v7109
      %v7470 = vunpack.c.l.b16 %v7110
      %v7471 = vunpack.c.l.b16 %v7111
      %v7472 = vunpack.c.l.b16 %v7112
      %v7473 = vunpack.c.l.b16 %v7113
      %v7474 = vunpack.c.l.b16 %v7114
      %v7475 = vunpack.c.l.b16 %v7115
      %v7476 = vunpack.c.l.b16 %v7116
      %v7477 = vunpack.c.l.b16 %v7117
      %v7478 = vunpack.c.l.b16 %v7118
      %vm7479 = vcmask 1041409
      %v7480 = vsel %vm7479, %v7120, %v7119
      %vm7481 = vcmask 1042434
      %v7482 = vsel %vm7481, %v7121, %v7480
      %vm7483 = vcmask 1043459
      %v7484 = vsel %vm7483, %v7122, %v7482
      %vm7485 = vcmask 1044484
      %v7486 = vsel %vm7485, %v7123, %v7484
      %vm7487 = vcmask 1045509
      %v7488 = vsel %vm7487, %v7124, %v7486
      %vm7489 = vcmask 1046534
      %v7490 = vsel %vm7489, %v7125, %v7488
      %vm7491 = vcmask 1047559
      %v7492 = vsel %vm7491, %v7126, %v7490
      %v7493 = vsel %vm7479, %v7128, %v7127
      %v7494 = vsel %vm7481, %v7129, %v7493
      %v7495 = vsel %vm7483, %v7130, %v7494
      %v7496 = vsel %vm7485, %v7131, %v7495
      %v7497 = vsel %vm7487, %v7132, %v7496
      %v7498 = vsel %vm7489, %v7133, %v7497
      %v7499 = vsel %vm7491, %v7134, %v7498
      %v7500 = vsel %vm7479, %v7136, %v7135
      %v7501 = vsel %vm7481, %v7137, %v7500
      %v7502 = vsel %vm7483, %v7138, %v7501
      %v7503 = vsel %vm7485, %v7139, %v7502
      %v7504 = vsel %vm7487, %v7140, %v7503
      %v7505 = vsel %vm7489, %v7141, %v7504
      %v7506 = vsel %vm7491, %v7142, %v7505
      %v7507 = vsel %vm7479, %v7144, %v7143
      %v7508 = vsel %vm7481, %v7145, %v7507
      %v7509 = vsel %vm7483, %v7146, %v7508
      %v7510 = vsel %vm7485, %v7147, %v7509
      %v7511 = vsel %vm7487, %v7148, %v7510
      %v7512 = vsel %vm7489, %v7149, %v7511
      %v7513 = vsel %vm7491, %v7150, %v7512
      %v7514 = vsel %vm7479, %v7152, %v7151
      %v7515 = vsel %vm7481, %v7153, %v7514
      %v7516 = vsel %vm7483, %v7154, %v7515
      %v7517 = vsel %vm7485, %v7155, %v7516
      %v7518 = vsel %vm7487, %v7156, %v7517
      %v7519 = vsel %vm7489, %v7157, %v7518
      %v7520 = vsel %vm7491, %v7158, %v7519
      %v7521 = vsel %vm7479, %v7160, %v7159
      %v7522 = vsel %vm7481, %v7161, %v7521
      %v7523 = vsel %vm7483, %v7162, %v7522
      %v7524 = vsel %vm7485, %v7163, %v7523
      %v7525 = vsel %vm7487, %v7164, %v7524
      %v7526 = vsel %vm7489, %v7165, %v7525
      %v7527 = vsel %vm7491, %v7166, %v7526
      %v7528 = vsel %vm7479, %v7168, %v7167
      %v7529 = vsel %vm7481, %v7169, %v7528
      %v7530 = vsel %vm7483, %v7170, %v7529
      %v7531 = vsel %vm7485, %v7171, %v7530
      %v7532 = vsel %vm7487, %v7172, %v7531
      %v7533 = vsel %vm7489, %v7173, %v7532
      %v7534 = vsel %vm7491, %v7174, %v7533
      %v7535 = vsel %vm7479, %v7176, %v7175
      %v7536 = vsel %vm7481, %v7177, %v7535
      %v7537 = vsel %vm7483, %v7178, %v7536
      %v7538 = vsel %vm7485, %v7179, %v7537
      %v7539 = vsel %vm7487, %v7180, %v7538
      %v7540 = vsel %vm7489, %v7181, %v7539
      %v7541 = vsel %vm7491, %v7182, %v7540
      %v7542 = vsel %vm7479, %v7184, %v7183
      %v7543 = vsel %vm7481, %v7185, %v7542
      %v7544 = vsel %vm7483, %v7186, %v7543
      %v7545 = vsel %vm7485, %v7187, %v7544
      %v7546 = vsel %vm7487, %v7188, %v7545
      %v7547 = vsel %vm7489, %v7189, %v7546
      %v7548 = vsel %vm7491, %v7190, %v7547
      %v7549 = vsel %vm7479, %v7192, %v7191
      %v7550 = vsel %vm7481, %v7193, %v7549
      %v7551 = vsel %vm7483, %v7194, %v7550
      %v7552 = vsel %vm7485, %v7195, %v7551
      %v7553 = vsel %vm7487, %v7196, %v7552
      %v7554 = vsel %vm7489, %v7197, %v7553
      %v7555 = vsel %vm7491, %v7198, %v7554
      %v7556 = vsel %vm7479, %v7200, %v7199
      %v7557 = vsel %vm7481, %v7201, %v7556
      %v7558 = vsel %vm7483, %v7202, %v7557
      %v7559 = vsel %vm7485, %v7203, %v7558
      %v7560 = vsel %vm7487, %v7204, %v7559
      %v7561 = vsel %vm7489, %v7205, %v7560
      %v7562 = vsel %vm7491, %v7206, %v7561
      %v7563 = vsel %vm7479, %v7208, %v7207
      %v7564 = vsel %vm7481, %v7209, %v7563
      %v7565 = vsel %vm7483, %v7210, %v7564
      %v7566 = vsel %vm7485, %v7211, %v7565
      %v7567 = vsel %vm7487, %v7212, %v7566
      %v7568 = vsel %vm7489, %v7213, %v7567
      %v7569 = vsel %vm7491, %v7214, %v7568
      %v7570 = vsel %vm7479, %v7216, %v7215
      %v7571 = vsel %vm7481, %v7217, %v7570
      %v7572 = vsel %vm7483, %v7218, %v7571
      %v7573 = vsel %vm7485, %v7219, %v7572
      %v7574 = vsel %vm7487, %v7220, %v7573
      %v7575 = vsel %vm7489, %v7221, %v7574
      %v7576 = vsel %vm7491, %v7222, %v7575
      %v7577 = vsel %vm7479, %v7224, %v7223
      %v7578 = vsel %vm7481, %v7225, %v7577
      %v7579 = vsel %vm7483, %v7226, %v7578
      %v7580 = vsel %vm7485, %v7227, %v7579
      %v7581 = vsel %vm7487, %v7228, %v7580
      %v7582 = vsel %vm7489, %v7229, %v7581
      %v7583 = vsel %vm7491, %v7230, %v7582
      %v7584 = vsel %vm7479, %v7232, %v7231
      %v7585 = vsel %vm7481, %v7233, %v7584
      %v7586 = vsel %vm7483, %v7234, %v7585
      %v7587 = vsel %vm7485, %v7235, %v7586
      %v7588 = vsel %vm7487, %v7236, %v7587
      %v7589 = vsel %vm7489, %v7237, %v7588
      %v7590 = vsel %vm7491, %v7238, %v7589
      %v7591 = vsel %vm7479, %v7240, %v7239
      %v7592 = vsel %vm7481, %v7241, %v7591
      %v7593 = vsel %vm7483, %v7242, %v7592
      %v7594 = vsel %vm7485, %v7243, %v7593
      %v7595 = vsel %vm7487, %v7244, %v7594
      %v7596 = vsel %vm7489, %v7245, %v7595
      %v7597 = vsel %vm7491, %v7246, %v7596
      %v7598 = vsel %vm7479, %v7248, %v7247
      %v7599 = vsel %vm7481, %v7249, %v7598
      %v7600 = vsel %vm7483, %v7250, %v7599
      %v7601 = vsel %vm7485, %v7251, %v7600
      %v7602 = vsel %vm7487, %v7252, %v7601
      %v7603 = vsel %vm7489, %v7253, %v7602
      %v7604 = vsel %vm7491, %v7254, %v7603
      %v7605 = vsel %vm7479, %v7256, %v7255
      %v7606 = vsel %vm7481, %v7257, %v7605
      %v7607 = vsel %vm7483, %v7258, %v7606
      %v7608 = vsel %vm7485, %v7259, %v7607
      %v7609 = vsel %vm7487, %v7260, %v7608
      %v7610 = vsel %vm7489, %v7261, %v7609
      %v7611 = vsel %vm7491, %v7262, %v7610
      %v7612 = vsel %vm7479, %v7264, %v7263
      %v7613 = vsel %vm7481, %v7265, %v7612
      %v7614 = vsel %vm7483, %v7266, %v7613
      %v7615 = vsel %vm7485, %v7267, %v7614
      %v7616 = vsel %vm7487, %v7268, %v7615
      %v7617 = vsel %vm7489, %v7269, %v7616
      %v7618 = vsel %vm7491, %v7270, %v7617
      %v7619 = vsel %vm7479, %v7272, %v7271
      %v7620 = vsel %vm7481, %v7273, %v7619
      %v7621 = vsel %vm7483, %v7274, %v7620
      %v7622 = vsel %vm7485, %v7275, %v7621
      %v7623 = vsel %vm7487, %v7276, %v7622
      %v7624 = vsel %vm7489, %v7277, %v7623
      %v7625 = vsel %vm7491, %v7278, %v7624
      %v7626 = vsel %vm7479, %v7280, %v7279
      %v7627 = vsel %vm7481, %v7281, %v7626
      %v7628 = vsel %vm7483, %v7282, %v7627
      %v7629 = vsel %vm7485, %v7283, %v7628
      %v7630 = vsel %vm7487, %v7284, %v7629
      %v7631 = vsel %vm7489, %v7285, %v7630
      %v7632 = vsel %vm7491, %v7286, %v7631
      %v7633 = vsel %vm7479, %v7288, %v7287
      %v7634 = vsel %vm7481, %v7289, %v7633
      %v7635 = vsel %vm7483, %v7290, %v7634
      %v7636 = vsel %vm7485, %v7291, %v7635
      %v7637 = vsel %vm7487, %v7292, %v7636
      %v7638 = vsel %vm7489, %v7293, %v7637
      %v7639 = vsel %vm7491, %v7294, %v7638
      %v7640 = vsel %vm7479, %v7296, %v7295
      %v7641 = vsel %vm7481, %v7297, %v7640
      %v7642 = vsel %vm7483, %v7298, %v7641
      %v7643 = vsel %vm7485, %v7299, %v7642
      %v7644 = vsel %vm7487, %v7300, %v7643
      %v7645 = vsel %vm7489, %v7301, %v7644
      %v7646 = vsel %vm7491, %v7302, %v7645
      %v7647 = vsel %vm7479, %v7304, %v7303
      %v7648 = vsel %vm7481, %v7305, %v7647
      %v7649 = vsel %vm7483, %v7306, %v7648
      %v7650 = vsel %vm7485, %v7307, %v7649
      %v7651 = vsel %vm7487, %v7308, %v7650
      %v7652 = vsel %vm7489, %v7309, %v7651
      %v7653 = vsel %vm7491, %v7310, %v7652
      %v7654 = vsel %vm7479, %v7312, %v7311
      %v7655 = vsel %vm7481, %v7313, %v7654
      %v7656 = vsel %vm7483, %v7314, %v7655
      %v7657 = vsel %vm7485, %v7315, %v7656
      %v7658 = vsel %vm7487, %v7316, %v7657
      %v7659 = vsel %vm7489, %v7317, %v7658
      %v7660 = vsel %vm7491, %v7318, %v7659
      %v7661 = vsel %vm7479, %v7320, %v7319
      %v7662 = vsel %vm7481, %v7321, %v7661
      %v7663 = vsel %vm7483, %v7322, %v7662
      %v7664 = vsel %vm7485, %v7323, %v7663
      %v7665 = vsel %vm7487, %v7324, %v7664
      %v7666 = vsel %vm7489, %v7325, %v7665
      %v7667 = vsel %vm7491, %v7326, %v7666
      %v7668 = vsel %vm7479, %v7328, %v7327
      %v7669 = vsel %vm7481, %v7329, %v7668
      %v7670 = vsel %vm7483, %v7330, %v7669
      %v7671 = vsel %vm7485, %v7331, %v7670
      %v7672 = vsel %vm7487, %v7332, %v7671
      %v7673 = vsel %vm7489, %v7333, %v7672
      %v7674 = vsel %vm7491, %v7334, %v7673
      %v7675 = vsel %vm7479, %v7336, %v7335
      %v7676 = vsel %vm7481, %v7337, %v7675
      %v7677 = vsel %vm7483, %v7338, %v7676
      %v7678 = vsel %vm7485, %v7339, %v7677
      %v7679 = vsel %vm7487, %v7340, %v7678
      %v7680 = vsel %vm7489, %v7341, %v7679
      %v7681 = vsel %vm7491, %v7342, %v7680
      %v7682 = vsel %vm7479, %v7344, %v7343
      %v7683 = vsel %vm7481, %v7345, %v7682
      %v7684 = vsel %vm7483, %v7346, %v7683
      %v7685 = vsel %vm7485, %v7347, %v7684
      %v7686 = vsel %vm7487, %v7348, %v7685
      %v7687 = vsel %vm7489, %v7349, %v7686
      %v7688 = vsel %vm7491, %v7350, %v7687
      %v7689 = vsel %vm7479, %v7352, %v7351
      %v7690 = vsel %vm7481, %v7353, %v7689
      %v7691 = vsel %vm7483, %v7354, %v7690
      %v7692 = vsel %vm7485, %v7355, %v7691
      %v7693 = vsel %vm7487, %v7356, %v7692
      %v7694 = vsel %vm7489, %v7357, %v7693
      %v7695 = vsel %vm7491, %v7358, %v7694
      %v7696 = vsel %vm7479, %v7360, %v7359
      %v7697 = vsel %vm7481, %v7361, %v7696
      %v7698 = vsel %vm7483, %v7362, %v7697
      %v7699 = vsel %vm7485, %v7363, %v7698
      %v7700 = vsel %vm7487, %v7364, %v7699
      %v7701 = vsel %vm7489, %v7365, %v7700
      %v7702 = vsel %vm7491, %v7366, %v7701
      %v7703 = vsel %vm7479, %v7368, %v7367
      %v7704 = vsel %vm7481, %v7369, %v7703
      %v7705 = vsel %vm7483, %v7370, %v7704
      %v7706 = vsel %vm7485, %v7371, %v7705
      %v7707 = vsel %vm7487, %v7372, %v7706
      %v7708 = vsel %vm7489, %v7373, %v7707
      %v7709 = vsel %vm7491, %v7374, %v7708
      %v7710 = vsel %vm7479, %v7376, %v7375
      %v7711 = vsel %vm7481, %v7377, %v7710
      %v7712 = vsel %vm7483, %v7378, %v7711
      %v7713 = vsel %vm7485, %v7379, %v7712
      %v7714 = vsel %vm7487, %v7380, %v7713
      %v7715 = vsel %vm7489, %v7381, %v7714
      %v7716 = vsel %vm7491, %v7382, %v7715
      %v7717 = vsel %vm7479, %v7384, %v7383
      %v7718 = vsel %vm7481, %v7385, %v7717
      %v7719 = vsel %vm7483, %v7386, %v7718
      %v7720 = vsel %vm7485, %v7387, %v7719
      %v7721 = vsel %vm7487, %v7388, %v7720
      %v7722 = vsel %vm7489, %v7389, %v7721
      %v7723 = vsel %vm7491, %v7390, %v7722
      %v7724 = vsel %vm7479, %v7392, %v7391
      %v7725 = vsel %vm7481, %v7393, %v7724
      %v7726 = vsel %vm7483, %v7394, %v7725
      %v7727 = vsel %vm7485, %v7395, %v7726
      %v7728 = vsel %vm7487, %v7396, %v7727
      %v7729 = vsel %vm7489, %v7397, %v7728
      %v7730 = vsel %vm7491, %v7398, %v7729
      %v7731 = vsel %vm7479, %v7400, %v7399
      %v7732 = vsel %vm7481, %v7401, %v7731
      %v7733 = vsel %vm7483, %v7402, %v7732
      %v7734 = vsel %vm7485, %v7403, %v7733
      %v7735 = vsel %vm7487, %v7404, %v7734
      %v7736 = vsel %vm7489, %v7405, %v7735
      %v7737 = vsel %vm7491, %v7406, %v7736
      %v7738 = vsel %vm7479, %v7408, %v7407
      %v7739 = vsel %vm7481, %v7409, %v7738
      %v7740 = vsel %vm7483, %v7410, %v7739
      %v7741 = vsel %vm7485, %v7411, %v7740
      %v7742 = vsel %vm7487, %v7412, %v7741
      %v7743 = vsel %vm7489, %v7413, %v7742
      %v7744 = vsel %vm7491, %v7414, %v7743
      %v7745 = vsel %vm7479, %v7416, %v7415
      %v7746 = vsel %vm7481, %v7417, %v7745
      %v7747 = vsel %vm7483, %v7418, %v7746
      %v7748 = vsel %vm7485, %v7419, %v7747
      %v7749 = vsel %vm7487, %v7420, %v7748
      %v7750 = vsel %vm7489, %v7421, %v7749
      %v7751 = vsel %vm7491, %v7422, %v7750
      %v7752 = vsel %vm7479, %v7424, %v7423
      %v7753 = vsel %vm7481, %v7425, %v7752
      %v7754 = vsel %vm7483, %v7426, %v7753
      %v7755 = vsel %vm7485, %v7427, %v7754
      %v7756 = vsel %vm7487, %v7428, %v7755
      %v7757 = vsel %vm7489, %v7429, %v7756
      %v7758 = vsel %vm7491, %v7430, %v7757
      %v7759 = vsel %vm7479, %v7432, %v7431
      %v7760 = vsel %vm7481, %v7433, %v7759
      %v7761 = vsel %vm7483, %v7434, %v7760
      %v7762 = vsel %vm7485, %v7435, %v7761
      %v7763 = vsel %vm7487, %v7436, %v7762
      %v7764 = vsel %vm7489, %v7437, %v7763
      %v7765 = vsel %vm7491, %v7438, %v7764
      %v7766 = vsel %vm7479, %v7440, %v7439
      %v7767 = vsel %vm7481, %v7441, %v7766
      %v7768 = vsel %vm7483, %v7442, %v7767
      %v7769 = vsel %vm7485, %v7443, %v7768
      %v7770 = vsel %vm7487, %v7444, %v7769
      %v7771 = vsel %vm7489, %v7445, %v7770
      %v7772 = vsel %vm7491, %v7446, %v7771
      %v7773 = vsel %vm7479, %v7448, %v7447
      %v7774 = vsel %vm7481, %v7449, %v7773
      %v7775 = vsel %vm7483, %v7450, %v7774
      %v7776 = vsel %vm7485, %v7451, %v7775
      %v7777 = vsel %vm7487, %v7452, %v7776
      %v7778 = vsel %vm7489, %v7453, %v7777
      %v7779 = vsel %vm7491, %v7454, %v7778
      %v7780 = vsel %vm7479, %v7456, %v7455
      %v7781 = vsel %vm7481, %v7457, %v7780
      %v7782 = vsel %vm7483, %v7458, %v7781
      %v7783 = vsel %vm7485, %v7459, %v7782
      %v7784 = vsel %vm7487, %v7460, %v7783
      %v7785 = vsel %vm7489, %v7461, %v7784
      %v7786 = vsel %vm7491, %v7462, %v7785
      %v7787 = vsel %vm7479, %v7464, %v7463
      %v7788 = vsel %vm7481, %v7465, %v7787
      %v7789 = vsel %vm7483, %v7466, %v7788
      %v7790 = vsel %vm7485, %v7467, %v7789
      %v7791 = vsel %vm7487, %v7468, %v7790
      %v7792 = vsel %vm7489, %v7469, %v7791
      %v7793 = vsel %vm7491, %v7470, %v7792
      %v7794 = vsel %vm7479, %v7472, %v7471
      %v7795 = vsel %vm7481, %v7473, %v7794
      %v7796 = vsel %vm7483, %v7474, %v7795
      %v7797 = vsel %vm7485, %v7475, %v7796
      %v7798 = vsel %vm7487, %v7476, %v7797
      %v7799 = vsel %vm7489, %v7477, %v7798
      %v7800 = vsel %vm7491, %v7478, %v7799
      %v7801 = vpack.c.b16 %v7492, %v7492
      %v7802 = vpack.c.b16 %v7499, %v7499
      %v7803 = vpack.c.b16 %v7506, %v7506
      %v7804 = vpack.c.b16 %v7513, %v7513
      %v7805 = vpack.c.b16 %v7520, %v7520
      %v7806 = vpack.c.b16 %v7527, %v7527
      %v7807 = vpack.c.b16 %v7534, %v7534
      %v7808 = vpack.c.b16 %v7541, %v7541
      %v7809 = vpack.c.b16 %v7548, %v7548
      %v7810 = vpack.c.b16 %v7555, %v7555
      %v7811 = vpack.c.b16 %v7562, %v7562
      %v7812 = vpack.c.b16 %v7569, %v7569
      %v7813 = vpack.c.b16 %v7576, %v7576
      %v7814 = vpack.c.b16 %v7583, %v7583
      %v7815 = vpack.c.b16 %v7590, %v7590
      %v7816 = vpack.c.b16 %v7597, %v7597
      %v7817 = vpack.c.b16 %v7604, %v7604
      %v7818 = vpack.c.b16 %v7611, %v7611
      %v7819 = vpack.c.b16 %v7618, %v7618
      %v7820 = vpack.c.b16 %v7625, %v7625
      %v7821 = vpack.c.b16 %v7632, %v7632
      %v7822 = vpack.c.b16 %v7639, %v7639
      %v7823 = vpack.c.b16 %v7646, %v7646
      %v7824 = vpack.c.b16 %v7653, %v7653
      %v7825 = vpack.c.b16 %v7660, %v7660
      %v7826 = vpack.c.b16 %v7667, %v7667
      %v7827 = vpack.c.b16 %v7674, %v7674
      %v7828 = vpack.c.b16 %v7681, %v7681
      %v7829 = vpack.c.b16 %v7688, %v7688
      %v7830 = vpack.c.b16 %v7695, %v7695
      %v7831 = vpack.c.b16 %v7702, %v7702
      %v7832 = vpack.c.b16 %v7709, %v7709
      %v7833 = vpack.c.b16 %v7716, %v7716
      %v7834 = vpack.c.b16 %v7723, %v7723
      %v7835 = vpack.c.b16 %v7730, %v7730
      %v7836 = vpack.c.b16 %v7737, %v7737
      %v7837 = vpack.c.b16 %v7744, %v7744
      %v7838 = vpack.c.b16 %v7751, %v7751
      %v7839 = vpack.c.b16 %v7758, %v7758
      %v7840 = vpack.c.b16 %v7765, %v7765
      %v7841 = vpack.c.b16 %v7772, %v7772
      %v7842 = vpack.c.b16 %v7779, %v7779
      %v7843 = vpack.c.b16 %v7786, %v7786
      %v7844 = vpack.c.b16 %v7793, %v7793
      %v7845 = vpack.c.b16 %v7800, %v7800
      %7891 = vst [vmem:[%s172] sm:$0xf] %v7801
      %7892 = vst [vmem:[%s172 + $0x4] sm:$0xf] %v7802
      %7893 = vst [vmem:[%s172 + $0x8] sm:$0xf] %v7803
      %7894 = vst [vmem:[%s172 + $0xc] sm:$0xf] %v7804
      %7895 = vst [vmem:[%s172 + $0x10] sm:$0xf] %v7805
      %7896 = vst [vmem:[%s172 + $0x14] sm:$0xf] %v7806
      %7897 = vst [vmem:[%s172 + $0x18] sm:$0xf] %v7807
      %7898 = vst [vmem:[%s172 + $0x1c] sm:$0xf] %v7808
      %7899 = vst [vmem:[%s172 + $0x20] sm:$0xf] %v7809
      %7900 = vst [vmem:[%s172 + $0x24] sm:$0xf] %v7810
      %7901 = vst [vmem:[%s172 + $0x28] sm:$0xf] %v7811
      %7902 = vst [vmem:[%s172 + $0x2c] sm:$0xf] %v7812
      %7903 = vst [vmem:[%s172 + $0x30] sm:$0xf] %v7813
      %7904 = vst [vmem:[%s172 + $0x34] sm:$0xf] %v7814
      %7905 = vst [vmem:[%s172 + $0x38] sm:$0xf] %v7815
      %7906 = vst [vmem:[%s172 + $0x3c] sm:$0xf] %v7816
      %7907 = vst [vmem:[%s172 + $0x40] sm:$0xf] %v7817
      %7908 = vst [vmem:[%s172 + $0x44] sm:$0xf] %v7818
      %7909 = vst [vmem:[%s172 + $0x48] sm:$0xf] %v7819
      %7910 = vst [vmem:[%s172 + $0x4c] sm:$0xf] %v7820
      %7911 = vst [vmem:[%s172 + $0x50] sm:$0xf] %v7821
      %7912 = vst [vmem:[%s172 + $0x54] sm:$0xf] %v7822
      %7913 = vst [vmem:[%s172 + $0x58] sm:$0xf] %v7823
      %7914 = vst [vmem:[%s172 + $0x5c] sm:$0xf] %v7824
      %7915 = vst [vmem:[%s172 + $0x60] sm:$0xf] %v7825
      %7916 = vst [vmem:[%s172 + $0x64] sm:$0xf] %v7826
      %7917 = vst [vmem:[%s172 + $0x68] sm:$0xf] %v7827
      %7918 = vst [vmem:[%s172 + $0x6c] sm:$0xf] %v7828
      %7919 = vst [vmem:[%s172 + $0x70] sm:$0xf] %v7829
      %7920 = vst [vmem:[%s172 + $0x74] sm:$0xf] %v7830
      %7921 = vst [vmem:[%s172 + $0x78] sm:$0xf] %v7831
      %7922 = vst [vmem:[%s172 + $0x7c] sm:$0xf] %v7832
      %7923 = vst [vmem:[%s172 + $0x80] sm:$0xf] %v7833
      %7924 = vst [vmem:[%s172 + $0x84] sm:$0xf] %v7834
      %7925 = vst [vmem:[%s172 + $0x88] sm:$0xf] %v7835
      %7926 = vst [vmem:[%s172 + $0x8c] sm:$0xf] %v7836
      %7927 = vst [vmem:[%s172 + $0x90] sm:$0xf] %v7837
      %7928 = vst [vmem:[%s172 + $0x94] sm:$0xf] %v7838
      %7929 = vst [vmem:[%s172 + $0x98] sm:$0xf] %v7839
      %7930 = vst [vmem:[%s172 + $0x9c] sm:$0xf] %v7840
      %7931 = vst [vmem:[%s172 + $0xa0] sm:$0xf] %v7841
      %7932 = vst [vmem:[%s172 + $0xa4] sm:$0xf] %v7842
      %7933 = vst [vmem:[%s172 + $0xa8] sm:$0xf] %v7843
      %7934 = vst [vmem:[%s172 + $0xac] sm:$0xf] %v7844
      %7935 = vst [vmem:[%s172 + $0xb0] sm:$0xf] %v7845
      %s7936 = smul.u32 45, %s14
      %p7937 = scmp.lt.s32.totalorder %s7936, 89
      %s7938 = scalar_select %p7937, %s7936, 89
      %s7939 = smul.addr %s7938, 4
      %s7940 = scalar_lea.vmem %s3, %s7939
      // Predicated region
      $region33: #{domain_classifier_forward.3} parent=31 // pred_check
        %p7941 = pneg %p100
      $region34: #{domain_classifier_forward.3} parent=31 // pred_check_branch
        %7943 = sbr.rel (%p7941) target = $region36
      $region35: #{domain_classifier_forward.3} parent=31 // pred_region
        %s7944 = smul.u32 45, %s14
      $region36: #{domain_classifier_forward.3} parent=31 // pred_fallthru
        _
    $region32: #{domain_classifier_forward.3} parent=5 // pred_fallthru
      _
    %p7945 = scmp.le.s32.totalorder 2, %s9
    // Predicated region
    $region37: #{domain_classifier_forward.3} parent=5 // pred_check
      %p7946 = pneg %p7945
    $region38: #{domain_classifier_forward.3} parent=5 // pred_check_branch
      %7948 = sbr.rel (%p7946) target = $region40
    $region39: #{domain_classifier_forward.3} parent=5 // pred_region
      %s7949 = ssub.s32 %s9, 2
      // Predicated region
      $region41: #{domain_classifier_forward.3} parent=39 // pred_check
        %p7950 = pneg %p106
      $region42: #{domain_classifier_forward.3} parent=39 // pred_check_branch
        %7952 = sbr.rel (%p7950) target = $region44
      $region43: #{domain_classifier_forward.3} parent=39 // pred_region
        %s7953 = smul.u32 45, %s15
        %p7954 = scmp.lt.s32.totalorder %s7953, 89
        %s7955 = scalar_select %p7954, %s7953, 89
        %s7956 = smul.addr %s7955, 4
        %s7957 = scalar_lea.vmem %s3, %s7956
      $region44: #{domain_classifier_forward.3} parent=39 // pred_fallthru
        _
    $region40: #{domain_classifier_forward.3} parent=5 // pred_fallthru
      _
  $region6: #{domain_classifier_forward.3} parent=0 // loop_footer
    %s13 = sadd.s32 1, %s9
  $region7: #{domain_classifier_forward.3} parent=0 // loop_footer_branch
    %8 = sbr.rel target = $region3
  $region8: #{domain_classifier_forward.3} parent=0 // loop_exit
    _

// kernel: domain_classifier_forward.4
$region0: #{domain_classifier_forward.4}
  #allocation0 [shape = 'u32[]', space=smem, size = 0x4, offset = 0x4, fixed_abs, tag = 'smem constant byte address 0x4 - core index']
  #allocation1 [shape = 'u32[144,128]{1,0:T(1,128)}', space=vmem, size = 0x12000, scoped, tag = 'internal scratch']
  %s0 = inlined_call_operand.vmem [shape: bf16[1536,128], index: 0, kind: input, shape index: {}]
  %s1 = inlined_call_operand.vmem [shape: bf16[128,128], index: 1, kind: input, shape index: {}]
  %s2 = inlined_call_operand.vmem [shape: f32[1,128], index: 2, kind: input, shape index: {}]
  %s3 = inlined_call_operand.vmem [shape: bf16[192,128], index: 3, kind: output, shape index: {}]
  %s4 = sld [smem:[#allocation0]]
  $region45: #{domain_classifier_forward.4} parent=0
    _
  %s6 = ssub.s32 1, %s4
  %s7 = scalar_select 0, %s6, %s4
  loop: start=0, step=1, limit=4
  $region2: #{domain_classifier_forward.4} parent=0 // loop_pre_header
    _
  $region3: #{domain_classifier_forward.4} parent=0 // loop_header
    %s9 = sphi 0, %s13
    %p10 = scmp.ge.s32.totalorder %s9, 4
    %s19 = sphi 0, %s21
    %s22 = sphi 0, %s19
    %s23 = sphi 0, %s22
    %s39 = sphi 0, %s23
    %s43 = sphi 0, %s43
    %s45 = sphi 0, %s43
    %s46 = sphi 0, %s45
    %s60 = sphi 0, %s46
    %s64 = sphi 0, %s64
    %s66 = sphi 0, %s64
    %s67 = sphi 0, %s66
    %s81 = sphi 0, %s67
    %s87 = sphi 0, %s89
    %s90 = sphi 0, %s87
    %s91 = sphi 0, %s90
    %s107 = sphi 0, %s91
  $region4: #{domain_classifier_forward.4} parent=0 // loop_header_branch
    %12 = sbr.rel (%p10) target = $region8
  $region5: #{domain_classifier_forward.4} parent=0 // loop_body
    %s14 = ssub.s32 %s9, 1
    %s15 = ssub.s32 %s9, 2
    %s16 = sadd.s32 %s9, 1
    %s17 = ssub.s32 %s9, %s16
    %p18 = scmp.eq.s32.totalorder %s17, 0
    %s20 = sadd.s32 %s19, 1
    %s21 = scalar_select %p18, %s19, %s20
    %p24 = pneg %p18
    %p25 = scmp.eq.s32.totalorder %s9, 1
    %p26 = por %p24, %p25
    %p27 = scmp.ne.s32.totalorder %s19, %s22
    %p28 = scmp.eq.s32.totalorder %s9, 0
    %p29 = por %p27, %p28
    %p30 = scmp.ne.s32.totalorder %s19, %s22
    %p31 = scmp.eq.s32.totalorder %s14, 1
    %p32 = por %p30, %p31
    %p33 = scmp.ne.s32.totalorder %s22, %s23
    %p34 = scmp.eq.s32.totalorder %s14, 0
    %p35 = por %p33, %p34
    %p36 = scmp.ne.s32.totalorder %s22, %s23
    %p37 = scmp.eq.s32.totalorder %s15, 1
    %p38 = por %p36, %p37
    %p40 = scmp.ne.s32.totalorder %s23, %s39
    %p41 = scmp.eq.s32.totalorder %s15, 0
    %p42 = por %p40, %p41
    %s44 = sadd.s32 %s43, 1
    %p47 = scmp.eq.s32.totalorder %s9, 1
    %p48 = scmp.ne.s32.totalorder %s43, %s45
    %p49 = scmp.eq.s32.totalorder %s9, 0
    %p50 = por %p48, %p49
    %p51 = scmp.ne.s32.totalorder %s43, %s45
    %p52 = scmp.eq.s32.totalorder %s14, 1
    %p53 = por %p51, %p52
    %p54 = scmp.ne.s32.totalorder %s45, %s46
    %p55 = scmp.eq.s32.totalorder %s14, 0
    %p56 = por %p54, %p55
    %p57 = scmp.ne.s32.totalorder %s45, %s46
    %p58 = scmp.eq.s32.totalorder %s15, 1
    %p59 = por %p57, %p58
    %p61 = scmp.ne.s32.totalorder %s46, %s60
    %p62 = scmp.eq.s32.totalorder %s15, 0
    %p63 = por %p61, %p62
    %s65 = sadd.s32 %s64, 1
    %p68 = scmp.eq.s32.totalorder %s9, 1
    %p69 = scmp.ne.s32.totalorder %s64, %s66
    %p70 = scmp.eq.s32.totalorder %s9, 0
    %p71 = por %p69, %p70
    %p72 = scmp.ne.s32.totalorder %s64, %s66
    %p73 = scmp.eq.s32.totalorder %s14, 1
    %p74 = por %p72, %p73
    %p75 = scmp.ne.s32.totalorder %s66, %s67
    %p76 = scmp.eq.s32.totalorder %s14, 0
    %p77 = por %p75, %p76
    %p78 = scmp.ne.s32.totalorder %s66, %s67
    %p79 = scmp.eq.s32.totalorder %s15, 1
    %p80 = por %p78, %p79
    %p82 = scmp.ne.s32.totalorder %s67, %s81
    %p83 = scmp.eq.s32.totalorder %s15, 0
    %p84 = por %p82, %p83
    %s85 = ssub.s32 %s9, %s16
    %p86 = scmp.eq.s32.totalorder %s85, 0
    %s88 = sadd.s32 %s87, 1
    %s89 = scalar_select %p86, %s87, %s88
    %p92 = pneg %p86
    %p93 = scmp.eq.s32.totalorder %s9, 1
    %p94 = por %p92, %p93
    %p95 = scmp.ne.s32.totalorder %s87, %s90
    %p96 = scmp.eq.s32.totalorder %s9, 0
    %p97 = por %p95, %p96
    %p98 = scmp.ne.s32.totalorder %s87, %s90
    %p99 = scmp.eq.s32.totalorder %s14, 1
    %p100 = por %p98, %p99
    %p101 = scmp.ne.s32.totalorder %s90, %s91
    %p102 = scmp.eq.s32.totalorder %s14, 0
    %p103 = por %p101, %p102
    %p104 = scmp.ne.s32.totalorder %s90, %s91
    %p105 = scmp.eq.s32.totalorder %s15, 1
    %p106 = por %p104, %p105
    %p108 = scmp.ne.s32.totalorder %s91, %s107
    %p109 = scmp.eq.s32.totalorder %s15, 0
    %p110 = por %p108, %p109
    %p111 = scmp.le.s32.totalorder 1, %s9
    %p112 = scmp.lt.s32.totalorder %s9, 3
    %p113 = pnand %p111, %p112
    %p114 = pneg %p113
    // Predicated region
    $region9: #{domain_classifier_forward.4} parent=5 // pred_check
      _
    $region10: #{domain_classifier_forward.4} parent=5 // pred_check_branch
      %116 = sbr.rel (%p113) target = $region12
    $region11: #{domain_classifier_forward.4} parent=5 // pred_region
      %s117 = ssub.s32 %s9, 1
      // Predicated region
      $region13: #{domain_classifier_forward.4} parent=11 // pred_check
        %p118 = pneg %p56
      $region14: #{domain_classifier_forward.4} parent=11 // pred_check_branch
        %120 = sbr.rel (%p118) target = $region16
      $region15: #{domain_classifier_forward.4} parent=11 // pred_region
        _
      $region16: #{domain_classifier_forward.4} parent=11 // pred_fallthru
        _
      // Predicated region
      $region17: #{domain_classifier_forward.4} parent=11 // pred_check
        %p121 = pneg %p77
      $region18: #{domain_classifier_forward.4} parent=11 // pred_check_branch
        %123 = sbr.rel (%p121) target = $region20
      $region19: #{domain_classifier_forward.4} parent=11 // pred_region
        _
      $region20: #{domain_classifier_forward.4} parent=11 // pred_fallthru
        _
    $region12: #{domain_classifier_forward.4} parent=5 // pred_fallthru
      _
    %p124 = scmp.lt.s32.totalorder %s9, 2
    // Predicated region
    $region21: #{domain_classifier_forward.4} parent=5 // pred_check
      %p125 = pneg %p124
    $region22: #{domain_classifier_forward.4} parent=5 // pred_check_branch
      %127 = sbr.rel (%p125) target = $region24
    $region23: #{domain_classifier_forward.4} parent=5 // pred_region
      // Predicated region
      $region25: #{domain_classifier_forward.4} parent=23 // pred_check
        %p128 = pneg %p29
      $region26: #{domain_classifier_forward.4} parent=23 // pred_check_branch
        %130 = sbr.rel (%p128) target = $region28
      $region27: #{domain_classifier_forward.4} parent=23 // pred_region
        %s131 = smul.u32 96, %s9
        %p132 = scmp.lt.s32.totalorder %s131, 191
        %s133 = scalar_select %p132, %s131, 191
        %s134 = smul.addr %s133, 4
        %s135 = scalar_lea.vmem %s0, %s134
        %s136 = smul.u32 96, %s9
      $region28: #{domain_classifier_forward.4} parent=23 // pred_fallthru
        _
    $region24: #{domain_classifier_forward.4} parent=5 // pred_fallthru
      _
    %p137 = scmp.le.s32.totalorder 1, %s9
    %p138 = scmp.lt.s32.totalorder %s9, 3
    %p139 = pnand %p137, %p138
    %p140 = pneg %p139
    // Predicated region
    $region29: #{domain_classifier_forward.4} parent=5 // pred_check
      _
    $region30: #{domain_classifier_forward.4} parent=5 // pred_check_branch
      %142 = sbr.rel (%p139) target = $region32
    $region31: #{domain_classifier_forward.4} parent=5 // pred_region
      %s143 = ssub.s32 %s9, 1
      %s144 = smul.u32 96, %s14
      %p145 = scmp.lt.s32.totalorder %s144, 191
      %s146 = scalar_select %p145, %s144, 191
      %s147 = smul.addr %s146, 4
      %s148 = scalar_lea.vmem %s0, %s147
      %p149 = pneg %p35
      %p150 = pneg %p32
      %p151 = pneg %p56
      %p152 = pneg %p53
      %p153 = pneg %p77
      %p154 = pneg %p74
      %p155 = pneg %p103
      %p156 = pneg %p100
      %s157 = smul.u32 12, %s14
      %p158 = scmp.lt.s32.totalorder %s157, 23
      %s159 = scalar_select %p158, %s157, 23
      %s160 = smul.addr %s159, 4
      %s161 = scalar_lea.vmem %s3, %s160
      %s162 = smul.u32 96, %s14
      %p163 = scmp.lt.s32.totalorder %s162, 191
      %s164 = scalar_select %p163, %s162, 191
      %s165 = smul.addr %s164, 4
      %s166 = scalar_lea.vmem %s0, %s165
      %s167 = smul.u32 96, %s14
      %s168 = smul.u32 12, %s14
      %p169 = scmp.lt.s32.totalorder %s168, 23
      %s170 = scalar_select %p169, %s168, 23
      %s171 = smul.addr %s170, 4
      %s172 = scalar_lea.vmem %s3, %s171
      %s173 = smul.u32 12, %s14
      %v175 = vld [vmem:[%s166] sm:$0xf]
      %v176 = vld [vmem:[%s166 + $0x4] sm:$0xf]
      %v177 = vld [vmem:[%s166 + $0x8] sm:$0xf]
      %v178 = vld [vmem:[%s166 + $0xc] sm:$0xf]
      %v179 = vld [vmem:[%s166 + $0x10] sm:$0xf]
      %v180 = vld [vmem:[%s166 + $0x14] sm:$0xf]
      %v181 = vld [vmem:[%s166 + $0x18] sm:$0xf]
      %v182 = vld [vmem:[%s166 + $0x1c] sm:$0xf]
      %v183 = vld [vmem:[%s166 + $0x20] sm:$0xf]
      %v184 = vld [vmem:[%s166 + $0x24] sm:$0xf]
      %v185 = vld [vmem:[%s166 + $0x28] sm:$0xf]
      %v186 = vld [vmem:[%s166 + $0x2c] sm:$0xf]
      %v187 = vld [vmem:[%s166 + $0x30] sm:$0xf]
      %v188 = vld [vmem:[%s166 + $0x34] sm:$0xf]
      %v189 = vld [vmem:[%s166 + $0x38] sm:$0xf]
      %v190 = vld [vmem:[%s166 + $0x3c] sm:$0xf]
      %v191 = vld [vmem:[%s166 + $0x40] sm:$0xf]
      %v192 = vld [vmem:[%s166 + $0x44] sm:$0xf]
      %v193 = vld [vmem:[%s166 + $0x48] sm:$0xf]
      %v194 = vld [vmem:[%s166 + $0x4c] sm:$0xf]
      %v195 = vld [vmem:[%s166 + $0x50] sm:$0xf]
      %v196 = vld [vmem:[%s166 + $0x54] sm:$0xf]
      %v197 = vld [vmem:[%s166 + $0x58] sm:$0xf]
      %v198 = vld [vmem:[%s166 + $0x5c] sm:$0xf]
      %v199 = vld [vmem:[%s166 + $0x60] sm:$0xf]
      %v200 = vld [vmem:[%s166 + $0x64] sm:$0xf]
      %v201 = vld [vmem:[%s166 + $0x68] sm:$0xf]
      %v202 = vld [vmem:[%s166 + $0x6c] sm:$0xf]
      %v203 = vld [vmem:[%s166 + $0x70] sm:$0xf]
      %v204 = vld [vmem:[%s166 + $0x74] sm:$0xf]
      %v205 = vld [vmem:[%s166 + $0x78] sm:$0xf]
      %v206 = vld [vmem:[%s166 + $0x7c] sm:$0xf]
      %v207 = vld [vmem:[%s166 + $0x80] sm:$0xf]
      %v208 = vld [vmem:[%s166 + $0x84] sm:$0xf]
      %v209 = vld [vmem:[%s166 + $0x88] sm:$0xf]
      %v210 = vld [vmem:[%s166 + $0x8c] sm:$0xf]
      %v211 = vld [vmem:[%s166 + $0x90] sm:$0xf]
      %v212 = vld [vmem:[%s166 + $0x94] sm:$0xf]
      %v213 = vld [vmem:[%s166 + $0x98] sm:$0xf]
      %v214 = vld [vmem:[%s166 + $0x9c] sm:$0xf]
      %v215 = vld [vmem:[%s166 + $0xa0] sm:$0xf]
      %v216 = vld [vmem:[%s166 + $0xa4] sm:$0xf]
      %v217 = vld [vmem:[%s166 + $0xa8] sm:$0xf]
      %v218 = vld [vmem:[%s166 + $0xac] sm:$0xf]
      %v219 = vld [vmem:[%s166 + $0xb0] sm:$0xf]
      %v220 = vld [vmem:[%s166 + $0xb4] sm:$0xf]
      %v221 = vld [vmem:[%s166 + $0xb8] sm:$0xf]
      %v222 = vld [vmem:[%s166 + $0xbc] sm:$0xf]
      %v223 = vld [vmem:[%s166 + $0xc0] sm:$0xf]
      %v224 = vld [vmem:[%s166 + $0xc4] sm:$0xf]
      %v225 = vld [vmem:[%s166 + $0xc8] sm:$0xf]
      %v226 = vld [vmem:[%s166 + $0xcc] sm:$0xf]
      %v227 = vld [vmem:[%s166 + $0xd0] sm:$0xf]
      %v228 = vld [vmem:[%s166 + $0xd4] sm:$0xf]
      %v229 = vld [vmem:[%s166 + $0xd8] sm:$0xf]
      %v230 = vld [vmem:[%s166 + $0xdc] sm:$0xf]
      %v231 = vld [vmem:[%s166 + $0xe0] sm:$0xf]
      %v232 = vld [vmem:[%s166 + $0xe4] sm:$0xf]
      %v233 = vld [vmem:[%s166 + $0xe8] sm:$0xf]
      %v234 = vld [vmem:[%s166 + $0xec] sm:$0xf]
      %v235 = vld [vmem:[%s166 + $0xf0] sm:$0xf]
      %v236 = vld [vmem:[%s166 + $0xf4] sm:$0xf]
      %v237 = vld [vmem:[%s166 + $0xf8] sm:$0xf]
      %v238 = vld [vmem:[%s166 + $0xfc] sm:$0xf]
      %v239 = vld [vmem:[%s166 + $0x100] sm:$0xf]
      %v240 = vld [vmem:[%s166 + $0x104] sm:$0xf]
      %v241 = vld [vmem:[%s166 + $0x108] sm:$0xf]
      %v242 = vld [vmem:[%s166 + $0x10c] sm:$0xf]
      %v243 = vld [vmem:[%s166 + $0x110] sm:$0xf]
      %v244 = vld [vmem:[%s166 + $0x114] sm:$0xf]
      %v245 = vld [vmem:[%s166 + $0x118] sm:$0xf]
      %v246 = vld [vmem:[%s166 + $0x11c] sm:$0xf]
      %v247 = vld [vmem:[%s166 + $0x120] sm:$0xf]
      %v248 = vld [vmem:[%s166 + $0x124] sm:$0xf]
      %v249 = vld [vmem:[%s166 + $0x128] sm:$0xf]
      %v250 = vld [vmem:[%s166 + $0x12c] sm:$0xf]
      %v251 = vld [vmem:[%s166 + $0x130] sm:$0xf]
      %v252 = vld [vmem:[%s166 + $0x134] sm:$0xf]
      %v253 = vld [vmem:[%s166 + $0x138] sm:$0xf]
      %v254 = vld [vmem:[%s166 + $0x13c] sm:$0xf]
      %v255 = vld [vmem:[%s166 + $0x140] sm:$0xf]
      %v256 = vld [vmem:[%s166 + $0x144] sm:$0xf]
      %v257 = vld [vmem:[%s166 + $0x148] sm:$0xf]
      %v258 = vld [vmem:[%s166 + $0x14c] sm:$0xf]
      %v259 = vld [vmem:[%s166 + $0x150] sm:$0xf]
      %v260 = vld [vmem:[%s166 + $0x154] sm:$0xf]
      %v261 = vld [vmem:[%s166 + $0x158] sm:$0xf]
      %v262 = vld [vmem:[%s166 + $0x15c] sm:$0xf]
      %v263 = vld [vmem:[%s166 + $0x160] sm:$0xf]
      %v264 = vld [vmem:[%s166 + $0x164] sm:$0xf]
      %v265 = vld [vmem:[%s166 + $0x168] sm:$0xf]
      %v266 = vld [vmem:[%s166 + $0x16c] sm:$0xf]
      %v267 = vld [vmem:[%s166 + $0x170] sm:$0xf]
      %v268 = vld [vmem:[%s166 + $0x174] sm:$0xf]
      %v269 = vld [vmem:[%s166 + $0x178] sm:$0xf]
      %v270 = vld [vmem:[%s166 + $0x17c] sm:$0xf]
      %v271 = vld [vmem:[%s1] sm:$0xf]
      %v272 = vld [vmem:[%s1 + $0x4] sm:$0xf]
      %v273 = vld [vmem:[%s1 + $0x8] sm:$0xf]
      %v274 = vld [vmem:[%s1 + $0xc] sm:$0xf]
      %v275 = vld [vmem:[%s1 + $0x10] sm:$0xf]
      %v276 = vld [vmem:[%s1 + $0x14] sm:$0xf]
      %v277 = vld [vmem:[%s1 + $0x18] sm:$0xf]
      %v278 = vld [vmem:[%s1 + $0x1c] sm:$0xf]
      %v279 = vld [vmem:[%s1 + $0x20] sm:$0xf]
      %v280 = vld [vmem:[%s1 + $0x24] sm:$0xf]
      %v281 = vld [vmem:[%s1 + $0x28] sm:$0xf]
      %v282 = vld [vmem:[%s1 + $0x2c] sm:$0xf]
      %v283 = vld [vmem:[%s1 + $0x30] sm:$0xf]
      %v284 = vld [vmem:[%s1 + $0x34] sm:$0xf]
      %v285 = vld [vmem:[%s1 + $0x38] sm:$0xf]
      %v286 = vld [vmem:[%s1 + $0x3c] sm:$0xf]
      %v287 = vld [vmem:[%s2] sm:$0x1]
      %v289 = vlaneseq
      %v290 = vshrl.u32 %v289, 7
      %v291 = vsub.s32 0, %v290
      %v292 = vrot.slane %v287, %v291
      %v390 = vunpack.c.l.b16 %v175
      %v391 = vunpack.c.l.b16 %v176
      %v392 = vunpack.c.l.b16 %v177
      %v393 = vunpack.c.l.b16 %v178
      %v394 = vunpack.c.l.b16 %v179
      %v395 = vunpack.c.l.b16 %v180
      %v396 = vunpack.c.l.b16 %v181
      %v397 = vunpack.c.l.b16 %v182
      %v398 = vunpack.c.l.b16 %v183
      %v399 = vunpack.c.l.b16 %v184
      %v400 = vunpack.c.l.b16 %v185
      %v401 = vunpack.c.l.b16 %v186
      %v402 = vunpack.c.l.b16 %v187
      %v403 = vunpack.c.l.b16 %v188
      %v404 = vunpack.c.l.b16 %v189
      %v405 = vunpack.c.l.b16 %v190
      %v406 = vunpack.c.l.b16 %v191
      %v407 = vunpack.c.l.b16 %v192
      %v408 = vunpack.c.l.b16 %v193
      %v409 = vunpack.c.l.b16 %v194
      %v410 = vunpack.c.l.b16 %v195
      %v411 = vunpack.c.l.b16 %v196
      %v412 = vunpack.c.l.b16 %v197
      %v413 = vunpack.c.l.b16 %v198
      %v414 = vunpack.c.l.b16 %v199
      %v415 = vunpack.c.l.b16 %v200
      %v416 = vunpack.c.l.b16 %v201
      %v417 = vunpack.c.l.b16 %v202
      %v418 = vunpack.c.l.b16 %v203
      %v419 = vunpack.c.l.b16 %v204
      %v420 = vunpack.c.l.b16 %v205
      %v421 = vunpack.c.l.b16 %v206
      %v422 = vunpack.c.l.b16 %v207
      %v423 = vunpack.c.l.b16 %v208
      %v424 = vunpack.c.l.b16 %v209
      %v425 = vunpack.c.l.b16 %v210
      %v426 = vunpack.c.l.b16 %v211
      %v427 = vunpack.c.l.b16 %v212
      %v428 = vunpack.c.l.b16 %v213
      %v429 = vunpack.c.l.b16 %v214
      %v430 = vunpack.c.l.b16 %v215
      %v431 = vunpack.c.l.b16 %v216
      %v432 = vunpack.c.l.b16 %v217
      %v433 = vunpack.c.l.b16 %v218
      %v434 = vunpack.c.l.b16 %v219
      %v435 = vunpack.c.l.b16 %v220
      %v436 = vunpack.c.l.b16 %v221
      %v437 = vunpack.c.l.b16 %v222
      %v438 = vunpack.c.l.b16 %v223
      %v439 = vunpack.c.l.b16 %v224
      %v440 = vunpack.c.l.b16 %v225
      %v441 = vunpack.c.l.b16 %v226
      %v442 = vunpack.c.l.b16 %v227
      %v443 = vunpack.c.l.b16 %v228
      %v444 = vunpack.c.l.b16 %v229
      %v445 = vunpack.c.l.b16 %v230
      %v446 = vunpack.c.l.b16 %v231
      %v447 = vunpack.c.l.b16 %v232
      %v448 = vunpack.c.l.b16 %v233
      %v449 = vunpack.c.l.b16 %v234
      %v450 = vunpack.c.l.b16 %v235
      %v451 = vunpack.c.l.b16 %v236
      %v452 = vunpack.c.l.b16 %v237
      %v453 = vunpack.c.l.b16 %v238
      %v454 = vunpack.c.l.b16 %v239
      %v455 = vunpack.c.l.b16 %v240
      %v456 = vunpack.c.l.b16 %v241
      %v457 = vunpack.c.l.b16 %v242
      %v458 = vunpack.c.l.b16 %v243
      %v459 = vunpack.c.l.b16 %v244
      %v460 = vunpack.c.l.b16 %v245
      %v461 = vunpack.c.l.b16 %v246
      %v462 = vunpack.c.l.b16 %v247
      %v463 = vunpack.c.l.b16 %v248
      %v464 = vunpack.c.l.b16 %v249
      %v465 = vunpack.c.l.b16 %v250
      %v466 = vunpack.c.l.b16 %v251
      %v467 = vunpack.c.l.b16 %v252
      %v468 = vunpack.c.l.b16 %v253
      %v469 = vunpack.c.l.b16 %v254
      %v470 = vunpack.c.l.b16 %v255
      %v471 = vunpack.c.l.b16 %v256
      %v472 = vunpack.c.l.b16 %v257
      %v473 = vunpack.c.l.b16 %v258
      %v474 = vunpack.c.l.b16 %v259
      %v475 = vunpack.c.l.b16 %v260
      %v476 = vunpack.c.l.b16 %v261
      %v477 = vunpack.c.l.b16 %v262
      %v478 = vunpack.c.l.b16 %v263
      %v479 = vunpack.c.l.b16 %v264
      %v480 = vunpack.c.l.b16 %v265
      %v481 = vunpack.c.l.b16 %v266
      %v482 = vunpack.c.l.b16 %v267
      %v483 = vunpack.c.l.b16 %v268
      %v484 = vunpack.c.l.b16 %v269
      %v485 = vunpack.c.l.b16 %v270
      %v486 = vpack.c.b16 %v391, %v390
      %v487 = vpack.c.b16 %v393, %v392
      %v488 = vpack.c.b16 %v395, %v394
      %v489 = vpack.c.b16 %v397, %v396
      %v490 = vpack.c.b16 %v399, %v398
      %v491 = vpack.c.b16 %v401, %v400
      %v492 = vpack.c.b16 %v403, %v402
      %v493 = vpack.c.b16 %v405, %v404
      %v494 = vpack.c.b16 %v407, %v406
      %v495 = vpack.c.b16 %v409, %v408
      %v496 = vpack.c.b16 %v411, %v410
      %v497 = vpack.c.b16 %v413, %v412
      %v498 = vpack.c.b16 %v415, %v414
      %v499 = vpack.c.b16 %v417, %v416
      %v500 = vpack.c.b16 %v419, %v418
      %v501 = vpack.c.b16 %v421, %v420
      %v502 = vpack.c.b16 %v423, %v422
      %v503 = vpack.c.b16 %v425, %v424
      %v504 = vpack.c.b16 %v427, %v426
      %v505 = vpack.c.b16 %v429, %v428
      %v506 = vpack.c.b16 %v431, %v430
      %v507 = vpack.c.b16 %v433, %v432
      %v508 = vpack.c.b16 %v435, %v434
      %v509 = vpack.c.b16 %v437, %v436
      %v510 = vpack.c.b16 %v439, %v438
      %v511 = vpack.c.b16 %v441, %v440
      %v512 = vpack.c.b16 %v443, %v442
      %v513 = vpack.c.b16 %v445, %v444
      %v514 = vpack.c.b16 %v447, %v446
      %v515 = vpack.c.b16 %v449, %v448
      %v516 = vpack.c.b16 %v451, %v450
      %v517 = vpack.c.b16 %v453, %v452
      %v518 = vpack.c.b16 %v455, %v454
      %v519 = vpack.c.b16 %v457, %v456
      %v520 = vpack.c.b16 %v459, %v458
      %v521 = vpack.c.b16 %v461, %v460
      %v522 = vpack.c.b16 %v463, %v462
      %v523 = vpack.c.b16 %v465, %v464
      %v524 = vpack.c.b16 %v467, %v466
      %v525 = vpack.c.b16 %v469, %v468
      %v526 = vpack.c.b16 %v471, %v470
      %v527 = vpack.c.b16 %v473, %v472
      %v528 = vpack.c.b16 %v475, %v474
      %v529 = vpack.c.b16 %v477, %v476
      %v530 = vpack.c.b16 %v479, %v478
      %v531 = vpack.c.b16 %v481, %v480
      %v532 = vpack.c.b16 %v483, %v482
      %v533 = vpack.c.b16 %v485, %v484
      %v598 = vunpack.c.l.b16 %v271
      %v599 = vunpack.c.l.b16 %v272
      %v600 = vunpack.c.l.b16 %v273
      %v601 = vunpack.c.l.b16 %v274
      %v602 = vunpack.c.l.b16 %v275
      %v603 = vunpack.c.l.b16 %v276
      %v604 = vunpack.c.l.b16 %v277
      %v605 = vunpack.c.l.b16 %v278
      %v606 = vunpack.c.l.b16 %v279
      %v607 = vunpack.c.l.b16 %v280
      %v608 = vunpack.c.l.b16 %v281
      %v609 = vunpack.c.l.b16 %v282
      %v610 = vunpack.c.l.b16 %v283
      %v611 = vunpack.c.l.b16 %v284
      %v612 = vunpack.c.l.b16 %v285
      %v613 = vunpack.c.l.b16 %v286
      %v614 = vpack.c.b16 %v599, %v598
      %v615 = vpack.c.b16 %v601, %v600
      %v616 = vpack.c.b16 %v603, %v602
      %v617 = vpack.c.b16 %v605, %v604
      %v618 = vpack.c.b16 %v607, %v606
      %v619 = vpack.c.b16 %v609, %v608
      %v620 = vpack.c.b16 %v611, %v610
      %v621 = vpack.c.b16 %v613, %v612
      %630 = vmatprep.subr.bf16.mxu0 0
      %631 = vmatpush1.bf16.msra.mxu0 %v614
      %632 = vmatprep.subr.bf16.mxu0 0
      %633 = vmatpush1.bf16.msra.mxu0 %v615
      %634 = vmatprep.subr.bf16.mxu0 0
      %635 = vmatpush1.bf16.msra.mxu0 %v616
      %636 = vmatprep.subr.bf16.mxu0 0
      %637 = vmatpush1.bf16.msra.mxu0 %v617
      %638 = vmatprep.subr.bf16.mxu0 0
      %639 = vmatpush1.bf16.msra.mxu0 %v618
      %640 = vmatprep.subr.bf16.mxu0 0
      %641 = vmatpush1.bf16.msra.mxu0 %v619
      %642 = vmatprep.subr.bf16.mxu0 0
      %643 = vmatpush1.bf16.msra.mxu0 %v620
      %644 = vmatprep.subr.bf16.mxu0 0
      %645 = vmatpush1.bf16.msra.mxu0 %v621
      %646 = vmatprep.subr.bf16.mxu0 0
      %647 = vmatpush1.bf16.msra.mxu0 0
      %648 = vmatprep.subr.bf16.mxu0 0
      %649 = vmatpush1.bf16.msra.mxu0 0
      %650 = vmatprep.subr.bf16.mxu0 0
      %651 = vmatpush1.bf16.msra.mxu0 0
      %652 = vmatprep.subr.bf16.mxu0 0
      %653 = vmatpush1.bf16.msra.mxu0 0
      %654 = vmatprep.subr.bf16.mxu0 0
      %655 = vmatpush1.bf16.msra.mxu0 0
      %656 = vmatprep.subr.bf16.mxu0 0
      %657 = vmatpush1.bf16.msra.mxu0 0
      %658 = vmatprep.subr.bf16.mxu0 0
      %659 = vmatpush1.bf16.msra.mxu0 0
      %660 = vmatprep.subr.bf16.mxu0 0
      %661 = vmatpush1.bf16.msra.mxu0 0
      %662 = vmatprep.mubr.bf16.mxu0 0
      %663 = vmatmul.mubr.bf16.gmra.mrb[0].mxu0 %v486
      %v664 = vpop.f32.mrb[0].mxu0
      %v665 = vadd.f32 %v292, %v664
      %v666 = vpop.f32.mrb[0].mxu0
      %v667 = vpop.f32.mrb[0].mxu0
      %v668 = vadd.f32 %v292, %v667
      %v669 = vpop.f32.mrb[0].mxu0
      %670 = vmatprep.mubr.bf16.mxu0 0
      %671 = vmatmul.mubr.bf16.gmra.mrb[0].mxu0 %v487
      %v672 = vpop.f32.mrb[0].mxu0
      %v673 = vadd.f32 %v292, %v672
      %v674 = vpop.f32.mrb[0].mxu0
      %v675 = vpop.f32.mrb[0].mxu0
      %v676 = vadd.f32 %v292, %v675
      %v677 = vpop.f32.mrb[0].mxu0
      %678 = vmatprep.mubr.bf16.mxu0 0
      %679 = vmatmul.mubr.bf16.gmra.mrb[0].mxu0 %v488
      %v680 = vpop.f32.mrb[0].mxu0
      %v681 = vadd.f32 %v292, %v680
      %v682 = vpop.f32.mrb[0].mxu0
      %v683 = vpop.f32.mrb[0].mxu0
      %v684 = vadd.f32 %v292, %v683
      %v685 = vpop.f32.mrb[0].mxu0
      %686 = vmatprep.mubr.bf16.mxu0 0
      %687 = vmatmul.mubr.bf16.gmra.mrb[0].mxu0 %v489
      %v688 = vpop.f32.mrb[0].mxu0
      %v689 = vadd.f32 %v292, %v688
      %v690 = vpop.f32.mrb[0].mxu0
      %v691 = vpop.f32.mrb[0].mxu0
      %v692 = vadd.f32 %v292, %v691
      %v693 = vpop.f32.mrb[0].mxu0
      %694 = vmatprep.mubr.bf16.mxu0 0
      %695 = vmatmul.mubr.bf16.gmra.mrb[0].mxu0 %v490
      %v696 = vpop.f32.mrb[0].mxu0
      %v697 = vadd.f32 %v292, %v696
      %v698 = vpop.f32.mrb[0].mxu0
      %v699 = vpop.f32.mrb[0].mxu0
      %v700 = vadd.f32 %v292, %v699
      %v701 = vpop.f32.mrb[0].mxu0
      %702 = vmatprep.mubr.bf16.mxu0 0
      %703 = vmatmul.mubr.bf16.gmra.mrb[0].mxu0 %v491
      %v704 = vpop.f32.mrb[0].mxu0
      %v705 = vadd.f32 %v292, %v704
      %v706 = vpop.f32.mrb[0].mxu0
      %v707 = vpop.f32.mrb[0].mxu0
      %v708 = vadd.f32 %v292, %v707
      %v709 = vpop.f32.mrb[0].mxu0
      %710 = vmatprep.mubr.bf16.mxu0 0
      %711 = vmatmul.mubr.bf16.gmra.mrb[0].mxu0 %v492
      %v712 = vpop.f32.mrb[0].mxu0
      %v713 = vadd.f32 %v292, %v712
      %v714 = vpop.f32.mrb[0].mxu0
      %v715 = vpop.f32.mrb[0].mxu0
      %v716 = vadd.f32 %v292, %v715
      %v717 = vpop.f32.mrb[0].mxu0
      %718 = vmatprep.mubr.bf16.mxu0 0
      %719 = vmatmul.mubr.bf16.gmra.mrb[0].mxu0 %v493
      %v720 = vpop.f32.mrb[0].mxu0
      %v721 = vadd.f32 %v292, %v720
      %v722 = vpop.f32.mrb[0].mxu0
      %v723 = vpop.f32.mrb[0].mxu0
      %v724 = vadd.f32 %v292, %v723
      %v725 = vpop.f32.mrb[0].mxu0
      %726 = vmatprep.mubr.bf16.mxu0 0
      %727 = vmatmul.mubr.bf16.gmra.mrb[0].mxu0 %v494
      %v728 = vpop.f32.mrb[0].mxu0
      %v729 = vadd.f32 %v292, %v728
      %v730 = vpop.f32.mrb[0].mxu0
      %v731 = vpop.f32.mrb[0].mxu0
      %v732 = vadd.f32 %v292, %v731
      %v733 = vpop.f32.mrb[0].mxu0
      %734 = vmatprep.mubr.bf16.mxu0 0
      %735 = vmatmul.mubr.bf16.gmra.mrb[0].mxu0 %v495
      %v736 = vpop.f32.mrb[0].mxu0
      %v737 = vadd.f32 %v292, %v736
      %v738 = vpop.f32.mrb[0].mxu0
      %v739 = vpop.f32.mrb[0].mxu0
      %v740 = vadd.f32 %v292, %v739
      %v741 = vpop.f32.mrb[0].mxu0
      %742 = vmatprep.mubr.bf16.mxu0 0
      %743 = vmatmul.mubr.bf16.gmra.mrb[0].mxu0 %v496
      %v744 = vpop.f32.mrb[0].mxu0
      %v745 = vadd.f32 %v292, %v744
      %v746 = vpop.f32.mrb[0].mxu0
      %v747 = vpop.f32.mrb[0].mxu0
      %v748 = vadd.f32 %v292, %v747
      %v749 = vpop.f32.mrb[0].mxu0
      %750 = vmatprep.mubr.bf16.mxu0 0
      %751 = vmatmul.mubr.bf16.gmra.mrb[0].mxu0 %v497
      %v752 = vpop.f32.mrb[0].mxu0
      %v753 = vadd.f32 %v292, %v752
      %v754 = vpop.f32.mrb[0].mxu0
      %v755 = vpop.f32.mrb[0].mxu0
      %v756 = vadd.f32 %v292, %v755
      %v757 = vpop.f32.mrb[0].mxu0
      %758 = vmatprep.mubr.bf16.mxu0 0
      %759 = vmatmul.mubr.bf16.gmra.mrb[0].mxu0 %v498
      %v760 = vpop.f32.mrb[0].mxu0
      %v761 = vadd.f32 %v292, %v760
      %v762 = vpop.f32.mrb[0].mxu0
      %v763 = vpop.f32.mrb[0].mxu0
      %v764 = vadd.f32 %v292, %v763
      %v765 = vpop.f32.mrb[0].mxu0
      %766 = vmatprep.mubr.bf16.mxu0 0
      %767 = vmatmul.mubr.bf16.gmra.mrb[0].mxu0 %v499
      %v768 = vpop.f32.mrb[0].mxu0
      %v769 = vadd.f32 %v292, %v768
      %v770 = vpop.f32.mrb[0].mxu0
      %v771 = vpop.f32.mrb[0].mxu0
      %v772 = vadd.f32 %v292, %v771
      %v773 = vpop.f32.mrb[0].mxu0
      %774 = vmatprep.mubr.bf16.mxu0 0
      %775 = vmatmul.mubr.bf16.gmra.mrb[0].mxu0 %v500
      %v776 = vpop.f32.mrb[0].mxu0
      %v777 = vadd.f32 %v292, %v776
      %v778 = vpop.f32.mrb[0].mxu0
      %v779 = vpop.f32.mrb[0].mxu0
      %v780 = vadd.f32 %v292, %v779
      %v781 = vpop.f32.mrb[0].mxu0
      %782 = vmatprep.mubr.bf16.mxu0 0
      %783 = vmatmul.mubr.bf16.gmra.mrb[0].mxu0 %v501
      %v784 = vpop.f32.mrb[0].mxu0
      %v785 = vadd.f32 %v292, %v784
      %v786 = vpop.f32.mrb[0].mxu0
      %v787 = vpop.f32.mrb[0].mxu0
      %v788 = vadd.f32 %v292, %v787
      %v789 = vpop.f32.mrb[0].mxu0
      %790 = vmatprep.mubr.bf16.mxu0 0
      %791 = vmatmul.mubr.bf16.gmra.mrb[0].mxu0 %v502
      %v792 = vpop.f32.mrb[0].mxu0
      %v793 = vadd.f32 %v292, %v792
      %v794 = vpop.f32.mrb[0].mxu0
      %v795 = vpop.f32.mrb[0].mxu0
      %v796 = vadd.f32 %v292, %v795
      %v797 = vpop.f32.mrb[0].mxu0
      %798 = vmatprep.mubr.bf16.mxu0 0
      %799 = vmatmul.mubr.bf16.gmra.mrb[0].mxu0 %v503
      %v800 = vpop.f32.mrb[0].mxu0
      %v801 = vadd.f32 %v292, %v800
      %v802 = vpop.f32.mrb[0].mxu0
      %v803 = vpop.f32.mrb[0].mxu0
      %v804 = vadd.f32 %v292, %v803
      %v805 = vpop.f32.mrb[0].mxu0
      %806 = vmatprep.mubr.bf16.mxu0 0
      %807 = vmatmul.mubr.bf16.gmra.mrb[0].mxu0 %v504
      %v808 = vpop.f32.mrb[0].mxu0
      %v809 = vadd.f32 %v292, %v808
      %v810 = vpop.f32.mrb[0].mxu0
      %v811 = vpop.f32.mrb[0].mxu0
      %v812 = vadd.f32 %v292, %v811
      %v813 = vpop.f32.mrb[0].mxu0
      %814 = vmatprep.mubr.bf16.mxu0 0
      %815 = vmatmul.mubr.bf16.gmra.mrb[0].mxu0 %v505
      %v816 = vpop.f32.mrb[0].mxu0
      %v817 = vadd.f32 %v292, %v816
      %v818 = vpop.f32.mrb[0].mxu0
      %v819 = vpop.f32.mrb[0].mxu0
      %v820 = vadd.f32 %v292, %v819
      %v821 = vpop.f32.mrb[0].mxu0
      %822 = vmatprep.mubr.bf16.mxu0 0
      %823 = vmatmul.mubr.bf16.gmra.mrb[0].mxu0 %v506
      %v824 = vpop.f32.mrb[0].mxu0
      %v825 = vadd.f32 %v292, %v824
      %v826 = vpop.f32.mrb[0].mxu0
      %v827 = vpop.f32.mrb[0].mxu0
      %v828 = vadd.f32 %v292, %v827
      %v829 = vpop.f32.mrb[0].mxu0
      %830 = vmatprep.mubr.bf16.mxu0 0
      %831 = vmatmul.mubr.bf16.gmra.mrb[0].mxu0 %v507
      %v832 = vpop.f32.mrb[0].mxu0
      %v833 = vadd.f32 %v292, %v832
      %v834 = vpop.f32.mrb[0].mxu0
      %v835 = vpop.f32.mrb[0].mxu0
      %v836 = vadd.f32 %v292, %v835
      %v837 = vpop.f32.mrb[0].mxu0
      %838 = vmatprep.mubr.bf16.mxu0 0
      %839 = vmatmul.mubr.bf16.gmra.mrb[0].mxu0 %v508
      %v840 = vpop.f32.mrb[0].mxu0
      %v841 = vadd.f32 %v292, %v840
      %v842 = vpop.f32.mrb[0].mxu0
      %v843 = vpop.f32.mrb[0].mxu0
      %v844 = vadd.f32 %v292, %v843
      %v845 = vpop.f32.mrb[0].mxu0
      %846 = vmatprep.mubr.bf16.mxu0 0
      %847 = vmatmul.mubr.bf16.gmra.mrb[0].mxu0 %v509
      %v848 = vpop.f32.mrb[0].mxu0
      %v849 = vadd.f32 %v292, %v848
      %v850 = vpop.f32.mrb[0].mxu0
      %v851 = vpop.f32.mrb[0].mxu0
      %v852 = vadd.f32 %v292, %v851
      %v853 = vpop.f32.mrb[0].mxu0
      %854 = vmatprep.mubr.bf16.mxu0 0
      %855 = vmatmul.mubr.bf16.gmra.mrb[0].mxu0 %v510
      %v856 = vpop.f32.mrb[0].mxu0
      %v857 = vadd.f32 %v292, %v856
      %v858 = vpop.f32.mrb[0].mxu0
      %v859 = vpop.f32.mrb[0].mxu0
      %v860 = vadd.f32 %v292, %v859
      %v861 = vpop.f32.mrb[0].mxu0
      %862 = vmatprep.mubr.bf16.mxu0 0
      %863 = vmatmul.mubr.bf16.gmra.mrb[0].mxu0 %v511
      %v864 = vpop.f32.mrb[0].mxu0
      %v865 = vadd.f32 %v292, %v864
      %v866 = vpop.f32.mrb[0].mxu0
      %v867 = vpop.f32.mrb[0].mxu0
      %v868 = vadd.f32 %v292, %v867
      %v869 = vpop.f32.mrb[0].mxu0
      %870 = vmatprep.mubr.bf16.mxu0 0
      %871 = vmatmul.mubr.bf16.gmra.mrb[0].mxu0 %v512
      %v872 = vpop.f32.mrb[0].mxu0
      %v873 = vadd.f32 %v292, %v872
      %v874 = vpop.f32.mrb[0].mxu0
      %v875 = vpop.f32.mrb[0].mxu0
      %v876 = vadd.f32 %v292, %v875
      %v877 = vpop.f32.mrb[0].mxu0
      %878 = vmatprep.mubr.bf16.mxu0 0
      %879 = vmatmul.mubr.bf16.gmra.mrb[0].mxu0 %v513
      %v880 = vpop.f32.mrb[0].mxu0
      %v881 = vadd.f32 %v292, %v880
      %v882 = vpop.f32.mrb[0].mxu0
      %v883 = vpop.f32.mrb[0].mxu0
      %v884 = vadd.f32 %v292, %v883
      %v885 = vpop.f32.mrb[0].mxu0
      %886 = vmatprep.mubr.bf16.mxu0 0
      %887 = vmatmul.mubr.bf16.gmra.mrb[0].mxu0 %v514
      %v888 = vpop.f32.mrb[0].mxu0
      %v889 = vadd.f32 %v292, %v888
      %v890 = vpop.f32.mrb[0].mxu0
      %v891 = vpop.f32.mrb[0].mxu0
      %v892 = vadd.f32 %v292, %v891
      %v893 = vpop.f32.mrb[0].mxu0
      %894 = vmatprep.mubr.bf16.mxu0 0
      %895 = vmatmul.mubr.bf16.gmra.mrb[0].mxu0 %v515
      %v896 = vpop.f32.mrb[0].mxu0
      %v897 = vadd.f32 %v292, %v896
      %v898 = vpop.f32.mrb[0].mxu0
      %v899 = vpop.f32.mrb[0].mxu0
      %v900 = vadd.f32 %v292, %v899
      %v901 = vpop.f32.mrb[0].mxu0
      %902 = vmatprep.mubr.bf16.mxu0 0
      %903 = vmatmul.mubr.bf16.gmra.mrb[0].mxu0 %v516
      %v904 = vpop.f32.mrb[0].mxu0
      %v905 = vadd.f32 %v292, %v904
      %v906 = vpop.f32.mrb[0].mxu0
      %v907 = vpop.f32.mrb[0].mxu0
      %v908 = vadd.f32 %v292, %v907
      %v909 = vpop.f32.mrb[0].mxu0
      %910 = vmatprep.mubr.bf16.mxu0 0
      %911 = vmatmul.mubr.bf16.gmra.mrb[0].mxu0 %v517
      %v912 = vpop.f32.mrb[0].mxu0
      %v913 = vadd.f32 %v292, %v912
      %v914 = vpop.f32.mrb[0].mxu0
      %v915 = vpop.f32.mrb[0].mxu0
      %v916 = vadd.f32 %v292, %v915
      %v917 = vpop.f32.mrb[0].mxu0
      %918 = vmatprep.mubr.bf16.mxu0 0
      %919 = vmatmul.mubr.bf16.gmra.mrb[0].mxu0 %v518
      %v920 = vpop.f32.mrb[0].mxu0
      %v921 = vadd.f32 %v292, %v920
      %v922 = vpop.f32.mrb[0].mxu0
      %v923 = vpop.f32.mrb[0].mxu0
      %v924 = vadd.f32 %v292, %v923
      %v925 = vpop.f32.mrb[0].mxu0
      %926 = vmatprep.mubr.bf16.mxu0 0
      %927 = vmatmul.mubr.bf16.gmra.mrb[0].mxu0 %v519
      %v928 = vpop.f32.mrb[0].mxu0
      %v929 = vadd.f32 %v292, %v928
      %v930 = vpop.f32.mrb[0].mxu0
      %v931 = vpop.f32.mrb[0].mxu0
      %v932 = vadd.f32 %v292, %v931
      %v933 = vpop.f32.mrb[0].mxu0
      %934 = vmatprep.mubr.bf16.mxu0 0
      %935 = vmatmul.mubr.bf16.gmra.mrb[0].mxu0 %v520
      %v936 = vpop.f32.mrb[0].mxu0
      %v937 = vadd.f32 %v292, %v936
      %v938 = vpop.f32.mrb[0].mxu0
      %v939 = vpop.f32.mrb[0].mxu0
      %v940 = vadd.f32 %v292, %v939
      %v941 = vpop.f32.mrb[0].mxu0
      %942 = vmatprep.mubr.bf16.mxu0 0
      %943 = vmatmul.mubr.bf16.gmra.mrb[0].mxu0 %v521
      %v944 = vpop.f32.mrb[0].mxu0
      %v945 = vadd.f32 %v292, %v944
      %v946 = vpop.f32.mrb[0].mxu0
      %v947 = vpop.f32.mrb[0].mxu0
      %v948 = vadd.f32 %v292, %v947
      %v949 = vpop.f32.mrb[0].mxu0
      %950 = vmatprep.mubr.bf16.mxu0 0
      %951 = vmatmul.mubr.bf16.gmra.mrb[0].mxu0 %v522
      %v952 = vpop.f32.mrb[0].mxu0
      %v953 = vadd.f32 %v292, %v952
      %v954 = vpop.f32.mrb[0].mxu0
      %v955 = vpop.f32.mrb[0].mxu0
      %v956 = vadd.f32 %v292, %v955
      %v957 = vpop.f32.mrb[0].mxu0
      %958 = vmatprep.mubr.bf16.mxu0 0
      %959 = vmatmul.mubr.bf16.gmra.mrb[0].mxu0 %v523
      %v960 = vpop.f32.mrb[0].mxu0
      %v961 = vadd.f32 %v292, %v960
      %v962 = vpop.f32.mrb[0].mxu0
      %v963 = vpop.f32.mrb[0].mxu0
      %v964 = vadd.f32 %v292, %v963
      %v965 = vpop.f32.mrb[0].mxu0
      %966 = vmatprep.mubr.bf16.mxu0 0
      %967 = vmatmul.mubr.bf16.gmra.mrb[0].mxu0 %v524
      %v968 = vpop.f32.mrb[0].mxu0
      %v969 = vadd.f32 %v292, %v968
      %v970 = vpop.f32.mrb[0].mxu0
      %v971 = vpop.f32.mrb[0].mxu0
      %v972 = vadd.f32 %v292, %v971
      %v973 = vpop.f32.mrb[0].mxu0
      %974 = vmatprep.mubr.bf16.mxu0 0
      %975 = vmatmul.mubr.bf16.gmra.mrb[0].mxu0 %v525
      %v976 = vpop.f32.mrb[0].mxu0
      %v977 = vadd.f32 %v292, %v976
      %v978 = vpop.f32.mrb[0].mxu0
      %v979 = vpop.f32.mrb[0].mxu0
      %v980 = vadd.f32 %v292, %v979
      %v981 = vpop.f32.mrb[0].mxu0
      %982 = vmatprep.mubr.bf16.mxu0 0
      %983 = vmatmul.mubr.bf16.gmra.mrb[0].mxu0 %v526
      %v984 = vpop.f32.mrb[0].mxu0
      %v985 = vadd.f32 %v292, %v984
      %v986 = vpop.f32.mrb[0].mxu0
      %v987 = vpop.f32.mrb[0].mxu0
      %v988 = vadd.f32 %v292, %v987
      %v989 = vpop.f32.mrb[0].mxu0
      %990 = vmatprep.mubr.bf16.mxu0 0
      %991 = vmatmul.mubr.bf16.gmra.mrb[0].mxu0 %v527
      %v992 = vpop.f32.mrb[0].mxu0
      %v993 = vadd.f32 %v292, %v992
      %v994 = vpop.f32.mrb[0].mxu0
      %v995 = vpop.f32.mrb[0].mxu0
      %v996 = vadd.f32 %v292, %v995
      %v997 = vpop.f32.mrb[0].mxu0
      %998 = vmatprep.mubr.bf16.mxu0 0
      %999 = vmatmul.mubr.bf16.gmra.mrb[0].mxu0 %v528
      %v1000 = vpop.f32.mrb[0].mxu0
      %v1001 = vadd.f32 %v292, %v1000
      %v1002 = vpop.f32.mrb[0].mxu0
      %v1003 = vpop.f32.mrb[0].mxu0
      %v1004 = vadd.f32 %v292, %v1003
      %v1005 = vpop.f32.mrb[0].mxu0
      %1006 = vmatprep.mubr.bf16.mxu0 0
      %1007 = vmatmul.mubr.bf16.gmra.mrb[0].mxu0 %v529
      %v1008 = vpop.f32.mrb[0].mxu0
      %v1009 = vadd.f32 %v292, %v1008
      %v1010 = vpop.f32.mrb[0].mxu0
      %v1011 = vpop.f32.mrb[0].mxu0
      %v1012 = vadd.f32 %v292, %v1011
      %v1013 = vpop.f32.mrb[0].mxu0
      %1014 = vmatprep.mubr.bf16.mxu0 0
      %1015 = vmatmul.mubr.bf16.gmra.mrb[0].mxu0 %v530
      %v1016 = vpop.f32.mrb[0].mxu0
      %v1017 = vadd.f32 %v292, %v1016
      %v1018 = vpop.f32.mrb[0].mxu0
      %v1019 = vpop.f32.mrb[0].mxu0
      %v1020 = vadd.f32 %v292, %v1019
      %v1021 = vpop.f32.mrb[0].mxu0
      %1022 = vmatprep.mubr.bf16.mxu0 0
      %1023 = vmatmul.mubr.bf16.gmra.mrb[0].mxu0 %v531
      %v1024 = vpop.f32.mrb[0].mxu0
      %v1025 = vadd.f32 %v292, %v1024
      %v1026 = vpop.f32.mrb[0].mxu0
      %v1027 = vpop.f32.mrb[0].mxu0
      %v1028 = vadd.f32 %v292, %v1027
      %v1029 = vpop.f32.mrb[0].mxu0
      %1030 = vmatprep.mubr.bf16.mxu0 0
      %1031 = vmatmul.mubr.bf16.gmra.mrb[0].mxu0 %v532
      %v1032 = vpop.f32.mrb[0].mxu0
      %v1033 = vadd.f32 %v292, %v1032
      %v1034 = vpop.f32.mrb[0].mxu0
      %v1035 = vpop.f32.mrb[0].mxu0
      %v1036 = vadd.f32 %v292, %v1035
      %v1037 = vpop.f32.mrb[0].mxu0
      %1038 = vmatprep.mubr.bf16.mxu0 0
      %1039 = vmatmul.mubr.bf16.gmra.mrb[0].mxu0 %v533
      %v1040 = vpop.f32.mrb[0].mxu0
      %v1041 = vadd.f32 %v292, %v1040
      %v1042 = vpop.f32.mrb[0].mxu0
      %v1043 = vpop.f32.mrb[0].mxu0
      %v1044 = vadd.f32 %v292, %v1043
      %v1045 = vpop.f32.mrb[0].mxu0
      %1046 = vdwg.mxu0
      %v1047 = vmax.f32 %v665, 0.0
      %v1048 = vmax.f32 %v668, 0.0
      %v1049 = vmax.f32 %v673, 0.0
      %v1050 = vmax.f32 %v676, 0.0
      %v1051 = vmax.f32 %v681, 0.0
      %v1052 = vmax.f32 %v684, 0.0
      %v1053 = vmax.f32 %v689, 0.0
      %v1054 = vmax.f32 %v692, 0.0
      %v1055 = vmax.f32 %v697, 0.0
      %v1056 = vmax.f32 %v700, 0.0
      %v1057 = vmax.f32 %v705, 0.0
      %v1058 = vmax.f32 %v708, 0.0
      %v1059 = vmax.f32 %v713, 0.0
      %v1060 = vmax.f32 %v716, 0.0
      %v1061 = vmax.f32 %v721, 0.0
      %v1062 = vmax.f32 %v724, 0.0
      %v1063 = vmax.f32 %v729, 0.0
      %v1064 = vmax.f32 %v732, 0.0
      %v1065 = vmax.f32 %v737, 0.0
      %v1066 = vmax.f32 %v740, 0.0
      %v1067 = vmax.f32 %v745, 0.0
      %v1068 = vmax.f32 %v748, 0.0
      %v1069 = vmax.f32 %v753, 0.0
      %v1070 = vmax.f32 %v756, 0.0
      %v1071 = vmax.f32 %v761, 0.0
      %v1072 = vmax.f32 %v764, 0.0
      %v1073 = vmax.f32 %v769, 0.0
      %v1074 = vmax.f32 %v772, 0.0
      %v1075 = vmax.f32 %v777, 0.0
      %v1076 = vmax.f32 %v780, 0.0
      %v1077 = vmax.f32 %v785, 0.0
      %v1078 = vmax.f32 %v788, 0.0
      %v1079 = vmax.f32 %v793, 0.0
      %v1080 = vmax.f32 %v796, 0.0
      %v1081 = vmax.f32 %v801, 0.0
      %v1082 = vmax.f32 %v804, 0.0
      %v1083 = vmax.f32 %v809, 0.0
      %v1084 = vmax.f32 %v812, 0.0
      %v1085 = vmax.f32 %v817, 0.0
      %v1086 = vmax.f32 %v820, 0.0
      %v1087 = vmax.f32 %v825, 0.0
      %v1088 = vmax.f32 %v828, 0.0
      %v1089 = vmax.f32 %v833, 0.0
      %v1090 = vmax.f32 %v836, 0.0
      %v1091 = vmax.f32 %v841, 0.0
      %v1092 = vmax.f32 %v844, 0.0
      %v1093 = vmax.f32 %v849, 0.0
      %v1094 = vmax.f32 %v852, 0.0
      %v1095 = vmax.f32 %v857, 0.0
      %v1096 = vmax.f32 %v860, 0.0
      %v1097 = vmax.f32 %v865, 0.0
      %v1098 = vmax.f32 %v868, 0.0
      %v1099 = vmax.f32 %v873, 0.0
      %v1100 = vmax.f32 %v876, 0.0
      %v1101 = vmax.f32 %v881, 0.0
      %v1102 = vmax.f32 %v884, 0.0
      %v1103 = vmax.f32 %v889, 0.0
      %v1104 = vmax.f32 %v892, 0.0
      %v1105 = vmax.f32 %v897, 0.0
      %v1106 = vmax.f32 %v900, 0.0
      %v1107 = vmax.f32 %v905, 0.0
      %v1108 = vmax.f32 %v908, 0.0
      %v1109 = vmax.f32 %v913, 0.0
      %v1110 = vmax.f32 %v916, 0.0
      %v1111 = vmax.f32 %v921, 0.0
      %v1112 = vmax.f32 %v924, 0.0
      %v1113 = vmax.f32 %v929, 0.0
      %v1114 = vmax.f32 %v932, 0.0
      %v1115 = vmax.f32 %v937, 0.0
      %v1116 = vmax.f32 %v940, 0.0
      %v1117 = vmax.f32 %v945, 0.0
      %v1118 = vmax.f32 %v948, 0.0
      %v1119 = vmax.f32 %v953, 0.0
      %v1120 = vmax.f32 %v956, 0.0
      %v1121 = vmax.f32 %v961, 0.0
      %v1122 = vmax.f32 %v964, 0.0
      %v1123 = vmax.f32 %v969, 0.0
      %v1124 = vmax.f32 %v972, 0.0
      %v1125 = vmax.f32 %v977, 0.0
      %v1126 = vmax.f32 %v980, 0.0
      %v1127 = vmax.f32 %v985, 0.0
      %v1128 = vmax.f32 %v988, 0.0
      %v1129 = vmax.f32 %v993, 0.0
      %v1130 = vmax.f32 %v996, 0.0
      %v1131 = vmax.f32 %v1001, 0.0
      %v1132 = vmax.f32 %v1004, 0.0
      %v1133 = vmax.f32 %v1009, 0.0
      %v1134 = vmax.f32 %v1012, 0.0
      %v1135 = vmax.f32 %v1017, 0.0
      %v1136 = vmax.f32 %v1020, 0.0
      %v1137 = vmax.f32 %v1025, 0.0
      %v1138 = vmax.f32 %v1028, 0.0
      %v1139 = vmax.f32 %v1033, 0.0
      %v1140 = vmax.f32 %v1036, 0.0
      %v1141 = vmax.f32 %v1041, 0.0
      %v1142 = vmax.f32 %v1044, 0.0
      %v1143 = vrot.slane %v1047, 4
      %v1144 = vmax.f32 %v1047, %v1143
      %v1145 = vrot.slane %v1144, 2
      %v1146 = vmax.f32 %v1144, %v1145
      %v1147 = vrot.slane %v1146, 1
      %v1148 = vmax.f32 %v1146, %v1147
      %v1149 = vrot.slane %v1048, 4
      %v1150 = vmax.f32 %v1048, %v1149
      %v1151 = vrot.slane %v1150, 2
      %v1152 = vmax.f32 %v1150, %v1151
      %v1153 = vrot.slane %v1152, 1
      %v1154 = vmax.f32 %v1152, %v1153
      %v1155 = vrot.slane %v1049, 4
      %v1156 = vmax.f32 %v1049, %v1155
      %v1157 = vrot.slane %v1156, 2
      %v1158 = vmax.f32 %v1156, %v1157
      %v1159 = vrot.slane %v1158, 1
      %v1160 = vmax.f32 %v1158, %v1159
      %v1161 = vrot.slane %v1050, 4
      %v1162 = vmax.f32 %v1050, %v1161
      %v1163 = vrot.slane %v1162, 2
      %v1164 = vmax.f32 %v1162, %v1163
      %v1165 = vrot.slane %v1164, 1
      %v1166 = vmax.f32 %v1164, %v1165
      %v1167 = vrot.slane %v1051, 4
      %v1168 = vmax.f32 %v1051, %v1167
      %v1169 = vrot.slane %v1168, 2
      %v1170 = vmax.f32 %v1168, %v1169
      %v1171 = vrot.slane %v1170, 1
      %v1172 = vmax.f32 %v1170, %v1171
      %v1173 = vrot.slane %v1052, 4
      %v1174 = vmax.f32 %v1052, %v1173
      %v1175 = vrot.slane %v1174, 2
      %v1176 = vmax.f32 %v1174, %v1175
      %v1177 = vrot.slane %v1176, 1
      %v1178 = vmax.f32 %v1176, %v1177
      %v1179 = vrot.slane %v1053, 4
      %v1180 = vmax.f32 %v1053, %v1179
      %v1181 = vrot.slane %v1180, 2
      %v1182 = vmax.f32 %v1180, %v1181
      %v1183 = vrot.slane %v1182, 1
      %v1184 = vmax.f32 %v1182, %v1183
      %v1185 = vrot.slane %v1054, 4
      %v1186 = vmax.f32 %v1054, %v1185
      %v1187 = vrot.slane %v1186, 2
      %v1188 = vmax.f32 %v1186, %v1187
      %v1189 = vrot.slane %v1188, 1
      %v1190 = vmax.f32 %v1188, %v1189
      %v1191 = vrot.slane %v1055, 4
      %v1192 = vmax.f32 %v1055, %v1191
      %v1193 = vrot.slane %v1192, 2
      %v1194 = vmax.f32 %v1192, %v1193
      %v1195 = vrot.slane %v1194, 1
      %v1196 = vmax.f32 %v1194, %v1195
      %v1197 = vrot.slane %v1056, 4
      %v1198 = vmax.f32 %v1056, %v1197
      %v1199 = vrot.slane %v1198, 2
      %v1200 = vmax.f32 %v1198, %v1199
      %v1201 = vrot.slane %v1200, 1
      %v1202 = vmax.f32 %v1200, %v1201
      %v1203 = vrot.slane %v1057, 4
      %v1204 = vmax.f32 %v1057, %v1203
      %v1205 = vrot.slane %v1204, 2
      %v1206 = vmax.f32 %v1204, %v1205
      %v1207 = vrot.slane %v1206, 1
      %v1208 = vmax.f32 %v1206, %v1207
      %v1209 = vrot.slane %v1058, 4
      %v1210 = vmax.f32 %v1058, %v1209
      %v1211 = vrot.slane %v1210, 2
      %v1212 = vmax.f32 %v1210, %v1211
      %v1213 = vrot.slane %v1212, 1
      %v1214 = vmax.f32 %v1212, %v1213
      %v1215 = vrot.slane %v1059, 4
      %v1216 = vmax.f32 %v1059, %v1215
      %v1217 = vrot.slane %v1216, 2
      %v1218 = vmax.f32 %v1216, %v1217
      %v1219 = vrot.slane %v1218, 1
      %v1220 = vmax.f32 %v1218, %v1219
      %v1221 = vrot.slane %v1060, 4
      %v1222 = vmax.f32 %v1060, %v1221
      %v1223 = vrot.slane %v1222, 2
      %v1224 = vmax.f32 %v1222, %v1223
      %v1225 = vrot.slane %v1224, 1
      %v1226 = vmax.f32 %v1224, %v1225
      %v1227 = vrot.slane %v1061, 4
      %v1228 = vmax.f32 %v1061, %v1227
      %v1229 = vrot.slane %v1228, 2
      %v1230 = vmax.f32 %v1228, %v1229
      %v1231 = vrot.slane %v1230, 1
      %v1232 = vmax.f32 %v1230, %v1231
      %v1233 = vrot.slane %v1062, 4
      %v1234 = vmax.f32 %v1062, %v1233
      %v1235 = vrot.slane %v1234, 2
      %v1236 = vmax.f32 %v1234, %v1235
      %v1237 = vrot.slane %v1236, 1
      %v1238 = vmax.f32 %v1236, %v1237
      %v1239 = vrot.slane %v1063, 4
      %v1240 = vmax.f32 %v1063, %v1239
      %v1241 = vrot.slane %v1240, 2
      %v1242 = vmax.f32 %v1240, %v1241
      %v1243 = vrot.slane %v1242, 1
      %v1244 = vmax.f32 %v1242, %v1243
      %v1245 = vrot.slane %v1064, 4
      %v1246 = vmax.f32 %v1064, %v1245
      %v1247 = vrot.slane %v1246, 2
      %v1248 = vmax.f32 %v1246, %v1247
      %v1249 = vrot.slane %v1248, 1
      %v1250 = vmax.f32 %v1248, %v1249
      %v1251 = vrot.slane %v1065, 4
      %v1252 = vmax.f32 %v1065, %v1251
      %v1253 = vrot.slane %v1252, 2
      %v1254 = vmax.f32 %v1252, %v1253
      %v1255 = vrot.slane %v1254, 1
      %v1256 = vmax.f32 %v1254, %v1255
      %v1257 = vrot.slane %v1066, 4
      %v1258 = vmax.f32 %v1066, %v1257
      %v1259 = vrot.slane %v1258, 2
      %v1260 = vmax.f32 %v1258, %v1259
      %v1261 = vrot.slane %v1260, 1
      %v1262 = vmax.f32 %v1260, %v1261
      %v1263 = vrot.slane %v1067, 4
      %v1264 = vmax.f32 %v1067, %v1263
      %v1265 = vrot.slane %v1264, 2
      %v1266 = vmax.f32 %v1264, %v1265
      %v1267 = vrot.slane %v1266, 1
      %v1268 = vmax.f32 %v1266, %v1267
      %v1269 = vrot.slane %v1068, 4
      %v1270 = vmax.f32 %v1068, %v1269
      %v1271 = vrot.slane %v1270, 2
      %v1272 = vmax.f32 %v1270, %v1271
      %v1273 = vrot.slane %v1272, 1
      %v1274 = vmax.f32 %v1272, %v1273
      %v1275 = vrot.slane %v1069, 4
      %v1276 = vmax.f32 %v1069, %v1275
      %v1277 = vrot.slane %v1276, 2
      %v1278 = vmax.f32 %v1276, %v1277
      %v1279 = vrot.slane %v1278, 1
      %v1280 = vmax.f32 %v1278, %v1279
      %v1281 = vrot.slane %v1070, 4
      %v1282 = vmax.f32 %v1070, %v1281
      %v1283 = vrot.slane %v1282, 2
      %v1284 = vmax.f32 %v1282, %v1283
      %v1285 = vrot.slane %v1284, 1
      %v1286 = vmax.f32 %v1284, %v1285
      %v1287 = vrot.slane %v1071, 4
      %v1288 = vmax.f32 %v1071, %v1287
      %v1289 = vrot.slane %v1288, 2
      %v1290 = vmax.f32 %v1288, %v1289
      %v1291 = vrot.slane %v1290, 1
      %v1292 = vmax.f32 %v1290, %v1291
      %v1293 = vrot.slane %v1072, 4
      %v1294 = vmax.f32 %v1072, %v1293
      %v1295 = vrot.slane %v1294, 2
      %v1296 = vmax.f32 %v1294, %v1295
      %v1297 = vrot.slane %v1296, 1
      %v1298 = vmax.f32 %v1296, %v1297
      %v1299 = vrot.slane %v1073, 4
      %v1300 = vmax.f32 %v1073, %v1299
      %v1301 = vrot.slane %v1300, 2
      %v1302 = vmax.f32 %v1300, %v1301
      %v1303 = vrot.slane %v1302, 1
      %v1304 = vmax.f32 %v1302, %v1303
      %v1305 = vrot.slane %v1074, 4
      %v1306 = vmax.f32 %v1074, %v1305
      %v1307 = vrot.slane %v1306, 2
      %v1308 = vmax.f32 %v1306, %v1307
      %v1309 = vrot.slane %v1308, 1
      %v1310 = vmax.f32 %v1308, %v1309
      %v1311 = vrot.slane %v1075, 4
      %v1312 = vmax.f32 %v1075, %v1311
      %v1313 = vrot.slane %v1312, 2
      %v1314 = vmax.f32 %v1312, %v1313
      %v1315 = vrot.slane %v1314, 1
      %v1316 = vmax.f32 %v1314, %v1315
      %v1317 = vrot.slane %v1076, 4
      %v1318 = vmax.f32 %v1076, %v1317
      %v1319 = vrot.slane %v1318, 2
      %v1320 = vmax.f32 %v1318, %v1319
      %v1321 = vrot.slane %v1320, 1
      %v1322 = vmax.f32 %v1320, %v1321
      %v1323 = vrot.slane %v1077, 4
      %v1324 = vmax.f32 %v1077, %v1323
      %v1325 = vrot.slane %v1324, 2
      %v1326 = vmax.f32 %v1324, %v1325
      %v1327 = vrot.slane %v1326, 1
      %v1328 = vmax.f32 %v1326, %v1327
      %v1329 = vrot.slane %v1078, 4
      %v1330 = vmax.f32 %v1078, %v1329
      %v1331 = vrot.slane %v1330, 2
      %v1332 = vmax.f32 %v1330, %v1331
      %v1333 = vrot.slane %v1332, 1
      %v1334 = vmax.f32 %v1332, %v1333
      %v1335 = vrot.slane %v1079, 4
      %v1336 = vmax.f32 %v1079, %v1335
      %v1337 = vrot.slane %v1336, 2
      %v1338 = vmax.f32 %v1336, %v1337
      %v1339 = vrot.slane %v1338, 1
      %v1340 = vmax.f32 %v1338, %v1339
      %v1341 = vrot.slane %v1080, 4
      %v1342 = vmax.f32 %v1080, %v1341
      %v1343 = vrot.slane %v1342, 2
      %v1344 = vmax.f32 %v1342, %v1343
      %v1345 = vrot.slane %v1344, 1
      %v1346 = vmax.f32 %v1344, %v1345
      %v1347 = vrot.slane %v1081, 4
      %v1348 = vmax.f32 %v1081, %v1347
      %v1349 = vrot.slane %v1348, 2
      %v1350 = vmax.f32 %v1348, %v1349
      %v1351 = vrot.slane %v1350, 1
      %v1352 = vmax.f32 %v1350, %v1351
      %v1353 = vrot.slane %v1082, 4
      %v1354 = vmax.f32 %v1082, %v1353
      %v1355 = vrot.slane %v1354, 2
      %v1356 = vmax.f32 %v1354, %v1355
      %v1357 = vrot.slane %v1356, 1
      %v1358 = vmax.f32 %v1356, %v1357
      %v1359 = vrot.slane %v1083, 4
      %v1360 = vmax.f32 %v1083, %v1359
      %v1361 = vrot.slane %v1360, 2
      %v1362 = vmax.f32 %v1360, %v1361
      %v1363 = vrot.slane %v1362, 1
      %v1364 = vmax.f32 %v1362, %v1363
      %v1365 = vrot.slane %v1084, 4
      %v1366 = vmax.f32 %v1084, %v1365
      %v1367 = vrot.slane %v1366, 2
      %v1368 = vmax.f32 %v1366, %v1367
      %v1369 = vrot.slane %v1368, 1
      %v1370 = vmax.f32 %v1368, %v1369
      %v1371 = vrot.slane %v1085, 4
      %v1372 = vmax.f32 %v1085, %v1371
      %v1373 = vrot.slane %v1372, 2
      %v1374 = vmax.f32 %v1372, %v1373
      %v1375 = vrot.slane %v1374, 1
      %v1376 = vmax.f32 %v1374, %v1375
      %v1377 = vrot.slane %v1086, 4
      %v1378 = vmax.f32 %v1086, %v1377
      %v1379 = vrot.slane %v1378, 2
      %v1380 = vmax.f32 %v1378, %v1379
      %v1381 = vrot.slane %v1380, 1
      %v1382 = vmax.f32 %v1380, %v1381
      %v1383 = vrot.slane %v1087, 4
      %v1384 = vmax.f32 %v1087, %v1383
      %v1385 = vrot.slane %v1384, 2
      %v1386 = vmax.f32 %v1384, %v1385
      %v1387 = vrot.slane %v1386, 1
      %v1388 = vmax.f32 %v1386, %v1387
      %v1389 = vrot.slane %v1088, 4
      %v1390 = vmax.f32 %v1088, %v1389
      %v1391 = vrot.slane %v1390, 2
      %v1392 = vmax.f32 %v1390, %v1391
      %v1393 = vrot.slane %v1392, 1
      %v1394 = vmax.f32 %v1392, %v1393
      %v1395 = vrot.slane %v1089, 4
      %v1396 = vmax.f32 %v1089, %v1395
      %v1397 = vrot.slane %v1396, 2
      %v1398 = vmax.f32 %v1396, %v1397
      %v1399 = vrot.slane %v1398, 1
      %v1400 = vmax.f32 %v1398, %v1399
      %v1401 = vrot.slane %v1090, 4
      %v1402 = vmax.f32 %v1090, %v1401
      %v1403 = vrot.slane %v1402, 2
      %v1404 = vmax.f32 %v1402, %v1403
      %v1405 = vrot.slane %v1404, 1
      %v1406 = vmax.f32 %v1404, %v1405
      %v1407 = vrot.slane %v1091, 4
      %v1408 = vmax.f32 %v1091, %v1407
      %v1409 = vrot.slane %v1408, 2
      %v1410 = vmax.f32 %v1408, %v1409
      %v1411 = vrot.slane %v1410, 1
      %v1412 = vmax.f32 %v1410, %v1411
      %v1413 = vrot.slane %v1092, 4
      %v1414 = vmax.f32 %v1092, %v1413
      %v1415 = vrot.slane %v1414, 2
      %v1416 = vmax.f32 %v1414, %v1415
      %v1417 = vrot.slane %v1416, 1
      %v1418 = vmax.f32 %v1416, %v1417
      %v1419 = vrot.slane %v1093, 4
      %v1420 = vmax.f32 %v1093, %v1419
      %v1421 = vrot.slane %v1420, 2
      %v1422 = vmax.f32 %v1420, %v1421
      %v1423 = vrot.slane %v1422, 1
      %v1424 = vmax.f32 %v1422, %v1423
      %v1425 = vrot.slane %v1094, 4
      %v1426 = vmax.f32 %v1094, %v1425
      %v1427 = vrot.slane %v1426, 2
      %v1428 = vmax.f32 %v1426, %v1427
      %v1429 = vrot.slane %v1428, 1
      %v1430 = vmax.f32 %v1428, %v1429
      %v1431 = vrot.slane %v1095, 4
      %v1432 = vmax.f32 %v1095, %v1431
      %v1433 = vrot.slane %v1432, 2
      %v1434 = vmax.f32 %v1432, %v1433
      %v1435 = vrot.slane %v1434, 1
      %v1436 = vmax.f32 %v1434, %v1435
      %v1437 = vrot.slane %v1096, 4
      %v1438 = vmax.f32 %v1096, %v1437
      %v1439 = vrot.slane %v1438, 2
      %v1440 = vmax.f32 %v1438, %v1439
      %v1441 = vrot.slane %v1440, 1
      %v1442 = vmax.f32 %v1440, %v1441
      %v1443 = vrot.slane %v1097, 4
      %v1444 = vmax.f32 %v1097, %v1443
      %v1445 = vrot.slane %v1444, 2
      %v1446 = vmax.f32 %v1444, %v1445
      %v1447 = vrot.slane %v1446, 1
      %v1448 = vmax.f32 %v1446, %v1447
      %v1449 = vrot.slane %v1098, 4
      %v1450 = vmax.f32 %v1098, %v1449
      %v1451 = vrot.slane %v1450, 2
      %v1452 = vmax.f32 %v1450, %v1451
      %v1453 = vrot.slane %v1452, 1
      %v1454 = vmax.f32 %v1452, %v1453
      %v1455 = vrot.slane %v1099, 4
      %v1456 = vmax.f32 %v1099, %v1455
      %v1457 = vrot.slane %v1456, 2
      %v1458 = vmax.f32 %v1456, %v1457
      %v1459 = vrot.slane %v1458, 1
      %v1460 = vmax.f32 %v1458, %v1459
      %v1461 = vrot.slane %v1100, 4
      %v1462 = vmax.f32 %v1100, %v1461
      %v1463 = vrot.slane %v1462, 2
      %v1464 = vmax.f32 %v1462, %v1463
      %v1465 = vrot.slane %v1464, 1
      %v1466 = vmax.f32 %v1464, %v1465
      %v1467 = vrot.slane %v1101, 4
      %v1468 = vmax.f32 %v1101, %v1467
      %v1469 = vrot.slane %v1468, 2
      %v1470 = vmax.f32 %v1468, %v1469
      %v1471 = vrot.slane %v1470, 1
      %v1472 = vmax.f32 %v1470, %v1471
      %v1473 = vrot.slane %v1102, 4
      %v1474 = vmax.f32 %v1102, %v1473
      %v1475 = vrot.slane %v1474, 2
      %v1476 = vmax.f32 %v1474, %v1475
      %v1477 = vrot.slane %v1476, 1
      %v1478 = vmax.f32 %v1476, %v1477
      %v1479 = vrot.slane %v1103, 4
      %v1480 = vmax.f32 %v1103, %v1479
      %v1481 = vrot.slane %v1480, 2
      %v1482 = vmax.f32 %v1480, %v1481
      %v1483 = vrot.slane %v1482, 1
      %v1484 = vmax.f32 %v1482, %v1483
      %v1485 = vrot.slane %v1104, 4
      %v1486 = vmax.f32 %v1104, %v1485
      %v1487 = vrot.slane %v1486, 2
      %v1488 = vmax.f32 %v1486, %v1487
      %v1489 = vrot.slane %v1488, 1
      %v1490 = vmax.f32 %v1488, %v1489
      %v1491 = vrot.slane %v1105, 4
      %v1492 = vmax.f32 %v1105, %v1491
      %v1493 = vrot.slane %v1492, 2
      %v1494 = vmax.f32 %v1492, %v1493
      %v1495 = vrot.slane %v1494, 1
      %v1496 = vmax.f32 %v1494, %v1495
      %v1497 = vrot.slane %v1106, 4
      %v1498 = vmax.f32 %v1106, %v1497
      %v1499 = vrot.slane %v1498, 2
      %v1500 = vmax.f32 %v1498, %v1499
      %v1501 = vrot.slane %v1500, 1
      %v1502 = vmax.f32 %v1500, %v1501
      %v1503 = vrot.slane %v1107, 4
      %v1504 = vmax.f32 %v1107, %v1503
      %v1505 = vrot.slane %v1504, 2
      %v1506 = vmax.f32 %v1504, %v1505
      %v1507 = vrot.slane %v1506, 1
      %v1508 = vmax.f32 %v1506, %v1507
      %v1509 = vrot.slane %v1108, 4
      %v1510 = vmax.f32 %v1108, %v1509
      %v1511 = vrot.slane %v1510, 2
      %v1512 = vmax.f32 %v1510, %v1511
      %v1513 = vrot.slane %v1512, 1
      %v1514 = vmax.f32 %v1512, %v1513
      %v1515 = vrot.slane %v1109, 4
      %v1516 = vmax.f32 %v1109, %v1515
      %v1517 = vrot.slane %v1516, 2
      %v1518 = vmax.f32 %v1516, %v1517
      %v1519 = vrot.slane %v1518, 1
      %v1520 = vmax.f32 %v1518, %v1519
      %v1521 = vrot.slane %v1110, 4
      %v1522 = vmax.f32 %v1110, %v1521
      %v1523 = vrot.slane %v1522, 2
      %v1524 = vmax.f32 %v1522, %v1523
      %v1525 = vrot.slane %v1524, 1
      %v1526 = vmax.f32 %v1524, %v1525
      %v1527 = vrot.slane %v1111, 4
      %v1528 = vmax.f32 %v1111, %v1527
      %v1529 = vrot.slane %v1528, 2
      %v1530 = vmax.f32 %v1528, %v1529
      %v1531 = vrot.slane %v1530, 1
      %v1532 = vmax.f32 %v1530, %v1531
      %v1533 = vrot.slane %v1112, 4
      %v1534 = vmax.f32 %v1112, %v1533
      %v1535 = vrot.slane %v1534, 2
      %v1536 = vmax.f32 %v1534, %v1535
      %v1537 = vrot.slane %v1536, 1
      %v1538 = vmax.f32 %v1536, %v1537
      %v1539 = vrot.slane %v1113, 4
      %v1540 = vmax.f32 %v1113, %v1539
      %v1541 = vrot.slane %v1540, 2
      %v1542 = vmax.f32 %v1540, %v1541
      %v1543 = vrot.slane %v1542, 1
      %v1544 = vmax.f32 %v1542, %v1543
      %v1545 = vrot.slane %v1114, 4
      %v1546 = vmax.f32 %v1114, %v1545
      %v1547 = vrot.slane %v1546, 2
      %v1548 = vmax.f32 %v1546, %v1547
      %v1549 = vrot.slane %v1548, 1
      %v1550 = vmax.f32 %v1548, %v1549
      %v1551 = vrot.slane %v1115, 4
      %v1552 = vmax.f32 %v1115, %v1551
      %v1553 = vrot.slane %v1552, 2
      %v1554 = vmax.f32 %v1552, %v1553
      %v1555 = vrot.slane %v1554, 1
      %v1556 = vmax.f32 %v1554, %v1555
      %v1557 = vrot.slane %v1116, 4
      %v1558 = vmax.f32 %v1116, %v1557
      %v1559 = vrot.slane %v1558, 2
      %v1560 = vmax.f32 %v1558, %v1559
      %v1561 = vrot.slane %v1560, 1
      %v1562 = vmax.f32 %v1560, %v1561
      %v1563 = vrot.slane %v1117, 4
      %v1564 = vmax.f32 %v1117, %v1563
      %v1565 = vrot.slane %v1564, 2
      %v1566 = vmax.f32 %v1564, %v1565
      %v1567 = vrot.slane %v1566, 1
      %v1568 = vmax.f32 %v1566, %v1567
      %v1569 = vrot.slane %v1118, 4
      %v1570 = vmax.f32 %v1118, %v1569
      %v1571 = vrot.slane %v1570, 2
      %v1572 = vmax.f32 %v1570, %v1571
      %v1573 = vrot.slane %v1572, 1
      %v1574 = vmax.f32 %v1572, %v1573
      %v1575 = vrot.slane %v1119, 4
      %v1576 = vmax.f32 %v1119, %v1575
      %v1577 = vrot.slane %v1576, 2
      %v1578 = vmax.f32 %v1576, %v1577
      %v1579 = vrot.slane %v1578, 1
      %v1580 = vmax.f32 %v1578, %v1579
      %v1581 = vrot.slane %v1120, 4
      %v1582 = vmax.f32 %v1120, %v1581
      %v1583 = vrot.slane %v1582, 2
      %v1584 = vmax.f32 %v1582, %v1583
      %v1585 = vrot.slane %v1584, 1
      %v1586 = vmax.f32 %v1584, %v1585
      %v1587 = vrot.slane %v1121, 4
      %v1588 = vmax.f32 %v1121, %v1587
      %v1589 = vrot.slane %v1588, 2
      %v1590 = vmax.f32 %v1588, %v1589
      %v1591 = vrot.slane %v1590, 1
      %v1592 = vmax.f32 %v1590, %v1591
      %v1593 = vrot.slane %v1122, 4
      %v1594 = vmax.f32 %v1122, %v1593
      %v1595 = vrot.slane %v1594, 2
      %v1596 = vmax.f32 %v1594, %v1595
      %v1597 = vrot.slane %v1596, 1
      %v1598 = vmax.f32 %v1596, %v1597
      %v1599 = vrot.slane %v1123, 4
      %v1600 = vmax.f32 %v1123, %v1599
      %v1601 = vrot.slane %v1600, 2
      %v1602 = vmax.f32 %v1600, %v1601
      %v1603 = vrot.slane %v1602, 1
      %v1604 = vmax.f32 %v1602, %v1603
      %v1605 = vrot.slane %v1124, 4
      %v1606 = vmax.f32 %v1124, %v1605
      %v1607 = vrot.slane %v1606, 2
      %v1608 = vmax.f32 %v1606, %v1607
      %v1609 = vrot.slane %v1608, 1
      %v1610 = vmax.f32 %v1608, %v1609
      %v1611 = vrot.slane %v1125, 4
      %v1612 = vmax.f32 %v1125, %v1611
      %v1613 = vrot.slane %v1612, 2
      %v1614 = vmax.f32 %v1612, %v1613
      %v1615 = vrot.slane %v1614, 1
      %v1616 = vmax.f32 %v1614, %v1615
      %v1617 = vrot.slane %v1126, 4
      %v1618 = vmax.f32 %v1126, %v1617
      %v1619 = vrot.slane %v1618, 2
      %v1620 = vmax.f32 %v1618, %v1619
      %v1621 = vrot.slane %v1620, 1
      %v1622 = vmax.f32 %v1620, %v1621
      %v1623 = vrot.slane %v1127, 4
      %v1624 = vmax.f32 %v1127, %v1623
      %v1625 = vrot.slane %v1624, 2
      %v1626 = vmax.f32 %v1624, %v1625
      %v1627 = vrot.slane %v1626, 1
      %v1628 = vmax.f32 %v1626, %v1627
      %v1629 = vrot.slane %v1128, 4
      %v1630 = vmax.f32 %v1128, %v1629
      %v1631 = vrot.slane %v1630, 2
      %v1632 = vmax.f32 %v1630, %v1631
      %v1633 = vrot.slane %v1632, 1
      %v1634 = vmax.f32 %v1632, %v1633
      %v1635 = vrot.slane %v1129, 4
      %v1636 = vmax.f32 %v1129, %v1635
      %v1637 = vrot.slane %v1636, 2
      %v1638 = vmax.f32 %v1636, %v1637
      %v1639 = vrot.slane %v1638, 1
      %v1640 = vmax.f32 %v1638, %v1639
      %v1641 = vrot.slane %v1130, 4
      %v1642 = vmax.f32 %v1130, %v1641
      %v1643 = vrot.slane %v1642, 2
      %v1644 = vmax.f32 %v1642, %v1643
      %v1645 = vrot.slane %v1644, 1
      %v1646 = vmax.f32 %v1644, %v1645
      %v1647 = vrot.slane %v1131, 4
      %v1648 = vmax.f32 %v1131, %v1647
      %v1649 = vrot.slane %v1648, 2
      %v1650 = vmax.f32 %v1648, %v1649
      %v1651 = vrot.slane %v1650, 1
      %v1652 = vmax.f32 %v1650, %v1651
      %v1653 = vrot.slane %v1132, 4
      %v1654 = vmax.f32 %v1132, %v1653
      %v1655 = vrot.slane %v1654, 2
      %v1656 = vmax.f32 %v1654, %v1655
      %v1657 = vrot.slane %v1656, 1
      %v1658 = vmax.f32 %v1656, %v1657
      %v1659 = vrot.slane %v1133, 4
      %v1660 = vmax.f32 %v1133, %v1659
      %v1661 = vrot.slane %v1660, 2
      %v1662 = vmax.f32 %v1660, %v1661
      %v1663 = vrot.slane %v1662, 1
      %v1664 = vmax.f32 %v1662, %v1663
      %v1665 = vrot.slane %v1134, 4
      %v1666 = vmax.f32 %v1134, %v1665
      %v1667 = vrot.slane %v1666, 2
      %v1668 = vmax.f32 %v1666, %v1667
      %v1669 = vrot.slane %v1668, 1
      %v1670 = vmax.f32 %v1668, %v1669
      %v1671 = vrot.slane %v1135, 4
      %v1672 = vmax.f32 %v1135, %v1671
      %v1673 = vrot.slane %v1672, 2
      %v1674 = vmax.f32 %v1672, %v1673
      %v1675 = vrot.slane %v1674, 1
      %v1676 = vmax.f32 %v1674, %v1675
      %v1677 = vrot.slane %v1136, 4
      %v1678 = vmax.f32 %v1136, %v1677
      %v1679 = vrot.slane %v1678, 2
      %v1680 = vmax.f32 %v1678, %v1679
      %v1681 = vrot.slane %v1680, 1
      %v1682 = vmax.f32 %v1680, %v1681
      %v1683 = vrot.slane %v1137, 4
      %v1684 = vmax.f32 %v1137, %v1683
      %v1685 = vrot.slane %v1684, 2
      %v1686 = vmax.f32 %v1684, %v1685
      %v1687 = vrot.slane %v1686, 1
      %v1688 = vmax.f32 %v1686, %v1687
      %v1689 = vrot.slane %v1138, 4
      %v1690 = vmax.f32 %v1138, %v1689
      %v1691 = vrot.slane %v1690, 2
      %v1692 = vmax.f32 %v1690, %v1691
      %v1693 = vrot.slane %v1692, 1
      %v1694 = vmax.f32 %v1692, %v1693
      %v1695 = vrot.slane %v1139, 4
      %v1696 = vmax.f32 %v1139, %v1695
      %v1697 = vrot.slane %v1696, 2
      %v1698 = vmax.f32 %v1696, %v1697
      %v1699 = vrot.slane %v1698, 1
      %v1700 = vmax.f32 %v1698, %v1699
      %v1701 = vrot.slane %v1140, 4
      %v1702 = vmax.f32 %v1140, %v1701
      %v1703 = vrot.slane %v1702, 2
      %v1704 = vmax.f32 %v1702, %v1703
      %v1705 = vrot.slane %v1704, 1
      %v1706 = vmax.f32 %v1704, %v1705
      %v1707 = vrot.slane %v1141, 4
      %v1708 = vmax.f32 %v1141, %v1707
      %v1709 = vrot.slane %v1708, 2
      %v1710 = vmax.f32 %v1708, %v1709
      %v1711 = vrot.slane %v1710, 1
      %v1712 = vmax.f32 %v1710, %v1711
      %v1713 = vrot.slane %v1142, 4
      %v1714 = vmax.f32 %v1142, %v1713
      %v1715 = vrot.slane %v1714, 2
      %v1716 = vmax.f32 %v1714, %v1715
      %v1717 = vrot.slane %v1716, 1
      %v1718 = vmax.f32 %v1716, %v1717
      %v1719 = vpack.c.bf16 %v1148, %v1148
      %v1720 = vpack.c.bf16 %v1154, %v1154
      %v1721 = vpack.c.bf16 %v1160, %v1160
      %v1722 = vpack.c.bf16 %v1166, %v1166
      %v1723 = vpack.c.bf16 %v1172, %v1172
      %v1724 = vpack.c.bf16 %v1178, %v1178
      %v1725 = vpack.c.bf16 %v1184, %v1184
      %v1726 = vpack.c.bf16 %v1190, %v1190
      %v1727 = vpack.c.bf16 %v1196, %v1196
      %v1728 = vpack.c.bf16 %v1202, %v1202
      %v1729 = vpack.c.bf16 %v1208, %v1208
      %v1730 = vpack.c.bf16 %v1214, %v1214
      %v1731 = vpack.c.bf16 %v1220, %v1220
      %v1732 = vpack.c.bf16 %v1226, %v1226
      %v1733 = vpack.c.bf16 %v1232, %v1232
      %v1734 = vpack.c.bf16 %v1238, %v1238
      %v1735 = vpack.c.bf16 %v1244, %v1244
      %v1736 = vpack.c.bf16 %v1250, %v1250
      %v1737 = vpack.c.bf16 %v1256, %v1256
      %v1738 = vpack.c.bf16 %v1262, %v1262
      %v1739 = vpack.c.bf16 %v1268, %v1268
      %v1740 = vpack.c.bf16 %v1274, %v1274
      %v1741 = vpack.c.bf16 %v1280, %v1280
      %v1742 = vpack.c.bf16 %v1286, %v1286
      %v1743 = vpack.c.bf16 %v1292, %v1292
      %v1744 = vpack.c.bf16 %v1298, %v1298
      %v1745 = vpack.c.bf16 %v1304, %v1304
      %v1746 = vpack.c.bf16 %v1310, %v1310
      %v1747 = vpack.c.bf16 %v1316, %v1316
      %v1748 = vpack.c.bf16 %v1322, %v1322
      %v1749 = vpack.c.bf16 %v1328, %v1328
      %v1750 = vpack.c.bf16 %v1334, %v1334
      %v1751 = vpack.c.bf16 %v1340, %v1340
      %v1752 = vpack.c.bf16 %v1346, %v1346
      %v1753 = vpack.c.bf16 %v1352, %v1352
      %v1754 = vpack.c.bf16 %v1358, %v1358
      %v1755 = vpack.c.bf16 %v1364, %v1364
      %v1756 = vpack.c.bf16 %v1370, %v1370
      %v1757 = vpack.c.bf16 %v1376, %v1376
      %v1758 = vpack.c.bf16 %v1382, %v1382
      %v1759 = vpack.c.bf16 %v1388, %v1388
      %v1760 = vpack.c.bf16 %v1394, %v1394
      %v1761 = vpack.c.bf16 %v1400, %v1400
      %v1762 = vpack.c.bf16 %v1406, %v1406
      %v1763 = vpack.c.bf16 %v1412, %v1412
      %v1764 = vpack.c.bf16 %v1418, %v1418
      %v1765 = vpack.c.bf16 %v1424, %v1424
      %v1766 = vpack.c.bf16 %v1430, %v1430
      %v1767 = vpack.c.bf16 %v1436, %v1436
      %v1768 = vpack.c.bf16 %v1442, %v1442
      %v1769 = vpack.c.bf16 %v1448, %v1448
      %v1770 = vpack.c.bf16 %v1454, %v1454
      %v1771 = vpack.c.bf16 %v1460, %v1460
      %v1772 = vpack.c.bf16 %v1466, %v1466
      %v1773 = vpack.c.bf16 %v1472, %v1472
      %v1774 = vpack.c.bf16 %v1478, %v1478
      %v1775 = vpack.c.bf16 %v1484, %v1484
      %v1776 = vpack.c.bf16 %v1490, %v1490
      %v1777 = vpack.c.bf16 %v1496, %v1496
      %v1778 = vpack.c.bf16 %v1502, %v1502
      %v1779 = vpack.c.bf16 %v1508, %v1508
      %v1780 = vpack.c.bf16 %v1514, %v1514
      %v1781 = vpack.c.bf16 %v1520, %v1520
      %v1782 = vpack.c.bf16 %v1526, %v1526
      %v1783 = vpack.c.bf16 %v1532, %v1532
      %v1784 = vpack.c.bf16 %v1538, %v1538
      %v1785 = vpack.c.bf16 %v1544, %v1544
      %v1786 = vpack.c.bf16 %v1550, %v1550
      %v1787 = vpack.c.bf16 %v1556, %v1556
      %v1788 = vpack.c.bf16 %v1562, %v1562
      %v1789 = vpack.c.bf16 %v1568, %v1568
      %v1790 = vpack.c.bf16 %v1574, %v1574
      %v1791 = vpack.c.bf16 %v1580, %v1580
      %v1792 = vpack.c.bf16 %v1586, %v1586
      %v1793 = vpack.c.bf16 %v1592, %v1592
      %v1794 = vpack.c.bf16 %v1598, %v1598
      %v1795 = vpack.c.bf16 %v1604, %v1604
      %v1796 = vpack.c.bf16 %v1610, %v1610
      %v1797 = vpack.c.bf16 %v1616, %v1616
      %v1798 = vpack.c.bf16 %v1622, %v1622
      %v1799 = vpack.c.bf16 %v1628, %v1628
      %v1800 = vpack.c.bf16 %v1634, %v1634
      %v1801 = vpack.c.bf16 %v1640, %v1640
      %v1802 = vpack.c.bf16 %v1646, %v1646
      %v1803 = vpack.c.bf16 %v1652, %v1652
      %v1804 = vpack.c.bf16 %v1658, %v1658
      %v1805 = vpack.c.bf16 %v1664, %v1664
      %v1806 = vpack.c.bf16 %v1670, %v1670
      %v1807 = vpack.c.bf16 %v1676, %v1676
      %v1808 = vpack.c.bf16 %v1682, %v1682
      %v1809 = vpack.c.bf16 %v1688, %v1688
      %v1810 = vpack.c.bf16 %v1694, %v1694
      %v1811 = vpack.c.bf16 %v1700, %v1700
      %v1812 = vpack.c.bf16 %v1706, %v1706
      %v1813 = vpack.c.bf16 %v1712, %v1712
      %v1814 = vpack.c.bf16 %v1718, %v1718
      %v1911 = vunpack.c.l.b16 %v1719
      %v1912 = vunpack.c.l.b16 %v1720
      %v1913 = vunpack.c.l.b16 %v1721
      %v1914 = vunpack.c.l.b16 %v1722
      %v1915 = vunpack.c.l.b16 %v1723
      %v1916 = vunpack.c.l.b16 %v1724
      %v1917 = vunpack.c.l.b16 %v1725
      %v1918 = vunpack.c.l.b16 %v1726
      %v1919 = vunpack.c.l.b16 %v1727
      %v1920 = vunpack.c.l.b16 %v1728
      %v1921 = vunpack.c.l.b16 %v1729
      %v1922 = vunpack.c.l.b16 %v1730
      %v1923 = vunpack.c.l.b16 %v1731
      %v1924 = vunpack.c.l.b16 %v1732
      %v1925 = vunpack.c.l.b16 %v1733
      %v1926 = vunpack.c.l.b16 %v1734
      %v1927 = vunpack.c.l.b16 %v1735
      %v1928 = vunpack.c.l.b16 %v1736
      %v1929 = vunpack.c.l.b16 %v1737
      %v1930 = vunpack.c.l.b16 %v1738
      %v1931 = vunpack.c.l.b16 %v1739
      %v1932 = vunpack.c.l.b16 %v1740
      %v1933 = vunpack.c.l.b16 %v1741
      %v1934 = vunpack.c.l.b16 %v1742
      %v1935 = vunpack.c.l.b16 %v1743
      %v1936 = vunpack.c.l.b16 %v1744
      %v1937 = vunpack.c.l.b16 %v1745
      %v1938 = vunpack.c.l.b16 %v1746
      %v1939 = vunpack.c.l.b16 %v1747
      %v1940 = vunpack.c.l.b16 %v1748
      %v1941 = vunpack.c.l.b16 %v1749
      %v1942 = vunpack.c.l.b16 %v1750
      %v1943 = vunpack.c.l.b16 %v1751
      %v1944 = vunpack.c.l.b16 %v1752
      %v1945 = vunpack.c.l.b16 %v1753
      %v1946 = vunpack.c.l.b16 %v1754
      %v1947 = vunpack.c.l.b16 %v1755
      %v1948 = vunpack.c.l.b16 %v1756
      %v1949 = vunpack.c.l.b16 %v1757
      %v1950 = vunpack.c.l.b16 %v1758
      %v1951 = vunpack.c.l.b16 %v1759
      %v1952 = vunpack.c.l.b16 %v1760
      %v1953 = vunpack.c.l.b16 %v1761
      %v1954 = vunpack.c.l.b16 %v1762
      %v1955 = vunpack.c.l.b16 %v1763
      %v1956 = vunpack.c.l.b16 %v1764
      %v1957 = vunpack.c.l.b16 %v1765
      %v1958 = vunpack.c.l.b16 %v1766
      %v1959 = vunpack.c.l.b16 %v1767
      %v1960 = vunpack.c.l.b16 %v1768
      %v1961 = vunpack.c.l.b16 %v1769
      %v1962 = vunpack.c.l.b16 %v1770
      %v1963 = vunpack.c.l.b16 %v1771
      %v1964 = vunpack.c.l.b16 %v1772
      %v1965 = vunpack.c.l.b16 %v1773
      %v1966 = vunpack.c.l.b16 %v1774
      %v1967 = vunpack.c.l.b16 %v1775
      %v1968 = vunpack.c.l.b16 %v1776
      %v1969 = vunpack.c.l.b16 %v1777
      %v1970 = vunpack.c.l.b16 %v1778
      %v1971 = vunpack.c.l.b16 %v1779
      %v1972 = vunpack.c.l.b16 %v1780
      %v1973 = vunpack.c.l.b16 %v1781
      %v1974 = vunpack.c.l.b16 %v1782
      %v1975 = vunpack.c.l.b16 %v1783
      %v1976 = vunpack.c.l.b16 %v1784
      %v1977 = vunpack.c.l.b16 %v1785
      %v1978 = vunpack.c.l.b16 %v1786
      %v1979 = vunpack.c.l.b16 %v1787
      %v1980 = vunpack.c.l.b16 %v1788
      %v1981 = vunpack.c.l.b16 %v1789
      %v1982 = vunpack.c.l.b16 %v1790
      %v1983 = vunpack.c.l.b16 %v1791
      %v1984 = vunpack.c.l.b16 %v1792
      %v1985 = vunpack.c.l.b16 %v1793
      %v1986 = vunpack.c.l.b16 %v1794
      %v1987 = vunpack.c.l.b16 %v1795
      %v1988 = vunpack.c.l.b16 %v1796
      %v1989 = vunpack.c.l.b16 %v1797
      %v1990 = vunpack.c.l.b16 %v1798
      %v1991 = vunpack.c.l.b16 %v1799
      %v1992 = vunpack.c.l.b16 %v1800
      %v1993 = vunpack.c.l.b16 %v1801
      %v1994 = vunpack.c.l.b16 %v1802
      %v1995 = vunpack.c.l.b16 %v1803
      %v1996 = vunpack.c.l.b16 %v1804
      %v1997 = vunpack.c.l.b16 %v1805
      %v1998 = vunpack.c.l.b16 %v1806
      %v1999 = vunpack.c.l.b16 %v1807
      %v2000 = vunpack.c.l.b16 %v1808
      %v2001 = vunpack.c.l.b16 %v1809
      %v2002 = vunpack.c.l.b16 %v1810
      %v2003 = vunpack.c.l.b16 %v1811
      %v2004 = vunpack.c.l.b16 %v1812
      %v2005 = vunpack.c.l.b16 %v1813
      %v2006 = vunpack.c.l.b16 %v1814
      %v2007 = vpack.c.b16 %v1911, %v1911
      %v2008 = vpack.c.b16 %v1912, %v1912
      %v2009 = vpack.c.b16 %v1913, %v1913
      %v2010 = vpack.c.b16 %v1914, %v1914
      %v2011 = vpack.c.b16 %v1915, %v1915
      %v2012 = vpack.c.b16 %v1916, %v1916
      %v2013 = vpack.c.b16 %v1917, %v1917
      %v2014 = vpack.c.b16 %v1918, %v1918
      %v2015 = vpack.c.b16 %v1919, %v1919
      %v2016 = vpack.c.b16 %v1920, %v1920
      %v2017 = vpack.c.b16 %v1921, %v1921
      %v2018 = vpack.c.b16 %v1922, %v1922
      %v2019 = vpack.c.b16 %v1923, %v1923
      %v2020 = vpack.c.b16 %v1924, %v1924
      %v2021 = vpack.c.b16 %v1925, %v1925
      %v2022 = vpack.c.b16 %v1926, %v1926
      %v2023 = vpack.c.b16 %v1927, %v1927
      %v2024 = vpack.c.b16 %v1928, %v1928
      %v2025 = vpack.c.b16 %v1929, %v1929
      %v2026 = vpack.c.b16 %v1930, %v1930
      %v2027 = vpack.c.b16 %v1931, %v1931
      %v2028 = vpack.c.b16 %v1932, %v1932
      %v2029 = vpack.c.b16 %v1933, %v1933
      %v2030 = vpack.c.b16 %v1934, %v1934
      %v2031 = vpack.c.b16 %v1935, %v1935
      %v2032 = vpack.c.b16 %v1936, %v1936
      %v2033 = vpack.c.b16 %v1937, %v1937
      %v2034 = vpack.c.b16 %v1938, %v1938
      %v2035 = vpack.c.b16 %v1939, %v1939
      %v2036 = vpack.c.b16 %v1940, %v1940
      %v2037 = vpack.c.b16 %v1941, %v1941
      %v2038 = vpack.c.b16 %v1942, %v1942
      %v2039 = vpack.c.b16 %v1943, %v1943
      %v2040 = vpack.c.b16 %v1944, %v1944
      %v2041 = vpack.c.b16 %v1945, %v1945
      %v2042 = vpack.c.b16 %v1946, %v1946
      %v2043 = vpack.c.b16 %v1947, %v1947
      %v2044 = vpack.c.b16 %v1948, %v1948
      %v2045 = vpack.c.b16 %v1949, %v1949
      %v2046 = vpack.c.b16 %v1950, %v1950
      %v2047 = vpack.c.b16 %v1951, %v1951
      %v2048 = vpack.c.b16 %v1952, %v1952
      %v2049 = vpack.c.b16 %v1953, %v1953
      %v2050 = vpack.c.b16 %v1954, %v1954
      %v2051 = vpack.c.b16 %v1955, %v1955
      %v2052 = vpack.c.b16 %v1956, %v1956
      %v2053 = vpack.c.b16 %v1957, %v1957
      %v2054 = vpack.c.b16 %v1958, %v1958
      %v2055 = vpack.c.b16 %v1959, %v1959
      %v2056 = vpack.c.b16 %v1960, %v1960
      %v2057 = vpack.c.b16 %v1961, %v1961
      %v2058 = vpack.c.b16 %v1962, %v1962
      %v2059 = vpack.c.b16 %v1963, %v1963
      %v2060 = vpack.c.b16 %v1964, %v1964
      %v2061 = vpack.c.b16 %v1965, %v1965
      %v2062 = vpack.c.b16 %v1966, %v1966
      %v2063 = vpack.c.b16 %v1967, %v1967
      %v2064 = vpack.c.b16 %v1968, %v1968
      %v2065 = vpack.c.b16 %v1969, %v1969
      %v2066 = vpack.c.b16 %v1970, %v1970
      %v2067 = vpack.c.b16 %v1971, %v1971
      %v2068 = vpack.c.b16 %v1972, %v1972
      %v2069 = vpack.c.b16 %v1973, %v1973
      %v2070 = vpack.c.b16 %v1974, %v1974
      %v2071 = vpack.c.b16 %v1975, %v1975
      %v2072 = vpack.c.b16 %v1976, %v1976
      %v2073 = vpack.c.b16 %v1977, %v1977
      %v2074 = vpack.c.b16 %v1978, %v1978
      %v2075 = vpack.c.b16 %v1979, %v1979
      %v2076 = vpack.c.b16 %v1980, %v1980
      %v2077 = vpack.c.b16 %v1981, %v1981
      %v2078 = vpack.c.b16 %v1982, %v1982
      %v2079 = vpack.c.b16 %v1983, %v1983
      %v2080 = vpack.c.b16 %v1984, %v1984
      %v2081 = vpack.c.b16 %v1985, %v1985
      %v2082 = vpack.c.b16 %v1986, %v1986
      %v2083 = vpack.c.b16 %v1987, %v1987
      %v2084 = vpack.c.b16 %v1988, %v1988
      %v2085 = vpack.c.b16 %v1989, %v1989
      %v2086 = vpack.c.b16 %v1990, %v1990
      %v2087 = vpack.c.b16 %v1991, %v1991
      %v2088 = vpack.c.b16 %v1992, %v1992
      %v2089 = vpack.c.b16 %v1993, %v1993
      %v2090 = vpack.c.b16 %v1994, %v1994
      %v2091 = vpack.c.b16 %v1995, %v1995
      %v2092 = vpack.c.b16 %v1996, %v1996
      %v2093 = vpack.c.b16 %v1997, %v1997
      %v2094 = vpack.c.b16 %v1998, %v1998
      %v2095 = vpack.c.b16 %v1999, %v1999
      %v2096 = vpack.c.b16 %v2000, %v2000
      %v2097 = vpack.c.b16 %v2001, %v2001
      %v2098 = vpack.c.b16 %v2002, %v2002
      %v2099 = vpack.c.b16 %v2003, %v2003
      %v2100 = vpack.c.b16 %v2004, %v2004
      %v2101 = vpack.c.b16 %v2005, %v2005
      %v2102 = vpack.c.b16 %v2006, %v2006
      %v2103 = vunpack.c.l.b16 %v2007
      %v2104 = vunpack.c.l.b16 %v2008
      %v2105 = vunpack.c.l.b16 %v2009
      %v2106 = vunpack.c.l.b16 %v2010
      %v2107 = vunpack.c.l.b16 %v2011
      %v2108 = vunpack.c.l.b16 %v2012
      %v2109 = vunpack.c.l.b16 %v2013
      %v2110 = vunpack.c.l.b16 %v2014
      %v2111 = vunpack.c.l.b16 %v2015
      %v2112 = vunpack.c.l.b16 %v2016
      %v2113 = vunpack.c.l.b16 %v2017
      %v2114 = vunpack.c.l.b16 %v2018
      %v2115 = vunpack.c.l.b16 %v2019
      %v2116 = vunpack.c.l.b16 %v2020
      %v2117 = vunpack.c.l.b16 %v2021
      %v2118 = vunpack.c.l.b16 %v2022
      %v2119 = vunpack.c.l.b16 %v2023
      %v2120 = vunpack.c.l.b16 %v2024
      %v2121 = vunpack.c.l.b16 %v2025
      %v2122 = vunpack.c.l.b16 %v2026
      %v2123 = vunpack.c.l.b16 %v2027
      %v2124 = vunpack.c.l.b16 %v2028
      %v2125 = vunpack.c.l.b16 %v2029
      %v2126 = vunpack.c.l.b16 %v2030
      %v2127 = vunpack.c.l.b16 %v2031
      %v2128 = vunpack.c.l.b16 %v2032
      %v2129 = vunpack.c.l.b16 %v2033
      %v2130 = vunpack.c.l.b16 %v2034
      %v2131 = vunpack.c.l.b16 %v2035
      %v2132 = vunpack.c.l.b16 %v2036
      %v2133 = vunpack.c.l.b16 %v2037
      %v2134 = vunpack.c.l.b16 %v2038
      %v2135 = vunpack.c.l.b16 %v2039
      %v2136 = vunpack.c.l.b16 %v2040
      %v2137 = vunpack.c.l.b16 %v2041
      %v2138 = vunpack.c.l.b16 %v2042
      %v2139 = vunpack.c.l.b16 %v2043
      %v2140 = vunpack.c.l.b16 %v2044
      %v2141 = vunpack.c.l.b16 %v2045
      %v2142 = vunpack.c.l.b16 %v2046
      %v2143 = vunpack.c.l.b16 %v2047
      %v2144 = vunpack.c.l.b16 %v2048
      %v2145 = vunpack.c.l.b16 %v2049
      %v2146 = vunpack.c.l.b16 %v2050
      %v2147 = vunpack.c.l.b16 %v2051
      %v2148 = vunpack.c.l.b16 %v2052
      %v2149 = vunpack.c.l.b16 %v2053
      %v2150 = vunpack.c.l.b16 %v2054
      %v2151 = vunpack.c.l.b16 %v2055
      %v2152 = vunpack.c.l.b16 %v2056
      %v2153 = vunpack.c.l.b16 %v2057
      %v2154 = vunpack.c.l.b16 %v2058
      %v2155 = vunpack.c.l.b16 %v2059
      %v2156 = vunpack.c.l.b16 %v2060
      %v2157 = vunpack.c.l.b16 %v2061
      %v2158 = vunpack.c.l.b16 %v2062
      %v2159 = vunpack.c.l.b16 %v2063
      %v2160 = vunpack.c.l.b16 %v2064
      %v2161 = vunpack.c.l.b16 %v2065
      %v2162 = vunpack.c.l.b16 %v2066
      %v2163 = vunpack.c.l.b16 %v2067
      %v2164 = vunpack.c.l.b16 %v2068
      %v2165 = vunpack.c.l.b16 %v2069
      %v2166 = vunpack.c.l.b16 %v2070
      %v2167 = vunpack.c.l.b16 %v2071
      %v2168 = vunpack.c.l.b16 %v2072
      %v2169 = vunpack.c.l.b16 %v2073
      %v2170 = vunpack.c.l.b16 %v2074
      %v2171 = vunpack.c.l.b16 %v2075
      %v2172 = vunpack.c.l.b16 %v2076
      %v2173 = vunpack.c.l.b16 %v2077
      %v2174 = vunpack.c.l.b16 %v2078
      %v2175 = vunpack.c.l.b16 %v2079
      %v2176 = vunpack.c.l.b16 %v2080
      %v2177 = vunpack.c.l.b16 %v2081
      %v2178 = vunpack.c.l.b16 %v2082
      %v2179 = vunpack.c.l.b16 %v2083
      %v2180 = vunpack.c.l.b16 %v2084
      %v2181 = vunpack.c.l.b16 %v2085
      %v2182 = vunpack.c.l.b16 %v2086
      %v2183 = vunpack.c.l.b16 %v2087
      %v2184 = vunpack.c.l.b16 %v2088
      %v2185 = vunpack.c.l.b16 %v2089
      %v2186 = vunpack.c.l.b16 %v2090
      %v2187 = vunpack.c.l.b16 %v2091
      %v2188 = vunpack.c.l.b16 %v2092
      %v2189 = vunpack.c.l.b16 %v2093
      %v2190 = vunpack.c.l.b16 %v2094
      %v2191 = vunpack.c.l.b16 %v2095
      %v2192 = vunpack.c.l.b16 %v2096
      %v2193 = vunpack.c.l.b16 %v2097
      %v2194 = vunpack.c.l.b16 %v2098
      %v2195 = vunpack.c.l.b16 %v2099
      %v2196 = vunpack.c.l.b16 %v2100
      %v2197 = vunpack.c.l.b16 %v2101
      %v2198 = vunpack.c.l.b16 %v2102
      %vm2199 = vcmask 1041409
      %v2200 = vsel %vm2199, %v2104, %v2103
      %vm2201 = vcmask 1042434
      %v2202 = vsel %vm2201, %v2105, %v2200
      %vm2203 = vcmask 1043459
      %v2204 = vsel %vm2203, %v2106, %v2202
      %vm2205 = vcmask 1044484
      %v2206 = vsel %vm2205, %v2107, %v2204
      %vm2207 = vcmask 1045509
      %v2208 = vsel %vm2207, %v2108, %v2206
      %vm2209 = vcmask 1046534
      %v2210 = vsel %vm2209, %v2109, %v2208
      %vm2211 = vcmask 1047559
      %v2212 = vsel %vm2211, %v2110, %v2210
      %v2213 = vsel %vm2199, %v2112, %v2111
      %v2214 = vsel %vm2201, %v2113, %v2213
      %v2215 = vsel %vm2203, %v2114, %v2214
      %v2216 = vsel %vm2205, %v2115, %v2215
      %v2217 = vsel %vm2207, %v2116, %v2216
      %v2218 = vsel %vm2209, %v2117, %v2217
      %v2219 = vsel %vm2211, %v2118, %v2218
      %v2220 = vsel %vm2199, %v2120, %v2119
      %v2221 = vsel %vm2201, %v2121, %v2220
      %v2222 = vsel %vm2203, %v2122, %v2221
      %v2223 = vsel %vm2205, %v2123, %v2222
      %v2224 = vsel %vm2207, %v2124, %v2223
      %v2225 = vsel %vm2209, %v2125, %v2224
      %v2226 = vsel %vm2211, %v2126, %v2225
      %v2227 = vsel %vm2199, %v2128, %v2127
      %v2228 = vsel %vm2201, %v2129, %v2227
      %v2229 = vsel %vm2203, %v2130, %v2228
      %v2230 = vsel %vm2205, %v2131, %v2229
      %v2231 = vsel %vm2207, %v2132, %v2230
      %v2232 = vsel %vm2209, %v2133, %v2231
      %v2233 = vsel %vm2211, %v2134, %v2232
      %v2234 = vsel %vm2199, %v2136, %v2135
      %v2235 = vsel %vm2201, %v2137, %v2234
      %v2236 = vsel %vm2203, %v2138, %v2235
      %v2237 = vsel %vm2205, %v2139, %v2236
      %v2238 = vsel %vm2207, %v2140, %v2237
      %v2239 = vsel %vm2209, %v2141, %v2238
      %v2240 = vsel %vm2211, %v2142, %v2239
      %v2241 = vsel %vm2199, %v2144, %v2143
      %v2242 = vsel %vm2201, %v2145, %v2241
      %v2243 = vsel %vm2203, %v2146, %v2242
      %v2244 = vsel %vm2205, %v2147, %v2243
      %v2245 = vsel %vm2207, %v2148, %v2244
      %v2246 = vsel %vm2209, %v2149, %v2245
      %v2247 = vsel %vm2211, %v2150, %v2246
      %v2248 = vsel %vm2199, %v2152, %v2151
      %v2249 = vsel %vm2201, %v2153, %v2248
      %v2250 = vsel %vm2203, %v2154, %v2249
      %v2251 = vsel %vm2205, %v2155, %v2250
      %v2252 = vsel %vm2207, %v2156, %v2251
      %v2253 = vsel %vm2209, %v2157, %v2252
      %v2254 = vsel %vm2211, %v2158, %v2253
      %v2255 = vsel %vm2199, %v2160, %v2159
      %v2256 = vsel %vm2201, %v2161, %v2255
      %v2257 = vsel %vm2203, %v2162, %v2256
      %v2258 = vsel %vm2205, %v2163, %v2257
      %v2259 = vsel %vm2207, %v2164, %v2258
      %v2260 = vsel %vm2209, %v2165, %v2259
      %v2261 = vsel %vm2211, %v2166, %v2260
      %v2262 = vsel %vm2199, %v2168, %v2167
      %v2263 = vsel %vm2201, %v2169, %v2262
      %v2264 = vsel %vm2203, %v2170, %v2263
      %v2265 = vsel %vm2205, %v2171, %v2264
      %v2266 = vsel %vm2207, %v2172, %v2265
      %v2267 = vsel %vm2209, %v2173, %v2266
      %v2268 = vsel %vm2211, %v2174, %v2267
      %v2269 = vsel %vm2199, %v2176, %v2175
      %v2270 = vsel %vm2201, %v2177, %v2269
      %v2271 = vsel %vm2203, %v2178, %v2270
      %v2272 = vsel %vm2205, %v2179, %v2271
      %v2273 = vsel %vm2207, %v2180, %v2272
      %v2274 = vsel %vm2209, %v2181, %v2273
      %v2275 = vsel %vm2211, %v2182, %v2274
      %v2276 = vsel %vm2199, %v2184, %v2183
      %v2277 = vsel %vm2201, %v2185, %v2276
      %v2278 = vsel %vm2203, %v2186, %v2277
      %v2279 = vsel %vm2205, %v2187, %v2278
      %v2280 = vsel %vm2207, %v2188, %v2279
      %v2281 = vsel %vm2209, %v2189, %v2280
      %v2282 = vsel %vm2211, %v2190, %v2281
      %v2283 = vsel %vm2199, %v2192, %v2191
      %v2284 = vsel %vm2201, %v2193, %v2283
      %v2285 = vsel %vm2203, %v2194, %v2284
      %v2286 = vsel %vm2205, %v2195, %v2285
      %v2287 = vsel %vm2207, %v2196, %v2286
      %v2288 = vsel %vm2209, %v2197, %v2287
      %v2289 = vsel %vm2211, %v2198, %v2288
      %v2290 = vpack.c.b16 %v2212, %v2212
      %v2291 = vpack.c.b16 %v2219, %v2219
      %v2292 = vpack.c.b16 %v2226, %v2226
      %v2293 = vpack.c.b16 %v2233, %v2233
      %v2294 = vpack.c.b16 %v2240, %v2240
      %v2295 = vpack.c.b16 %v2247, %v2247
      %v2296 = vpack.c.b16 %v2254, %v2254
      %v2297 = vpack.c.b16 %v2261, %v2261
      %v2298 = vpack.c.b16 %v2268, %v2268
      %v2299 = vpack.c.b16 %v2275, %v2275
      %v2300 = vpack.c.b16 %v2282, %v2282
      %v2301 = vpack.c.b16 %v2289, %v2289
      %2314 = vst [vmem:[%s172] sm:$0xf] %v2290
      %2315 = vst [vmem:[%s172 + $0x4] sm:$0xf] %v2291
      %2316 = vst [vmem:[%s172 + $0x8] sm:$0xf] %v2292
      %2317 = vst [vmem:[%s172 + $0xc] sm:$0xf] %v2293
      %2318 = vst [vmem:[%s172 + $0x10] sm:$0xf] %v2294
      %2319 = vst [vmem:[%s172 + $0x14] sm:$0xf] %v2295
      %2320 = vst [vmem:[%s172 + $0x18] sm:$0xf] %v2296
      %2321 = vst [vmem:[%s172 + $0x1c] sm:$0xf] %v2297
      %2322 = vst [vmem:[%s172 + $0x20] sm:$0xf] %v2298
      %2323 = vst [vmem:[%s172 + $0x24] sm:$0xf] %v2299
      %2324 = vst [vmem:[%s172 + $0x28] sm:$0xf] %v2300
      %2325 = vst [vmem:[%s172 + $0x2c] sm:$0xf] %v2301
      %s2326 = smul.u32 12, %s14
      %p2327 = scmp.lt.s32.totalorder %s2326, 23
      %s2328 = scalar_select %p2327, %s2326, 23
      %s2329 = smul.addr %s2328, 4
      %s2330 = scalar_lea.vmem %s3, %s2329
      // Predicated region
      $region33: #{domain_classifier_forward.4} parent=31 // pred_check
        %p2331 = pneg %p100
      $region34: #{domain_classifier_forward.4} parent=31 // pred_check_branch
        %2333 = sbr.rel (%p2331) target = $region36
      $region35: #{domain_classifier_forward.4} parent=31 // pred_region
        %s2334 = smul.u32 12, %s14
      $region36: #{domain_classifier_forward.4} parent=31 // pred_fallthru
        _
    $region32: #{domain_classifier_forward.4} parent=5 // pred_fallthru
      _
    %p2335 = scmp.le.s32.totalorder 2, %s9
    // Predicated region
    $region37: #{domain_classifier_forward.4} parent=5 // pred_check
      %p2336 = pneg %p2335
    $region38: #{domain_classifier_forward.4} parent=5 // pred_check_branch
      %2338 = sbr.rel (%p2336) target = $region40
    $region39: #{domain_classifier_forward.4} parent=5 // pred_region
      %s2339 = ssub.s32 %s9, 2
      // Predicated region
      $region41: #{domain_classifier_forward.4} parent=39 // pred_check
        %p2340 = pneg %p106
      $region42: #{domain_classifier_forward.4} parent=39 // pred_check_branch
        %2342 = sbr.rel (%p2340) target = $region44
      $region43: #{domain_classifier_forward.4} parent=39 // pred_region
        %s2343 = smul.u32 12, %s15
        %p2344 = scmp.lt.s32.totalorder %s2343, 23
        %s2345 = scalar_select %p2344, %s2343, 23
        %s2346 = smul.addr %s2345, 4
        %s2347 = scalar_lea.vmem %s3, %s2346
      $region44: #{domain_classifier_forward.4} parent=39 // pred_fallthru
        _
    $region40: #{domain_classifier_forward.4} parent=5 // pred_fallthru
      _
  $region6: #{domain_classifier_forward.4} parent=0 // loop_footer
    %s13 = sadd.s32 1, %s9
  $region7: #{domain_classifier_forward.4} parent=0 // loop_footer_branch
    %8 = sbr.rel target = $region3
  $region8: #{domain_classifier_forward.4} parent=0 // loop_exit
    _

// kernel: domain_classifier_forward.5
$region0: #{domain_classifier_forward.5}
  #allocation0 [shape = 'u32[]', space=smem, size = 0x4, offset = 0x4, fixed_abs, tag = 'smem constant byte address 0x4 - core index']
  #allocation1 [shape = 'u32[144,128]{1,0:T(1,128)}', space=vmem, size = 0x12000, scoped, tag = 'internal scratch']
  %s0 = inlined_call_operand.vmem [shape: bf16[32,3456], index: 0, kind: input, shape index: {}]
  %s1 = inlined_call_operand.vmem [shape: bf16[3456,128], index: 1, kind: input, shape index: {}]
  %s2 = inlined_call_operand.vmem [shape: f32[1,128], index: 2, kind: input, shape index: {}]
  %s3 = inlined_call_operand.vmem [shape: bf16[2,128,64], index: 3, kind: input, shape index: {}]
  %s4 = inlined_call_operand.vmem [shape: f32[1,64], index: 4, kind: input, shape index: {}]
  %s5 = inlined_call_operand.vmem [shape: bf16[64,3], index: 5, kind: input, shape index: {}]
  %s6 = inlined_call_operand.vmem [shape: f32[1,3], index: 6, kind: input, shape index: {}]
  %s7 = inlined_call_operand.hbm [shape: f32[2,3], index: 7, kind: output, shape index: {}]
  %s8 = sld [smem:[#allocation0]]
  $region38: #{domain_classifier_forward.5} parent=0
    _
  %s10 = ssub.s32 1, %s8
  %s11 = scalar_select 0, %s10, %s8
  $region1: #{domain_classifier_forward.5} parent=0
    #allocation2 [shape = 'u8[1024]{0}', space=vmem, size = 0x400, scoped, tag = 'output window, operand 0, single buffered']
    #allocation3 [shape = 's32[1]{0}', space=sflag, size = 0x4, scoped, tag = 'scoped memory for domain_classifier_forward.5']
    %12 = vsyncpa [#allocation3], 0
    // Predicated region
    $region2: #{domain_classifier_forward.5} parent=1 // pred_check
      _
    $region3: #{domain_classifier_forward.5} parent=1 // pred_check_branch
      %14 = sbr.rel (0) target = $region5
    $region4: #{domain_classifier_forward.5} parent=1 // pred_region
      _
    $region5: #{domain_classifier_forward.5} parent=1 // pred_fallthru
      _
    // Predicated region
    $region6: #{domain_classifier_forward.5} parent=1 // pred_check
      _
    $region7: #{domain_classifier_forward.5} parent=1 // pred_check_branch
      %16 = sbr.rel (0) target = $region9
    $region8: #{domain_classifier_forward.5} parent=1 // pred_region
      _
    $region9: #{domain_classifier_forward.5} parent=1 // pred_fallthru
      _
    // Predicated region
    $region10: #{domain_classifier_forward.5} parent=1 // pred_check
      _
    $region11: #{domain_classifier_forward.5} parent=1 // pred_check_branch
      %18 = sbr.rel (0) target = $region13
    $region12: #{domain_classifier_forward.5} parent=1 // pred_region
      _
    $region13: #{domain_classifier_forward.5} parent=1 // pred_fallthru
      _
    // Predicated region
    $region14: #{domain_classifier_forward.5} parent=1 // pred_check
      _
    $region15: #{domain_classifier_forward.5} parent=1 // pred_check_branch
      %20 = sbr.rel (0) target = $region17
    $region16: #{domain_classifier_forward.5} parent=1 // pred_region
      _
    $region17: #{domain_classifier_forward.5} parent=1 // pred_fallthru
      _
    // Predicated region
    $region18: #{domain_classifier_forward.5} parent=1 // pred_check
      _
    $region19: #{domain_classifier_forward.5} parent=1 // pred_check_branch
      %22 = sbr.rel (0) target = $region21
    $region20: #{domain_classifier_forward.5} parent=1 // pred_region
      _
    $region21: #{domain_classifier_forward.5} parent=1 // pred_fallthru
      _
    // Predicated region
    $region22: #{domain_classifier_forward.5} parent=1 // pred_check
      _
    $region23: #{domain_classifier_forward.5} parent=1 // pred_check_branch
      %24 = sbr.rel (0) target = $region25
    $region24: #{domain_classifier_forward.5} parent=1 // pred_region
      _
    $region25: #{domain_classifier_forward.5} parent=1 // pred_fallthru
      _
    // Predicated region
    $region26: #{domain_classifier_forward.5} parent=1 // pred_check
      _
    $region27: #{domain_classifier_forward.5} parent=1 // pred_check_branch
      %26 = sbr.rel (0) target = $region29
    $region28: #{domain_classifier_forward.5} parent=1 // pred_region
      _
    $region29: #{domain_classifier_forward.5} parent=1 // pred_fallthru
      _
    %v28 = vld [vmem:[%s0] sm:$0xff]
    %v29 = vld [vmem:[%s0 + $0x8] sm:$0xff]
    %v30 = vld [vmem:[%s0 + $0x10] sm:$0xff]
    %v31 = vld [vmem:[%s0 + $0x18] sm:$0xff]
    %v32 = vld [vmem:[%s0 + $0x20] sm:$0xff]
    %v33 = vld [vmem:[%s0 + $0x28] sm:$0xff]
    %v34 = vld [vmem:[%s0 + $0x30] sm:$0xff]
    %v35 = vld [vmem:[%s0 + $0x38] sm:$0xff]
    %v36 = vld [vmem:[%s0 + $0x40] sm:$0xff]
    %v37 = vld [vmem:[%s0 + $0x48] sm:$0xff]
    %v38 = vld [vmem:[%s0 + $0x50] sm:$0xff]
    %v39 = vld [vmem:[%s0 + $0x58] sm:$0xff]
    %v40 = vld [vmem:[%s0 + $0x60] sm:$0xff]
    %v41 = vld [vmem:[%s0 + $0x68] sm:$0xf]
    %v42 = vld [vmem:[%s0 + $0x6c] sm:$0xff]
    %v43 = vld [vmem:[%s0 + $0x74] sm:$0xff]
    %v44 = vld [vmem:[%s0 + $0x7c] sm:$0xff]
    %v45 = vld [vmem:[%s0 + $0x84] sm:$0xff]
    %v46 = vld [vmem:[%s0 + $0x8c] sm:$0xff]
    %v47 = vld [vmem:[%s0 + $0x94] sm:$0xff]
    %v48 = vld [vmem:[%s0 + $0x9c] sm:$0xff]
    %v49 = vld [vmem:[%s0 + $0xa4] sm:$0xff]
    %v50 = vld [vmem:[%s0 + $0xac] sm:$0xff]
    %v51 = vld [vmem:[%s0 + $0xb4] sm:$0xff]
    %v52 = vld [vmem:[%s0 + $0xbc] sm:$0xff]
    %v53 = vld [vmem:[%s0 + $0xc4] sm:$0xff]
    %v54 = vld [vmem:[%s0 + $0xcc] sm:$0xff]
    %v55 = vld [vmem:[%s0 + $0xd4] sm:$0xf]
    %v56 = vld [vmem:[%s0 + $0xd8] sm:$0xff]
    %v57 = vld [vmem:[%s0 + $0xe0] sm:$0xff]
    %v58 = vld [vmem:[%s0 + $0xe8] sm:$0xff]
    %v59 = vld [vmem:[%s0 + $0xf0] sm:$0xff]
    %v60 = vld [vmem:[%s0 + $0xf8] sm:$0xff]
    %v61 = vld [vmem:[%s0 + $0x100] sm:$0xff]
    %v62 = vld [vmem:[%s0 + $0x108] sm:$0xff]
    %v63 = vld [vmem:[%s0 + $0x110] sm:$0xff]
    %v64 = vld [vmem:[%s0 + $0x118] sm:$0xff]
    %v65 = vld [vmem:[%s0 + $0x120] sm:$0xff]
    %v66 = vld [vmem:[%s0 + $0x128] sm:$0xff]
    %v67 = vld [vmem:[%s0 + $0x130] sm:$0xff]
    %v68 = vld [vmem:[%s0 + $0x138] sm:$0xff]
    %v69 = vld [vmem:[%s0 + $0x140] sm:$0xf]
    %v70 = vld [vmem:[%s0 + $0x144] sm:$0xff]
    %v71 = vld [vmem:[%s0 + $0x14c] sm:$0xff]
    %v72 = vld [vmem:[%s0 + $0x154] sm:$0xff]
    %v73 = vld [vmem:[%s0 + $0x15c] sm:$0xff]
    %v74 = vld [vmem:[%s0 + $0x164] sm:$0xff]
    %v75 = vld [vmem:[%s0 + $0x16c] sm:$0xff]
    %v76 = vld [vmem:[%s0 + $0x174] sm:$0xff]
    %v77 = vld [vmem:[%s0 + $0x17c] sm:$0xff]
    %v78 = vld [vmem:[%s0 + $0x184] sm:$0xff]
    %v79 = vld [vmem:[%s0 + $0x18c] sm:$0xff]
    %v80 = vld [vmem:[%s0 + $0x194] sm:$0xff]
    %v81 = vld [vmem:[%s0 + $0x19c] sm:$0xff]
    %v82 = vld [vmem:[%s0 + $0x1a4] sm:$0xff]
    %v83 = vld [vmem:[%s0 + $0x1ac] sm:$0xf]
    %v84 = vld [vmem:[%s1] sm:$0xf]
    %v85 = vld [vmem:[%s1 + $0x4] sm:$0xf]
    %v86 = vld [vmem:[%s1 + $0x8] sm:$0xf]
    %v87 = vld [vmem:[%s1 + $0xc] sm:$0xf]
    %v88 = vld [vmem:[%s1 + $0x10] sm:$0xf]
    %v89 = vld [vmem:[%s1 + $0x14] sm:$0xf]
    %v90 = vld [vmem:[%s1 + $0x18] sm:$0xf]
    %v91 = vld [vmem:[%s1 + $0x1c] sm:$0xf]
    %v92 = vld [vmem:[%s1 + $0x20] sm:$0xf]
    %v93 = vld [vmem:[%s1 + $0x24] sm:$0xf]
    %v94 = vld [vmem:[%s1 + $0x28] sm:$0xf]
    %v95 = vld [vmem:[%s1 + $0x2c] sm:$0xf]
    %v96 = vld [vmem:[%s1 + $0x30] sm:$0xf]
    %v97 = vld [vmem:[%s1 + $0x34] sm:$0xf]
    %v98 = vld [vmem:[%s1 + $0x38] sm:$0xf]
    %v99 = vld [vmem:[%s1 + $0x3c] sm:$0xf]
    %v100 = vld [vmem:[%s1 + $0x40] sm:$0xf]
    %v101 = vld [vmem:[%s1 + $0x44] sm:$0xf]
    %v102 = vld [vmem:[%s1 + $0x48] sm:$0xf]
    %v103 = vld [vmem:[%s1 + $0x4c] sm:$0xf]
    %v104 = vld [vmem:[%s1 + $0x50] sm:$0xf]
    %v105 = vld [vmem:[%s1 + $0x54] sm:$0xf]
    %v106 = vld [vmem:[%s1 + $0x58] sm:$0xf]
    %v107 = vld [vmem:[%s1 + $0x5c] sm:$0xf]
    %v108 = vld [vmem:[%s1 + $0x60] sm:$0xf]
    %v109 = vld [vmem:[%s1 + $0x64] sm:$0xf]
    %v110 = vld [vmem:[%s1 + $0x68] sm:$0xf]
    %v111 = vld [vmem:[%s1 + $0x6c] sm:$0xf]
    %v112 = vld [vmem:[%s1 + $0x70] sm:$0xf]
    %v113 = vld [vmem:[%s1 + $0x74] sm:$0xf]
    %v114 = vld [vmem:[%s1 + $0x78] sm:$0xf]
    %v115 = vld [vmem:[%s1 + $0x7c] sm:$0xf]
    %v116 = vld [vmem:[%s1 + $0x80] sm:$0xf]
    %v117 = vld [vmem:[%s1 + $0x84] sm:$0xf]
    %v118 = vld [vmem:[%s1 + $0x88] sm:$0xf]
    %v119 = vld [vmem:[%s1 + $0x8c] sm:$0xf]
    %v120 = vld [vmem:[%s1 + $0x90] sm:$0xf]
    %v121 = vld [vmem:[%s1 + $0x94] sm:$0xf]
    %v122 = vld [vmem:[%s1 + $0x98] sm:$0xf]
    %v123 = vld [vmem:[%s1 + $0x9c] sm:$0xf]
    %v124 = vld [vmem:[%s1 + $0xa0] sm:$0xf]
    %v125 = vld [vmem:[%s1 + $0xa4] sm:$0xf]
    %v126 = vld [vmem:[%s1 + $0xa8] sm:$0xf]
    %v127 = vld [vmem:[%s1 + $0xac] sm:$0xf]
    %v128 = vld [vmem:[%s1 + $0xb0] sm:$0xf]
    %v129 = vld [vmem:[%s1 + $0xb4] sm:$0xf]
    %v130 = vld [vmem:[%s1 + $0xb8] sm:$0xf]
    %v131 = vld [vmem:[%s1 + $0xbc] sm:$0xf]
    %v132 = vld [vmem:[%s1 + $0xc0] sm:$0xf]
    %v133 = vld [vmem:[%s1 + $0xc4] sm:$0xf]
    %v134 = vld [vmem:[%s1 + $0xc8] sm:$0xf]
    %v135 = vld [vmem:[%s1 + $0xcc] sm:$0xf]
    %v136 = vld [vmem:[%s1 + $0xd0] sm:$0xf]
    %v137 = vld [vmem:[%s1 + $0xd4] sm:$0xf]
    %v138 = vld [vmem:[%s1 + $0xd8] sm:$0xf]
    %v139 = vld [vmem:[%s1 + $0xdc] sm:$0xf]
    %v140 = vld [vmem:[%s1 + $0xe0] sm:$0xf]
    %v141 = vld [vmem:[%s1 + $0xe4] sm:$0xf]
    %v142 = vld [vmem:[%s1 + $0xe8] sm:$0xf]
    %v143 = vld [vmem:[%s1 + $0xec] sm:$0xf]
    %v144 = vld [vmem:[%s1 + $0xf0] sm:$0xf]
    %v145 = vld [vmem:[%s1 + $0xf4] sm:$0xf]
    %v146 = vld [vmem:[%s1 + $0xf8] sm:$0xf]
    %v147 = vld [vmem:[%s1 + $0xfc] sm:$0xf]
    %v148 = vld [vmem:[%s1 + $0x100] sm:$0xf]
    %v149 = vld [vmem:[%s1 + $0x104] sm:$0xf]
    %v150 = vld [vmem:[%s1 + $0x108] sm:$0xf]
    %v151 = vld [vmem:[%s1 + $0x10c] sm:$0xf]
    %v152 = vld [vmem:[%s1 + $0x110] sm:$0xf]
    %v153 = vld [vmem:[%s1 + $0x114] sm:$0xf]
    %v154 = vld [vmem:[%s1 + $0x118] sm:$0xf]
    %v155 = vld [vmem:[%s1 + $0x11c] sm:$0xf]
    %v156 = vld [vmem:[%s1 + $0x120] sm:$0xf]
    %v157 = vld [vmem:[%s1 + $0x124] sm:$0xf]
    %v158 = vld [vmem:[%s1 + $0x128] sm:$0xf]
    %v159 = vld [vmem:[%s1 + $0x12c] sm:$0xf]
    %v160 = vld [vmem:[%s1 + $0x130] sm:$0xf]
    %v161 = vld [vmem:[%s1 + $0x134] sm:$0xf]
    %v162 = vld [vmem:[%s1 + $0x138] sm:$0xf]
    %v163 = vld [vmem:[%s1 + $0x13c] sm:$0xf]
    %v164 = vld [vmem:[%s1 + $0x140] sm:$0xf]
    %v165 = vld [vmem:[%s1 + $0x144] sm:$0xf]
    %v166 = vld [vmem:[%s1 + $0x148] sm:$0xf]
    %v167 = vld [vmem:[%s1 + $0x14c] sm:$0xf]
    %v168 = vld [vmem:[%s1 + $0x150] sm:$0xf]
    %v169 = vld [vmem:[%s1 + $0x154] sm:$0xf]
    %v170 = vld [vmem:[%s1 + $0x158] sm:$0xf]
    %v171 = vld [vmem:[%s1 + $0x15c] sm:$0xf]
    %v172 = vld [vmem:[%s1 + $0x160] sm:$0xf]
    %v173 = vld [vmem:[%s1 + $0x164] sm:$0xf]
    %v174 = vld [vmem:[%s1 + $0x168] sm:$0xf]
    %v175 = vld [vmem:[%s1 + $0x16c] sm:$0xf]
    %v176 = vld [vmem:[%s1 + $0x170] sm:$0xf]
    %v177 = vld [vmem:[%s1 + $0x174] sm:$0xf]
    %v178 = vld [vmem:[%s1 + $0x178] sm:$0xf]
    %v179 = vld [vmem:[%s1 + $0x17c] sm:$0xf]
    %v180 = vld [vmem:[%s1 + $0x180] sm:$0xf]
    %v181 = vld [vmem:[%s1 + $0x184] sm:$0xf]
    %v182 = vld [vmem:[%s1 + $0x188] sm:$0xf]
    %v183 = vld [vmem:[%s1 + $0x18c] sm:$0xf]
    %v184 = vld [vmem:[%s1 + $0x190] sm:$0xf]
    %v185 = vld [vmem:[%s1 + $0x194] sm:$0xf]
    %v186 = vld [vmem:[%s1 + $0x198] sm:$0xf]
    %v187 = vld [vmem:[%s1 + $0x19c] sm:$0xf]
    %v188 = vld [vmem:[%s1 + $0x1a0] sm:$0xf]
    %v189 = vld [vmem:[%s1 + $0x1a4] sm:$0xf]
    %v190 = vld [vmem:[%s1 + $0x1a8] sm:$0xf]
    %v191 = vld [vmem:[%s1 + $0x1ac] sm:$0xf]
    %v192 = vld [vmem:[%s1 + $0x1b0] sm:$0xf]
    %v193 = vld [vmem:[%s1 + $0x1b4] sm:$0xf]
    %v194 = vld [vmem:[%s1 + $0x1b8] sm:$0xf]
    %v195 = vld [vmem:[%s1 + $0x1bc] sm:$0xf]
    %v196 = vld [vmem:[%s1 + $0x1c0] sm:$0xf]
    %v197 = vld [vmem:[%s1 + $0x1c4] sm:$0xf]
    %v198 = vld [vmem:[%s1 + $0x1c8] sm:$0xf]
    %v199 = vld [vmem:[%s1 + $0x1cc] sm:$0xf]
    %v200 = vld [vmem:[%s1 + $0x1d0] sm:$0xf]
    %v201 = vld [vmem:[%s1 + $0x1d4] sm:$0xf]
    %v202 = vld [vmem:[%s1 + $0x1d8] sm:$0xf]
    %v203 = vld [vmem:[%s1 + $0x1dc] sm:$0xf]
    %v204 = vld [vmem:[%s1 + $0x1e0] sm:$0xf]
    %v205 = vld [vmem:[%s1 + $0x1e4] sm:$0xf]
    %v206 = vld [vmem:[%s1 + $0x1e8] sm:$0xf]
    %v207 = vld [vmem:[%s1 + $0x1ec] sm:$0xf]
    %v208 = vld [vmem:[%s1 + $0x1f0] sm:$0xf]
    %v209 = vld [vmem:[%s1 + $0x1f4] sm:$0xf]
    %v210 = vld [vmem:[%s1 + $0x1f8] sm:$0xf]
    %v211 = vld [vmem:[%s1 + $0x1fc] sm:$0xf]
    %v212 = vld [vmem:[%s1 + $0x200] sm:$0xf]
    %v213 = vld [vmem:[%s1 + $0x204] sm:$0xf]
    %v214 = vld [vmem:[%s1 + $0x208] sm:$0xf]
    %v215 = vld [vmem:[%s1 + $0x20c] sm:$0xf]
    %v216 = vld [vmem:[%s1 + $0x210] sm:$0xf]
    %v217 = vld [vmem:[%s1 + $0x214] sm:$0xf]
    %v218 = vld [vmem:[%s1 + $0x218] sm:$0xf]
    %v219 = vld [vmem:[%s1 + $0x21c] sm:$0xf]
    %v220 = vld [vmem:[%s1 + $0x220] sm:$0xf]
    %v221 = vld [vmem:[%s1 + $0x224] sm:$0xf]
    %v222 = vld [vmem:[%s1 + $0x228] sm:$0xf]
    %v223 = vld [vmem:[%s1 + $0x22c] sm:$0xf]
    %v224 = vld [vmem:[%s1 + $0x230] sm:$0xf]
    %v225 = vld [vmem:[%s1 + $0x234] sm:$0xf]
    %v226 = vld [vmem:[%s1 + $0x238] sm:$0xf]
    %v227 = vld [vmem:[%s1 + $0x23c] sm:$0xf]
    %v228 = vld [vmem:[%s1 + $0x240] sm:$0xf]
    %v229 = vld [vmem:[%s1 + $0x244] sm:$0xf]
    %v230 = vld [vmem:[%s1 + $0x248] sm:$0xf]
    %v231 = vld [vmem:[%s1 + $0x24c] sm:$0xf]
    %v232 = vld [vmem:[%s1 + $0x250] sm:$0xf]
    %v233 = vld [vmem:[%s1 + $0x254] sm:$0xf]
    %v234 = vld [vmem:[%s1 + $0x258] sm:$0xf]
    %v235 = vld [vmem:[%s1 + $0x25c] sm:$0xf]
    %v236 = vld [vmem:[%s1 + $0x260] sm:$0xf]
    %v237 = vld [vmem:[%s1 + $0x264] sm:$0xf]
    %v238 = vld [vmem:[%s1 + $0x268] sm:$0xf]
    %v239 = vld [vmem:[%s1 + $0x26c] sm:$0xf]
    %v240 = vld [vmem:[%s1 + $0x270] sm:$0xf]
    %v241 = vld [vmem:[%s1 + $0x274] sm:$0xf]
    %v242 = vld [vmem:[%s1 + $0x278] sm:$0xf]
    %v243 = vld [vmem:[%s1 + $0x27c] sm:$0xf]
    %v244 = vld [vmem:[%s1 + $0x280] sm:$0xf]
    %v245 = vld [vmem:[%s1 + $0x284] sm:$0xf]
    %v246 = vld [vmem:[%s1 + $0x288] sm:$0xf]
    %v247 = vld [vmem:[%s1 + $0x28c] sm:$0xf]
    %v248 = vld [vmem:[%s1 + $0x290] sm:$0xf]
    %v249 = vld [vmem:[%s1 + $0x294] sm:$0xf]
    %v250 = vld [vmem:[%s1 + $0x298] sm:$0xf]
    %v251 = vld [vmem:[%s1 + $0x29c] sm:$0xf]
    %v252 = vld [vmem:[%s1 + $0x2a0] sm:$0xf]
    %v253 = vld [vmem:[%s1 + $0x2a4] sm:$0xf]
    %v254 = vld [vmem:[%s1 + $0x2a8] sm:$0xf]
    %v255 = vld [vmem:[%s1 + $0x2ac] sm:$0xf]
    %v256 = vld [vmem:[%s1 + $0x2b0] sm:$0xf]
    %v257 = vld [vmem:[%s1 + $0x2b4] sm:$0xf]
    %v258 = vld [vmem:[%s1 + $0x2b8] sm:$0xf]
    %v259 = vld [vmem:[%s1 + $0x2bc] sm:$0xf]
    %v260 = vld [vmem:[%s1 + $0x2c0] sm:$0xf]
    %v261 = vld [vmem:[%s1 + $0x2c4] sm:$0xf]
    %v262 = vld [vmem:[%s1 + $0x2c8] sm:$0xf]
    %v263 = vld [vmem:[%s1 + $0x2cc] sm:$0xf]
    %v264 = vld [vmem:[%s1 + $0x2d0] sm:$0xf]
    %v265 = vld [vmem:[%s1 + $0x2d4] sm:$0xf]
    %v266 = vld [vmem:[%s1 + $0x2d8] sm:$0xf]
    %v267 = vld [vmem:[%s1 + $0x2dc] sm:$0xf]
    %v268 = vld [vmem:[%s1 + $0x2e0] sm:$0xf]
    %v269 = vld [vmem:[%s1 + $0x2e4] sm:$0xf]
    %v270 = vld [vmem:[%s1 + $0x2e8] sm:$0xf]
    %v271 = vld [vmem:[%s1 + $0x2ec] sm:$0xf]
    %v272 = vld [vmem:[%s1 + $0x2f0] sm:$0xf]
    %v273 = vld [vmem:[%s1 + $0x2f4] sm:$0xf]
    %v274 = vld [vmem:[%s1 + $0x2f8] sm:$0xf]
    %v275 = vld [vmem:[%s1 + $0x2fc] sm:$0xf]
    %v276 = vld [vmem:[%s1 + $0x300] sm:$0xf]
    %v277 = vld [vmem:[%s1 + $0x304] sm:$0xf]
    %v278 = vld [vmem:[%s1 + $0x308] sm:$0xf]
    %v279 = vld [vmem:[%s1 + $0x30c] sm:$0xf]
    %v280 = vld [vmem:[%s1 + $0x310] sm:$0xf]
    %v281 = vld [vmem:[%s1 + $0x314] sm:$0xf]
    %v282 = vld [vmem:[%s1 + $0x318] sm:$0xf]
    %v283 = vld [vmem:[%s1 + $0x31c] sm:$0xf]
    %v284 = vld [vmem:[%s1 + $0x320] sm:$0xf]
    %v285 = vld [vmem:[%s1 + $0x324] sm:$0xf]
    %v286 = vld [vmem:[%s1 + $0x328] sm:$0xf]
    %v287 = vld [vmem:[%s1 + $0x32c] sm:$0xf]
    %v288 = vld [vmem:[%s1 + $0x330] sm:$0xf]
    %v289 = vld [vmem:[%s1 + $0x334] sm:$0xf]
    %v290 = vld [vmem:[%s1 + $0x338] sm:$0xf]
    %v291 = vld [vmem:[%s1 + $0x33c] sm:$0xf]
    %v292 = vld [vmem:[%s1 + $0x340] sm:$0xf]
    %v293 = vld [vmem:[%s1 + $0x344] sm:$0xf]
    %v294 = vld [vmem:[%s1 + $0x348] sm:$0xf]
    %v295 = vld [vmem:[%s1 + $0x34c] sm:$0xf]
    %v296 = vld [vmem:[%s1 + $0x350] sm:$0xf]
    %v297 = vld [vmem:[%s1 + $0x354] sm:$0xf]
    %v298 = vld [vmem:[%s1 + $0x358] sm:$0xf]
    %v299 = vld [vmem:[%s1 + $0x35c] sm:$0xf]
    %v300 = vld [vmem:[%s1 + $0x360] sm:$0xf]
    %v301 = vld [vmem:[%s1 + $0x364] sm:$0xf]
    %v302 = vld [vmem:[%s1 + $0x368] sm:$0xf]
    %v303 = vld [vmem:[%s1 + $0x36c] sm:$0xf]
    %v304 = vld [vmem:[%s1 + $0x370] sm:$0xf]
    %v305 = vld [vmem:[%s1 + $0x374] sm:$0xf]
    %v306 = vld [vmem:[%s1 + $0x378] sm:$0xf]
    %v307 = vld [vmem:[%s1 + $0x37c] sm:$0xf]
    %v308 = vld [vmem:[%s1 + $0x380] sm:$0xf]
    %v309 = vld [vmem:[%s1 + $0x384] sm:$0xf]
    %v310 = vld [vmem:[%s1 + $0x388] sm:$0xf]
    %v311 = vld [vmem:[%s1 + $0x38c] sm:$0xf]
    %v312 = vld [vmem:[%s1 + $0x390] sm:$0xf]
    %v313 = vld [vmem:[%s1 + $0x394] sm:$0xf]
    %v314 = vld [vmem:[%s1 + $0x398] sm:$0xf]
    %v315 = vld [vmem:[%s1 + $0x39c] sm:$0xf]
    %v316 = vld [vmem:[%s1 + $0x3a0] sm:$0xf]
    %v317 = vld [vmem:[%s1 + $0x3a4] sm:$0xf]
    %v318 = vld [vmem:[%s1 + $0x3a8] sm:$0xf]
    %v319 = vld [vmem:[%s1 + $0x3ac] sm:$0xf]
    %v320 = vld [vmem:[%s1 + $0x3b0] sm:$0xf]
    %v321 = vld [vmem:[%s1 + $0x3b4] sm:$0xf]
    %v322 = vld [vmem:[%s1 + $0x3b8] sm:$0xf]
    %v323 = vld [vmem:[%s1 + $0x3bc] sm:$0xf]
    %v324 = vld [vmem:[%s1 + $0x3c0] sm:$0xf]
    %v325 = vld [vmem:[%s1 + $0x3c4] sm:$0xf]
    %v326 = vld [vmem:[%s1 + $0x3c8] sm:$0xf]
    %v327 = vld [vmem:[%s1 + $0x3cc] sm:$0xf]
    %v328 = vld [vmem:[%s1 + $0x3d0] sm:$0xf]
    %v329 = vld [vmem:[%s1 + $0x3d4] sm:$0xf]
    %v330 = vld [vmem:[%s1 + $0x3d8] sm:$0xf]
    %v331 = vld [vmem:[%s1 + $0x3dc] sm:$0xf]
    %v332 = vld [vmem:[%s1 + $0x3e0] sm:$0xf]
    %v333 = vld [vmem:[%s1 + $0x3e4] sm:$0xf]
    %v334 = vld [vmem:[%s1 + $0x3e8] sm:$0xf]
    %v335 = vld [vmem:[%s1 + $0x3ec] sm:$0xf]
    %v336 = vld [vmem:[%s1 + $0x3f0] sm:$0xf]
    %v337 = vld [vmem:[%s1 + $0x3f4] sm:$0xf]
    %v338 = vld [vmem:[%s1 + $0x3f8] sm:$0xf]
    %v339 = vld [vmem:[%s1 + $0x3fc] sm:$0xf]
    %v340 = vld [vmem:[%s1 + $0x400] sm:$0xf]
    %v341 = vld [vmem:[%s1 + $0x404] sm:$0xf]
    %v342 = vld [vmem:[%s1 + $0x408] sm:$0xf]
    %v343 = vld [vmem:[%s1 + $0x40c] sm:$0xf]
    %v344 = vld [vmem:[%s1 + $0x410] sm:$0xf]
    %v345 = vld [vmem:[%s1 + $0x414] sm:$0xf]
    %v346 = vld [vmem:[%s1 + $0x418] sm:$0xf]
    %v347 = vld [vmem:[%s1 + $0x41c] sm:$0xf]
    %v348 = vld [vmem:[%s1 + $0x420] sm:$0xf]
    %v349 = vld [vmem:[%s1 + $0x424] sm:$0xf]
    %v350 = vld [vmem:[%s1 + $0x428] sm:$0xf]
    %v351 = vld [vmem:[%s1 + $0x42c] sm:$0xf]
    %v352 = vld [vmem:[%s1 + $0x430] sm:$0xf]
    %v353 = vld [vmem:[%s1 + $0x434] sm:$0xf]
    %v354 = vld [vmem:[%s1 + $0x438] sm:$0xf]
    %v355 = vld [vmem:[%s1 + $0x43c] sm:$0xf]
    %v356 = vld [vmem:[%s1 + $0x440] sm:$0xf]
    %v357 = vld [vmem:[%s1 + $0x444] sm:$0xf]
    %v358 = vld [vmem:[%s1 + $0x448] sm:$0xf]
    %v359 = vld [vmem:[%s1 + $0x44c] sm:$0xf]
    %v360 = vld [vmem:[%s1 + $0x450] sm:$0xf]
    %v361 = vld [vmem:[%s1 + $0x454] sm:$0xf]
    %v362 = vld [vmem:[%s1 + $0x458] sm:$0xf]
    %v363 = vld [vmem:[%s1 + $0x45c] sm:$0xf]
    %v364 = vld [vmem:[%s1 + $0x460] sm:$0xf]
    %v365 = vld [vmem:[%s1 + $0x464] sm:$0xf]
    %v366 = vld [vmem:[%s1 + $0x468] sm:$0xf]
    %v367 = vld [vmem:[%s1 + $0x46c] sm:$0xf]
    %v368 = vld [vmem:[%s1 + $0x470] sm:$0xf]
    %v369 = vld [vmem:[%s1 + $0x474] sm:$0xf]
    %v370 = vld [vmem:[%s1 + $0x478] sm:$0xf]
    %v371 = vld [vmem:[%s1 + $0x47c] sm:$0xf]
    %v372 = vld [vmem:[%s1 + $0x480] sm:$0xf]
    %v373 = vld [vmem:[%s1 + $0x484] sm:$0xf]
    %v374 = vld [vmem:[%s1 + $0x488] sm:$0xf]
    %v375 = vld [vmem:[%s1 + $0x48c] sm:$0xf]
    %v376 = vld [vmem:[%s1 + $0x490] sm:$0xf]
    %v377 = vld [vmem:[%s1 + $0x494] sm:$0xf]
    %v378 = vld [vmem:[%s1 + $0x498] sm:$0xf]
    %v379 = vld [vmem:[%s1 + $0x49c] sm:$0xf]
    %v380 = vld [vmem:[%s1 + $0x4a0] sm:$0xf]
    %v381 = vld [vmem:[%s1 + $0x4a4] sm:$0xf]
    %v382 = vld [vmem:[%s1 + $0x4a8] sm:$0xf]
    %v383 = vld [vmem:[%s1 + $0x4ac] sm:$0xf]
    %v384 = vld [vmem:[%s1 + $0x4b0] sm:$0xf]
    %v385 = vld [vmem:[%s1 + $0x4b4] sm:$0xf]
    %v386 = vld [vmem:[%s1 + $0x4b8] sm:$0xf]
    %v387 = vld [vmem:[%s1 + $0x4bc] sm:$0xf]
    %v388 = vld [vmem:[%s1 + $0x4c0] sm:$0xf]
    %v389 = vld [vmem:[%s1 + $0x4c4] sm:$0xf]
    %v390 = vld [vmem:[%s1 + $0x4c8] sm:$0xf]
    %v391 = vld [vmem:[%s1 + $0x4cc] sm:$0xf]
    %v392 = vld [vmem:[%s1 + $0x4d0] sm:$0xf]
    %v393 = vld [vmem:[%s1 + $0x4d4] sm:$0xf]
    %v394 = vld [vmem:[%s1 + $0x4d8] sm:$0xf]
    %v395 = vld [vmem:[%s1 + $0x4dc] sm:$0xf]
    %v396 = vld [vmem:[%s1 + $0x4e0] sm:$0xf]
    %v397 = vld [vmem:[%s1 + $0x4e4] sm:$0xf]
    %v398 = vld [vmem:[%s1 + $0x4e8] sm:$0xf]
    %v399 = vld [vmem:[%s1 + $0x4ec] sm:$0xf]
    %v400 = vld [vmem:[%s1 + $0x4f0] sm:$0xf]
    %v401 = vld [vmem:[%s1 + $0x4f4] sm:$0xf]
    %v402 = vld [vmem:[%s1 + $0x4f8] sm:$0xf]
    %v403 = vld [vmem:[%s1 + $0x4fc] sm:$0xf]
    %v404 = vld [vmem:[%s1 + $0x500] sm:$0xf]
    %v405 = vld [vmem:[%s1 + $0x504] sm:$0xf]
    %v406 = vld [vmem:[%s1 + $0x508] sm:$0xf]
    %v407 = vld [vmem:[%s1 + $0x50c] sm:$0xf]
    %v408 = vld [vmem:[%s1 + $0x510] sm:$0xf]
    %v409 = vld [vmem:[%s1 + $0x514] sm:$0xf]
    %v410 = vld [vmem:[%s1 + $0x518] sm:$0xf]
    %v411 = vld [vmem:[%s1 + $0x51c] sm:$0xf]
    %v412 = vld [vmem:[%s1 + $0x520] sm:$0xf]
    %v413 = vld [vmem:[%s1 + $0x524] sm:$0xf]
    %v414 = vld [vmem:[%s1 + $0x528] sm:$0xf]
    %v415 = vld [vmem:[%s1 + $0x52c] sm:$0xf]
    %v416 = vld [vmem:[%s1 + $0x530] sm:$0xf]
    %v417 = vld [vmem:[%s1 + $0x534] sm:$0xf]
    %v418 = vld [vmem:[%s1 + $0x538] sm:$0xf]
    %v419 = vld [vmem:[%s1 + $0x53c] sm:$0xf]
    %v420 = vld [vmem:[%s1 + $0x540] sm:$0xf]
    %v421 = vld [vmem:[%s1 + $0x544] sm:$0xf]
    %v422 = vld [vmem:[%s1 + $0x548] sm:$0xf]
    %v423 = vld [vmem:[%s1 + $0x54c] sm:$0xf]
    %v424 = vld [vmem:[%s1 + $0x550] sm:$0xf]
    %v425 = vld [vmem:[%s1 + $0x554] sm:$0xf]
    %v426 = vld [vmem:[%s1 + $0x558] sm:$0xf]
    %v427 = vld [vmem:[%s1 + $0x55c] sm:$0xf]
    %v428 = vld [vmem:[%s1 + $0x560] sm:$0xf]
    %v429 = vld [vmem:[%s1 + $0x564] sm:$0xf]
    %v430 = vld [vmem:[%s1 + $0x568] sm:$0xf]
    %v431 = vld [vmem:[%s1 + $0x56c] sm:$0xf]
    %v432 = vld [vmem:[%s1 + $0x570] sm:$0xf]
    %v433 = vld [vmem:[%s1 + $0x574] sm:$0xf]
    %v434 = vld [vmem:[%s1 + $0x578] sm:$0xf]
    %v435 = vld [vmem:[%s1 + $0x57c] sm:$0xf]
    %v436 = vld [vmem:[%s1 + $0x580] sm:$0xf]
    %v437 = vld [vmem:[%s1 + $0x584] sm:$0xf]
    %v438 = vld [vmem:[%s1 + $0x588] sm:$0xf]
    %v439 = vld [vmem:[%s1 + $0x58c] sm:$0xf]
    %v440 = vld [vmem:[%s1 + $0x590] sm:$0xf]
    %v441 = vld [vmem:[%s1 + $0x594] sm:$0xf]
    %v442 = vld [vmem:[%s1 + $0x598] sm:$0xf]
    %v443 = vld [vmem:[%s1 + $0x59c] sm:$0xf]
    %v444 = vld [vmem:[%s1 + $0x5a0] sm:$0xf]
    %v445 = vld [vmem:[%s1 + $0x5a4] sm:$0xf]
    %v446 = vld [vmem:[%s1 + $0x5a8] sm:$0xf]
    %v447 = vld [vmem:[%s1 + $0x5ac] sm:$0xf]
    %v448 = vld [vmem:[%s1 + $0x5b0] sm:$0xf]
    %v449 = vld [vmem:[%s1 + $0x5b4] sm:$0xf]
    %v450 = vld [vmem:[%s1 + $0x5b8] sm:$0xf]
    %v451 = vld [vmem:[%s1 + $0x5bc] sm:$0xf]
    %v452 = vld [vmem:[%s1 + $0x5c0] sm:$0xf]
    %v453 = vld [vmem:[%s1 + $0x5c4] sm:$0xf]
    %v454 = vld [vmem:[%s1 + $0x5c8] sm:$0xf]
    %v455 = vld [vmem:[%s1 + $0x5cc] sm:$0xf]
    %v456 = vld [vmem:[%s1 + $0x5d0] sm:$0xf]
    %v457 = vld [vmem:[%s1 + $0x5d4] sm:$0xf]
    %v458 = vld [vmem:[%s1 + $0x5d8] sm:$0xf]
    %v459 = vld [vmem:[%s1 + $0x5dc] sm:$0xf]
    %v460 = vld [vmem:[%s1 + $0x5e0] sm:$0xf]
    %v461 = vld [vmem:[%s1 + $0x5e4] sm:$0xf]
    %v462 = vld [vmem:[%s1 + $0x5e8] sm:$0xf]
    %v463 = vld [vmem:[%s1 + $0x5ec] sm:$0xf]
    %v464 = vld [vmem:[%s1 + $0x5f0] sm:$0xf]
    %v465 = vld [vmem:[%s1 + $0x5f4] sm:$0xf]
    %v466 = vld [vmem:[%s1 + $0x5f8] sm:$0xf]
    %v467 = vld [vmem:[%s1 + $0x5fc] sm:$0xf]
    %v468 = vld [vmem:[%s1 + $0x600] sm:$0xf]
    %v469 = vld [vmem:[%s1 + $0x604] sm:$0xf]
    %v470 = vld [vmem:[%s1 + $0x608] sm:$0xf]
    %v471 = vld [vmem:[%s1 + $0x60c] sm:$0xf]
    %v472 = vld [vmem:[%s1 + $0x610] sm:$0xf]
    %v473 = vld [vmem:[%s1 + $0x614] sm:$0xf]
    %v474 = vld [vmem:[%s1 + $0x618] sm:$0xf]
    %v475 = vld [vmem:[%s1 + $0x61c] sm:$0xf]
    %v476 = vld [vmem:[%s1 + $0x620] sm:$0xf]
    %v477 = vld [vmem:[%s1 + $0x624] sm:$0xf]
    %v478 = vld [vmem:[%s1 + $0x628] sm:$0xf]
    %v479 = vld [vmem:[%s1 + $0x62c] sm:$0xf]
    %v480 = vld [vmem:[%s1 + $0x630] sm:$0xf]
    %v481 = vld [vmem:[%s1 + $0x634] sm:$0xf]
    %v482 = vld [vmem:[%s1 + $0x638] sm:$0xf]
    %v483 = vld [vmem:[%s1 + $0x63c] sm:$0xf]
    %v484 = vld [vmem:[%s1 + $0x640] sm:$0xf]
    %v485 = vld [vmem:[%s1 + $0x644] sm:$0xf]
    %v486 = vld [vmem:[%s1 + $0x648] sm:$0xf]
    %v487 = vld [vmem:[%s1 + $0x64c] sm:$0xf]
    %v488 = vld [vmem:[%s1 + $0x650] sm:$0xf]
    %v489 = vld [vmem:[%s1 + $0x654] sm:$0xf]
    %v490 = vld [vmem:[%s1 + $0x658] sm:$0xf]
    %v491 = vld [vmem:[%s1 + $0x65c] sm:$0xf]
    %v492 = vld [vmem:[%s1 + $0x660] sm:$0xf]
    %v493 = vld [vmem:[%s1 + $0x664] sm:$0xf]
    %v494 = vld [vmem:[%s1 + $0x668] sm:$0xf]
    %v495 = vld [vmem:[%s1 + $0x66c] sm:$0xf]
    %v496 = vld [vmem:[%s1 + $0x670] sm:$0xf]
    %v497 = vld [vmem:[%s1 + $0x674] sm:$0xf]
    %v498 = vld [vmem:[%s1 + $0x678] sm:$0xf]
    %v499 = vld [vmem:[%s1 + $0x67c] sm:$0xf]
    %v500 = vld [vmem:[%s1 + $0x680] sm:$0xf]
    %v501 = vld [vmem:[%s1 + $0x684] sm:$0xf]
    %v502 = vld [vmem:[%s1 + $0x688] sm:$0xf]
    %v503 = vld [vmem:[%s1 + $0x68c] sm:$0xf]
    %v504 = vld [vmem:[%s1 + $0x690] sm:$0xf]
    %v505 = vld [vmem:[%s1 + $0x694] sm:$0xf]
    %v506 = vld [vmem:[%s1 + $0x698] sm:$0xf]
    %v507 = vld [vmem:[%s1 + $0x69c] sm:$0xf]
    %v508 = vld [vmem:[%s1 + $0x6a0] sm:$0xf]
    %v509 = vld [vmem:[%s1 + $0x6a4] sm:$0xf]
    %v510 = vld [vmem:[%s1 + $0x6a8] sm:$0xf]
    %v511 = vld [vmem:[%s1 + $0x6ac] sm:$0xf]
    %v512 = vld [vmem:[%s1 + $0x6b0] sm:$0xf]
    %v513 = vld [vmem:[%s1 + $0x6b4] sm:$0xf]
    %v514 = vld [vmem:[%s1 + $0x6b8] sm:$0xf]
    %v515 = vld [vmem:[%s1 + $0x6bc] sm:$0xf]
    %v516 = vld [vmem:[%s2] sm:$0x1]
    %v518 = vlaneseq
    %v519 = vshrl.u32 %v518, 7
    %v520 = vsub.s32 0, %v519
    %v521 = vrot.slane %v516, %v520
    %v579 = vunpack.c.l.b16 %v28
    %v580 = vunpack.c.h.b16 %v28
    %v581 = vunpack.c.l.b16 %v29
    %v582 = vunpack.c.h.b16 %v29
    %v583 = vunpack.c.l.b16 %v30
    %v584 = vunpack.c.h.b16 %v30
    %v585 = vunpack.c.l.b16 %v31
    %v586 = vunpack.c.h.b16 %v31
    %v587 = vunpack.c.l.b16 %v32
    %v588 = vunpack.c.h.b16 %v32
    %v589 = vunpack.c.l.b16 %v33
    %v590 = vunpack.c.h.b16 %v33
    %v591 = vunpack.c.l.b16 %v34
    %v592 = vunpack.c.h.b16 %v34
    %v593 = vunpack.c.l.b16 %v35
    %v594 = vunpack.c.h.b16 %v35
    %v595 = vunpack.c.l.b16 %v36
    %v596 = vunpack.c.h.b16 %v36
    %v597 = vunpack.c.l.b16 %v37
    %v598 = vunpack.c.h.b16 %v37
    %v599 = vunpack.c.l.b16 %v38
    %v600 = vunpack.c.h.b16 %v38
    %v601 = vunpack.c.l.b16 %v39
    %v602 = vunpack.c.h.b16 %v39
    %v603 = vunpack.c.l.b16 %v40
    %v604 = vunpack.c.h.b16 %v40
    %v605 = vunpack.c.l.b16 %v41
    %v606 = vunpack.c.l.b16 %v42
    %v607 = vunpack.c.h.b16 %v42
    %v608 = vunpack.c.l.b16 %v43
    %v609 = vunpack.c.h.b16 %v43
    %v610 = vunpack.c.l.b16 %v44
    %v611 = vunpack.c.h.b16 %v44
    %v612 = vunpack.c.l.b16 %v45
    %v613 = vunpack.c.h.b16 %v45
    %v614 = vunpack.c.l.b16 %v46
    %v615 = vunpack.c.h.b16 %v46
    %v616 = vunpack.c.l.b16 %v47
    %v617 = vunpack.c.h.b16 %v47
    %v618 = vunpack.c.l.b16 %v48
    %v619 = vunpack.c.h.b16 %v48
    %v620 = vunpack.c.l.b16 %v49
    %v621 = vunpack.c.h.b16 %v49
    %v622 = vunpack.c.l.b16 %v50
    %v623 = vunpack.c.h.b16 %v50
    %v624 = vunpack.c.l.b16 %v51
    %v625 = vunpack.c.h.b16 %v51
    %v626 = vunpack.c.l.b16 %v52
    %v627 = vunpack.c.h.b16 %v52
    %v628 = vunpack.c.l.b16 %v53
    %v629 = vunpack.c.h.b16 %v53
    %v630 = vunpack.c.l.b16 %v54
    %v631 = vunpack.c.h.b16 %v54
    %v632 = vunpack.c.l.b16 %v55
    %v633 = vunpack.c.l.b16 %v56
    %v634 = vunpack.c.h.b16 %v56
    %v635 = vunpack.c.l.b16 %v57
    %v636 = vunpack.c.h.b16 %v57
    %v637 = vunpack.c.l.b16 %v58
    %v638 = vunpack.c.h.b16 %v58
    %v639 = vunpack.c.l.b16 %v59
    %v640 = vunpack.c.h.b16 %v59
    %v641 = vunpack.c.l.b16 %v60
    %v642 = vunpack.c.h.b16 %v60
    %v643 = vunpack.c.l.b16 %v61
    %v644 = vunpack.c.h.b16 %v61
    %v645 = vunpack.c.l.b16 %v62
    %v646 = vunpack.c.h.b16 %v62
    %v647 = vunpack.c.l.b16 %v63
    %v648 = vunpack.c.h.b16 %v63
    %v649 = vunpack.c.l.b16 %v64
    %v650 = vunpack.c.h.b16 %v64
    %v651 = vunpack.c.l.b16 %v65
    %v652 = vunpack.c.h.b16 %v65
    %v653 = vunpack.c.l.b16 %v66
    %v654 = vunpack.c.h.b16 %v66
    %v655 = vunpack.c.l.b16 %v67
    %v656 = vunpack.c.h.b16 %v67
    %v657 = vunpack.c.l.b16 %v68
    %v658 = vunpack.c.h.b16 %v68
    %v659 = vunpack.c.l.b16 %v69
    %v660 = vunpack.c.l.b16 %v70
    %v661 = vunpack.c.h.b16 %v70
    %v662 = vunpack.c.l.b16 %v71
    %v663 = vunpack.c.h.b16 %v71
    %v664 = vunpack.c.l.b16 %v72
    %v665 = vunpack.c.h.b16 %v72
    %v666 = vunpack.c.l.b16 %v73
    %v667 = vunpack.c.h.b16 %v73
    %v668 = vunpack.c.l.b16 %v74
    %v669 = vunpack.c.h.b16 %v74
    %v670 = vunpack.c.l.b16 %v75
    %v671 = vunpack.c.h.b16 %v75
    %v672 = vunpack.c.l.b16 %v76
    %v673 = vunpack.c.h.b16 %v76
    %v674 = vunpack.c.l.b16 %v77
    %v675 = vunpack.c.h.b16 %v77
    %v676 = vunpack.c.l.b16 %v78
    %v677 = vunpack.c.h.b16 %v78
    %v678 = vunpack.c.l.b16 %v79
    %v679 = vunpack.c.h.b16 %v79
    %v680 = vunpack.c.l.b16 %v80
    %v681 = vunpack.c.h.b16 %v80
    %v682 = vunpack.c.l.b16 %v81
    %v683 = vunpack.c.h.b16 %v81
    %v684 = vunpack.c.l.b16 %v82
    %v685 = vunpack.c.h.b16 %v82
    %v686 = vunpack.c.l.b16 %v83
    %v687 = vpack.c.b16 %v606, %v579
    %v688 = vpack.c.b16 %v607, %v580
    %v689 = vpack.c.b16 %v608, %v581
    %v690 = vpack.c.b16 %v609, %v582
    %v691 = vpack.c.b16 %v610, %v583
    %v692 = vpack.c.b16 %v611, %v584
    %v693 = vpack.c.b16 %v612, %v585
    %v694 = vpack.c.b16 %v613, %v586
    %v695 = vpack.c.b16 %v614, %v587
    %v696 = vpack.c.b16 %v615, %v588
    %v697 = vpack.c.b16 %v616, %v589
    %v698 = vpack.c.b16 %v617, %v590
    %v699 = vpack.c.b16 %v618, %v591
    %v700 = vpack.c.b16 %v619, %v592
    %v701 = vpack.c.b16 %v620, %v593
    %v702 = vpack.c.b16 %v621, %v594
    %v703 = vpack.c.b16 %v622, %v595
    %v704 = vpack.c.b16 %v623, %v596
    %v705 = vpack.c.b16 %v624, %v597
    %v706 = vpack.c.b16 %v625, %v598
    %v707 = vpack.c.b16 %v626, %v599
    %v708 = vpack.c.b16 %v627, %v600
    %v709 = vpack.c.b16 %v628, %v601
    %v710 = vpack.c.b16 %v629, %v602
    %v711 = vpack.c.b16 %v630, %v603
    %v712 = vpack.c.b16 %v631, %v604
    %v713 = vpack.c.b16 %v632, %v605
    %v714 = vpack.c.b16 %v660, %v633
    %v715 = vpack.c.b16 %v661, %v634
    %v716 = vpack.c.b16 %v662, %v635
    %v717 = vpack.c.b16 %v663, %v636
    %v718 = vpack.c.b16 %v664, %v637
    %v719 = vpack.c.b16 %v665, %v638
    %v720 = vpack.c.b16 %v666, %v639
    %v721 = vpack.c.b16 %v667, %v640
    %v722 = vpack.c.b16 %v668, %v641
    %v723 = vpack.c.b16 %v669, %v642
    %v724 = vpack.c.b16 %v670, %v643
    %v725 = vpack.c.b16 %v671, %v644
    %v726 = vpack.c.b16 %v672, %v645
    %v727 = vpack.c.b16 %v673, %v646
    %v728 = vpack.c.b16 %v674, %v647
    %v729 = vpack.c.b16 %v675, %v648
    %v730 = vpack.c.b16 %v676, %v649
    %v731 = vpack.c.b16 %v677, %v650
    %v732 = vpack.c.b16 %v678, %v651
    %v733 = vpack.c.b16 %v679, %v652
    %v734 = vpack.c.b16 %v680, %v653
    %v735 = vpack.c.b16 %v681, %v654
    %v736 = vpack.c.b16 %v682, %v655
    %v737 = vpack.c.b16 %v683, %v656
    %v738 = vpack.c.b16 %v684, %v657
    %v739 = vpack.c.b16 %v685, %v658
    %v740 = vpack.c.b16 %v686, %v659
    %v1227 = vunpack.c.l.b16 %v84
    %v1228 = vunpack.c.l.b16 %v85
    %v1229 = vunpack.c.l.b16 %v86
    %v1230 = vunpack.c.l.b16 %v87
    %v1231 = vunpack.c.l.b16 %v88
    %v1232 = vunpack.c.l.b16 %v89
    %v1233 = vunpack.c.l.b16 %v90
    %v1234 = vunpack.c.l.b16 %v91
    %v1235 = vunpack.c.l.b16 %v92
    %v1236 = vunpack.c.l.b16 %v93
    %v1237 = vunpack.c.l.b16 %v94
    %v1238 = vunpack.c.l.b16 %v95
    %v1239 = vunpack.c.l.b16 %v96
    %v1240 = vunpack.c.l.b16 %v97
    %v1241 = vunpack.c.l.b16 %v98
    %v1242 = vunpack.c.l.b16 %v99
    %v1243 = vunpack.c.l.b16 %v100
    %v1244 = vunpack.c.l.b16 %v101
    %v1245 = vunpack.c.l.b16 %v102
    %v1246 = vunpack.c.l.b16 %v103
    %v1247 = vunpack.c.l.b16 %v104
    %v1248 = vunpack.c.l.b16 %v105
    %v1249 = vunpack.c.l.b16 %v106
    %v1250 = vunpack.c.l.b16 %v107
    %v1251 = vunpack.c.l.b16 %v108
    %v1252 = vunpack.c.l.b16 %v109
    %v1253 = vunpack.c.l.b16 %v110
    %v1254 = vunpack.c.l.b16 %v111
    %v1255 = vunpack.c.l.b16 %v112
    %v1256 = vunpack.c.l.b16 %v113
    %v1257 = vunpack.c.l.b16 %v114
    %v1258 = vunpack.c.l.b16 %v115
    %v1259 = vunpack.c.l.b16 %v116
    %v1260 = vunpack.c.l.b16 %v117
    %v1261 = vunpack.c.l.b16 %v118
    %v1262 = vunpack.c.l.b16 %v119
    %v1263 = vunpack.c.l.b16 %v120
    %v1264 = vunpack.c.l.b16 %v121
    %v1265 = vunpack.c.l.b16 %v122
    %v1266 = vunpack.c.l.b16 %v123
    %v1267 = vunpack.c.l.b16 %v124
    %v1268 = vunpack.c.l.b16 %v125
    %v1269 = vunpack.c.l.b16 %v126
    %v1270 = vunpack.c.l.b16 %v127
    %v1271 = vunpack.c.l.b16 %v128
    %v1272 = vunpack.c.l.b16 %v129
    %v1273 = vunpack.c.l.b16 %v130
    %v1274 = vunpack.c.l.b16 %v131
    %v1275 = vunpack.c.l.b16 %v132
    %v1276 = vunpack.c.l.b16 %v133
    %v1277 = vunpack.c.l.b16 %v134
    %v1278 = vunpack.c.l.b16 %v135
    %v1279 = vunpack.c.l.b16 %v136
    %v1280 = vunpack.c.l.b16 %v137
    %v1281 = vunpack.c.l.b16 %v138
    %v1282 = vunpack.c.l.b16 %v139
    %v1283 = vunpack.c.l.b16 %v140
    %v1284 = vunpack.c.l.b16 %v141
    %v1285 = vunpack.c.l.b16 %v142
    %v1286 = vunpack.c.l.b16 %v143
    %v1287 = vunpack.c.l.b16 %v144
    %v1288 = vunpack.c.l.b16 %v145
    %v1289 = vunpack.c.l.b16 %v146
    %v1290 = vunpack.c.l.b16 %v147
    %v1291 = vunpack.c.l.b16 %v148
    %v1292 = vunpack.c.l.b16 %v149
    %v1293 = vunpack.c.l.b16 %v150
    %v1294 = vunpack.c.l.b16 %v151
    %v1295 = vunpack.c.l.b16 %v152
    %v1296 = vunpack.c.l.b16 %v153
    %v1297 = vunpack.c.l.b16 %v154
    %v1298 = vunpack.c.l.b16 %v155
    %v1299 = vunpack.c.l.b16 %v156
    %v1300 = vunpack.c.l.b16 %v157
    %v1301 = vunpack.c.l.b16 %v158
    %v1302 = vunpack.c.l.b16 %v159
    %v1303 = vunpack.c.l.b16 %v160
    %v1304 = vunpack.c.l.b16 %v161
    %v1305 = vunpack.c.l.b16 %v162
    %v1306 = vunpack.c.l.b16 %v163
    %v1307 = vunpack.c.l.b16 %v164
    %v1308 = vunpack.c.l.b16 %v165
    %v1309 = vunpack.c.l.b16 %v166
    %v1310 = vunpack.c.l.b16 %v167
    %v1311 = vunpack.c.l.b16 %v168
    %v1312 = vunpack.c.l.b16 %v169
    %v1313 = vunpack.c.l.b16 %v170
    %v1314 = vunpack.c.l.b16 %v171
    %v1315 = vunpack.c.l.b16 %v172
    %v1316 = vunpack.c.l.b16 %v173
    %v1317 = vunpack.c.l.b16 %v174
    %v1318 = vunpack.c.l.b16 %v175
    %v1319 = vunpack.c.l.b16 %v176
    %v1320 = vunpack.c.l.b16 %v177
    %v1321 = vunpack.c.l.b16 %v178
    %v1322 = vunpack.c.l.b16 %v179
    %v1323 = vunpack.c.l.b16 %v180
    %v1324 = vunpack.c.l.b16 %v181
    %v1325 = vunpack.c.l.b16 %v182
    %v1326 = vunpack.c.l.b16 %v183
    %v1327 = vunpack.c.l.b16 %v184
    %v1328 = vunpack.c.l.b16 %v185
    %v1329 = vunpack.c.l.b16 %v186
    %v1330 = vunpack.c.l.b16 %v187
    %v1331 = vunpack.c.l.b16 %v188
    %v1332 = vunpack.c.l.b16 %v189
    %v1333 = vunpack.c.l.b16 %v190
    %v1334 = vunpack.c.l.b16 %v191
    %v1335 = vunpack.c.l.b16 %v192
    %v1336 = vunpack.c.l.b16 %v193
    %v1337 = vunpack.c.l.b16 %v194
    %v1338 = vunpack.c.l.b16 %v195
    %v1339 = vunpack.c.l.b16 %v196
    %v1340 = vunpack.c.l.b16 %v197
    %v1341 = vunpack.c.l.b16 %v198
    %v1342 = vunpack.c.l.b16 %v199
    %v1343 = vunpack.c.l.b16 %v200
    %v1344 = vunpack.c.l.b16 %v201
    %v1345 = vunpack.c.l.b16 %v202
    %v1346 = vunpack.c.l.b16 %v203
    %v1347 = vunpack.c.l.b16 %v204
    %v1348 = vunpack.c.l.b16 %v205
    %v1349 = vunpack.c.l.b16 %v206
    %v1350 = vunpack.c.l.b16 %v207
    %v1351 = vunpack.c.l.b16 %v208
    %v1352 = vunpack.c.l.b16 %v209
    %v1353 = vunpack.c.l.b16 %v210
    %v1354 = vunpack.c.l.b16 %v211
    %v1355 = vunpack.c.l.b16 %v212
    %v1356 = vunpack.c.l.b16 %v213
    %v1357 = vunpack.c.l.b16 %v214
    %v1358 = vunpack.c.l.b16 %v215
    %v1359 = vunpack.c.l.b16 %v216
    %v1360 = vunpack.c.l.b16 %v217
    %v1361 = vunpack.c.l.b16 %v218
    %v1362 = vunpack.c.l.b16 %v219
    %v1363 = vunpack.c.l.b16 %v220
    %v1364 = vunpack.c.l.b16 %v221
    %v1365 = vunpack.c.l.b16 %v222
    %v1366 = vunpack.c.l.b16 %v223
    %v1367 = vunpack.c.l.b16 %v224
    %v1368 = vunpack.c.l.b16 %v225
    %v1369 = vunpack.c.l.b16 %v226
    %v1370 = vunpack.c.l.b16 %v227
    %v1371 = vunpack.c.l.b16 %v228
    %v1372 = vunpack.c.l.b16 %v229
    %v1373 = vunpack.c.l.b16 %v230
    %v1374 = vunpack.c.l.b16 %v231
    %v1375 = vunpack.c.l.b16 %v232
    %v1376 = vunpack.c.l.b16 %v233
    %v1377 = vunpack.c.l.b16 %v234
    %v1378 = vunpack.c.l.b16 %v235
    %v1379 = vunpack.c.l.b16 %v236
    %v1380 = vunpack.c.l.b16 %v237
    %v1381 = vunpack.c.l.b16 %v238
    %v1382 = vunpack.c.l.b16 %v239
    %v1383 = vunpack.c.l.b16 %v240
    %v1384 = vunpack.c.l.b16 %v241
    %v1385 = vunpack.c.l.b16 %v242
    %v1386 = vunpack.c.l.b16 %v243
    %v1387 = vunpack.c.l.b16 %v244
    %v1388 = vunpack.c.l.b16 %v245
    %v1389 = vunpack.c.l.b16 %v246
    %v1390 = vunpack.c.l.b16 %v247
    %v1391 = vunpack.c.l.b16 %v248
    %v1392 = vunpack.c.l.b16 %v249
    %v1393 = vunpack.c.l.b16 %v250
    %v1394 = vunpack.c.l.b16 %v251
    %v1395 = vunpack.c.l.b16 %v252
    %v1396 = vunpack.c.l.b16 %v253
    %v1397 = vunpack.c.l.b16 %v254
    %v1398 = vunpack.c.l.b16 %v255
    %v1399 = vunpack.c.l.b16 %v256
    %v1400 = vunpack.c.l.b16 %v257
    %v1401 = vunpack.c.l.b16 %v258
    %v1402 = vunpack.c.l.b16 %v259
    %v1403 = vunpack.c.l.b16 %v260
    %v1404 = vunpack.c.l.b16 %v261
    %v1405 = vunpack.c.l.b16 %v262
    %v1406 = vunpack.c.l.b16 %v263
    %v1407 = vunpack.c.l.b16 %v264
    %v1408 = vunpack.c.l.b16 %v265
    %v1409 = vunpack.c.l.b16 %v266
    %v1410 = vunpack.c.l.b16 %v267
    %v1411 = vunpack.c.l.b16 %v268
    %v1412 = vunpack.c.l.b16 %v269
    %v1413 = vunpack.c.l.b16 %v270
    %v1414 = vunpack.c.l.b16 %v271
    %v1415 = vunpack.c.l.b16 %v272
    %v1416 = vunpack.c.l.b16 %v273
    %v1417 = vunpack.c.l.b16 %v274
    %v1418 = vunpack.c.l.b16 %v275
    %v1419 = vunpack.c.l.b16 %v276
    %v1420 = vunpack.c.l.b16 %v277
    %v1421 = vunpack.c.l.b16 %v278
    %v1422 = vunpack.c.l.b16 %v279
    %v1423 = vunpack.c.l.b16 %v280
    %v1424 = vunpack.c.l.b16 %v281
    %v1425 = vunpack.c.l.b16 %v282
    %v1426 = vunpack.c.l.b16 %v283
    %v1427 = vunpack.c.l.b16 %v284
    %v1428 = vunpack.c.l.b16 %v285
    %v1429 = vunpack.c.l.b16 %v286
    %v1430 = vunpack.c.l.b16 %v287
    %v1431 = vunpack.c.l.b16 %v288
    %v1432 = vunpack.c.l.b16 %v289
    %v1433 = vunpack.c.l.b16 %v290
    %v1434 = vunpack.c.l.b16 %v291
    %v1435 = vunpack.c.l.b16 %v292
    %v1436 = vunpack.c.l.b16 %v293
    %v1437 = vunpack.c.l.b16 %v294
    %v1438 = vunpack.c.l.b16 %v295
    %v1439 = vunpack.c.l.b16 %v296
    %v1440 = vunpack.c.l.b16 %v297
    %v1441 = vunpack.c.l.b16 %v298
    %v1442 = vunpack.c.l.b16 %v299
    %v1443 = vunpack.c.l.b16 %v300
    %v1444 = vunpack.c.l.b16 %v301
    %v1445 = vunpack.c.l.b16 %v302
    %v1446 = vunpack.c.l.b16 %v303
    %v1447 = vunpack.c.l.b16 %v304
    %v1448 = vunpack.c.l.b16 %v305
    %v1449 = vunpack.c.l.b16 %v306
    %v1450 = vunpack.c.l.b16 %v307
    %v1451 = vunpack.c.l.b16 %v308
    %v1452 = vunpack.c.l.b16 %v309
    %v1453 = vunpack.c.l.b16 %v310
    %v1454 = vunpack.c.l.b16 %v311
    %v1455 = vunpack.c.l.b16 %v312
    %v1456 = vunpack.c.l.b16 %v313
    %v1457 = vunpack.c.l.b16 %v314
    %v1458 = vunpack.c.l.b16 %v315
    %v1459 = vunpack.c.l.b16 %v316
    %v1460 = vunpack.c.l.b16 %v317
    %v1461 = vunpack.c.l.b16 %v318
    %v1462 = vunpack.c.l.b16 %v319
    %v1463 = vunpack.c.l.b16 %v320
    %v1464 = vunpack.c.l.b16 %v321
    %v1465 = vunpack.c.l.b16 %v322
    %v1466 = vunpack.c.l.b16 %v323
    %v1467 = vunpack.c.l.b16 %v324
    %v1468 = vunpack.c.l.b16 %v325
    %v1469 = vunpack.c.l.b16 %v326
    %v1470 = vunpack.c.l.b16 %v327
    %v1471 = vunpack.c.l.b16 %v328
    %v1472 = vunpack.c.l.b16 %v329
    %v1473 = vunpack.c.l.b16 %v330
    %v1474 = vunpack.c.l.b16 %v331
    %v1475 = vunpack.c.l.b16 %v332
    %v1476 = vunpack.c.l.b16 %v333
    %v1477 = vunpack.c.l.b16 %v334
    %v1478 = vunpack.c.l.b16 %v335
    %v1479 = vunpack.c.l.b16 %v336
    %v1480 = vunpack.c.l.b16 %v337
    %v1481 = vunpack.c.l.b16 %v338
    %v1482 = vunpack.c.l.b16 %v339
    %v1483 = vunpack.c.l.b16 %v340
    %v1484 = vunpack.c.l.b16 %v341
    %v1485 = vunpack.c.l.b16 %v342
    %v1486 = vunpack.c.l.b16 %v343
    %v1487 = vunpack.c.l.b16 %v344
    %v1488 = vunpack.c.l.b16 %v345
    %v1489 = vunpack.c.l.b16 %v346
    %v1490 = vunpack.c.l.b16 %v347
    %v1491 = vunpack.c.l.b16 %v348
    %v1492 = vunpack.c.l.b16 %v349
    %v1493 = vunpack.c.l.b16 %v350
    %v1494 = vunpack.c.l.b16 %v351
    %v1495 = vunpack.c.l.b16 %v352
    %v1496 = vunpack.c.l.b16 %v353
    %v1497 = vunpack.c.l.b16 %v354
    %v1498 = vunpack.c.l.b16 %v355
    %v1499 = vunpack.c.l.b16 %v356
    %v1500 = vunpack.c.l.b16 %v357
    %v1501 = vunpack.c.l.b16 %v358
    %v1502 = vunpack.c.l.b16 %v359
    %v1503 = vunpack.c.l.b16 %v360
    %v1504 = vunpack.c.l.b16 %v361
    %v1505 = vunpack.c.l.b16 %v362
    %v1506 = vunpack.c.l.b16 %v363
    %v1507 = vunpack.c.l.b16 %v364
    %v1508 = vunpack.c.l.b16 %v365
    %v1509 = vunpack.c.l.b16 %v366
    %v1510 = vunpack.c.l.b16 %v367
    %v1511 = vunpack.c.l.b16 %v368
    %v1512 = vunpack.c.l.b16 %v369
    %v1513 = vunpack.c.l.b16 %v370
    %v1514 = vunpack.c.l.b16 %v371
    %v1515 = vunpack.c.l.b16 %v372
    %v1516 = vunpack.c.l.b16 %v373
    %v1517 = vunpack.c.l.b16 %v374
    %v1518 = vunpack.c.l.b16 %v375
    %v1519 = vunpack.c.l.b16 %v376
    %v1520 = vunpack.c.l.b16 %v377
    %v1521 = vunpack.c.l.b16 %v378
    %v1522 = vunpack.c.l.b16 %v379
    %v1523 = vunpack.c.l.b16 %v380
    %v1524 = vunpack.c.l.b16 %v381
    %v1525 = vunpack.c.l.b16 %v382
    %v1526 = vunpack.c.l.b16 %v383
    %v1527 = vunpack.c.l.b16 %v384
    %v1528 = vunpack.c.l.b16 %v385
    %v1529 = vunpack.c.l.b16 %v386
    %v1530 = vunpack.c.l.b16 %v387
    %v1531 = vunpack.c.l.b16 %v388
    %v1532 = vunpack.c.l.b16 %v389
    %v1533 = vunpack.c.l.b16 %v390
    %v1534 = vunpack.c.l.b16 %v391
    %v1535 = vunpack.c.l.b16 %v392
    %v1536 = vunpack.c.l.b16 %v393
    %v1537 = vunpack.c.l.b16 %v394
    %v1538 = vunpack.c.l.b16 %v395
    %v1539 = vunpack.c.l.b16 %v396
    %v1540 = vunpack.c.l.b16 %v397
    %v1541 = vunpack.c.l.b16 %v398
    %v1542 = vunpack.c.l.b16 %v399
    %v1543 = vunpack.c.l.b16 %v400
    %v1544 = vunpack.c.l.b16 %v401
    %v1545 = vunpack.c.l.b16 %v402
    %v1546 = vunpack.c.l.b16 %v403
    %v1547 = vunpack.c.l.b16 %v404
    %v1548 = vunpack.c.l.b16 %v405
    %v1549 = vunpack.c.l.b16 %v406
    %v1550 = vunpack.c.l.b16 %v407
    %v1551 = vunpack.c.l.b16 %v408
    %v1552 = vunpack.c.l.b16 %v409
    %v1553 = vunpack.c.l.b16 %v410
    %v1554 = vunpack.c.l.b16 %v411
    %v1555 = vunpack.c.l.b16 %v412
    %v1556 = vunpack.c.l.b16 %v413
    %v1557 = vunpack.c.l.b16 %v414
    %v1558 = vunpack.c.l.b16 %v415
    %v1559 = vunpack.c.l.b16 %v416
    %v1560 = vunpack.c.l.b16 %v417
    %v1561 = vunpack.c.l.b16 %v418
    %v1562 = vunpack.c.l.b16 %v419
    %v1563 = vunpack.c.l.b16 %v420
    %v1564 = vunpack.c.l.b16 %v421
    %v1565 = vunpack.c.l.b16 %v422
    %v1566 = vunpack.c.l.b16 %v423
    %v1567 = vunpack.c.l.b16 %v424
    %v1568 = vunpack.c.l.b16 %v425
    %v1569 = vunpack.c.l.b16 %v426
    %v1570 = vunpack.c.l.b16 %v427
    %v1571 = vunpack.c.l.b16 %v428
    %v1572 = vunpack.c.l.b16 %v429
    %v1573 = vunpack.c.l.b16 %v430
    %v1574 = vunpack.c.l.b16 %v431
    %v1575 = vunpack.c.l.b16 %v432
    %v1576 = vunpack.c.l.b16 %v433
    %v1577 = vunpack.c.l.b16 %v434
    %v1578 = vunpack.c.l.b16 %v435
    %v1579 = vunpack.c.l.b16 %v436
    %v1580 = vunpack.c.l.b16 %v437
    %v1581 = vunpack.c.l.b16 %v438
    %v1582 = vunpack.c.l.b16 %v439
    %v1583 = vunpack.c.l.b16 %v440
    %v1584 = vunpack.c.l.b16 %v441
    %v1585 = vunpack.c.l.b16 %v442
    %v1586 = vunpack.c.l.b16 %v443
    %v1587 = vunpack.c.l.b16 %v444
    %v1588 = vunpack.c.l.b16 %v445
    %v1589 = vunpack.c.l.b16 %v446
    %v1590 = vunpack.c.l.b16 %v447
    %v1591 = vunpack.c.l.b16 %v448
    %v1592 = vunpack.c.l.b16 %v449
    %v1593 = vunpack.c.l.b16 %v450
    %v1594 = vunpack.c.l.b16 %v451
    %v1595 = vunpack.c.l.b16 %v452
    %v1596 = vunpack.c.l.b16 %v453
    %v1597 = vunpack.c.l.b16 %v454
    %v1598 = vunpack.c.l.b16 %v455
    %v1599 = vunpack.c.l.b16 %v456
    %v1600 = vunpack.c.l.b16 %v457
    %v1601 = vunpack.c.l.b16 %v458
    %v1602 = vunpack.c.l.b16 %v459
    %v1603 = vunpack.c.l.b16 %v460
    %v1604 = vunpack.c.l.b16 %v461
    %v1605 = vunpack.c.l.b16 %v462
    %v1606 = vunpack.c.l.b16 %v463
    %v1607 = vunpack.c.l.b16 %v464
    %v1608 = vunpack.c.l.b16 %v465
    %v1609 = vunpack.c.l.b16 %v466
    %v1610 = vunpack.c.l.b16 %v467
    %v1611 = vunpack.c.l.b16 %v468
    %v1612 = vunpack.c.l.b16 %v469
    %v1613 = vunpack.c.l.b16 %v470
    %v1614 = vunpack.c.l.b16 %v471
    %v1615 = vunpack.c.l.b16 %v472
    %v1616 = vunpack.c.l.b16 %v473
    %v1617 = vunpack.c.l.b16 %v474
    %v1618 = vunpack.c.l.b16 %v475
    %v1619 = vunpack.c.l.b16 %v476
    %v1620 = vunpack.c.l.b16 %v477
    %v1621 = vunpack.c.l.b16 %v478
    %v1622 = vunpack.c.l.b16 %v479
    %v1623 = vunpack.c.l.b16 %v480
    %v1624 = vunpack.c.l.b16 %v481
    %v1625 = vunpack.c.l.b16 %v482
    %v1626 = vunpack.c.l.b16 %v483
    %v1627 = vunpack.c.l.b16 %v484
    %v1628 = vunpack.c.l.b16 %v485
    %v1629 = vunpack.c.l.b16 %v486
    %v1630 = vunpack.c.l.b16 %v487
    %v1631 = vunpack.c.l.b16 %v488
    %v1632 = vunpack.c.l.b16 %v489
    %v1633 = vunpack.c.l.b16 %v490
    %v1634 = vunpack.c.l.b16 %v491
    %v1635 = vunpack.c.l.b16 %v492
    %v1636 = vunpack.c.l.b16 %v493
    %v1637 = vunpack.c.l.b16 %v494
    %v1638 = vunpack.c.l.b16 %v495
    %v1639 = vunpack.c.l.b16 %v496
    %v1640 = vunpack.c.l.b16 %v497
    %v1641 = vunpack.c.l.b16 %v498
    %v1642 = vunpack.c.l.b16 %v499
    %v1643 = vunpack.c.l.b16 %v500
    %v1644 = vunpack.c.l.b16 %v501
    %v1645 = vunpack.c.l.b16 %v502
    %v1646 = vunpack.c.l.b16 %v503
    %v1647 = vunpack.c.l.b16 %v504
    %v1648 = vunpack.c.l.b16 %v505
    %v1649 = vunpack.c.l.b16 %v506
    %v1650 = vunpack.c.l.b16 %v507
    %v1651 = vunpack.c.l.b16 %v508
    %v1652 = vunpack.c.l.b16 %v509
    %v1653 = vunpack.c.l.b16 %v510
    %v1654 = vunpack.c.l.b16 %v511
    %v1655 = vunpack.c.l.b16 %v512
    %v1656 = vunpack.c.l.b16 %v513
    %v1657 = vunpack.c.l.b16 %v514
    %v1658 = vunpack.c.l.b16 %v515
    %v1659 = vpack.c.b16 %v1228, %v1227
    %v1660 = vpack.c.b16 %v1230, %v1229
    %v1661 = vpack.c.b16 %v1232, %v1231
    %v1662 = vpack.c.b16 %v1234, %v1233
    %v1663 = vpack.c.b16 %v1236, %v1235
    %v1664 = vpack.c.b16 %v1238, %v1237
    %v1665 = vpack.c.b16 %v1240, %v1239
    %v1666 = vpack.c.b16 %v1242, %v1241
    %v1667 = vpack.c.b16 %v1244, %v1243
    %v1668 = vpack.c.b16 %v1246, %v1245
    %v1669 = vpack.c.b16 %v1248, %v1247
    %v1670 = vpack.c.b16 %v1250, %v1249
    %v1671 = vpack.c.b16 %v1252, %v1251
    %v1672 = vpack.c.b16 %v1254, %v1253
    %v1673 = vpack.c.b16 %v1256, %v1255
    %v1674 = vpack.c.b16 %v1258, %v1257
    %v1675 = vpack.c.b16 %v1260, %v1259
    %v1676 = vpack.c.b16 %v1262, %v1261
    %v1677 = vpack.c.b16 %v1264, %v1263
    %v1678 = vpack.c.b16 %v1266, %v1265
    %v1679 = vpack.c.b16 %v1268, %v1267
    %v1680 = vpack.c.b16 %v1270, %v1269
    %v1681 = vpack.c.b16 %v1272, %v1271
    %v1682 = vpack.c.b16 %v1274, %v1273
    %v1683 = vpack.c.b16 %v1276, %v1275
    %v1684 = vpack.c.b16 %v1278, %v1277
    %v1685 = vpack.c.b16 %v1280, %v1279
    %v1686 = vpack.c.b16 %v1282, %v1281
    %v1687 = vpack.c.b16 %v1284, %v1283
    %v1688 = vpack.c.b16 %v1286, %v1285
    %v1689 = vpack.c.b16 %v1288, %v1287
    %v1690 = vpack.c.b16 %v1290, %v1289
    %v1691 = vpack.c.b16 %v1292, %v1291
    %v1692 = vpack.c.b16 %v1294, %v1293
    %v1693 = vpack.c.b16 %v1296, %v1295
    %v1694 = vpack.c.b16 %v1298, %v1297
    %v1695 = vpack.c.b16 %v1300, %v1299
    %v1696 = vpack.c.b16 %v1302, %v1301
    %v1697 = vpack.c.b16 %v1304, %v1303
    %v1698 = vpack.c.b16 %v1306, %v1305
    %v1699 = vpack.c.b16 %v1308, %v1307
    %v1700 = vpack.c.b16 %v1310, %v1309
    %v1701 = vpack.c.b16 %v1312, %v1311
    %v1702 = vpack.c.b16 %v1314, %v1313
    %v1703 = vpack.c.b16 %v1316, %v1315
    %v1704 = vpack.c.b16 %v1318, %v1317
    %v1705 = vpack.c.b16 %v1320, %v1319
    %v1706 = vpack.c.b16 %v1322, %v1321
    %v1707 = vpack.c.b16 %v1324, %v1323
    %v1708 = vpack.c.b16 %v1326, %v1325
    %v1709 = vpack.c.b16 %v1328, %v1327
    %v1710 = vpack.c.b16 %v1330, %v1329
    %v1711 = vpack.c.b16 %v1332, %v1331
    %v1712 = vpack.c.b16 %v1334, %v1333
    %v1713 = vpack.c.b16 %v1336, %v1335
    %v1714 = vpack.c.b16 %v1338, %v1337
    %v1715 = vpack.c.b16 %v1340, %v1339
    %v1716 = vpack.c.b16 %v1342, %v1341
    %v1717 = vpack.c.b16 %v1344, %v1343
    %v1718 = vpack.c.b16 %v1346, %v1345
    %v1719 = vpack.c.b16 %v1348, %v1347
    %v1720 = vpack.c.b16 %v1350, %v1349
    %v1721 = vpack.c.b16 %v1352, %v1351
    %v1722 = vpack.c.b16 %v1354, %v1353
    %v1723 = vpack.c.b16 %v1356, %v1355
    %v1724 = vpack.c.b16 %v1358, %v1357
    %v1725 = vpack.c.b16 %v1360, %v1359
    %v1726 = vpack.c.b16 %v1362, %v1361
    %v1727 = vpack.c.b16 %v1364, %v1363
    %v1728 = vpack.c.b16 %v1366, %v1365
    %v1729 = vpack.c.b16 %v1368, %v1367
    %v1730 = vpack.c.b16 %v1370, %v1369
    %v1731 = vpack.c.b16 %v1372, %v1371
    %v1732 = vpack.c.b16 %v1374, %v1373
    %v1733 = vpack.c.b16 %v1376, %v1375
    %v1734 = vpack.c.b16 %v1378, %v1377
    %v1735 = vpack.c.b16 %v1380, %v1379
    %v1736 = vpack.c.b16 %v1382, %v1381
    %v1737 = vpack.c.b16 %v1384, %v1383
    %v1738 = vpack.c.b16 %v1386, %v1385
    %v1739 = vpack.c.b16 %v1388, %v1387
    %v1740 = vpack.c.b16 %v1390, %v1389
    %v1741 = vpack.c.b16 %v1392, %v1391
    %v1742 = vpack.c.b16 %v1394, %v1393
    %v1743 = vpack.c.b16 %v1396, %v1395
    %v1744 = vpack.c.b16 %v1398, %v1397
    %v1745 = vpack.c.b16 %v1400, %v1399
    %v1746 = vpack.c.b16 %v1402, %v1401
    %v1747 = vpack.c.b16 %v1404, %v1403
    %v1748 = vpack.c.b16 %v1406, %v1405
    %v1749 = vpack.c.b16 %v1408, %v1407
    %v1750 = vpack.c.b16 %v1410, %v1409
    %v1751 = vpack.c.b16 %v1412, %v1411
    %v1752 = vpack.c.b16 %v1414, %v1413
    %v1753 = vpack.c.b16 %v1416, %v1415
    %v1754 = vpack.c.b16 %v1418, %v1417
    %v1755 = vpack.c.b16 %v1420, %v1419
    %v1756 = vpack.c.b16 %v1422, %v1421
    %v1757 = vpack.c.b16 %v1424, %v1423
    %v1758 = vpack.c.b16 %v1426, %v1425
    %v1759 = vpack.c.b16 %v1428, %v1427
    %v1760 = vpack.c.b16 %v1430, %v1429
    %v1761 = vpack.c.b16 %v1432, %v1431
    %v1762 = vpack.c.b16 %v1434, %v1433
    %v1763 = vpack.c.b16 %v1436, %v1435
    %v1764 = vpack.c.b16 %v1438, %v1437
    %v1765 = vpack.c.b16 %v1440, %v1439
    %v1766 = vpack.c.b16 %v1442, %v1441
    %v1767 = vpack.c.b16 %v1444, %v1443
    %v1768 = vpack.c.b16 %v1446, %v1445
    %v1769 = vpack.c.b16 %v1448, %v1447
    %v1770 = vpack.c.b16 %v1450, %v1449
    %v1771 = vpack.c.b16 %v1452, %v1451
    %v1772 = vpack.c.b16 %v1454, %v1453
    %v1773 = vpack.c.b16 %v1456, %v1455
    %v1774 = vpack.c.b16 %v1458, %v1457
    %v1775 = vpack.c.b16 %v1460, %v1459
    %v1776 = vpack.c.b16 %v1462, %v1461
    %v1777 = vpack.c.b16 %v1464, %v1463
    %v1778 = vpack.c.b16 %v1466, %v1465
    %v1779 = vpack.c.b16 %v1468, %v1467
    %v1780 = vpack.c.b16 %v1470, %v1469
    %v1781 = vpack.c.b16 %v1472, %v1471
    %v1782 = vpack.c.b16 %v1474, %v1473
    %v1783 = vpack.c.b16 %v1476, %v1475
    %v1784 = vpack.c.b16 %v1478, %v1477
    %v1785 = vpack.c.b16 %v1480, %v1479
    %v1786 = vpack.c.b16 %v1482, %v1481
    %v1787 = vpack.c.b16 %v1484, %v1483
    %v1788 = vpack.c.b16 %v1486, %v1485
    %v1789 = vpack.c.b16 %v1488, %v1487
    %v1790 = vpack.c.b16 %v1490, %v1489
    %v1791 = vpack.c.b16 %v1492, %v1491
    %v1792 = vpack.c.b16 %v1494, %v1493
    %v1793 = vpack.c.b16 %v1496, %v1495
    %v1794 = vpack.c.b16 %v1498, %v1497
    %v1795 = vpack.c.b16 %v1500, %v1499
    %v1796 = vpack.c.b16 %v1502, %v1501
    %v1797 = vpack.c.b16 %v1504, %v1503
    %v1798 = vpack.c.b16 %v1506, %v1505
    %v1799 = vpack.c.b16 %v1508, %v1507
    %v1800 = vpack.c.b16 %v1510, %v1509
    %v1801 = vpack.c.b16 %v1512, %v1511
    %v1802 = vpack.c.b16 %v1514, %v1513
    %v1803 = vpack.c.b16 %v1516, %v1515
    %v1804 = vpack.c.b16 %v1518, %v1517
    %v1805 = vpack.c.b16 %v1520, %v1519
    %v1806 = vpack.c.b16 %v1522, %v1521
    %v1807 = vpack.c.b16 %v1524, %v1523
    %v1808 = vpack.c.b16 %v1526, %v1525
    %v1809 = vpack.c.b16 %v1528, %v1527
    %v1810 = vpack.c.b16 %v1530, %v1529
    %v1811 = vpack.c.b16 %v1532, %v1531
    %v1812 = vpack.c.b16 %v1534, %v1533
    %v1813 = vpack.c.b16 %v1536, %v1535
    %v1814 = vpack.c.b16 %v1538, %v1537
    %v1815 = vpack.c.b16 %v1540, %v1539
    %v1816 = vpack.c.b16 %v1542, %v1541
    %v1817 = vpack.c.b16 %v1544, %v1543
    %v1818 = vpack.c.b16 %v1546, %v1545
    %v1819 = vpack.c.b16 %v1548, %v1547
    %v1820 = vpack.c.b16 %v1550, %v1549
    %v1821 = vpack.c.b16 %v1552, %v1551
    %v1822 = vpack.c.b16 %v1554, %v1553
    %v1823 = vpack.c.b16 %v1556, %v1555
    %v1824 = vpack.c.b16 %v1558, %v1557
    %v1825 = vpack.c.b16 %v1560, %v1559
    %v1826 = vpack.c.b16 %v1562, %v1561
    %v1827 = vpack.c.b16 %v1564, %v1563
    %v1828 = vpack.c.b16 %v1566, %v1565
    %v1829 = vpack.c.b16 %v1568, %v1567
    %v1830 = vpack.c.b16 %v1570, %v1569
    %v1831 = vpack.c.b16 %v1572, %v1571
    %v1832 = vpack.c.b16 %v1574, %v1573
    %v1833 = vpack.c.b16 %v1576, %v1575
    %v1834 = vpack.c.b16 %v1578, %v1577
    %v1835 = vpack.c.b16 %v1580, %v1579
    %v1836 = vpack.c.b16 %v1582, %v1581
    %v1837 = vpack.c.b16 %v1584, %v1583
    %v1838 = vpack.c.b16 %v1586, %v1585
    %v1839 = vpack.c.b16 %v1588, %v1587
    %v1840 = vpack.c.b16 %v1590, %v1589
    %v1841 = vpack.c.b16 %v1592, %v1591
    %v1842 = vpack.c.b16 %v1594, %v1593
    %v1843 = vpack.c.b16 %v1596, %v1595
    %v1844 = vpack.c.b16 %v1598, %v1597
    %v1845 = vpack.c.b16 %v1600, %v1599
    %v1846 = vpack.c.b16 %v1602, %v1601
    %v1847 = vpack.c.b16 %v1604, %v1603
    %v1848 = vpack.c.b16 %v1606, %v1605
    %v1849 = vpack.c.b16 %v1608, %v1607
    %v1850 = vpack.c.b16 %v1610, %v1609
    %v1851 = vpack.c.b16 %v1612, %v1611
    %v1852 = vpack.c.b16 %v1614, %v1613
    %v1853 = vpack.c.b16 %v1616, %v1615
    %v1854 = vpack.c.b16 %v1618, %v1617
    %v1855 = vpack.c.b16 %v1620, %v1619
    %v1856 = vpack.c.b16 %v1622, %v1621
    %v1857 = vpack.c.b16 %v1624, %v1623
    %v1858 = vpack.c.b16 %v1626, %v1625
    %v1859 = vpack.c.b16 %v1628, %v1627
    %v1860 = vpack.c.b16 %v1630, %v1629
    %v1861 = vpack.c.b16 %v1632, %v1631
    %v1862 = vpack.c.b16 %v1634, %v1633
    %v1863 = vpack.c.b16 %v1636, %v1635
    %v1864 = vpack.c.b16 %v1638, %v1637
    %v1865 = vpack.c.b16 %v1640, %v1639
    %v1866 = vpack.c.b16 %v1642, %v1641
    %v1867 = vpack.c.b16 %v1644, %v1643
    %v1868 = vpack.c.b16 %v1646, %v1645
    %v1869 = vpack.c.b16 %v1648, %v1647
    %v1870 = vpack.c.b16 %v1650, %v1649
    %v1871 = vpack.c.b16 %v1652, %v1651
    %v1872 = vpack.c.b16 %v1654, %v1653
    %v1873 = vpack.c.b16 %v1656, %v1655
    %v1874 = vpack.c.b16 %v1658, %v1657
    %2091 = vmatprep.subr.bf16.mxu0 0
    %2092 = vmatpush1.bf16.msra.mxu0 %v1659
    %2093 = vmatprep.subr.bf16.mxu0 0
    %2094 = vmatpush1.bf16.msra.mxu0 %v1660
    %2095 = vmatprep.subr.bf16.mxu0 0
    %2096 = vmatpush1.bf16.msra.mxu0 %v1661
    %2097 = vmatprep.subr.bf16.mxu0 0
    %2098 = vmatpush1.bf16.msra.mxu0 %v1662
    %2099 = vmatprep.subr.bf16.mxu0 0
    %2100 = vmatpush1.bf16.msra.mxu0 %v1663
    %2101 = vmatprep.subr.bf16.mxu0 0
    %2102 = vmatpush1.bf16.msra.mxu0 %v1664
    %2103 = vmatprep.subr.bf16.mxu0 0
    %2104 = vmatpush1.bf16.msra.mxu0 %v1665
    %2105 = vmatprep.subr.bf16.mxu0 0
    %2106 = vmatpush1.bf16.msra.mxu0 %v1666
    %2107 = vmatprep.subr.bf16.mxu0 0
    %2108 = vmatpush1.bf16.msra.mxu0 %v1667
    %2109 = vmatprep.subr.bf16.mxu0 0
    %2110 = vmatpush1.bf16.msra.mxu0 %v1668
    %2111 = vmatprep.subr.bf16.mxu0 0
    %2112 = vmatpush1.bf16.msra.mxu0 %v1669
    %2113 = vmatprep.subr.bf16.mxu0 0
    %2114 = vmatpush1.bf16.msra.mxu0 %v1670
    %2115 = vmatprep.subr.bf16.mxu0 0
    %2116 = vmatpush1.bf16.msra.mxu0 %v1671
    %2117 = vmatprep.subr.bf16.mxu0 0
    %2118 = vmatpush1.bf16.msra.mxu0 %v1672
    %2119 = vmatprep.subr.bf16.mxu0 0
    %2120 = vmatpush1.bf16.msra.mxu0 %v1673
    %2121 = vmatprep.subr.bf16.mxu0 0
    %2122 = vmatpush1.bf16.msra.mxu0 %v1674
    %2123 = vmatprep.mubr.bf16.mxu0 %v688
    %2124 = vmatmul.mubr.bf16.gmra.mrb[0].mxu0 %v687
    %v2125 = vpop.f32.mrb[0].mxu0
    %v2126 = vadd.f32 %v521, %v2125
    %v2127 = vpop.f32.mrb[0].mxu0
    %v2128 = vpop.f32.mrb[0].mxu0
    %v2129 = vadd.f32 %v521, %v2128
    %v2130 = vpop.f32.mrb[0].mxu0
    %2131 = vmatprep.mubr.bf16.mxu0 %v715
    %2132 = vmatmul.mubr.bf16.gmra.mrb[0].mxu0 %v714
    %v2133 = vpop.f32.mrb[0].mxu0
    %v2134 = vadd.f32 %v521, %v2133
    %v2135 = vpop.f32.mrb[0].mxu0
    %v2136 = vpop.f32.mrb[0].mxu0
    %v2137 = vadd.f32 %v521, %v2136
    %v2138 = vpop.f32.mrb[0].mxu0
    %2139 = vdwg.mxu0
    %2140 = vmatprep.subr.bf16.mxu0 0
    %2141 = vmatpush1.bf16.msra.mxu0 %v1675
    %2142 = vmatprep.subr.bf16.mxu0 0
    %2143 = vmatpush1.bf16.msra.mxu0 %v1676
    %2144 = vmatprep.subr.bf16.mxu0 0
    %2145 = vmatpush1.bf16.msra.mxu0 %v1677
    %2146 = vmatprep.subr.bf16.mxu0 0
    %2147 = vmatpush1.bf16.msra.mxu0 %v1678
    %2148 = vmatprep.subr.bf16.mxu0 0
    %2149 = vmatpush1.bf16.msra.mxu0 %v1679
    %2150 = vmatprep.subr.bf16.mxu0 0
    %2151 = vmatpush1.bf16.msra.mxu0 %v1680
    %2152 = vmatprep.subr.bf16.mxu0 0
    %2153 = vmatpush1.bf16.msra.mxu0 %v1681
    %2154 = vmatprep.subr.bf16.mxu0 0
    %2155 = vmatpush1.bf16.msra.mxu0 %v1682
    %2156 = vmatprep.subr.bf16.mxu0 0
    %2157 = vmatpush1.bf16.msra.mxu0 %v1683
    %2158 = vmatprep.subr.bf16.mxu0 0
    %2159 = vmatpush1.bf16.msra.mxu0 %v1684
    %2160 = vmatprep.subr.bf16.mxu0 0
    %2161 = vmatpush1.bf16.msra.mxu0 %v1685
    %2162 = vmatprep.subr.bf16.mxu0 0
    %2163 = vmatpush1.bf16.msra.mxu0 %v1686
    %2164 = vmatprep.subr.bf16.mxu0 0
    %2165 = vmatpush1.bf16.msra.mxu0 %v1687
    %2166 = vmatprep.subr.bf16.mxu0 0
    %2167 = vmatpush1.bf16.msra.mxu0 %v1688
    %2168 = vmatprep.subr.bf16.mxu0 0
    %2169 = vmatpush1.bf16.msra.mxu0 %v1689
    %2170 = vmatprep.subr.bf16.mxu0 0
    %2171 = vmatpush1.bf16.msra.mxu0 %v1690
    %2172 = vmatprep.mubr.bf16.mxu0 %v690
    %2173 = vmatmul.mubr.bf16.gmra.mrb[0].mxu0 %v689
    %v2174 = vpop.f32.mrb[0].mxu0
    %v2175 = vadd.f32 %v2126, %v2174
    %v2176 = vpop.f32.mrb[0].mxu0
    %v2177 = vpop.f32.mrb[0].mxu0
    %v2178 = vadd.f32 %v2129, %v2177
    %v2179 = vpop.f32.mrb[0].mxu0
    %2180 = vmatprep.mubr.bf16.mxu0 %v717
    %2181 = vmatmul.mubr.bf16.gmra.mrb[0].mxu0 %v716
    %v2182 = vpop.f32.mrb[0].mxu0
    %v2183 = vadd.f32 %v2134, %v2182
    %v2184 = vpop.f32.mrb[0].mxu0
    %v2185 = vpop.f32.mrb[0].mxu0
    %v2186 = vadd.f32 %v2137, %v2185
    %v2187 = vpop.f32.mrb[0].mxu0
    %2188 = vdwg.mxu0
    %2189 = vmatprep.subr.bf16.mxu0 0
    %2190 = vmatpush1.bf16.msra.mxu0 %v1691
    %2191 = vmatprep.subr.bf16.mxu0 0
    %2192 = vmatpush1.bf16.msra.mxu0 %v1692
    %2193 = vmatprep.subr.bf16.mxu0 0
    %2194 = vmatpush1.bf16.msra.mxu0 %v1693
    %2195 = vmatprep.subr.bf16.mxu0 0
    %2196 = vmatpush1.bf16.msra.mxu0 %v1694
    %2197 = vmatprep.subr.bf16.mxu0 0
    %2198 = vmatpush1.bf16.msra.mxu0 %v1695
    %2199 = vmatprep.subr.bf16.mxu0 0
    %2200 = vmatpush1.bf16.msra.mxu0 %v1696
    %2201 = vmatprep.subr.bf16.mxu0 0
    %2202 = vmatpush1.bf16.msra.mxu0 %v1697
    %2203 = vmatprep.subr.bf16.mxu0 0
    %2204 = vmatpush1.bf16.msra.mxu0 %v1698
    %2205 = vmatprep.subr.bf16.mxu0 0
    %2206 = vmatpush1.bf16.msra.mxu0 %v1699
    %2207 = vmatprep.subr.bf16.mxu0 0
    %2208 = vmatpush1.bf16.msra.mxu0 %v1700
    %2209 = vmatprep.subr.bf16.mxu0 0
    %2210 = vmatpush1.bf16.msra.mxu0 %v1701
    %2211 = vmatprep.subr.bf16.mxu0 0
    %2212 = vmatpush1.bf16.msra.mxu0 %v1702
    %2213 = vmatprep.subr.bf16.mxu0 0
    %2214 = vmatpush1.bf16.msra.mxu0 %v1703
    %2215 = vmatprep.subr.bf16.mxu0 0
    %2216 = vmatpush1.bf16.msra.mxu0 %v1704
    %2217 = vmatprep.subr.bf16.mxu0 0
    %2218 = vmatpush1.bf16.msra.mxu0 %v1705
    %2219 = vmatprep.subr.bf16.mxu0 0
    %2220 = vmatpush1.bf16.msra.mxu0 %v1706
    %2221 = vmatprep.mubr.bf16.mxu0 %v692
    %2222 = vmatmul.mubr.bf16.gmra.mrb[0].mxu0 %v691
    %v2223 = vpop.f32.mrb[0].mxu0
    %v2224 = vadd.f32 %v2175, %v2223
    %v2225 = vpop.f32.mrb[0].mxu0
    %v2226 = vpop.f32.mrb[0].mxu0
    %v2227 = vadd.f32 %v2178, %v2226
    %v2228 = vpop.f32.mrb[0].mxu0
    %2229 = vmatprep.mubr.bf16.mxu0 %v719
    %2230 = vmatmul.mubr.bf16.gmra.mrb[0].mxu0 %v718
    %v2231 = vpop.f32.mrb[0].mxu0
    %v2232 = vadd.f32 %v2183, %v2231
    %v2233 = vpop.f32.mrb[0].mxu0
    %v2234 = vpop.f32.mrb[0].mxu0
    %v2235 = vadd.f32 %v2186, %v2234
    %v2236 = vpop.f32.mrb[0].mxu0
    %2237 = vdwg.mxu0
    %2238 = vmatprep.subr.bf16.mxu0 0
    %2239 = vmatpush1.bf16.msra.mxu0 %v1707
    %2240 = vmatprep.subr.bf16.mxu0 0
    %2241 = vmatpush1.bf16.msra.mxu0 %v1708
    %2242 = vmatprep.subr.bf16.mxu0 0
    %2243 = vmatpush1.bf16.msra.mxu0 %v1709
    %2244 = vmatprep.subr.bf16.mxu0 0
    %2245 = vmatpush1.bf16.msra.mxu0 %v1710
    %2246 = vmatprep.subr.bf16.mxu0 0
    %2247 = vmatpush1.bf16.msra.mxu0 %v1711
    %2248 = vmatprep.subr.bf16.mxu0 0
    %2249 = vmatpush1.bf16.msra.mxu0 %v1712
    %2250 = vmatprep.subr.bf16.mxu0 0
    %2251 = vmatpush1.bf16.msra.mxu0 %v1713
    %2252 = vmatprep.subr.bf16.mxu0 0
    %2253 = vmatpush1.bf16.msra.mxu0 %v1714
    %2254 = vmatprep.subr.bf16.mxu0 0
    %2255 = vmatpush1.bf16.msra.mxu0 %v1715
    %2256 = vmatprep.subr.bf16.mxu0 0
    %2257 = vmatpush1.bf16.msra.mxu0 %v1716
    %2258 = vmatprep.subr.bf16.mxu0 0
    %2259 = vmatpush1.bf16.msra.mxu0 %v1717
    %2260 = vmatprep.subr.bf16.mxu0 0
    %2261 = vmatpush1.bf16.msra.mxu0 %v1718
    %2262 = vmatprep.subr.bf16.mxu0 0
    %2263 = vmatpush1.bf16.msra.mxu0 %v1719
    %2264 = vmatprep.subr.bf16.mxu0 0
    %2265 = vmatpush1.bf16.msra.mxu0 %v1720
    %2266 = vmatprep.subr.bf16.mxu0 0
    %2267 = vmatpush1.bf16.msra.mxu0 %v1721
    %2268 = vmatprep.subr.bf16.mxu0 0
    %2269 = vmatpush1.bf16.msra.mxu0 %v1722
    %2270 = vmatprep.mubr.bf16.mxu0 %v694
    %2271 = vmatmul.mubr.bf16.gmra.mrb[0].mxu0 %v693
    %v2272 = vpop.f32.mrb[0].mxu0
    %v2273 = vadd.f32 %v2224, %v2272
    %v2274 = vpop.f32.mrb[0].mxu0
    %v2275 = vpop.f32.mrb[0].mxu0
    %v2276 = vadd.f32 %v2227, %v2275
    %v2277 = vpop.f32.mrb[0].mxu0
    %2278 = vmatprep.mubr.bf16.mxu0 %v721
    %2279 = vmatmul.mubr.bf16.gmra.mrb[0].mxu0 %v720
    %v2280 = vpop.f32.mrb[0].mxu0
    %v2281 = vadd.f32 %v2232, %v2280
    %v2282 = vpop.f32.mrb[0].mxu0
    %v2283 = vpop.f32.mrb[0].mxu0
    %v2284 = vadd.f32 %v2235, %v2283
    %v2285 = vpop.f32.mrb[0].mxu0
    %2286 = vdwg.mxu0
    %2287 = vmatprep.subr.bf16.mxu0 0
    %2288 = vmatpush1.bf16.msra.mxu0 %v1723
    %2289 = vmatprep.subr.bf16.mxu0 0
    %2290 = vmatpush1.bf16.msra.mxu0 %v1724
    %2291 = vmatprep.subr.bf16.mxu0 0
    %2292 = vmatpush1.bf16.msra.mxu0 %v1725
    %2293 = vmatprep.subr.bf16.mxu0 0
    %2294 = vmatpush1.bf16.msra.mxu0 %v1726
    %2295 = vmatprep.subr.bf16.mxu0 0
    %2296 = vmatpush1.bf16.msra.mxu0 %v1727
    %2297 = vmatprep.subr.bf16.mxu0 0
    %2298 = vmatpush1.bf16.msra.mxu0 %v1728
    %2299 = vmatprep.subr.bf16.mxu0 0
    %2300 = vmatpush1.bf16.msra.mxu0 %v1729
    %2301 = vmatprep.subr.bf16.mxu0 0
    %2302 = vmatpush1.bf16.msra.mxu0 %v1730
    %2303 = vmatprep.subr.bf16.mxu0 0
    %2304 = vmatpush1.bf16.msra.mxu0 %v1731
    %2305 = vmatprep.subr.bf16.mxu0 0
    %2306 = vmatpush1.bf16.msra.mxu0 %v1732
    %2307 = vmatprep.subr.bf16.mxu0 0
    %2308 = vmatpush1.bf16.msra.mxu0 %v1733
    %2309 = vmatprep.subr.bf16.mxu0 0
    %2310 = vmatpush1.bf16.msra.mxu0 %v1734
    %2311 = vmatprep.subr.bf16.mxu0 0
    %2312 = vmatpush1.bf16.msra.mxu0 %v1735
    %2313 = vmatprep.subr.bf16.mxu0 0
    %2314 = vmatpush1.bf16.msra.mxu0 %v1736
    %2315 = vmatprep.subr.bf16.mxu0 0
    %2316 = vmatpush1.bf16.msra.mxu0 %v1737
    %2317 = vmatprep.subr.bf16.mxu0 0
    %2318 = vmatpush1.bf16.msra.mxu0 %v1738
    %2319 = vmatprep.mubr.bf16.mxu0 %v696
    %2320 = vmatmul.mubr.bf16.gmra.mrb[0].mxu0 %v695
    %v2321 = vpop.f32.mrb[0].mxu0
    %v2322 = vadd.f32 %v2273, %v2321
    %v2323 = vpop.f32.mrb[0].mxu0
    %v2324 = vpop.f32.mrb[0].mxu0
    %v2325 = vadd.f32 %v2276, %v2324
    %v2326 = vpop.f32.mrb[0].mxu0
    %2327 = vmatprep.mubr.bf16.mxu0 %v723
    %2328 = vmatmul.mubr.bf16.gmra.mrb[0].mxu0 %v722
    %v2329 = vpop.f32.mrb[0].mxu0
    %v2330 = vadd.f32 %v2281, %v2329
    %v2331 = vpop.f32.mrb[0].mxu0
    %v2332 = vpop.f32.mrb[0].mxu0
    %v2333 = vadd.f32 %v2284, %v2332
    %v2334 = vpop.f32.mrb[0].mxu0
    %2335 = vdwg.mxu0
    %2336 = vmatprep.subr.bf16.mxu0 0
    %2337 = vmatpush1.bf16.msra.mxu0 %v1739
    %2338 = vmatprep.subr.bf16.mxu0 0
    %2339 = vmatpush1.bf16.msra.mxu0 %v1740
    %2340 = vmatprep.subr.bf16.mxu0 0
    %2341 = vmatpush1.bf16.msra.mxu0 %v1741
    %2342 = vmatprep.subr.bf16.mxu0 0
    %2343 = vmatpush1.bf16.msra.mxu0 %v1742
    %2344 = vmatprep.subr.bf16.mxu0 0
    %2345 = vmatpush1.bf16.msra.mxu0 %v1743
    %2346 = vmatprep.subr.bf16.mxu0 0
    %2347 = vmatpush1.bf16.msra.mxu0 %v1744
    %2348 = vmatprep.subr.bf16.mxu0 0
    %2349 = vmatpush1.bf16.msra.mxu0 %v1745
    %2350 = vmatprep.subr.bf16.mxu0 0
    %2351 = vmatpush1.bf16.msra.mxu0 %v1746
    %2352 = vmatprep.subr.bf16.mxu0 0
    %2353 = vmatpush1.bf16.msra.mxu0 %v1747
    %2354 = vmatprep.subr.bf16.mxu0 0
    %2355 = vmatpush1.bf16.msra.mxu0 %v1748
    %2356 = vmatprep.subr.bf16.mxu0 0
    %2357 = vmatpush1.bf16.msra.mxu0 %v1749
    %2358 = vmatprep.subr.bf16.mxu0 0
    %2359 = vmatpush1.bf16.msra.mxu0 %v1750
    %2360 = vmatprep.subr.bf16.mxu0 0
    %2361 = vmatpush1.bf16.msra.mxu0 %v1751
    %2362 = vmatprep.subr.bf16.mxu0 0
    %2363 = vmatpush1.bf16.msra.mxu0 %v1752
    %2364 = vmatprep.subr.bf16.mxu0 0
    %2365 = vmatpush1.bf16.msra.mxu0 %v1753
    %2366 = vmatprep.subr.bf16.mxu0 0
    %2367 = vmatpush1.bf16.msra.mxu0 %v1754
    %2368 = vmatprep.mubr.bf16.mxu0 %v698
    %2369 = vmatmul.mubr.bf16.gmra.mrb[0].mxu0 %v697
    %v2370 = vpop.f32.mrb[0].mxu0
    %v2371 = vadd.f32 %v2322, %v2370
    %v2372 = vpop.f32.mrb[0].mxu0
    %v2373 = vpop.f32.mrb[0].mxu0
    %v2374 = vadd.f32 %v2325, %v2373
    %v2375 = vpop.f32.mrb[0].mxu0
    %2376 = vmatprep.mubr.bf16.mxu0 %v725
    %2377 = vmatmul.mubr.bf16.gmra.mrb[0].mxu0 %v724
    %v2378 = vpop.f32.mrb[0].mxu0
    %v2379 = vadd.f32 %v2330, %v2378
    %v2380 = vpop.f32.mrb[0].mxu0
    %v2381 = vpop.f32.mrb[0].mxu0
    %v2382 = vadd.f32 %v2333, %v2381
    %v2383 = vpop.f32.mrb[0].mxu0
    %2384 = vdwg.mxu0
    %2385 = vmatprep.subr.bf16.mxu0 0
    %2386 = vmatpush1.bf16.msra.mxu0 %v1755
    %2387 = vmatprep.subr.bf16.mxu0 0
    %2388 = vmatpush1.bf16.msra.mxu0 %v1756
    %2389 = vmatprep.subr.bf16.mxu0 0
    %2390 = vmatpush1.bf16.msra.mxu0 %v1757
    %2391 = vmatprep.subr.bf16.mxu0 0
    %2392 = vmatpush1.bf16.msra.mxu0 %v1758
    %2393 = vmatprep.subr.bf16.mxu0 0
    %2394 = vmatpush1.bf16.msra.mxu0 %v1759
    %2395 = vmatprep.subr.bf16.mxu0 0
    %2396 = vmatpush1.bf16.msra.mxu0 %v1760
    %2397 = vmatprep.subr.bf16.mxu0 0
    %2398 = vmatpush1.bf16.msra.mxu0 %v1761
    %2399 = vmatprep.subr.bf16.mxu0 0
    %2400 = vmatpush1.bf16.msra.mxu0 %v1762
    %2401 = vmatprep.subr.bf16.mxu0 0
    %2402 = vmatpush1.bf16.msra.mxu0 %v1763
    %2403 = vmatprep.subr.bf16.mxu0 0
    %2404 = vmatpush1.bf16.msra.mxu0 %v1764
    %2405 = vmatprep.subr.bf16.mxu0 0
    %2406 = vmatpush1.bf16.msra.mxu0 %v1765
    %2407 = vmatprep.subr.bf16.mxu0 0
    %2408 = vmatpush1.bf16.msra.mxu0 %v1766
    %2409 = vmatprep.subr.bf16.mxu0 0
    %2410 = vmatpush1.bf16.msra.mxu0 %v1767
    %2411 = vmatprep.subr.bf16.mxu0 0
    %2412 = vmatpush1.bf16.msra.mxu0 %v1768
    %2413 = vmatprep.subr.bf16.mxu0 0
    %2414 = vmatpush1.bf16.msra.mxu0 %v1769
    %2415 = vmatprep.subr.bf16.mxu0 0
    %2416 = vmatpush1.bf16.msra.mxu0 %v1770
    %2417 = vmatprep.mubr.bf16.mxu0 %v700
    %2418 = vmatmul.mubr.bf16.gmra.mrb[0].mxu0 %v699
    %v2419 = vpop.f32.mrb[0].mxu0
    %v2420 = vadd.f32 %v2371, %v2419
    %v2421 = vpop.f32.mrb[0].mxu0
    %v2422 = vpop.f32.mrb[0].mxu0
    %v2423 = vadd.f32 %v2374, %v2422
    %v2424 = vpop.f32.mrb[0].mxu0
    %2425 = vmatprep.mubr.bf16.mxu0 %v727
    %2426 = vmatmul.mubr.bf16.gmra.mrb[0].mxu0 %v726
    %v2427 = vpop.f32.mrb[0].mxu0
    %v2428 = vadd.f32 %v2379, %v2427
    %v2429 = vpop.f32.mrb[0].mxu0
    %v2430 = vpop.f32.mrb[0].mxu0
    %v2431 = vadd.f32 %v2382, %v2430
    %v2432 = vpop.f32.mrb[0].mxu0
    %2433 = vdwg.mxu0
    %2434 = vmatprep.subr.bf16.mxu0 0
    %2435 = vmatpush1.bf16.msra.mxu0 %v1771
    %2436 = vmatprep.subr.bf16.mxu0 0
    %2437 = vmatpush1.bf16.msra.mxu0 %v1772
    %2438 = vmatprep.subr.bf16.mxu0 0
    %2439 = vmatpush1.bf16.msra.mxu0 %v1773
    %2440 = vmatprep.subr.bf16.mxu0 0
    %2441 = vmatpush1.bf16.msra.mxu0 %v1774
    %2442 = vmatprep.subr.bf16.mxu0 0
    %2443 = vmatpush1.bf16.msra.mxu0 %v1775
    %2444 = vmatprep.subr.bf16.mxu0 0
    %2445 = vmatpush1.bf16.msra.mxu0 %v1776
    %2446 = vmatprep.subr.bf16.mxu0 0
    %2447 = vmatpush1.bf16.msra.mxu0 %v1777
    %2448 = vmatprep.subr.bf16.mxu0 0
    %2449 = vmatpush1.bf16.msra.mxu0 %v1778
    %2450 = vmatprep.subr.bf16.mxu0 0
    %2451 = vmatpush1.bf16.msra.mxu0 %v1779
    %2452 = vmatprep.subr.bf16.mxu0 0
    %2453 = vmatpush1.bf16.msra.mxu0 %v1780
    %2454 = vmatprep.subr.bf16.mxu0 0
    %2455 = vmatpush1.bf16.msra.mxu0 %v1781
    %2456 = vmatprep.subr.bf16.mxu0 0
    %2457 = vmatpush1.bf16.msra.mxu0 %v1782
    %2458 = vmatprep.subr.bf16.mxu0 0
    %2459 = vmatpush1.bf16.msra.mxu0 %v1783
    %2460 = vmatprep.subr.bf16.mxu0 0
    %2461 = vmatpush1.bf16.msra.mxu0 %v1784
    %2462 = vmatprep.subr.bf16.mxu0 0
    %2463 = vmatpush1.bf16.msra.mxu0 %v1785
    %2464 = vmatprep.subr.bf16.mxu0 0
    %2465 = vmatpush1.bf16.msra.mxu0 %v1786
    %2466 = vmatprep.mubr.bf16.mxu0 %v702
    %2467 = vmatmul.mubr.bf16.gmra.mrb[0].mxu0 %v701
    %v2468 = vpop.f32.mrb[0].mxu0
    %v2469 = vadd.f32 %v2420, %v2468
    %v2470 = vpop.f32.mrb[0].mxu0
    %v2471 = vpop.f32.mrb[0].mxu0
    %v2472 = vadd.f32 %v2423, %v2471
    %v2473 = vpop.f32.mrb[0].mxu0
    %2474 = vmatprep.mubr.bf16.mxu0 %v729
    %2475 = vmatmul.mubr.bf16.gmra.mrb[0].mxu0 %v728
    %v2476 = vpop.f32.mrb[0].mxu0
    %v2477 = vadd.f32 %v2428, %v2476
    %v2478 = vpop.f32.mrb[0].mxu0
    %v2479 = vpop.f32.mrb[0].mxu0
    %v2480 = vadd.f32 %v2431, %v2479
    %v2481 = vpop.f32.mrb[0].mxu0
    %2482 = vdwg.mxu0
    %2483 = vmatprep.subr.bf16.mxu0 0
    %2484 = vmatpush1.bf16.msra.mxu0 %v1787
    %2485 = vmatprep.subr.bf16.mxu0 0
    %2486 = vmatpush1.bf16.msra.mxu0 %v1788
    %2487 = vmatprep.subr.bf16.mxu0 0
    %2488 = vmatpush1.bf16.msra.mxu0 %v1789
    %2489 = vmatprep.subr.bf16.mxu0 0
    %2490 = vmatpush1.bf16.msra.mxu0 %v1790
    %2491 = vmatprep.subr.bf16.mxu0 0
    %2492 = vmatpush1.bf16.msra.mxu0 %v1791
    %2493 = vmatprep.subr.bf16.mxu0 0
    %2494 = vmatpush1.bf16.msra.mxu0 %v1792
    %2495 = vmatprep.subr.bf16.mxu0 0
    %2496 = vmatpush1.bf16.msra.mxu0 %v1793
    %2497 = vmatprep.subr.bf16.mxu0 0
    %2498 = vmatpush1.bf16.msra.mxu0 %v1794
    %2499 = vmatprep.subr.bf16.mxu0 0
    %2500 = vmatpush1.bf16.msra.mxu0 %v1795
    %2501 = vmatprep.subr.bf16.mxu0 0
    %2502 = vmatpush1.bf16.msra.mxu0 %v1796
    %2503 = vmatprep.subr.bf16.mxu0 0
    %2504 = vmatpush1.bf16.msra.mxu0 %v1797
    %2505 = vmatprep.subr.bf16.mxu0 0
    %2506 = vmatpush1.bf16.msra.mxu0 %v1798
    %2507 = vmatprep.subr.bf16.mxu0 0
    %2508 = vmatpush1.bf16.msra.mxu0 %v1799
    %2509 = vmatprep.subr.bf16.mxu0 0
    %2510 = vmatpush1.bf16.msra.mxu0 %v1800
    %2511 = vmatprep.subr.bf16.mxu0 0
    %2512 = vmatpush1.bf16.msra.mxu0 %v1801
    %2513 = vmatprep.subr.bf16.mxu0 0
    %2514 = vmatpush1.bf16.msra.mxu0 %v1802
    %2515 = vmatprep.mubr.bf16.mxu0 %v704
    %2516 = vmatmul.mubr.bf16.gmra.mrb[0].mxu0 %v703
    %v2517 = vpop.f32.mrb[0].mxu0
    %v2518 = vadd.f32 %v2469, %v2517
    %v2519 = vpop.f32.mrb[0].mxu0
    %v2520 = vpop.f32.mrb[0].mxu0
    %v2521 = vadd.f32 %v2472, %v2520
    %v2522 = vpop.f32.mrb[0].mxu0
    %2523 = vmatprep.mubr.bf16.mxu0 %v731
    %2524 = vmatmul.mubr.bf16.gmra.mrb[0].mxu0 %v730
    %v2525 = vpop.f32.mrb[0].mxu0
    %v2526 = vadd.f32 %v2477, %v2525
    %v2527 = vpop.f32.mrb[0].mxu0
    %v2528 = vpop.f32.mrb[0].mxu0
    %v2529 = vadd.f32 %v2480, %v2528
    %v2530 = vpop.f32.mrb[0].mxu0
    %2531 = vdwg.mxu0
    %2532 = vmatprep.subr.bf16.mxu0 0
    %2533 = vmatpush1.bf16.msra.mxu0 %v1803
    %2534 = vmatprep.subr.bf16.mxu0 0
    %2535 = vmatpush1.bf16.msra.mxu0 %v1804
    %2536 = vmatprep.subr.bf16.mxu0 0
    %2537 = vmatpush1.bf16.msra.mxu0 %v1805
    %2538 = vmatprep.subr.bf16.mxu0 0
    %2539 = vmatpush1.bf16.msra.mxu0 %v1806
    %2540 = vmatprep.subr.bf16.mxu0 0
    %2541 = vmatpush1.bf16.msra.mxu0 %v1807
    %2542 = vmatprep.subr.bf16.mxu0 0
    %2543 = vmatpush1.bf16.msra.mxu0 %v1808
    %2544 = vmatprep.subr.bf16.mxu0 0
    %2545 = vmatpush1.bf16.msra.mxu0 %v1809
    %2546 = vmatprep.subr.bf16.mxu0 0
    %2547 = vmatpush1.bf16.msra.mxu0 %v1810
    %2548 = vmatprep.subr.bf16.mxu0 0
    %2549 = vmatpush1.bf16.msra.mxu0 %v1811
    %2550 = vmatprep.subr.bf16.mxu0 0
    %2551 = vmatpush1.bf16.msra.mxu0 %v1812
    %2552 = vmatprep.subr.bf16.mxu0 0
    %2553 = vmatpush1.bf16.msra.mxu0 %v1813
    %2554 = vmatprep.subr.bf16.mxu0 0
    %2555 = vmatpush1.bf16.msra.mxu0 %v1814
    %2556 = vmatprep.subr.bf16.mxu0 0
    %2557 = vmatpush1.bf16.msra.mxu0 %v1815
    %2558 = vmatprep.subr.bf16.mxu0 0
    %2559 = vmatpush1.bf16.msra.mxu0 %v1816
    %2560 = vmatprep.subr.bf16.mxu0 0
    %2561 = vmatpush1.bf16.msra.mxu0 %v1817
    %2562 = vmatprep.subr.bf16.mxu0 0
    %2563 = vmatpush1.bf16.msra.mxu0 %v1818
    %2564 = vmatprep.mubr.bf16.mxu0 %v706
    %2565 = vmatmul.mubr.bf16.gmra.mrb[0].mxu0 %v705
    %v2566 = vpop.f32.mrb[0].mxu0
    %v2567 = vadd.f32 %v2518, %v2566
    %v2568 = vpop.f32.mrb[0].mxu0
    %v2569 = vpop.f32.mrb[0].mxu0
    %v2570 = vadd.f32 %v2521, %v2569
    %v2571 = vpop.f32.mrb[0].mxu0
    %2572 = vmatprep.mubr.bf16.mxu0 %v733
    %2573 = vmatmul.mubr.bf16.gmra.mrb[0].mxu0 %v732
    %v2574 = vpop.f32.mrb[0].mxu0
    %v2575 = vadd.f32 %v2526, %v2574
    %v2576 = vpop.f32.mrb[0].mxu0
    %v2577 = vpop.f32.mrb[0].mxu0
    %v2578 = vadd.f32 %v2529, %v2577
    %v2579 = vpop.f32.mrb[0].mxu0
    %2580 = vdwg.mxu0
    %2581 = vmatprep.subr.bf16.mxu0 0
    %2582 = vmatpush1.bf16.msra.mxu0 %v1819
    %2583 = vmatprep.subr.bf16.mxu0 0
    %2584 = vmatpush1.bf16.msra.mxu0 %v1820
    %2585 = vmatprep.subr.bf16.mxu0 0
    %2586 = vmatpush1.bf16.msra.mxu0 %v1821
    %2587 = vmatprep.subr.bf16.mxu0 0
    %2588 = vmatpush1.bf16.msra.mxu0 %v1822
    %2589 = vmatprep.subr.bf16.mxu0 0
    %2590 = vmatpush1.bf16.msra.mxu0 %v1823
    %2591 = vmatprep.subr.bf16.mxu0 0
    %2592 = vmatpush1.bf16.msra.mxu0 %v1824
    %2593 = vmatprep.subr.bf16.mxu0 0
    %2594 = vmatpush1.bf16.msra.mxu0 %v1825
    %2595 = vmatprep.subr.bf16.mxu0 0
    %2596 = vmatpush1.bf16.msra.mxu0 %v1826
    %2597 = vmatprep.subr.bf16.mxu0 0
    %2598 = vmatpush1.bf16.msra.mxu0 %v1827
    %2599 = vmatprep.subr.bf16.mxu0 0
    %2600 = vmatpush1.bf16.msra.mxu0 %v1828
    %2601 = vmatprep.subr.bf16.mxu0 0
    %2602 = vmatpush1.bf16.msra.mxu0 %v1829
    %2603 = vmatprep.subr.bf16.mxu0 0
    %2604 = vmatpush1.bf16.msra.mxu0 %v1830
    %2605 = vmatprep.subr.bf16.mxu0 0
    %2606 = vmatpush1.bf16.msra.mxu0 %v1831
    %2607 = vmatprep.subr.bf16.mxu0 0
    %2608 = vmatpush1.bf16.msra.mxu0 %v1832
    %2609 = vmatprep.subr.bf16.mxu0 0
    %2610 = vmatpush1.bf16.msra.mxu0 %v1833
    %2611 = vmatprep.subr.bf16.mxu0 0
    %2612 = vmatpush1.bf16.msra.mxu0 %v1834
    %2613 = vmatprep.mubr.bf16.mxu0 %v708
    %2614 = vmatmul.mubr.bf16.gmra.mrb[0].mxu0 %v707
    %v2615 = vpop.f32.mrb[0].mxu0
    %v2616 = vadd.f32 %v2567, %v2615
    %v2617 = vpop.f32.mrb[0].mxu0
    %v2618 = vpop.f32.mrb[0].mxu0
    %v2619 = vadd.f32 %v2570, %v2618
    %v2620 = vpop.f32.mrb[0].mxu0
    %2621 = vmatprep.mubr.bf16.mxu0 %v735
    %2622 = vmatmul.mubr.bf16.gmra.mrb[0].mxu0 %v734
    %v2623 = vpop.f32.mrb[0].mxu0
    %v2624 = vadd.f32 %v2575, %v2623
    %v2625 = vpop.f32.mrb[0].mxu0
    %v2626 = vpop.f32.mrb[0].mxu0
    %v2627 = vadd.f32 %v2578, %v2626
    %v2628 = vpop.f32.mrb[0].mxu0
    %2629 = vdwg.mxu0
    %2630 = vmatprep.subr.bf16.mxu0 0
    %2631 = vmatpush1.bf16.msra.mxu0 %v1835
    %2632 = vmatprep.subr.bf16.mxu0 0
    %2633 = vmatpush1.bf16.msra.mxu0 %v1836
    %2634 = vmatprep.subr.bf16.mxu0 0
    %2635 = vmatpush1.bf16.msra.mxu0 %v1837
    %2636 = vmatprep.subr.bf16.mxu0 0
    %2637 = vmatpush1.bf16.msra.mxu0 %v1838
    %2638 = vmatprep.subr.bf16.mxu0 0
    %2639 = vmatpush1.bf16.msra.mxu0 %v1839
    %2640 = vmatprep.subr.bf16.mxu0 0
    %2641 = vmatpush1.bf16.msra.mxu0 %v1840
    %2642 = vmatprep.subr.bf16.mxu0 0
    %2643 = vmatpush1.bf16.msra.mxu0 %v1841
    %2644 = vmatprep.subr.bf16.mxu0 0
    %2645 = vmatpush1.bf16.msra.mxu0 %v1842
    %2646 = vmatprep.subr.bf16.mxu0 0
    %2647 = vmatpush1.bf16.msra.mxu0 %v1843
    %2648 = vmatprep.subr.bf16.mxu0 0
    %2649 = vmatpush1.bf16.msra.mxu0 %v1844
    %2650 = vmatprep.subr.bf16.mxu0 0
    %2651 = vmatpush1.bf16.msra.mxu0 %v1845
    %2652 = vmatprep.subr.bf16.mxu0 0
    %2653 = vmatpush1.bf16.msra.mxu0 %v1846
    %2654 = vmatprep.subr.bf16.mxu0 0
    %2655 = vmatpush1.bf16.msra.mxu0 %v1847
    %2656 = vmatprep.subr.bf16.mxu0 0
    %2657 = vmatpush1.bf16.msra.mxu0 %v1848
    %2658 = vmatprep.subr.bf16.mxu0 0
    %2659 = vmatpush1.bf16.msra.mxu0 %v1849
    %2660 = vmatprep.subr.bf16.mxu0 0
    %2661 = vmatpush1.bf16.msra.mxu0 %v1850
    %2662 = vmatprep.mubr.bf16.mxu0 %v710
    %2663 = vmatmul.mubr.bf16.gmra.mrb[0].mxu0 %v709
    %v2664 = vpop.f32.mrb[0].mxu0
    %v2665 = vadd.f32 %v2616, %v2664
    %v2666 = vpop.f32.mrb[0].mxu0
    %v2667 = vpop.f32.mrb[0].mxu0
    %v2668 = vadd.f32 %v2619, %v2667
    %v2669 = vpop.f32.mrb[0].mxu0
    %2670 = vmatprep.mubr.bf16.mxu0 %v737
    %2671 = vmatmul.mubr.bf16.gmra.mrb[0].mxu0 %v736
    %v2672 = vpop.f32.mrb[0].mxu0
    %v2673 = vadd.f32 %v2624, %v2672
    %v2674 = vpop.f32.mrb[0].mxu0
    %v2675 = vpop.f32.mrb[0].mxu0
    %v2676 = vadd.f32 %v2627, %v2675
    %v2677 = vpop.f32.mrb[0].mxu0
    %2678 = vdwg.mxu0
    %2679 = vmatprep.subr.bf16.mxu0 0
    %2680 = vmatpush1.bf16.msra.mxu0 %v1851
    %2681 = vmatprep.subr.bf16.mxu0 0
    %2682 = vmatpush1.bf16.msra.mxu0 %v1852
    %2683 = vmatprep.subr.bf16.mxu0 0
    %2684 = vmatpush1.bf16.msra.mxu0 %v1853
    %2685 = vmatprep.subr.bf16.mxu0 0
    %2686 = vmatpush1.bf16.msra.mxu0 %v1854
    %2687 = vmatprep.subr.bf16.mxu0 0
    %2688 = vmatpush1.bf16.msra.mxu0 %v1855
    %2689 = vmatprep.subr.bf16.mxu0 0
    %2690 = vmatpush1.bf16.msra.mxu0 %v1856
    %2691 = vmatprep.subr.bf16.mxu0 0
    %2692 = vmatpush1.bf16.msra.mxu0 %v1857
    %2693 = vmatprep.subr.bf16.mxu0 0
    %2694 = vmatpush1.bf16.msra.mxu0 %v1858
    %2695 = vmatprep.subr.bf16.mxu0 0
    %2696 = vmatpush1.bf16.msra.mxu0 %v1859
    %2697 = vmatprep.subr.bf16.mxu0 0
    %2698 = vmatpush1.bf16.msra.mxu0 %v1860
    %2699 = vmatprep.subr.bf16.mxu0 0
    %2700 = vmatpush1.bf16.msra.mxu0 %v1861
    %2701 = vmatprep.subr.bf16.mxu0 0
    %2702 = vmatpush1.bf16.msra.mxu0 %v1862
    %2703 = vmatprep.subr.bf16.mxu0 0
    %2704 = vmatpush1.bf16.msra.mxu0 %v1863
    %2705 = vmatprep.subr.bf16.mxu0 0
    %2706 = vmatpush1.bf16.msra.mxu0 %v1864
    %2707 = vmatprep.subr.bf16.mxu0 0
    %2708 = vmatpush1.bf16.msra.mxu0 %v1865
    %2709 = vmatprep.subr.bf16.mxu0 0
    %2710 = vmatpush1.bf16.msra.mxu0 %v1866
    %2711 = vmatprep.mubr.bf16.mxu0 %v712
    %2712 = vmatmul.mubr.bf16.gmra.mrb[0].mxu0 %v711
    %v2713 = vpop.f32.mrb[0].mxu0
    %v2714 = vadd.f32 %v2665, %v2713
    %v2715 = vpop.f32.mrb[0].mxu0
    %v2716 = vpop.f32.mrb[0].mxu0
    %v2717 = vadd.f32 %v2668, %v2716
    %v2718 = vpop.f32.mrb[0].mxu0
    %2719 = vmatprep.mubr.bf16.mxu0 %v739
    %2720 = vmatmul.mubr.bf16.gmra.mrb[0].mxu0 %v738
    %v2721 = vpop.f32.mrb[0].mxu0
    %v2722 = vadd.f32 %v2673, %v2721
    %v2723 = vpop.f32.mrb[0].mxu0
    %v2724 = vpop.f32.mrb[0].mxu0
    %v2725 = vadd.f32 %v2676, %v2724
    %v2726 = vpop.f32.mrb[0].mxu0
    %2727 = vdwg.mxu0
    %2728 = vmatprep.subr.bf16.mxu0 0
    %2729 = vmatpush1.bf16.msra.mxu0 %v1867
    %2730 = vmatprep.subr.bf16.mxu0 0
    %2731 = vmatpush1.bf16.msra.mxu0 %v1868
    %2732 = vmatprep.subr.bf16.mxu0 0
    %2733 = vmatpush1.bf16.msra.mxu0 %v1869
    %2734 = vmatprep.subr.bf16.mxu0 0
    %2735 = vmatpush1.bf16.msra.mxu0 %v1870
    %2736 = vmatprep.subr.bf16.mxu0 0
    %2737 = vmatpush1.bf16.msra.mxu0 %v1871
    %2738 = vmatprep.subr.bf16.mxu0 0
    %2739 = vmatpush1.bf16.msra.mxu0 %v1872
    %2740 = vmatprep.subr.bf16.mxu0 0
    %2741 = vmatpush1.bf16.msra.mxu0 %v1873
    %2742 = vmatprep.subr.bf16.mxu0 0
    %2743 = vmatpush1.bf16.msra.mxu0 %v1874
    %2744 = vmatprep.subr.bf16.mxu0 0
    %2745 = vmatpush1.bf16.msra.mxu0 0
    %2746 = vmatprep.subr.bf16.mxu0 0
    %2747 = vmatpush1.bf16.msra.mxu0 0
    %2748 = vmatprep.subr.bf16.mxu0 0
    %2749 = vmatpush1.bf16.msra.mxu0 0
    %2750 = vmatprep.subr.bf16.mxu0 0
    %2751 = vmatpush1.bf16.msra.mxu0 0
    %2752 = vmatprep.subr.bf16.mxu0 0
    %2753 = vmatpush1.bf16.msra.mxu0 0
    %2754 = vmatprep.subr.bf16.mxu0 0
    %2755 = vmatpush1.bf16.msra.mxu0 0
    %2756 = vmatprep.subr.bf16.mxu0 0
    %2757 = vmatpush1.bf16.msra.mxu0 0
    %2758 = vmatprep.subr.bf16.mxu0 0
    %2759 = vmatpush1.bf16.msra.mxu0 0
    %2760 = vmatprep.mubr.bf16.mxu0 0
    %2761 = vmatmul.mubr.bf16.gmra.mrb[0].mxu0 %v713
    %v2762 = vpop.f32.mrb[0].mxu0
    %v2763 = vadd.f32 %v2714, %v2762
    %v2764 = vpop.f32.mrb[0].mxu0
    %v2765 = vpop.f32.mrb[0].mxu0
    %v2766 = vadd.f32 %v2717, %v2765
    %v2767 = vpop.f32.mrb[0].mxu0
    %2768 = vmatprep.mubr.bf16.mxu0 0
    %2769 = vmatmul.mubr.bf16.gmra.mrb[0].mxu0 %v740
    %v2770 = vpop.f32.mrb[0].mxu0
    %v2771 = vadd.f32 %v2722, %v2770
    %v2772 = vpop.f32.mrb[0].mxu0
    %v2773 = vpop.f32.mrb[0].mxu0
    %v2774 = vadd.f32 %v2725, %v2773
    %v2775 = vpop.f32.mrb[0].mxu0
    %2776 = vdwg.mxu0
    %v2777 = vmax.f32 %v2763, 0.0
    %v2778 = vmax.f32 %v2766, 0.0
    %v2779 = vmax.f32 %v2771, 0.0
    %v2780 = vmax.f32 %v2774, 0.0
    %v2781 = vrot.slane %v2777, 4
    %v2782 = vmax.f32 %v2777, %v2781
    %v2783 = vrot.slane %v2782, 2
    %v2784 = vmax.f32 %v2782, %v2783
    %v2785 = vrot.slane %v2784, 1
    %v2786 = vmax.f32 %v2784, %v2785
    %v2787 = vrot.slane %v2778, 4
    %v2788 = vmax.f32 %v2778, %v2787
    %v2789 = vrot.slane %v2788, 2
    %v2790 = vmax.f32 %v2788, %v2789
    %v2791 = vrot.slane %v2790, 1
    %v2792 = vmax.f32 %v2790, %v2791
    %v2793 = vpack.c.bf16 %v2786, %v2786
    %v2794 = vpack.c.bf16 %v2792, %v2792
    %v2795 = vld [vmem:[%s3] sm:$0xf]
    %v2796 = vld [vmem:[%s3 + $0x4] sm:$0xf]
    %v2797 = vld [vmem:[%s3 + $0x8] sm:$0xf]
    %v2798 = vld [vmem:[%s3 + $0xc] sm:$0xf]
    %v2799 = vld [vmem:[%s3 + $0x10] sm:$0xf]
    %v2800 = vld [vmem:[%s3 + $0x14] sm:$0xf]
    %v2801 = vld [vmem:[%s3 + $0x18] sm:$0xf]
    %v2802 = vld [vmem:[%s3 + $0x1c] sm:$0xf]
    %v2803 = vld [vmem:[%s3 + $0x20] sm:$0xf]
    %v2804 = vld [vmem:[%s3 + $0x24] sm:$0xf]
    %v2805 = vld [vmem:[%s3 + $0x28] sm:$0xf]
    %v2806 = vld [vmem:[%s3 + $0x2c] sm:$0xf]
    %v2807 = vld [vmem:[%s3 + $0x30] sm:$0xf]
    %v2808 = vld [vmem:[%s3 + $0x34] sm:$0xf]
    %v2809 = vld [vmem:[%s3 + $0x38] sm:$0xf]
    %v2810 = vld [vmem:[%s3 + $0x3c] sm:$0xf]
    %v2811 = vrot.slane %v2779, 4
    %v2812 = vmax.f32 %v2779, %v2811
    %v2813 = vrot.slane %v2812, 2
    %v2814 = vmax.f32 %v2812, %v2813
    %v2815 = vrot.slane %v2814, 1
    %v2816 = vmax.f32 %v2814, %v2815
    %v2817 = vrot.slane %v2780, 4
    %v2818 = vmax.f32 %v2780, %v2817
    %v2819 = vrot.slane %v2818, 2
    %v2820 = vmax.f32 %v2818, %v2819
    %v2821 = vrot.slane %v2820, 1
    %v2822 = vmax.f32 %v2820, %v2821
    %v2823 = vpack.c.bf16 %v2816, %v2816
    %v2824 = vpack.c.bf16 %v2822, %v2822
    %s2825 = scalar_lea.vmem %s3, 64
    %v2826 = vld [vmem:[%s2825] sm:$0xf]
    %v2827 = vld [vmem:[%s2825 + $0x4] sm:$0xf]
    %v2828 = vld [vmem:[%s2825 + $0x8] sm:$0xf]
    %v2829 = vld [vmem:[%s2825 + $0xc] sm:$0xf]
    %v2830 = vld [vmem:[%s2825 + $0x10] sm:$0xf]
    %v2831 = vld [vmem:[%s2825 + $0x14] sm:$0xf]
    %v2832 = vld [vmem:[%s2825 + $0x18] sm:$0xf]
    %v2833 = vld [vmem:[%s2825 + $0x1c] sm:$0xf]
    %v2834 = vld [vmem:[%s2825 + $0x20] sm:$0xf]
    %v2835 = vld [vmem:[%s2825 + $0x24] sm:$0xf]
    %v2836 = vld [vmem:[%s2825 + $0x28] sm:$0xf]
    %v2837 = vld [vmem:[%s2825 + $0x2c] sm:$0xf]
    %v2838 = vld [vmem:[%s2825 + $0x30] sm:$0xf]
    %v2839 = vld [vmem:[%s2825 + $0x34] sm:$0xf]
    %v2840 = vld [vmem:[%s2825 + $0x38] sm:$0xf]
    %v2841 = vld [vmem:[%s2825 + $0x3c] sm:$0xf]
    %v2844 = vunpack.c.l.b16 %v2823
    %v2845 = vunpack.c.l.b16 %v2824
    %vm2846 = vcmask 1041409
    %v2847 = vsel %vm2846, %v2845, %v2844
    %v2848 = vpack.c.b16 %v2847, %v2847
    %v2866 = vunpack.c.l.b16 %v2826
    %v2867 = vunpack.c.l.b16 %v2827
    %v2868 = vunpack.c.l.b16 %v2828
    %v2869 = vunpack.c.l.b16 %v2829
    %v2870 = vunpack.c.l.b16 %v2830
    %v2871 = vunpack.c.l.b16 %v2831
    %v2872 = vunpack.c.l.b16 %v2832
    %v2873 = vunpack.c.l.b16 %v2833
    %v2874 = vunpack.c.l.b16 %v2834
    %v2875 = vunpack.c.l.b16 %v2835
    %v2876 = vunpack.c.l.b16 %v2836
    %v2877 = vunpack.c.l.b16 %v2837
    %v2878 = vunpack.c.l.b16 %v2838
    %v2879 = vunpack.c.l.b16 %v2839
    %v2880 = vunpack.c.l.b16 %v2840
    %v2881 = vunpack.c.l.b16 %v2841
    %v2882 = vpack.c.b16 %v2867, %v2866
    %v2883 = vpack.c.b16 %v2869, %v2868
    %v2884 = vpack.c.b16 %v2871, %v2870
    %v2885 = vpack.c.b16 %v2873, %v2872
    %v2886 = vpack.c.b16 %v2875, %v2874
    %v2887 = vpack.c.b16 %v2877, %v2876
    %v2888 = vpack.c.b16 %v2879, %v2878
    %v2889 = vpack.c.b16 %v2881, %v2880
    %2898 = vmatprep.subr.bf16.mxu0 0
    %2899 = vmatpush1.bf16.msra.mxu0 %v2882
    %2900 = vmatprep.subr.bf16.mxu0 0
    %2901 = vmatpush1.bf16.msra.mxu0 %v2883
    %2902 = vmatprep.subr.bf16.mxu0 0
    %2903 = vmatpush1.bf16.msra.mxu0 %v2884
    %2904 = vmatprep.subr.bf16.mxu0 0
    %2905 = vmatpush1.bf16.msra.mxu0 %v2885
    %2906 = vmatprep.subr.bf16.mxu0 0
    %2907 = vmatpush1.bf16.msra.mxu0 %v2886
    %2908 = vmatprep.subr.bf16.mxu0 0
    %2909 = vmatpush1.bf16.msra.mxu0 %v2887
    %2910 = vmatprep.subr.bf16.mxu0 0
    %2911 = vmatpush1.bf16.msra.mxu0 %v2888
    %2912 = vmatprep.subr.bf16.mxu0 0
    %2913 = vmatpush1.bf16.msra.mxu0 %v2889
    %2914 = vmatprep.subr.bf16.mxu0 0
    %2915 = vmatpush1.bf16.msra.mxu0 0
    %2916 = vmatprep.subr.bf16.mxu0 0
    %2917 = vmatpush1.bf16.msra.mxu0 0
    %2918 = vmatprep.subr.bf16.mxu0 0
    %2919 = vmatpush1.bf16.msra.mxu0 0
    %2920 = vmatprep.subr.bf16.mxu0 0
    %2921 = vmatpush1.bf16.msra.mxu0 0
    %2922 = vmatprep.subr.bf16.mxu0 0
    %2923 = vmatpush1.bf16.msra.mxu0 0
    %2924 = vmatprep.subr.bf16.mxu0 0
    %2925 = vmatpush1.bf16.msra.mxu0 0
    %2926 = vmatprep.subr.bf16.mxu0 0
    %2927 = vmatpush1.bf16.msra.mxu0 0
    %2928 = vmatprep.subr.bf16.mxu0 0
    %2929 = vmatpush1.bf16.msra.mxu0 0
    %2930 = vmatprep.mubr.bf16.mxu0 0
    %2931 = vmatmul.mubr.bf16.gmra.mrb[0].mxu0 %v2848
    %v2932 = vpop.f32.mrb[0].mxu0
    %v2933 = vadd.f32 0.0, %v2932
    %v2934 = vpop.f32.mrb[0].mxu0
    %v2935 = vpop.f32.mrb[0].mxu0
    %v2936 = vpop.f32.mrb[0].mxu0
    %2937 = vdwg.mxu0
    %v2940 = vunpack.c.l.b16 %v2793
    %v2941 = vunpack.c.l.b16 %v2794
    %v2942 = vsel %vm2846, %v2941, %v2940
    %v2943 = vpack.c.b16 %v2942, %v2942
    %v2961 = vunpack.c.l.b16 %v2795
    %v2962 = vunpack.c.l.b16 %v2796
    %v2963 = vunpack.c.l.b16 %v2797
    %v2964 = vunpack.c.l.b16 %v2798
    %v2965 = vunpack.c.l.b16 %v2799
    %v2966 = vunpack.c.l.b16 %v2800
    %v2967 = vunpack.c.l.b16 %v2801
    %v2968 = vunpack.c.l.b16 %v2802
    %v2969 = vunpack.c.l.b16 %v2803
    %v2970 = vunpack.c.l.b16 %v2804
    %v2971 = vunpack.c.l.b16 %v2805
    %v2972 = vunpack.c.l.b16 %v2806
    %v2973 = vunpack.c.l.b16 %v2807
    %v2974 = vunpack.c.l.b16 %v2808
    %v2975 = vunpack.c.l.b16 %v2809
    %v2976 = vunpack.c.l.b16 %v2810
    %v2977 = vpack.c.b16 %v2962, %v2961
    %v2978 = vpack.c.b16 %v2964, %v2963
    %v2979 = vpack.c.b16 %v2966, %v2965
    %v2980 = vpack.c.b16 %v2968, %v2967
    %v2981 = vpack.c.b16 %v2970, %v2969
    %v2982 = vpack.c.b16 %v2972, %v2971
    %v2983 = vpack.c.b16 %v2974, %v2973
    %v2984 = vpack.c.b16 %v2976, %v2975
    %2993 = vmatprep.subr.bf16.mxu0 0
    %2994 = vmatpush1.bf16.msra.mxu0 %v2977
    %2995 = vmatprep.subr.bf16.mxu0 0
    %2996 = vmatpush1.bf16.msra.mxu0 %v2978
    %2997 = vmatprep.subr.bf16.mxu0 0
    %2998 = vmatpush1.bf16.msra.mxu0 %v2979
    %2999 = vmatprep.subr.bf16.mxu0 0
    %3000 = vmatpush1.bf16.msra.mxu0 %v2980
    %3001 = vmatprep.subr.bf16.mxu0 0
    %3002 = vmatpush1.bf16.msra.mxu0 %v2981
    %3003 = vmatprep.subr.bf16.mxu0 0
    %3004 = vmatpush1.bf16.msra.mxu0 %v2982
    %3005 = vmatprep.subr.bf16.mxu0 0
    %3006 = vmatpush1.bf16.msra.mxu0 %v2983
    %3007 = vmatprep.subr.bf16.mxu0 0
    %3008 = vmatpush1.bf16.msra.mxu0 %v2984
    %3009 = vmatprep.subr.bf16.mxu0 0
    %3010 = vmatpush1.bf16.msra.mxu0 0
    %3011 = vmatprep.subr.bf16.mxu0 0
    %3012 = vmatpush1.bf16.msra.mxu0 0
    %3013 = vmatprep.subr.bf16.mxu0 0
    %3014 = vmatpush1.bf16.msra.mxu0 0
    %3015 = vmatprep.subr.bf16.mxu0 0
    %3016 = vmatpush1.bf16.msra.mxu0 0
    %3017 = vmatprep.subr.bf16.mxu0 0
    %3018 = vmatpush1.bf16.msra.mxu0 0
    %3019 = vmatprep.subr.bf16.mxu0 0
    %3020 = vmatpush1.bf16.msra.mxu0 0
    %3021 = vmatprep.subr.bf16.mxu0 0
    %3022 = vmatpush1.bf16.msra.mxu0 0
    %3023 = vmatprep.subr.bf16.mxu0 0
    %3024 = vmatpush1.bf16.msra.mxu0 0
    %3025 = vmatprep.mubr.bf16.mxu0 0
    %3026 = vmatmul.mubr.bf16.gmra.mrb[0].mxu0 %v2943
    %v3027 = vpop.f32.mrb[0].mxu0
    %v3028 = vadd.f32 %v2933, %v3027
    %v3029 = vpop.f32.mrb[0].mxu0
    %v3030 = vpop.f32.mrb[0].mxu0
    %v3031 = vpop.f32.mrb[0].mxu0
    %3032 = vdwg.mxu0
    %v3033 = vld [vmem:[%s4] sm:$0x1]
    %v3035 = vlaneseq
    %v3036 = vshrl.u32 %v3035, 7
    %v3037 = vsub.s32 0, %v3036
    %v3038 = vrot.slane %v3033, %v3037
    %v3040 = vadd.f32 %v3028, %v3038
    %v3041 = vmax.f32 %v3040, 0.0
    %v3042 = vpack.c.bf16 %v3041, %v3041
    %v3043 = vld [vmem:[%s5] sm:$0xf]
    %v3044 = vld [vmem:[%s5 + $0x4] sm:$0xf]
    %v3045 = vld [vmem:[%s5 + $0x8] sm:$0xf]
    %v3046 = vld [vmem:[%s5 + $0xc] sm:$0xf]
    %v3047 = vld [vmem:[%s5 + $0x10] sm:$0xf]
    %v3048 = vld [vmem:[%s5 + $0x14] sm:$0xf]
    %v3049 = vld [vmem:[%s5 + $0x18] sm:$0xf]
    %v3050 = vld [vmem:[%s5 + $0x1c] sm:$0xf]
    %v3051 = vld [vmem:[%s6] sm:$0x1]
    %v3053 = vlaneseq
    %v3054 = vshrl.u32 %v3053, 7
    %v3055 = vsub.s32 0, %v3054
    %v3056 = vrot.slane %v3051, %v3055
    %v3066 = vunpack.c.l.b16 %v3043
    %v3067 = vunpack.c.l.b16 %v3044
    %v3068 = vunpack.c.l.b16 %v3045
    %v3069 = vunpack.c.l.b16 %v3046
    %v3070 = vunpack.c.l.b16 %v3047
    %v3071 = vunpack.c.l.b16 %v3048
    %v3072 = vunpack.c.l.b16 %v3049
    %v3073 = vunpack.c.l.b16 %v3050
    %v3074 = vpack.c.b16 %v3067, %v3066
    %v3075 = vpack.c.b16 %v3069, %v3068
    %v3076 = vpack.c.b16 %v3071, %v3070
    %v3077 = vpack.c.b16 %v3073, %v3072
    %vm3082 = vcmask 523264
    %v3084 = vsel %vm3082, %v3042, 0
    %3086 = vmatprep.subr.bf16.mxu0 0
    %3087 = vmatpush1.bf16.msra.mxu0 %v3074
    %3088 = vmatprep.subr.bf16.mxu0 0
    %3089 = vmatpush1.bf16.msra.mxu0 %v3075
    %3090 = vmatprep.subr.bf16.mxu0 0
    %3091 = vmatpush1.bf16.msra.mxu0 %v3076
    %3092 = vmatprep.subr.bf16.mxu0 0
    %3093 = vmatpush1.bf16.msra.mxu0 %v3077
    %3094 = vmatprep.subr.bf16.mxu0 0
    %3095 = vmatpush1.bf16.msra.mxu0 0
    %3096 = vmatprep.subr.bf16.mxu0 0
    %3097 = vmatpush1.bf16.msra.mxu0 0
    %3098 = vmatprep.subr.bf16.mxu0 0
    %3099 = vmatpush1.bf16.msra.mxu0 0
    %3100 = vmatprep.subr.bf16.mxu0 0
    %3101 = vmatpush1.bf16.msra.mxu0 0
    %3102 = vmatprep.subr.bf16.mxu0 0
    %3103 = vmatpush1.bf16.msra.mxu0 0
    %3104 = vmatprep.subr.bf16.mxu0 0
    %3105 = vmatpush1.bf16.msra.mxu0 0
    %3106 = vmatprep.subr.bf16.mxu0 0
    %3107 = vmatpush1.bf16.msra.mxu0 0
    %3108 = vmatprep.subr.bf16.mxu0 0
    %3109 = vmatpush1.bf16.msra.mxu0 0
    %3110 = vmatprep.subr.bf16.mxu0 0
    %3111 = vmatpush1.bf16.msra.mxu0 0
    %3112 = vmatprep.subr.bf16.mxu0 0
    %3113 = vmatpush1.bf16.msra.mxu0 0
    %3114 = vmatprep.subr.bf16.mxu0 0
    %3115 = vmatpush1.bf16.msra.mxu0 0
    %3116 = vmatprep.subr.bf16.mxu0 0
    %3117 = vmatpush1.bf16.msra.mxu0 0
    %3118 = vmatprep.mubr.bf16.mxu0 0
    %3119 = vmatmul.mubr.bf16.gmra.mrb[0].mxu0 %v3084
    %v3120 = vpop.f32.mrb[0].mxu0
    %v3121 = vadd.f32 %v3056, %v3120
    %v3122 = vpop.f32.mrb[0].mxu0
    %v3123 = vpop.f32.mrb[0].mxu0
    %v3124 = vpop.f32.mrb[0].mxu0
    %3125 = vdwg.mxu0
    %vm3126 = vcmask 17408
    %v3127 = vsel %vm3126, %v3121, -inf
    %3128 = vmax.xlane.f32.xlu0 %v3127
    %v3129 = vpop.xlane.xlu0 %3128
    %v3130 = vsub.f32 %v3121, %v3129
    %v3131 = vmul.f32 %v3130, 1.442695
    %v3132 = vpow.pop %v3131
    %v3133 = vsel %vm3126, %v3132, 0.0
    %3134 = vadd.xlane.f32.xlu0 %v3133
    %v3135 = vpop.xlane.xlu0 %3134
    %v3136 = vrcp.pop %v3135
    %v3137 = vmul.f32 %v3132, %v3136
    %3138 = vst.msk [vmem:[#allocation2] sm:$0x3] %vm3126, %v3137
    // Predicated region
    $region30: #{domain_classifier_forward.5} parent=1 // pred_check
      _
    $region31: #{domain_classifier_forward.5} parent=1 // pred_check_branch
      %3140 = sbr.rel (0) target = $region33
    $region32: #{domain_classifier_forward.5} parent=1 // pred_region
      %s3142 = ssub.s32 32, 32
      %3143 = vsyncadd [#allocation3], %s3142
      %s3145 = sshll.u32 [#allocation2], 4
      %s3146 = int_to_ptr.vmem [resolvable:$true] %s3145
      %3148 = dma.vmem_to_hbm [thread:$0]  %s3146, 32, %s7, [#allocation3]
    $region33: #{domain_classifier_forward.5} parent=1 // pred_fallthru
      _
    // Predicated region
    $region34: #{domain_classifier_forward.5} parent=1 // pred_check
      _
    $region35: #{domain_classifier_forward.5} parent=1 // pred_check_branch
      %3150 = sbr.rel (0) target = $region37
    $region36: #{domain_classifier_forward.5} parent=1 // pred_region
      %3151 = dma.done [#allocation3], 32
    $region37: #{domain_classifier_forward.5} parent=1 // pred_fallthru
      _
    %3152 = vsyncpa [#allocation3], 1

</llo_original>
